<compile_context>
chip_gen: v5e
topology: v5e:2x2
jax: 0.10.0
libtpu: 0.0.40
codegen_flags: <defaults>
</compile_context>

<pallas_src>
import functools
import math

import numpy as np
import jax
import jax.numpy as jnp
from jax.experimental import pallas as pl
from jax.experimental.pallas import tpu as pltpu


# ----------------------------------------------------------------------------- utilities
def _round_up(x, m):
    return (x + m - 1) // m * m


def _pick_tile(dim, unit, cap):
    """Return (padded_dim, tile) with tile | padded_dim and tile a multiple of `unit`."""
    p = _round_up(dim, unit)
    if p <= cap:
        return p, p
    p = _round_up(dim, cap)
    return p, cap


def _erf_approx(x):
    # Abramowitz & Stegun 7.1.26 (max abs err ~1.5e-7) — exact-erf GELU fidelity at f32,
    # built only from primitives guaranteed to lower in Mosaic (exp, div, where).
    a1, a2, a3, a4, a5 = 0.254829592, -0.284496736, 1.421413741, -1.453152027, 1.061405429
    p = 0.3275911
    ax = jnp.abs(x)
    t = 1.0 / (1.0 + p * ax)
    poly = ((((a5 * t + a4) * t + a3) * t + a2) * t + a1) * t
    y = 1.0 - poly * jnp.exp(-ax * ax)
    return jnp.where(x >= 0, y, -y)


# ------------------------------------------------------------------- fused matmul kernel
# out = act( LN?(A) @ B + bias ) + residual?
#   * tiled (M//tm, N//tn, K//tk) grid, f32 accumulator scratch
#   * A/B fed to the MXU in bf16, everything else (LN, bias, act, residual) stays f32
def _matmul_kernel(*refs, act, ln, res, e_valid):
    idx = 0
    a_ref = refs[idx]; idx += 1
    b_ref = refs[idx]; idx += 1
    bias_ref = refs[idx]; idx += 1
    if ln:
        g_ref = refs[idx]; bt_ref = refs[idx + 1]; idx += 2
    if res:
        r_ref = refs[idx]; idx += 1
    o_ref = refs[idx]
    acc_ref = refs[idx + 1]

    kk = pl.program_id(2)

    @pl.when(kk == 0)
    def _init():
        acc_ref[...] = jnp.zeros_like(acc_ref)

    a = a_ref[...]
    if ln:
        # LayerNorm prologue over the first `e_valid` columns (padded columns are zero,
        # so the sum is exact; mask them out of the variance).  N is a single tile at the
        # sizes used here, so the prologue is not recomputed across N blocks.
        a = a.astype(jnp.float32)
        col = jax.lax.broadcasted_iota(jnp.int32, a.shape, 1)
        valid = (col < e_valid).astype(jnp.float32)
        inv_e = 1.0 / float(e_valid)
        mean = jnp.sum(a, axis=-1, keepdims=True) * inv_e
        cen = (a - mean) * valid
        var = jnp.sum(cen * cen, axis=-1, keepdims=True) * inv_e
        a = cen * jax.lax.rsqrt(var + 1e-5) * g_ref[...] + bt_ref[...]

    acc_ref[...] += jnp.dot(a.astype(jnp.bfloat16), b_ref[...],
                            preferred_element_type=jnp.float32)

    @pl.when(kk == pl.num_programs(2) - 1)
    def _finalize():
        r = acc_ref[...] + bias_ref[...]
        if act == "relu":
            r = jnp.maximum(r, 0.0)
        elif act == "gelu":
            r = 0.5 * r * (1.0 + _erf_approx(r * 0.7071067811865476))
        if res:
            r = r + r_ref[...]
        o_ref[...] = r.astype(o_ref.dtype)


_TM_CAP, _TN_CAP, _TK_CAP = 512, 256, 512   # worst-case 2x-buffered footprint ~5 MiB << 32 MiB


def prep_weight(w, bias):
    """Pad a (K, N) weight to lane/tile multiples and cast to bf16 — done once per model."""
    K, N = w.shape
    Kp, tk = _pick_tile(K, 128, _TK_CAP)
    Np, tn = _pick_tile(N, 128, _TN_CAP)
    w_p = jnp.pad(w.astype(jnp.float32), ((0, Kp - K), (0, Np - N))).astype(jnp.bfloat16)
    b_p = jnp.pad(bias.astype(jnp.float32).reshape(1, N), ((0, 0), (0, Np - N)))
    return dict(w=w_p, bias=b_p, K=K, N=N, Kp=Kp, tk=tk, Np=Np, tn=tn)


def matmul_fused(a, wp, act="none", ln=None, residual=None, keep_padded=False):
    """act( LN?(a) @ w + bias ) + residual — tiled MXU matmul with fused epilogue.

    `wp` is a weight pack from prep_weight(): bf16 weight, BN already folded, padded to
    (Kp, Np); f32 bias (1, Np).  `a` may be (M, K) or already padded (M, Kp) with zero
    columns beyond K; `residual` may be (M, N) or already padded (Mp, Np).
    """
    M, Ka = a.shape
    K, N, Kp, tk, Np, tn = wp["K"], wp["N"], wp["Kp"], wp["tk"], wp["Np"], wp["tn"]
    assert Ka in (K, Kp), (Ka, K, Kp)

    use_ln = ln is not None
    use_res = residual is not None

    Mp, tm = _pick_tile(M, 16, _TM_CAP)          # 16-row unit: native bf16 (16,128) tile
    # v7x megacore: guarantee >=2 blocks along a "parallel" grid axis.
    if Mp // tm == 1 and Np // tn == 1 and Mp % 32 == 0:
        tm = Mp // 2
    if use_ln:
        assert Kp == tk, "LN prologue needs the whole feature dim in one K tile"

    a_dtype = jnp.float32 if use_ln else jnp.bfloat16   # LN needs f32 row stats
    a_p = a.astype(a_dtype)
    if a_p.shape != (Mp, Kp):
        a_p = jnp.pad(a_p, ((0, Mp - M), (0, Kp - Ka)))

    operands = [a_p, wp["w"], wp["bias"]]
    in_specs = [
        pl.BlockSpec((tm, tk), lambda i, j, kk: (i, kk)),
        pl.BlockSpec((tk, tn), lambda i, j, kk: (kk, j)),
        pl.BlockSpec((1, tn), lambda i, j, kk: (0, j)),
    ]
    if use_ln:
        g, bt = ln
        operands.append(jnp.pad(g.astype(jnp.float32).reshape(1, -1),
                                ((0, 0), (0, Kp - g.shape[0]))))
        operands.append(jnp.pad(bt.astype(jnp.float32).reshape(1, -1),
                                ((0, 0), (0, Kp - bt.shape[0]))))
        in_specs += [pl.BlockSpec((1, tk), lambda i, j, kk: (0, kk))] * 2
    if use_res:
        r = residual.astype(jnp.float32)
        if r.shape != (Mp, Np):
            r = jnp.pad(r, ((0, Mp - r.shape[0]), (0, Np - r.shape[1])))
        operands.append(r)
        in_specs.append(pl.BlockSpec((tm, tn), lambda i, j, kk: (i, j)))

    grid = (Mp // tm, Np // tn, Kp // tk)
    cost = pl.CostEstimate(
        flops=2 * Mp * Kp * Np,
        transcendentals=Mp * Np if act == "gelu" else 0,
        bytes_accessed=Mp * Kp * (4 if use_ln else 2) + Kp * Np * 2 + Mp * Np * 4,
    )
    out = pl.pallas_call(
        functools.partial(_matmul_kernel, act=act, ln=use_ln, res=use_res, e_valid=K),
        out_shape=jax.ShapeDtypeStruct((Mp, Np), jnp.float32),
        grid=grid,
        in_specs=in_specs,
        out_specs=pl.BlockSpec((tm, tn), lambda i, j, kk: (i, j)),
        scratch_shapes=[pltpu.VMEM((tm, tn), jnp.float32)],
        compiler_params=pltpu.CompilerParams(
            dimension_semantics=("parallel", "parallel", "arbitrary"),
            vmem_limit_bytes=32 * 1024 * 1024,
        ),
        cost_estimate=cost,
    )(*operands)
    return out if keep_padded else out[:M, :N]


# ---------------------------------------------------------------------- attention kernel
# Lane-dense layout: q/k/v blocks are (L, Dh, nb) with the batch*heads axis on lanes.
# L=2, Dh=8 here -> scores are 2x2 per (batch, head): pure VPU elementwise + sublane sums,
# exp on the EUP, pl.reciprocal on the EUP, full-width (unmasked) stores.
def _attention_kernel(q_ref, k_ref, v_ref, o_ref, *, scale):
    q = q_ref[...]
    k = k_ref[...]
    v = v_ref[...]
    L = q.shape[0]
    # s[i][j]: (1, nb) score row
    s = [[jnp.sum(q[i] * k[j], axis=0, keepdims=True) * scale for j in range(L)]
         for i in range(L)]
    for i in range(L):
        m = s[i][0]
        for j in range(1, L):
            m = jnp.maximum(m, s[i][j])
        p = [jnp.exp(s[i][j] - m) for j in range(L)]
        denom = p[0]
        for j in range(1, L):
            denom = denom + p[j]
        inv = pl.reciprocal(denom, approx=True)
        acc = (p[0] * inv) * v[0]
        for j in range(1, L):
            acc = acc + (p[j] * inv) * v[j]
        o_ref[i] = acc


def attention(q, k, v, scale):
    # q/k/v: (L, Dh, NH) f32 with NH = batch*heads last (lane-dense).
    L, Dh, NH = q.shape
    assert Dh % 8 == 0, "head_dim must be a multiple of 8 (sublane tile)"
    nb = 128 if NH % 128 == 0 else NH
    spec = pl.BlockSpec((L, Dh, nb), lambda i: (0, 0, i))
    return pl.pallas_call(
        functools.partial(_attention_kernel, scale=scale),
        out_shape=jax.ShapeDtypeStruct((L, Dh, NH), jnp.float32),
        grid=(NH // nb,),
        in_specs=[spec] * 3,
        out_specs=spec,
        compiler_params=pltpu.CompilerParams(dimension_semantics=("parallel",)),
    )(q.astype(jnp.float32), k.astype(jnp.float32), v.astype(jnp.float32))
    # TODO(synk): at larger L, switch to an online-softmax kv-grid (flash-style scratch).


# ------------------------------------------------------------------------------ max-pool
def maxpool2x2(x):  # NHWC; trivial reshape-max, not worth a kernel launch
    B, H, W, C = x.shape
    return x.reshape(B, H // 2, 2, W // 2, 2, C).max(axis=(2, 4))


# ----------------------------------------------------------------------- conv via im2col
def im2col(x, kh, kw, pad):
    B, H, W, C = x.shape
    xp = jnp.pad(x, ((0, 0), (pad, pad), (pad, pad), (0, 0)))
    Ho = H + 2 * pad - kh + 1
    Wo = W + 2 * pad - kw + 1
    patches = []
    for i in range(kh):
        for j in range(kw):
            patches.append(xp[:, i:i + Ho, j:j + Wo, :])
    cols = jnp.stack(patches, axis=3)                       # (B, Ho, Wo, kh*kw, C)
    return cols.reshape(B * Ho * Wo, kh * kw * C), (B, Ho, Wo)


def conv2d(x, wp, relu=False):
    """x: NHWC; `wp` carries the folded eval-BN weight/bias + (kh, kw, pad)."""
    cols, (B, Ho, Wo) = im2col(x, wp["kh"], wp["kw"], wp["pad"])
    y = matmul_fused(cols, wp, act="relu" if relu else "none")
    return y.reshape(B, Ho, Wo, wp["N"])


def conv_transpose2d(x, wp):
    """ConvTranspose2d(k=4, s=2, p=1) as ONE 3x3 conv (sub-pixel decomposition).

    Output parity (r,c) of each input pixel is a separate column block of the prepped
    (9*Cin, 4*Cout) weight, so no zero-dilated input is ever materialized.
    """
    B, H, W, _ = x.shape
    cols, _ = im2col(x, 3, 3, 1)
    y = matmul_fused(cols, wp)                              # (B*H*W, 4*Cout)
    Cout = wp["N"] // 4
    y = y.reshape(B, H, W, 2, 2, Cout)
    return y.transpose(0, 1, 3, 2, 4, 5).reshape(B, 2 * H, 2 * W, Cout)


# --------------------------------------------------------------------- bilinear resizing
def bilinear_matrix(out_size, in_size):
    """Interpolation matrix matching F.interpolate(bilinear, align_corners=False)."""
    scale = in_size / out_size
    M = np.zeros((out_size, in_size), np.float32)
    for o in range(out_size):
        src = max((o + 0.5) * scale - 0.5, 0.0)
        i0 = min(int(np.floor(src)), in_size - 1)
        i1 = min(i0 + 1, in_size - 1)
        lam = src - i0
        M[o, i0] += 1.0 - lam
        M[o, i1] += lam
    return jnp.asarray(M)


def bilinear_resize_to_nchw(x_nhwc, Hout, Wout):
    # Tiny K (<=32) / N (<=32) matmuls -> plain XLA per the perf review (no lane padding).
    B, Hin, Win, C = x_nhwc.shape
    Ww = bilinear_matrix(Wout, Win)
    Wh = bilinear_matrix(Hout, Hin)
    t = jnp.einsum("bhwc,Ww->bhWc", x_nhwc, Ww)
    t = jnp.einsum("bhWc,Hh->bHWc", t, Wh)
    return jnp.transpose(t, (0, 3, 1, 2))                   # NCHW


# --------------------------------------------------------------------------- transformer
def transformer_block(x2, bp, num_heads, L, N, E):
    """x2: (M, E) or padded (Mp, Ep) with zero pad columns; returns padded (Mp, Ep)."""
    M = L * N
    Dh = E // num_heads
    NH = N * num_heads

    # ---- attention sub-block: LN1 fused as prologue of the QKV projection --------------
    qkv = matmul_fused(x2, bp["in_proj"], ln=(bp["ln1_g"], bp["ln1_b"]),
                       keep_padded=True)[:M, :3 * E]
    qkv = qkv.reshape(L, N, 3, num_heads, Dh)
    # (L, Dh, N*heads): batch*heads on lanes for the lane-dense attention kernel.
    q = qkv[:, :, 0].transpose(0, 3, 1, 2).reshape(L, Dh, NH)
    k = qkv[:, :, 1].transpose(0, 3, 1, 2).reshape(L, Dh, NH)
    v = qkv[:, :, 2].transpose(0, 3, 1, 2).reshape(L, Dh, NH)
    o = attention(q, k, v, scale=1.0 / math.sqrt(Dh))
    o = o.reshape(L, Dh, N, num_heads).transpose(0, 2, 3, 1).reshape(M, E)
    x2 = matmul_fused(o, bp["out_proj"], residual=x2, keep_padded=True)

    # ---- MLP sub-block: LN2 prologue + exact-GELU epilogue in FC1, residual in FC2 ------
    h = matmul_fused(x2, bp["fc1"], ln=(bp["ln2_g"], bp["ln2_b"]), act="gelu",
                     keep_padded=True)
    x2 = matmul_fused(h, bp["fc2"], residual=x2, keep_padded=True)
    return x2                                               # padded (Mp, Ep), pad cols zero


# --------------------------------------------------------------------------------- model
def cvt_forward(prepped, x_nchw, num_heads=4, patch_size=16):
    B, C, H, W = x_nchw.shape
    x = jnp.transpose(x_nchw, (0, 2, 3, 1)).astype(jnp.float32)          # NCHW -> NHWC

    # Patch embedding: 3 x (conv + folded-BN + ReLU) fused matmuls, then 2x2 max-pool.
    for wp in prepped["pe"]:
        x = conv2d(x, wp, relu=True)
    pool = patch_size // 8
    assert pool == 2, "this script implements the default MaxPool2d(2, 2)"
    assert x.shape[1] % 2 == 0 and x.shape[2] % 2 == 0
    x = maxpool2x2(x)

    Bt, h, w, E = x.shape
    # nn.MultiheadAttention(batch_first=False): dim0 = sequence (=Bt), dim1 = batch (=h*w).
    L, N = Bt, h * w
    x2 = x.reshape(L * N, E)                                             # 'b c h w -> b (h w) c'
    for bp in prepped["blocks"]:
        x2 = transformer_block(x2, bp, num_heads, L, N, E)
    x = x2[:L * N, :E].reshape(Bt, h, w, E)                              # slice padding ONCE

    # Decoder
    d = prepped["dec"]
    x = conv_transpose2d(x, d["ct1"])
    x = conv2d(x, d["cb1"], relu=True)
    x = conv_transpose2d(x, d["ct2"])
    x = conv2d(x, d["cb2"], relu=True)
    # Final 1x1 conv (num_classes=3 would waste >97% of lanes) stays in plain XLA.
    x = jnp.einsum("bhwc,oc->bhwo", x, d["final"]["w"]) + d["final"]["b"]

    return bilinear_resize_to_nchw(x, H, W)                              # (B, num_classes, H, W)


# -------------------------------------------------------------- one-time parameter prep
def prep_conv(cb, pad):
    """(O, C, kh, kw) conv + eval-BatchNorm folded into one (kh*kw*C, O) weight pack."""
    O, C, kh, kw = cb["w"].shape
    wm = jnp.transpose(cb["w"], (2, 3, 1, 0)).reshape(kh * kw * C, O).astype(jnp.float32)
    bias = cb["b"].astype(jnp.float32)
    if "bn_g" in cb:
        scale = cb["bn_g"] / jnp.sqrt(cb["bn_v"] + 1e-5)
        shift = cb["bn_b"] - cb["bn_m"] * scale
        wm = wm * scale[None, :]
        bias = bias * scale + shift
    wp = prep_weight(wm, bias)
    wp.update(kh=kh, kw=kw, pad=pad)
    return wp


def prep_conv_transpose(w, bias):
    """ConvTranspose2d(k=4,s=2,p=1) -> 3x3-window weight (9*Cin, 4*Cout), parity on N."""
    Cin, Cout, KH, KW = w.shape
    assert KH == 4 and KW == 4
    # output parity r (or c) -> {3x3 window offset -> kernel row (or col) index}
    tap = {0: {0: 3, 1: 1}, 1: {1: 2, 2: 0}}
    big = jnp.zeros((3, 3, Cin, 2, 2, Cout), jnp.float32)
    for r, rt in tap.items():
        for c, ct in tap.items():
            for di, ki in rt.items():
                for dj, kj in ct.items():
                    big = big.at[di, dj, :, r, c, :].set(w[:, :, ki, kj].astype(jnp.float32))
    wp = prep_weight(big.reshape(9 * Cin, 4 * Cout), jnp.tile(bias.astype(jnp.float32), 4))
    wp.update(kh=3, kw=3, pad=1)
    return wp


def prepare_params(params):
    """BN fold / reshape / pad / bf16-cast every weight ONCE, outside the jitted forward."""
    d = params["dec"]
    return dict(
        pe=[prep_conv(cb, p) for cb, p in zip(params["pe"], [3, 1, 1])],
        blocks=[dict(
            ln1_g=bp["ln1_g"], ln1_b=bp["ln1_b"],
            ln2_g=bp["ln2_g"], ln2_b=bp["ln2_b"],
            in_proj=prep_weight(bp["in_proj_w"].T, bp["in_proj_b"]),
            out_proj=prep_weight(bp["out_proj_w"].T, bp["out_proj_b"]),
            fc1=prep_weight(bp["fc1_w"].T, bp["fc1_b"]),
            fc2=prep_weight(bp["fc2_w"].T, bp["fc2_b"]),
        ) for bp in params["blocks"]],
        dec=dict(
            ct1=prep_conv_transpose(d["ct1"]["w"], d["ct1"]["b"]),
            cb1=prep_conv(d["cb1"], 1),
            ct2=prep_conv_transpose(d["ct2"]["w"], d["ct2"]["b"]),
            cb2=prep_conv(d["cb2"], 1),
            final=dict(w=d["final"]["w"][:, :, 0, 0].astype(jnp.float32),
                       b=d["final"]["b"].astype(jnp.float32)),
        ),
    )


# ------------------------------------------------------------------------- parameter init
def conv_block_params(key, cin, cout, k):
    k1, k2, k3, k4 = jax.random.split(key, 4)
    s = 1.0 / math.sqrt(cin * k * k)
    return dict(
        w=jax.random.uniform(k1, (cout, cin, k, k), jnp.float32, -s, s),
        b=jax.random.uniform(k2, (cout,), jnp.float32, -s, s),
        bn_g=1.0 + 0.1 * jax.random.normal(k3, (cout,), jnp.float32),
        bn_b=0.1 * jax.random.normal(k4, (cout,), jnp.float32),
        bn_m=jnp.zeros((cout,), jnp.float32),
        bn_v=jnp.ones((cout,), jnp.float32),
    )


def transformer_params(key, E):
    ks = jax.random.split(key, 6)
    s = 1.0 / math.sqrt(E)
    s4 = 1.0 / math.sqrt(4 * E)
    return dict(
        ln1_g=jnp.ones((E,), jnp.float32), ln1_b=jnp.zeros((E,), jnp.float32),
        in_proj_w=jax.random.uniform(ks[0], (3 * E, E), jnp.float32, -s, s),
        in_proj_b=jnp.zeros((3 * E,), jnp.float32),
        out_proj_w=jax.random.uniform(ks[1], (E, E), jnp.float32, -s, s),
        out_proj_b=jnp.zeros((E,), jnp.float32),
        ln2_g=jnp.ones((E,), jnp.float32), ln2_b=jnp.zeros((E,), jnp.float32),
        fc1_w=jax.random.uniform(ks[2], (4 * E, E), jnp.float32, -s, s),
        fc1_b=jax.random.uniform(ks[3], (4 * E,), jnp.float32, -s, s),
        fc2_w=jax.random.uniform(ks[4], (E, 4 * E), jnp.float32, -s4, s4),
        fc2_b=jax.random.uniform(ks[5], (E,), jnp.float32, -s4, s4),
    )


def init_params(key, in_channels=1, num_classes=3, embed_dim=32, num_layers=2):
    E = embed_dim
    keys = jax.random.split(key, 2 + num_layers)
    k_pe, k_dec, k_blocks = keys[0], keys[1], keys[2:]
    pe_keys = jax.random.split(k_pe, 3)
    pe = [
        conv_block_params(pe_keys[0], in_channels, E // 4, 7),
        conv_block_params(pe_keys[1], E // 4, E // 2, 3),
        conv_block_params(pe_keys[2], E // 2, E, 3),
    ]
    blocks = [transformer_params(k, E) for k in k_blocks]
    dk = jax.random.split(k_dec, 6)

    def uni(k, shape, fan_in):
        s = 1.0 / math.sqrt(fan_in)
        return jax.random.uniform(k, shape, jnp.float32, -s, s)

    dec = dict(
        ct1=dict(w=uni(dk[0], (E, E // 2, 4, 4), E * 16), b=jnp.zeros((E // 2,), jnp.float32)),
        cb1=conv_block_params(dk[1], E // 2, E // 4, 3),
        ct2=dict(w=uni(dk[2], (E // 4, E // 8, 4, 4), (E // 4) * 16),
                 b=jnp.zeros((E // 8,), jnp.float32)),
        cb2=conv_block_params(dk[3], E // 8, E // 16, 3),
        final=dict(w=uni(dk[4], (num_classes, E // 16, 1, 1), E // 16),
                   b=uni(dk[5], (num_classes,), E // 16)),
    )
    return dict(pe=pe, blocks=blocks, dec=dec)


# ---------------------------------------------------------------------------------- main
if __name__ == "__main__":
    key = jax.random.PRNGKey(0)
    k_x, k_p = jax.random.split(key)

    B, C, H, W = 2, 1, 16, 16
    NUM_CLASSES, EMBED_DIM, NUM_HEADS, NUM_LAYERS, PATCH_SIZE = 3, 32, 4, 2, 16

    x = jax.random.normal(k_x, (B, C, H, W), jnp.float32)
    params = init_params(k_p, in_channels=C, num_classes=NUM_CLASSES,
                         embed_dim=EMBED_DIM, num_layers=NUM_LAYERS)
    prepped = prepare_params(params)   # one-time weight fold / pad / bf16 cast (outside jit)

    fwd = jax.jit(lambda inp: cvt_forward(prepped, inp,
                                          num_heads=NUM_HEADS, patch_size=PATCH_SIZE))
    out = jax.block_until_ready(fwd(x))

    assert out.shape == (B, NUM_CLASSES, H, W), out.shape
    assert bool(jnp.all(jnp.isfinite(out)))
    print("KERNEL_OK")
</pallas_src>

<mosaic_0001>
module attributes {stable_mosaic.version = 11 : i64} {
  func.func @_matmul_kernel(%arg0: i32, %arg1: i32, %arg2: i32, %arg3: memref<256x128xbf16, #tpu.memory_space<vmem>>, %arg4: memref<128x128xbf16, #tpu.memory_space<vmem>>, %arg5: memref<1x128xf32, #tpu.memory_space<vmem>>, %arg6: memref<256x128xf32, #tpu.memory_space<vmem>>, %arg7: memref<256x128xf32, #tpu.memory_space<vmem>>) attributes {dimension_semantics = [#tpu.dimension_semantics<parallel>, #tpu.dimension_semantics<parallel>, #tpu.dimension_semantics<arbitrary>], iteration_bounds = array<i64: 2, 1, 1>, scalar_prefetch = 0 : i64, scratch_operands = 1 : i64, tpu.core_type = #tpu.core_type<tc>, window_params = [{transform_indices = @transform_0, window_bounds = array<i64: 256, 128>}, {transform_indices = @transform_1, window_bounds = array<i64: 128, 128>}, {transform_indices = @transform_2, window_bounds = array<i64: 1, 128>}, {transform_indices = @transform_3, window_bounds = array<i64: 256, 128>}]} {
    %c0_i32 = arith.constant 0 : i32
    %0 = arith.cmpi eq, %arg2, %c0_i32 : i32
    %1 = arith.extui %0 : i1 to i32
    %c0_i32_0 = arith.constant 0 : i32
    %2 = arith.cmpi ne, %1, %c0_i32_0 : i32
    scf.if %2 {
      %cst_10 = arith.constant 0.000000e+00 : f32
      %12 = vector.broadcast %cst_10 : f32 to vector<256x128xf32>
      %c0_11 = arith.constant 0 : index
      %c0_12 = arith.constant 0 : index
      %13 = vector.load %arg7[%c0_11, %c0_12] : memref<256x128xf32, #tpu.memory_space<vmem>>, vector<256x128xf32>
      tpu.vector_store %arg7[%c0_11, %c0_12], %12 {strides = array<i32>} : memref<256x128xf32, #tpu.memory_space<vmem>>, vector<256x128xf32>,
    } else {
    }
    %c0 = arith.constant 0 : index
    %c0_1 = arith.constant 0 : index
    %3 = vector.load %arg3[%c0, %c0_1] : memref<256x128xbf16, #tpu.memory_space<vmem>>, vector<256x128xbf16>
    %c0_2 = arith.constant 0 : index
    %c0_3 = arith.constant 0 : index
    %4 = vector.load %arg7[%c0_2, %c0_3] : memref<256x128xf32, #tpu.memory_space<vmem>>, vector<256x128xf32>
    %c0_4 = arith.constant 0 : index
    %c0_5 = arith.constant 0 : index
    %5 = vector.load %arg4[%c0_4, %c0_5] : memref<128x128xbf16, #tpu.memory_space<vmem>>, vector<128x128xbf16>
    %cst = arith.constant dense<0.000000e+00> : vector<256x128xf32>
    %6 = tpu.matmul %3, %5, %cst {dimension_numbers = #tpu.dot_dimension_numbers<[1], [0], [0], [1], [0, 0, 1, 1], [], []>} : vector<256x128xbf16>, vector<128x128xbf16>, vector<256x128xf32> -> vector<256x128xf32>
    %7 = arith.addf %4, %6 : vector<256x128xf32>
    %c0_6 = arith.constant 0 : index
    %c0_7 = arith.constant 0 : index
    %8 = vector.load %arg7[%c0_6, %c0_7] : memref<256x128xf32, #tpu.memory_space<vmem>>, vector<256x128xf32>
    tpu.vector_store %arg7[%c0_6, %c0_7], %7 {strides = array<i32>} : memref<256x128xf32, #tpu.memory_space<vmem>>, vector<256x128xf32>,
    %c0_i32_8 = arith.constant 0 : i32
    %9 = arith.cmpi eq, %arg2, %c0_i32_8 : i32
    %10 = arith.extui %9 : i1 to i32
    %c0_i32_9 = arith.constant 0 : i32
    %11 = arith.cmpi ne, %10, %c0_i32_9 : i32
    scf.if %11 {
      %c0_10 = arith.constant 0 : index
      %c0_11 = arith.constant 0 : index
      %12 = vector.load %arg7[%c0_10, %c0_11] : memref<256x128xf32, #tpu.memory_space<vmem>>, vector<256x128xf32>
      %c0_12 = arith.constant 0 : index
      %c0_13 = arith.constant 0 : index
      %13 = vector.load %arg5[%c0_12, %c0_13] : memref<1x128xf32, #tpu.memory_space<vmem>>, vector<1x128xf32>
      %14 = vector.broadcast %13 : vector<1x128xf32> to vector<256x128xf32>
      %15 = arith.addf %12, %14 : vector<256x128xf32>
      %cst_14 = arith.constant 0.000000e+00 : f32
      %16 = vector.broadcast %cst_14 : f32 to vector<256x128xf32>
      %17 = arith.maximumf %15, %16 : vector<256x128xf32>
      %c0_15 = arith.constant 0 : index
      %c0_16 = arith.constant 0 : index
      %18 = vector.load %arg6[%c0_15, %c0_16] : memref<256x128xf32, #tpu.memory_space<vmem>>, vector<256x128xf32>
      tpu.vector_store %arg6[%c0_15, %c0_16], %17 {strides = array<i32>} : memref<256x128xf32, #tpu.memory_space<vmem>>, vector<256x128xf32>,
    } else {
    }
    return
  }
  func.func @transform_0(%arg0: i32, %arg1: i32, %arg2: i32) -> (i32, i32) {
    %c0_i32 = arith.constant 0 : i32
    return %arg0, %arg2 : i32, i32
  }
  func.func @transform_1(%arg0: i32, %arg1: i32, %arg2: i32) -> (i32, i32) {
    %c0_i32 = arith.constant 0 : i32
    return %arg2, %arg1 : i32, i32
  }
  func.func @transform_2(%arg0: i32, %arg1: i32, %arg2: i32) -> (i32, i32) {
    %c0_i32 = arith.constant 0 : i32
    %c0_i32_0 = arith.constant 0 : i32
    return %c0_i32, %arg1 : i32, i32
  }
  func.func @transform_3(%arg0: i32, %arg1: i32, %arg2: i32) -> (i32, i32) {
    %c0_i32 = arith.constant 0 : i32
    return %arg0, %arg1 : i32, i32
  }
}

module attributes {stable_mosaic.version = 11 : i64} {
  func.func @_matmul_kernel(%arg0: i32, %arg1: i32, %arg2: i32, %arg3: memref<256x256xbf16, #tpu.memory_space<vmem>>, %arg4: memref<256x128xbf16, #tpu.memory_space<vmem>>, %arg5: memref<1x128xf32, #tpu.memory_space<vmem>>, %arg6: memref<256x128xf32, #tpu.memory_space<vmem>>, %arg7: memref<256x128xf32, #tpu.memory_space<vmem>>) attributes {dimension_semantics = [#tpu.dimension_semantics<parallel>, #tpu.dimension_semantics<parallel>, #tpu.dimension_semantics<arbitrary>], iteration_bounds = array<i64: 2, 1, 1>, scalar_prefetch = 0 : i64, scratch_operands = 1 : i64, tpu.core_type = #tpu.core_type<tc>, window_params = [{transform_indices = @transform_0, window_bounds = array<i64: 256, 256>}, {transform_indices = @transform_1, window_bounds = array<i64: 256, 128>}, {transform_indices = @transform_2, window_bounds = array<i64: 1, 128>}, {transform_indices = @transform_3, window_bounds = array<i64: 256, 128>}]} {
    %c0_i32 = arith.constant 0 : i32
    %0 = arith.cmpi eq, %arg2, %c0_i32 : i32
    %1 = arith.extui %0 : i1 to i32
    %c0_i32_0 = arith.constant 0 : i32
    %2 = arith.cmpi ne, %1, %c0_i32_0 : i32
    scf.if %2 {
      %cst_10 = arith.constant 0.000000e+00 : f32
      %12 = vector.broadcast %cst_10 : f32 to vector<256x128xf32>
      %c0_11 = arith.constant 0 : index
      %c0_12 = arith.constant 0 : index
      %13 = vector.load %arg7[%c0_11, %c0_12] : memref<256x128xf32, #tpu.memory_space<vmem>>, vector<256x128xf32>
      tpu.vector_store %arg7[%c0_11, %c0_12], %12 {strides = array<i32>} : memref<256x128xf32, #tpu.memory_space<vmem>>, vector<256x128xf32>,
    } else {
    }
    %c0 = arith.constant 0 : index
    %c0_1 = arith.constant 0 : index
    %3 = vector.load %arg3[%c0, %c0_1] : memref<256x256xbf16, #tpu.memory_space<vmem>>, vector<256x256xbf16>
    %c0_2 = arith.constant 0 : index
    %c0_3 = arith.constant 0 : index
    %4 = vector.load %arg7[%c0_2, %c0_3] : memref<256x128xf32, #tpu.memory_space<vmem>>, vector<256x128xf32>
    %c0_4 = arith.constant 0 : index
    %c0_5 = arith.constant 0 : index
    %5 = vector.load %arg4[%c0_4, %c0_5] : memref<256x128xbf16, #tpu.memory_space<vmem>>, vector<256x128xbf16>
    %cst = arith.constant dense<0.000000e+00> : vector<256x128xf32>
    %6 = tpu.matmul %3, %5, %cst {dimension_numbers = #tpu.dot_dimension_numbers<[1], [0], [0], [1], [0, 0, 1, 1], [], []>} : vector<256x256xbf16>, vector<256x128xbf16>, vector<256x128xf32> -> vector<256x128xf32>
    %7 = arith.addf %4, %6 : vector<256x128xf32>
    %c0_6 = arith.constant 0 : index
    %c0_7 = arith.constant 0 : index
    %8 = vector.load %arg7[%c0_6, %c0_7] : memref<256x128xf32, #tpu.memory_space<vmem>>, vector<256x128xf32>
    tpu.vector_store %arg7[%c0_6, %c0_7], %7 {strides = array<i32>} : memref<256x128xf32, #tpu.memory_space<vmem>>, vector<256x128xf32>,
    %c0_i32_8 = arith.constant 0 : i32
    %9 = arith.cmpi eq, %arg2, %c0_i32_8 : i32
    %10 = arith.extui %9 : i1 to i32
    %c0_i32_9 = arith.constant 0 : i32
    %11 = arith.cmpi ne, %10, %c0_i32_9 : i32
    scf.if %11 {
      %c0_10 = arith.constant 0 : index
      %c0_11 = arith.constant 0 : index
      %12 = vector.load %arg7[%c0_10, %c0_11] : memref<256x128xf32, #tpu.memory_space<vmem>>, vector<256x128xf32>
      %c0_12 = arith.constant 0 : index
      %c0_13 = arith.constant 0 : index
      %13 = vector.load %arg5[%c0_12, %c0_13] : memref<1x128xf32, #tpu.memory_space<vmem>>, vector<1x128xf32>
      %14 = vector.broadcast %13 : vector<1x128xf32> to vector<256x128xf32>
      %15 = arith.addf %12, %14 : vector<256x128xf32>
      %cst_14 = arith.constant 0.000000e+00 : f32
      %16 = vector.broadcast %cst_14 : f32 to vector<256x128xf32>
      %17 = arith.maximumf %15, %16 : vector<256x128xf32>
      %c0_15 = arith.constant 0 : index
      %c0_16 = arith.constant 0 : index
      %18 = vector.load %arg6[%c0_15, %c0_16] : memref<256x128xf32, #tpu.memory_space<vmem>>, vector<256x128xf32>
      tpu.vector_store %arg6[%c0_15, %c0_16], %17 {strides = array<i32>} : memref<256x128xf32, #tpu.memory_space<vmem>>, vector<256x128xf32>,
    } else {
    }
    return
  }
  func.func @transform_0(%arg0: i32, %arg1: i32, %arg2: i32) -> (i32, i32) {
    %c0_i32 = arith.constant 0 : i32
    return %arg0, %arg2 : i32, i32
  }
  func.func @transform_1(%arg0: i32, %arg1: i32, %arg2: i32) -> (i32, i32) {
    %c0_i32 = arith.constant 0 : i32
    return %arg2, %arg1 : i32, i32
  }
  func.func @transform_2(%arg0: i32, %arg1: i32, %arg2: i32) -> (i32, i32) {
    %c0_i32 = arith.constant 0 : i32
    %c0_i32_0 = arith.constant 0 : i32
    return %c0_i32, %arg1 : i32, i32
  }
  func.func @transform_3(%arg0: i32, %arg1: i32, %arg2: i32) -> (i32, i32) {
    %c0_i32 = arith.constant 0 : i32
    return %arg0, %arg1 : i32, i32
  }
}

module attributes {stable_mosaic.version = 11 : i64} {
  func.func @_matmul_kernel(%arg0: i32, %arg1: i32, %arg2: i32, %arg3: memref<64x128xf32, #tpu.memory_space<vmem>>, %arg4: memref<128x128xbf16, #tpu.memory_space<vmem>>, %arg5: memref<1x128xf32, #tpu.memory_space<vmem>>, %arg6: memref<1x128xf32, #tpu.memory_space<vmem>>, %arg7: memref<1x128xf32, #tpu.memory_space<vmem>>, %arg8: memref<64x128xf32, #tpu.memory_space<vmem>>, %arg9: memref<64x128xf32, #tpu.memory_space<vmem>>) attributes {dimension_semantics = [#tpu.dimension_semantics<parallel>, #tpu.dimension_semantics<parallel>, #tpu.dimension_semantics<arbitrary>], iteration_bounds = array<i64: 2, 1, 1>, scalar_prefetch = 0 : i64, scratch_operands = 1 : i64, tpu.core_type = #tpu.core_type<tc>, window_params = [{transform_indices = @transform_0, window_bounds = array<i64: 64, 128>}, {transform_indices = @transform_1, window_bounds = array<i64: 128, 128>}, {transform_indices = @transform_2, window_bounds = array<i64: 1, 128>}, {transform_indices = @transform_3, window_bounds = array<i64: 1, 128>}, {transform_indices = @transform_4, window_bounds = array<i64: 1, 128>}, {transform_indices = @transform_5, window_bounds = array<i64: 64, 128>}]} {
    %c0_i32 = arith.constant 0 : i32
    %0 = arith.cmpi eq, %arg2, %c0_i32 : i32
    %1 = arith.extui %0 : i1 to i32
    %c0_i32_0 = arith.constant 0 : i32
    %2 = arith.cmpi ne, %1, %c0_i32_0 : i32
    scf.if %2 {
      %cst_19 = arith.constant 0.000000e+00 : f32
      %41 = vector.broadcast %cst_19 : f32 to vector<64x128xf32>
      %c0_20 = arith.constant 0 : index
      %c0_21 = arith.constant 0 : index
      %42 = vector.load %arg9[%c0_20, %c0_21] : memref<64x128xf32, #tpu.memory_space<vmem>>, vector<64x128xf32>
      tpu.vector_store %arg9[%c0_20, %c0_21], %41 {strides = array<i32>} : memref<64x128xf32, #tpu.memory_space<vmem>>, vector<64x128xf32>,
    } else {
    }
    %c0 = arith.constant 0 : index
    %c0_1 = arith.constant 0 : index
    %3 = vector.load %arg3[%c0, %c0_1] : memref<64x128xf32, #tpu.memory_space<vmem>>, vector<64x128xf32>
    %4 = tpu.iota {dimensions = array<i32: 1>} : vector<64x128xi32>
    %c32_i32 = arith.constant 32 : i32
    %5 = vector.broadcast %c32_i32 : i32 to vector<64x128xi32>
    %6 = arith.cmpi slt, %4, %5 : vector<64x128xi32>
    %7 = arith.extui %6 : vector<64x128xi1> to vector<64x128xi32>
    %8 = arith.sitofp %7 : vector<64x128xi32> to vector<64x128xf32>
    %cst = arith.constant dense<0.000000e+00> : vector<64xf32>
    %9 = vector.multi_reduction <add>, %3, %cst [1] : vector<64x128xf32> to vector<64xf32>
    %10 = vector.shape_cast %9 : vector<64xf32> to vector<64x1xf32>
    %cst_2 = arith.constant 3.125000e-02 : f32
    %11 = vector.broadcast %cst_2 : f32 to vector<64x1xf32>
    %12 = arith.mulf %10, %11 : vector<64x1xf32>
    %13 = vector.broadcast %12 : vector<64x1xf32> to vector<64x128xf32>
    %14 = arith.subf %3, %13 : vector<64x128xf32>
    %15 = arith.mulf %14, %8 : vector<64x128xf32>
    %16 = arith.mulf %15, %15 : vector<64x128xf32>
    %cst_3 = arith.constant dense<0.000000e+00> : vector<64xf32>
    %17 = vector.multi_reduction <add>, %16, %cst_3 [1] : vector<64x128xf32> to vector<64xf32>
    %18 = vector.shape_cast %17 : vector<64xf32> to vector<64x1xf32>
    %cst_4 = arith.constant 3.125000e-02 : f32
    %19 = vector.broadcast %cst_4 : f32 to vector<64x1xf32>
    %20 = arith.mulf %18, %19 : vector<64x1xf32>
    %cst_5 = arith.constant 9.99999974E-6 : f32
    %21 = vector.broadcast %cst_5 : f32 to vector<64x1xf32>
    %22 = arith.addf %20, %21 : vector<64x1xf32>
    %23 = math.rsqrt %22 : vector<64x1xf32>
    %24 = vector.broadcast %23 : vector<64x1xf32> to vector<64x128xf32>
    %25 = arith.mulf %15, %24 : vector<64x128xf32>
    %c0_6 = arith.constant 0 : index
    %c0_7 = arith.constant 0 : index
    %26 = vector.load %arg6[%c0_6, %c0_7] : memref<1x128xf32, #tpu.memory_space<vmem>>, vector<1x128xf32>
    %27 = vector.broadcast %26 : vector<1x128xf32> to vector<64x128xf32>
    %28 = arith.mulf %25, %27 : vector<64x128xf32>
    %c0_8 = arith.constant 0 : index
    %c0_9 = arith.constant 0 : index
    %29 = vector.load %arg7[%c0_8, %c0_9] : memref<1x128xf32, #tpu.memory_space<vmem>>, vector<1x128xf32>
    %30 = vector.broadcast %29 : vector<1x128xf32> to vector<64x128xf32>
    %31 = arith.addf %28, %30 : vector<64x128xf32>
    %c0_10 = arith.constant 0 : index
    %c0_11 = arith.constant 0 : index
    %32 = vector.load %arg9[%c0_10, %c0_11] : memref<64x128xf32, #tpu.memory_space<vmem>>, vector<64x128xf32>
    %33 = arith.truncf %31 : vector<64x128xf32> to vector<64x128xbf16>
    %c0_12 = arith.constant 0 : index
    %c0_13 = arith.constant 0 : index
    %34 = vector.load %arg4[%c0_12, %c0_13] : memref<128x128xbf16, #tpu.memory_space<vmem>>, vector<128x128xbf16>
    %cst_14 = arith.constant dense<0.000000e+00> : vector<64x128xf32>
    %35 = tpu.matmul %33, %34, %cst_14 {dimension_numbers = #tpu.dot_dimension_numbers<[1], [0], [0], [1], [0, 0, 1, 1], [], []>} : vector<64x128xbf16>, vector<128x128xbf16>, vector<64x128xf32> -> vector<64x128xf32>
    %36 = arith.addf %32, %35 : vector<64x128xf32>
    %c0_15 = arith.constant 0 : index
    %c0_16 = arith.constant 0 : index
    %37 = vector.load %arg9[%c0_15, %c0_16] : memref<64x128xf32, #tpu.memory_space<vmem>>, vector<64x128xf32>
    tpu.vector_store %arg9[%c0_15, %c0_16], %36 {strides = array<i32>} : memref<64x128xf32, #tpu.memory_space<vmem>>, vector<64x128xf32>,
    %c0_i32_17 = arith.constant 0 : i32
    %38 = arith.cmpi eq, %arg2, %c0_i32_17 : i32
    %39 = arith.extui %38 : i1 to i32
    %c0_i32_18 = arith.constant 0 : i32
    %40 = arith.cmpi ne, %39, %c0_i32_18 : i32
    scf.if %40 {
      %c0_19 = arith.constant 0 : index
      %c0_20 = arith.constant 0 : index
      %41 = vector.load %arg9[%c0_19, %c0_20] : memref<64x128xf32, #tpu.memory_space<vmem>>, vector<64x128xf32>
      %c0_21 = arith.constant 0 : index
      %c0_22 = arith.constant 0 : index
      %42 = vector.load %arg5[%c0_21, %c0_22] : memref<1x128xf32, #tpu.memory_space<vmem>>, vector<1x128xf32>
      %43 = vector.broadcast %42 : vector<1x128xf32> to vector<64x128xf32>
      %44 = arith.addf %41, %43 : vector<64x128xf32>
      %c0_23 = arith.constant 0 : index
      %c0_24 = arith.constant 0 : index
      %45 = vector.load %arg8[%c0_23, %c0_24] : memref<64x128xf32, #tpu.memory_space<vmem>>, vector<64x128xf32>
      tpu.vector_store %arg8[%c0_23, %c0_24], %44 {strides = array<i32>} : memref<64x128xf32, #tpu.memory_space<vmem>>, vector<64x128xf32>,
    } else {
    }
    return
  }
  func.func @transform_0(%arg0: i32, %arg1: i32, %arg2: i32) -> (i32, i32) {
    %c0_i32 = arith.constant 0 : i32
    return %arg0, %arg2 : i32, i32
  }
  func.func @transform_1(%arg0: i32, %arg1: i32, %arg2: i32) -> (i32, i32) {
    %c0_i32 = arith.constant 0 : i32
    return %arg2, %arg1 : i32, i32
  }
  func.func @transform_2(%arg0: i32, %arg1: i32, %arg2: i32) -> (i32, i32) {
    %c0_i32 = arith.constant 0 : i32
    %c0_i32_0 = arith.constant 0 : i32
    return %c0_i32, %arg1 : i32, i32
  }
  func.func @transform_3(%arg0: i32, %arg1: i32, %arg2: i32) -> (i32, i32) {
    %c0_i32 = arith.constant 0 : i32
    %c0_i32_0 = arith.constant 0 : i32
    return %c0_i32, %arg2 : i32, i32
  }
  func.func @transform_4(%arg0: i32, %arg1: i32, %arg2: i32) -> (i32, i32) {
    %c0_i32 = arith.constant 0 : i32
    %c0_i32_0 = arith.constant 0 : i32
    return %c0_i32, %arg2 : i32, i32
  }
  func.func @transform_5(%arg0: i32, %arg1: i32, %arg2: i32) -> (i32, i32) {
    %c0_i32 = arith.constant 0 : i32
    return %arg0, %arg1 : i32, i32
  }
}

module attributes {stable_mosaic.version = 11 : i64} {
  func.func @_attention_kernel(%arg0: i32, %arg1: memref<2x8x128xf32, #tpu.memory_space<vmem>>, %arg2: memref<2x8x128xf32, #tpu.memory_space<vmem>>, %arg3: memref<2x8x128xf32, #tpu.memory_space<vmem>>, %arg4: memref<2x8x128xf32, #tpu.memory_space<vmem>>) attributes {dimension_semantics = [#tpu.dimension_semantics<parallel>], iteration_bounds = array<i64: 2>, scalar_prefetch = 0 : i64, scratch_operands = 0 : i64, tpu.core_type = #tpu.core_type<tc>, window_params = [{transform_indices = @transform_0, window_bounds = array<i64: 2, 8, 128>}, {transform_indices = @transform_1, window_bounds = array<i64: 2, 8, 128>}, {transform_indices = @transform_2, window_bounds = array<i64: 2, 8, 128>}, {transform_indices = @transform_3, window_bounds = array<i64: 2, 8, 128>}]} {
    %c0 = arith.constant 0 : index
    %c0_0 = arith.constant 0 : index
    %c0_1 = arith.constant 0 : index
    %0 = vector.load %arg1[%c0, %c0_0, %c0_1] : memref<2x8x128xf32, #tpu.memory_space<vmem>>, vector<2x8x128xf32>
    %c0_2 = arith.constant 0 : index
    %c0_3 = arith.constant 0 : index
    %c0_4 = arith.constant 0 : index
    %1 = vector.load %arg2[%c0_2, %c0_3, %c0_4] : memref<2x8x128xf32, #tpu.memory_space<vmem>>, vector<2x8x128xf32>
    %c0_5 = arith.constant 0 : index
    %c0_6 = arith.constant 0 : index
    %c0_7 = arith.constant 0 : index
    %2 = vector.load %arg3[%c0_5, %c0_6, %c0_7] : memref<2x8x128xf32, #tpu.memory_space<vmem>>, vector<2x8x128xf32>
    %3 = vector.extract_strided_slice %0 {offsets = [0, 0, 0], sizes = [1, 8, 128], strides = [1, 1, 1]} : vector<2x8x128xf32> to vector<1x8x128xf32>
    %4 = vector.shape_cast %3 : vector<1x8x128xf32> to vector<8x128xf32>
    %5 = vector.extract_strided_slice %1 {offsets = [0, 0, 0], sizes = [1, 8, 128], strides = [1, 1, 1]} : vector<2x8x128xf32> to vector<1x8x128xf32>
    %6 = vector.shape_cast %5 : vector<1x8x128xf32> to vector<8x128xf32>
    %7 = arith.mulf %4, %6 : vector<8x128xf32>
    %cst = arith.constant dense<0.000000e+00> : vector<128xf32>
    %8 = vector.multi_reduction <add>, %7, %cst [0] : vector<8x128xf32> to vector<128xf32>
    %9 = vector.shape_cast %8 : vector<128xf32> to vector<1x128xf32>
    %cst_8 = arith.constant 0.353553385 : f32
    %10 = vector.broadcast %cst_8 : f32 to vector<1x128xf32>
    %11 = arith.mulf %9, %10 : vector<1x128xf32>
    %12 = vector.extract_strided_slice %0 {offsets = [0, 0, 0], sizes = [1, 8, 128], strides = [1, 1, 1]} : vector<2x8x128xf32> to vector<1x8x128xf32>
    %13 = vector.shape_cast %12 : vector<1x8x128xf32> to vector<8x128xf32>
    %14 = vector.extract_strided_slice %1 {offsets = [1, 0, 0], sizes = [1, 8, 128], strides = [1, 1, 1]} : vector<2x8x128xf32> to vector<1x8x128xf32>
    %15 = vector.shape_cast %14 : vector<1x8x128xf32> to vector<8x128xf32>
    %16 = arith.mulf %13, %15 : vector<8x128xf32>
    %cst_9 = arith.constant dense<0.000000e+00> : vector<128xf32>
    %17 = vector.multi_reduction <add>, %16, %cst_9 [0] : vector<8x128xf32> to vector<128xf32>
    %18 = vector.shape_cast %17 : vector<128xf32> to vector<1x128xf32>
    %cst_10 = arith.constant 0.353553385 : f32
    %19 = vector.broadcast %cst_10 : f32 to vector<1x128xf32>
    %20 = arith.mulf %18, %19 : vector<1x128xf32>
    %21 = vector.extract_strided_slice %0 {offsets = [1, 0, 0], sizes = [1, 8, 128], strides = [1, 1, 1]} : vector<2x8x128xf32> to vector<1x8x128xf32>
    %22 = vector.shape_cast %21 : vector<1x8x128xf32> to vector<8x128xf32>
    %23 = vector.extract_strided_slice %1 {offsets = [0, 0, 0], sizes = [1, 8, 128], strides = [1, 1, 1]} : vector<2x8x128xf32> to vector<1x8x128xf32>
    %24 = vector.shape_cast %23 : vector<1x8x128xf32> to vector<8x128xf32>
    %25 = arith.mulf %22, %24 : vector<8x128xf32>
    %cst_11 = arith.constant dense<0.000000e+00> : vector<128xf32>
    %26 = vector.multi_reduction <add>, %25, %cst_11 [0] : vector<8x128xf32> to vector<128xf32>
    %27 = vector.shape_cast %26 : vector<128xf32> to vector<1x128xf32>
    %cst_12 = arith.constant 0.353553385 : f32
    %28 = vector.broadcast %cst_12 : f32 to vector<1x128xf32>
    %29 = arith.mulf %27, %28 : vector<1x128xf32>
    %30 = vector.extract_strided_slice %0 {offsets = [1, 0, 0], sizes = [1, 8, 128], strides = [1, 1, 1]} : vector<2x8x128xf32> to vector<1x8x128xf32>
    %31 = vector.shape_cast %30 : vector<1x8x128xf32> to vector<8x128xf32>
    %32 = vector.extract_strided_slice %1 {offsets = [1, 0, 0], sizes = [1, 8, 128], strides = [1, 1, 1]} : vector<2x8x128xf32> to vector<1x8x128xf32>
    %33 = vector.shape_cast %32 : vector<1x8x128xf32> to vector<8x128xf32>
    %34 = arith.mulf %31, %33 : vector<8x128xf32>
    %cst_13 = arith.constant dense<0.000000e+00> : vector<128xf32>
    %35 = vector.multi_reduction <add>, %34, %cst_13 [0] : vector<8x128xf32> to vector<128xf32>
    %36 = vector.shape_cast %35 : vector<128xf32> to vector<1x128xf32>
    %cst_14 = arith.constant 0.353553385 : f32
    %37 = vector.broadcast %cst_14 : f32 to vector<1x128xf32>
    %38 = arith.mulf %36, %37 : vector<1x128xf32>
    %39 = arith.maximumf %11, %20 : vector<1x128xf32>
    %40 = arith.subf %11, %39 : vector<1x128xf32>
    %41 = math.exp %40 : vector<1x128xf32>
    %42 = arith.subf %20, %39 : vector<1x128xf32>
    %43 = math.exp %42 : vector<1x128xf32>
    %44 = arith.addf %41, %43 : vector<1x128xf32>
    %45 = tpu.reciprocal %44 {approx = true} : vector<1x128xf32> -> vector<1x128xf32>
    %46 = arith.mulf %41, %45 : vector<1x128xf32>
    %47 = vector.extract_strided_slice %2 {offsets = [0, 0, 0], sizes = [1, 8, 128], strides = [1, 1, 1]} : vector<2x8x128xf32> to vector<1x8x128xf32>
    %48 = vector.shape_cast %47 : vector<1x8x128xf32> to vector<8x128xf32>
    %49 = vector.broadcast %46 : vector<1x128xf32> to vector<8x128xf32>
    %50 = arith.mulf %49, %48 : vector<8x128xf32>
    %51 = arith.mulf %43, %45 : vector<1x128xf32>
    %52 = vector.extract_strided_slice %2 {offsets = [1, 0, 0], sizes = [1, 8, 128], strides = [1, 1, 1]} : vector<2x8x128xf32> to vector<1x8x128xf32>
    %53 = vector.shape_cast %52 : vector<1x8x128xf32> to vector<8x128xf32>
    %54 = vector.broadcast %51 : vector<1x128xf32> to vector<8x128xf32>
    %55 = arith.mulf %54, %53 : vector<8x128xf32>
    %56 = arith.addf %50, %55 : vector<8x128xf32>
    %c0_15 = arith.constant 0 : index
    %c0_16 = arith.constant 0 : index
    %c0_17 = arith.constant 0 : index
    %57 = vector.load %arg4[%c0_15, %c0_16, %c0_17] : memref<2x8x128xf32, #tpu.memory_space<vmem>>, vector<1x8x128xf32>
    %58 = vector.shape_cast %57 : vector<1x8x128xf32> to vector<8x128xf32>
    %59 = vector.shape_cast %56 : vector<8x128xf32> to vector<1x8x128xf32>
    tpu.vector_store %arg4[%c0_15, %c0_16, %c0_17], %59 {strides = array<i32>} : memref<2x8x128xf32, #tpu.memory_space<vmem>>, vector<1x8x128xf32>,
    %60 = arith.maximumf %29, %38 : vector<1x128xf32>
    %61 = arith.subf %29, %60 : vector<1x128xf32>
    %62 = math.exp %61 : vector<1x128xf32>
    %63 = arith.subf %38, %60 : vector<1x128xf32>
    %64 = math.exp %63 : vector<1x128xf32>
    %65 = arith.addf %62, %64 : vector<1x128xf32>
    %66 = tpu.reciprocal %65 {approx = true} : vector<1x128xf32> -> vector<1x128xf32>
    %67 = arith.mulf %62, %66 : vector<1x128xf32>
    %68 = vector.extract_strided_slice %2 {offsets = [0, 0, 0], sizes = [1, 8, 128], strides = [1, 1, 1]} : vector<2x8x128xf32> to vector<1x8x128xf32>
    %69 = vector.shape_cast %68 : vector<1x8x128xf32> to vector<8x128xf32>
    %70 = vector.broadcast %67 : vector<1x128xf32> to vector<8x128xf32>
    %71 = arith.mulf %70, %69 : vector<8x128xf32>
    %72 = arith.mulf %64, %66 : vector<1x128xf32>
    %73 = vector.extract_strided_slice %2 {offsets = [1, 0, 0], sizes = [1, 8, 128], strides = [1, 1, 1]} : vector<2x8x128xf32> to vector<1x8x128xf32>
    %74 = vector.shape_cast %73 : vector<1x8x128xf32> to vector<8x128xf32>
    %75 = vector.broadcast %72 : vector<1x128xf32> to vector<8x128xf32>
    %76 = arith.mulf %75, %74 : vector<8x128xf32>
    %77 = arith.addf %71, %76 : vector<8x128xf32>
    %c1 = arith.constant 1 : index
    %c0_18 = arith.constant 0 : index
    %c0_19 = arith.constant 0 : index
    %78 = vector.load %arg4[%c1, %c0_18, %c0_19] : memref<2x8x128xf32, #tpu.memory_space<vmem>>, vector<1x8x128xf32>
    %79 = vector.shape_cast %78 : vector<1x8x128xf32> to vector<8x128xf32>
    %80 = vector.shape_cast %77 : vector<8x128xf32> to vector<1x8x128xf32>
    tpu.vector_store %arg4[%c1, %c0_18, %c0_19], %80 {strides = array<i32>} : memref<2x8x128xf32, #tpu.memory_space<vmem>>, vector<1x8x128xf32>,
    return
  }
  func.func @transform_0(%arg0: i32) -> (i32, i32, i32) {
    %c0_i32 = arith.constant 0 : i32
    %c0_i32_0 = arith.constant 0 : i32
    %c0_i32_1 = arith.constant 0 : i32
    return %c0_i32, %c0_i32_0, %arg0 : i32, i32, i32
  }
  func.func @transform_1(%arg0: i32) -> (i32, i32, i32) {
    %c0_i32 = arith.constant 0 : i32
    %c0_i32_0 = arith.constant 0 : i32
    %c0_i32_1 = arith.constant 0 : i32
    return %c0_i32, %c0_i32_0, %arg0 : i32, i32, i32
  }
  func.func @transform_2(%arg0: i32) -> (i32, i32, i32) {
    %c0_i32 = arith.constant 0 : i32
    %c0_i32_0 = arith.constant 0 : i32
    %c0_i32_1 = arith.constant 0 : i32
    return %c0_i32, %c0_i32_0, %arg0 : i32, i32, i32
  }
  func.func @transform_3(%arg0: i32) -> (i32, i32, i32) {
    %c0_i32 = arith.constant 0 : i32
    %c0_i32_0 = arith.constant 0 : i32
    %c0_i32_1 = arith.constant 0 : i32
    return %c0_i32, %c0_i32_0, %arg0 : i32, i32, i32
  }
}

module attributes {stable_mosaic.version = 11 : i64} {
  func.func @_matmul_kernel(%arg0: i32, %arg1: i32, %arg2: i32, %arg3: memref<64x128xbf16, #tpu.memory_space<vmem>>, %arg4: memref<128x128xbf16, #tpu.memory_space<vmem>>, %arg5: memref<1x128xf32, #tpu.memory_space<vmem>>, %arg6: memref<64x128xf32, #tpu.memory_space<vmem>>, %arg7: memref<64x128xf32, #tpu.memory_space<vmem>>, %arg8: memref<64x128xf32, #tpu.memory_space<vmem>>) attributes {dimension_semantics = [#tpu.dimension_semantics<parallel>, #tpu.dimension_semantics<parallel>, #tpu.dimension_semantics<arbitrary>], iteration_bounds = array<i64: 2, 1, 1>, scalar_prefetch = 0 : i64, scratch_operands = 1 : i64, tpu.core_type = #tpu.core_type<tc>, window_params = [{transform_indices = @transform_0, window_bounds = array<i64: 64, 128>}, {transform_indices = @transform_1, window_bounds = array<i64: 128, 128>}, {transform_indices = @transform_2, window_bounds = array<i64: 1, 128>}, {transform_indices = @transform_3, window_bounds = array<i64: 64, 128>}, {transform_indices = @transform_4, window_bounds = array<i64: 64, 128>}]} {
    %c0_i32 = arith.constant 0 : i32
    %0 = arith.cmpi eq, %arg2, %c0_i32 : i32
    %1 = arith.extui %0 : i1 to i32
    %c0_i32_0 = arith.constant 0 : i32
    %2 = arith.cmpi ne, %1, %c0_i32_0 : i32
    scf.if %2 {
      %cst_10 = arith.constant 0.000000e+00 : f32
      %12 = vector.broadcast %cst_10 : f32 to vector<64x128xf32>
      %c0_11 = arith.constant 0 : index
      %c0_12 = arith.constant 0 : index
      %13 = vector.load %arg8[%c0_11, %c0_12] : memref<64x128xf32, #tpu.memory_space<vmem>>, vector<64x128xf32>
      tpu.vector_store %arg8[%c0_11, %c0_12], %12 {strides = array<i32>} : memref<64x128xf32, #tpu.memory_space<vmem>>, vector<64x128xf32>,
    } else {
    }
    %c0 = arith.constant 0 : index
    %c0_1 = arith.constant 0 : index
    %3 = vector.load %arg3[%c0, %c0_1] : memref<64x128xbf16, #tpu.memory_space<vmem>>, vector<64x128xbf16>
    %c0_2 = arith.constant 0 : index
    %c0_3 = arith.constant 0 : index
    %4 = vector.load %arg8[%c0_2, %c0_3] : memref<64x128xf32, #tpu.memory_space<vmem>>, vector<64x128xf32>
    %c0_4 = arith.constant 0 : index
    %c0_5 = arith.constant 0 : index
    %5 = vector.load %arg4[%c0_4, %c0_5] : memref<128x128xbf16, #tpu.memory_space<vmem>>, vector<128x128xbf16>
    %cst = arith.constant dense<0.000000e+00> : vector<64x128xf32>
    %6 = tpu.matmul %3, %5, %cst {dimension_numbers = #tpu.dot_dimension_numbers<[1], [0], [0], [1], [0, 0, 1, 1], [], []>} : vector<64x128xbf16>, vector<128x128xbf16>, vector<64x128xf32> -> vector<64x128xf32>
    %7 = arith.addf %4, %6 : vector<64x128xf32>
    %c0_6 = arith.constant 0 : index
    %c0_7 = arith.constant 0 : index
    %8 = vector.load %arg8[%c0_6, %c0_7] : memref<64x128xf32, #tpu.memory_space<vmem>>, vector<64x128xf32>
    tpu.vector_store %arg8[%c0_6, %c0_7], %7 {strides = array<i32>} : memref<64x128xf32, #tpu.memory_space<vmem>>, vector<64x128xf32>,
    %c0_i32_8 = arith.constant 0 : i32
    %9 = arith.cmpi eq, %arg2, %c0_i32_8 : i32
    %10 = arith.extui %9 : i1 to i32
    %c0_i32_9 = arith.constant 0 : i32
    %11 = arith.cmpi ne, %10, %c0_i32_9 : i32
    scf.if %11 {
      %c0_10 = arith.constant 0 : index
      %c0_11 = arith.constant 0 : index
      %12 = vector.load %arg8[%c0_10, %c0_11] : memref<64x128xf32, #tpu.memory_space<vmem>>, vector<64x128xf32>
      %c0_12 = arith.constant 0 : index
      %c0_13 = arith.constant 0 : index
      %13 = vector.load %arg5[%c0_12, %c0_13] : memref<1x128xf32, #tpu.memory_space<vmem>>, vector<1x128xf32>
      %14 = vector.broadcast %13 : vector<1x128xf32> to vector<64x128xf32>
      %15 = arith.addf %12, %14 : vector<64x128xf32>
      %c0_14 = arith.constant 0 : index
      %c0_15 = arith.constant 0 : index
      %16 = vector.load %arg6[%c0_14, %c0_15] : memref<64x128xf32, #tpu.memory_space<vmem>>, vector<64x128xf32>
      %17 = arith.addf %15, %16 : vector<64x128xf32>
      %c0_16 = arith.constant 0 : index
      %c0_17 = arith.constant 0 : index
      %18 = vector.load %arg7[%c0_16, %c0_17] : memref<64x128xf32, #tpu.memory_space<vmem>>, vector<64x128xf32>
      tpu.vector_store %arg7[%c0_16, %c0_17], %17 {strides = array<i32>} : memref<64x128xf32, #tpu.memory_space<vmem>>, vector<64x128xf32>,
    } else {
    }
    return
  }
  func.func @transform_0(%arg0: i32, %arg1: i32, %arg2: i32) -> (i32, i32) {
    %c0_i32 = arith.constant 0 : i32
    return %arg0, %arg2 : i32, i32
  }
  func.func @transform_1(%arg0: i32, %arg1: i32, %arg2: i32) -> (i32, i32) {
    %c0_i32 = arith.constant 0 : i32
    return %arg2, %arg1 : i32, i32
  }
  func.func @transform_2(%arg0: i32, %arg1: i32, %arg2: i32) -> (i32, i32) {
    %c0_i32 = arith.constant 0 : i32
    %c0_i32_0 = arith.constant 0 : i32
    return %c0_i32, %arg1 : i32, i32
  }
  func.func @transform_3(%arg0: i32, %arg1: i32, %arg2: i32) -> (i32, i32) {
    %c0_i32 = arith.constant 0 : i32
    return %arg0, %arg1 : i32, i32
  }
  func.func @transform_4(%arg0: i32, %arg1: i32, %arg2: i32) -> (i32, i32) {
    %c0_i32 = arith.constant 0 : i32
    return %arg0, %arg1 : i32, i32
  }
}

module attributes {stable_mosaic.version = 11 : i64} {
  func.func @_matmul_kernel(%arg0: i32, %arg1: i32, %arg2: i32, %arg3: memref<64x128xf32, #tpu.memory_space<vmem>>, %arg4: memref<128x128xbf16, #tpu.memory_space<vmem>>, %arg5: memref<1x128xf32, #tpu.memory_space<vmem>>, %arg6: memref<1x128xf32, #tpu.memory_space<vmem>>, %arg7: memref<1x128xf32, #tpu.memory_space<vmem>>, %arg8: memref<64x128xf32, #tpu.memory_space<vmem>>, %arg9: memref<64x128xf32, #tpu.memory_space<vmem>>) attributes {dimension_semantics = [#tpu.dimension_semantics<parallel>, #tpu.dimension_semantics<parallel>, #tpu.dimension_semantics<arbitrary>], iteration_bounds = array<i64: 2, 1, 1>, scalar_prefetch = 0 : i64, scratch_operands = 1 : i64, tpu.core_type = #tpu.core_type<tc>, window_params = [{transform_indices = @transform_0, window_bounds = array<i64: 64, 128>}, {transform_indices = @transform_1, window_bounds = array<i64: 128, 128>}, {transform_indices = @transform_2, window_bounds = array<i64: 1, 128>}, {transform_indices = @transform_3, window_bounds = array<i64: 1, 128>}, {transform_indices = @transform_4, window_bounds = array<i64: 1, 128>}, {transform_indices = @transform_5, window_bounds = array<i64: 64, 128>}]} {
    %c0_i32 = arith.constant 0 : i32
    %0 = arith.cmpi eq, %arg2, %c0_i32 : i32
    %1 = arith.extui %0 : i1 to i32
    %c0_i32_0 = arith.constant 0 : i32
    %2 = arith.cmpi ne, %1, %c0_i32_0 : i32
    scf.if %2 {
      %cst_19 = arith.constant 0.000000e+00 : f32
      %41 = vector.broadcast %cst_19 : f32 to vector<64x128xf32>
      %c0_20 = arith.constant 0 : index
      %c0_21 = arith.constant 0 : index
      %42 = vector.load %arg9[%c0_20, %c0_21] : memref<64x128xf32, #tpu.memory_space<vmem>>, vector<64x128xf32>
      tpu.vector_store %arg9[%c0_20, %c0_21], %41 {strides = array<i32>} : memref<64x128xf32, #tpu.memory_space<vmem>>, vector<64x128xf32>,
    } else {
    }
    %c0 = arith.constant 0 : index
    %c0_1 = arith.constant 0 : index
    %3 = vector.load %arg3[%c0, %c0_1] : memref<64x128xf32, #tpu.memory_space<vmem>>, vector<64x128xf32>
    %4 = tpu.iota {dimensions = array<i32: 1>} : vector<64x128xi32>
    %c32_i32 = arith.constant 32 : i32
    %5 = vector.broadcast %c32_i32 : i32 to vector<64x128xi32>
    %6 = arith.cmpi slt, %4, %5 : vector<64x128xi32>
    %7 = arith.extui %6 : vector<64x128xi1> to vector<64x128xi32>
    %8 = arith.sitofp %7 : vector<64x128xi32> to vector<64x128xf32>
    %cst = arith.constant dense<0.000000e+00> : vector<64xf32>
    %9 = vector.multi_reduction <add>, %3, %cst [1] : vector<64x128xf32> to vector<64xf32>
    %10 = vector.shape_cast %9 : vector<64xf32> to vector<64x1xf32>
    %cst_2 = arith.constant 3.125000e-02 : f32
    %11 = vector.broadcast %cst_2 : f32 to vector<64x1xf32>
    %12 = arith.mulf %10, %11 : vector<64x1xf32>
    %13 = vector.broadcast %12 : vector<64x1xf32> to vector<64x128xf32>
    %14 = arith.subf %3, %13 : vector<64x128xf32>
    %15 = arith.mulf %14, %8 : vector<64x128xf32>
    %16 = arith.mulf %15, %15 : vector<64x128xf32>
    %cst_3 = arith.constant dense<0.000000e+00> : vector<64xf32>
    %17 = vector.multi_reduction <add>, %16, %cst_3 [1] : vector<64x128xf32> to vector<64xf32>
    %18 = vector.shape_cast %17 : vector<64xf32> to vector<64x1xf32>
    %cst_4 = arith.constant 3.125000e-02 : f32
    %19 = vector.broadcast %cst_4 : f32 to vector<64x1xf32>
    %20 = arith.mulf %18, %19 : vector<64x1xf32>
    %cst_5 = arith.constant 9.99999974E-6 : f32
    %21 = vector.broadcast %cst_5 : f32 to vector<64x1xf32>
    %22 = arith.addf %20, %21 : vector<64x1xf32>
    %23 = math.rsqrt %22 : vector<64x1xf32>
    %24 = vector.broadcast %23 : vector<64x1xf32> to vector<64x128xf32>
    %25 = arith.mulf %15, %24 : vector<64x128xf32>
    %c0_6 = arith.constant 0 : index
    %c0_7 = arith.constant 0 : index
    %26 = vector.load %arg6[%c0_6, %c0_7] : memref<1x128xf32, #tpu.memory_space<vmem>>, vector<1x128xf32>
    %27 = vector.broadcast %26 : vector<1x128xf32> to vector<64x128xf32>
    %28 = arith.mulf %25, %27 : vector<64x128xf32>
    %c0_8 = arith.constant 0 : index
    %c0_9 = arith.constant 0 : index
    %29 = vector.load %arg7[%c0_8, %c0_9] : memref<1x128xf32, #tpu.memory_space<vmem>>, vector<1x128xf32>
    %30 = vector.broadcast %29 : vector<1x128xf32> to vector<64x128xf32>
    %31 = arith.addf %28, %30 : vector<64x128xf32>
    %c0_10 = arith.constant 0 : index
    %c0_11 = arith.constant 0 : index
    %32 = vector.load %arg9[%c0_10, %c0_11] : memref<64x128xf32, #tpu.memory_space<vmem>>, vector<64x128xf32>
    %33 = arith.truncf %31 : vector<64x128xf32> to vector<64x128xbf16>
    %c0_12 = arith.constant 0 : index
    %c0_13 = arith.constant 0 : index
    %34 = vector.load %arg4[%c0_12, %c0_13] : memref<128x128xbf16, #tpu.memory_space<vmem>>, vector<128x128xbf16>
    %cst_14 = arith.constant dense<0.000000e+00> : vector<64x128xf32>
    %35 = tpu.matmul %33, %34, %cst_14 {dimension_numbers = #tpu.dot_dimension_numbers<[1], [0], [0], [1], [0, 0, 1, 1], [], []>} : vector<64x128xbf16>, vector<128x128xbf16>, vector<64x128xf32> -> vector<64x128xf32>
    %36 = arith.addf %32, %35 : vector<64x128xf32>
    %c0_15 = arith.constant 0 : index
    %c0_16 = arith.constant 0 : index
    %37 = vector.load %arg9[%c0_15, %c0_16] : memref<64x128xf32, #tpu.memory_space<vmem>>, vector<64x128xf32>
    tpu.vector_store %arg9[%c0_15, %c0_16], %36 {strides = array<i32>} : memref<64x128xf32, #tpu.memory_space<vmem>>, vector<64x128xf32>,
    %c0_i32_17 = arith.constant 0 : i32
    %38 = arith.cmpi eq, %arg2, %c0_i32_17 : i32
    %39 = arith.extui %38 : i1 to i32
    %c0_i32_18 = arith.constant 0 : i32
    %40 = arith.cmpi ne, %39, %c0_i32_18 : i32
    scf.if %40 {
      %c0_19 = arith.constant 0 : index
      %c0_20 = arith.constant 0 : index
      %41 = vector.load %arg9[%c0_19, %c0_20] : memref<64x128xf32, #tpu.memory_space<vmem>>, vector<64x128xf32>
      %c0_21 = arith.constant 0 : index
      %c0_22 = arith.constant 0 : index
      %42 = vector.load %arg5[%c0_21, %c0_22] : memref<1x128xf32, #tpu.memory_space<vmem>>, vector<1x128xf32>
      %43 = vector.broadcast %42 : vector<1x128xf32> to vector<64x128xf32>
      %44 = arith.addf %41, %43 : vector<64x128xf32>
      %cst_23 = arith.constant 5.000000e-01 : f32
      %45 = vector.broadcast %cst_23 : f32 to vector<64x128xf32>
      %46 = arith.mulf %45, %44 : vector<64x128xf32>
      %cst_24 = arith.constant 0.707106769 : f32
      %47 = vector.broadcast %cst_24 : f32 to vector<64x128xf32>
      %48 = arith.mulf %44, %47 : vector<64x128xf32>
      %49 = math.absf %48 : vector<64x128xf32>
      %cst_25 = arith.constant 0.327591091 : f32
      %50 = vector.broadcast %cst_25 : f32 to vector<64x128xf32>
      %51 = arith.mulf %50, %49 : vector<64x128xf32>
      %cst_26 = arith.constant 1.000000e+00 : f32
      %52 = vector.broadcast %cst_26 : f32 to vector<64x128xf32>
      %53 = arith.addf %52, %51 : vector<64x128xf32>
      %cst_27 = arith.constant 1.000000e+00 : f32
      %54 = vector.broadcast %cst_27 : f32 to vector<64x128xf32>
      %55 = arith.divf %54, %53 : vector<64x128xf32>
      %cst_28 = arith.constant 1.06140542 : f32
      %56 = vector.broadcast %cst_28 : f32 to vector<64x128xf32>
      %57 = arith.mulf %56, %55 : vector<64x128xf32>
      %cst_29 = arith.constant -1.45315206 : f32
      %58 = vector.broadcast %cst_29 : f32 to vector<64x128xf32>
      %59 = arith.addf %57, %58 : vector<64x128xf32>
      %60 = arith.mulf %59, %55 : vector<64x128xf32>
      %cst_30 = arith.constant 1.42141378 : f32
      %61 = vector.broadcast %cst_30 : f32 to vector<64x128xf32>
      %62 = arith.addf %60, %61 : vector<64x128xf32>
      %63 = arith.mulf %62, %55 : vector<64x128xf32>
      %cst_31 = arith.constant -0.284496725 : f32
      %64 = vector.broadcast %cst_31 : f32 to vector<64x128xf32>
      %65 = arith.addf %63, %64 : vector<64x128xf32>
      %66 = arith.mulf %65, %55 : vector<64x128xf32>
      %cst_32 = arith.constant 0.254829586 : f32
      %67 = vector.broadcast %cst_32 : f32 to vector<64x128xf32>
      %68 = arith.addf %66, %67 : vector<64x128xf32>
      %69 = arith.mulf %68, %55 : vector<64x128xf32>
      %cst_33 = arith.constant 0.000000e+00 : f32
      %70 = vector.broadcast %cst_33 : f32 to vector<64x128xf32>
      %71 = arith.subf %70, %49 : vector<64x128xf32>
      %72 = arith.mulf %71, %49 : vector<64x128xf32>
      %73 = math.exp %72 : vector<64x128xf32>
      %74 = arith.mulf %69, %73 : vector<64x128xf32>
      %cst_34 = arith.constant 1.000000e+00 : f32
      %75 = vector.broadcast %cst_34 : f32 to vector<64x128xf32>
      %76 = arith.subf %75, %74 : vector<64x128xf32>
      %cst_35 = arith.constant 0.000000e+00 : f32
      %77 = vector.broadcast %cst_35 : f32 to vector<64x128xf32>
      %78 = arith.cmpf oge, %48, %77 : vector<64x128xf32>
      %cst_36 = arith.constant 0.000000e+00 : f32
      %79 = vector.broadcast %cst_36 : f32 to vector<64x128xf32>
      %80 = arith.subf %79, %76 : vector<64x128xf32>
      %81 = arith.select %78, %76, %80 : vector<64x128xi1>, vector<64x128xf32>
      %cst_37 = arith.constant 1.000000e+00 : f32
      %82 = vector.broadcast %cst_37 : f32 to vector<64x128xf32>
      %83 = arith.addf %82, %81 : vector<64x128xf32>
      %84 = arith.mulf %46, %83 : vector<64x128xf32>
      %c0_38 = arith.constant 0 : index
      %c0_39 = arith.constant 0 : index
      %85 = vector.load %arg8[%c0_38, %c0_39] : memref<64x128xf32, #tpu.memory_space<vmem>>, vector<64x128xf32>
      tpu.vector_store %arg8[%c0_38, %c0_39], %84 {strides = array<i32>} : memref<64x128xf32, #tpu.memory_space<vmem>>, vector<64x128xf32>,
    } else {
    }
    return
  }
  func.func @transform_0(%arg0: i32, %arg1: i32, %arg2: i32) -> (i32, i32) {
    %c0_i32 = arith.constant 0 : i32
    return %arg0, %arg2 : i32, i32
  }
  func.func @transform_1(%arg0: i32, %arg1: i32, %arg2: i32) -> (i32, i32) {
    %c0_i32 = arith.constant 0 : i32
    return %arg2, %arg1 : i32, i32
  }
  func.func @transform_2(%arg0: i32, %arg1: i32, %arg2: i32) -> (i32, i32) {
    %c0_i32 = arith.constant 0 : i32
    %c0_i32_0 = arith.constant 0 : i32
    return %c0_i32, %arg1 : i32, i32
  }
  func.func @transform_3(%arg0: i32, %arg1: i32, %arg2: i32) -> (i32, i32) {
    %c0_i32 = arith.constant 0 : i32
    %c0_i32_0 = arith.constant 0 : i32
    return %c0_i32, %arg2 : i32, i32
  }
  func.func @transform_4(%arg0: i32, %arg1: i32, %arg2: i32) -> (i32, i32) {
    %c0_i32 = arith.constant 0 : i32
    %c0_i32_0 = arith.constant 0 : i32
    return %c0_i32, %arg2 : i32, i32
  }
  func.func @transform_5(%arg0: i32, %arg1: i32, %arg2: i32) -> (i32, i32) {
    %c0_i32 = arith.constant 0 : i32
    return %arg0, %arg1 : i32, i32
  }
}

module attributes {stable_mosaic.version = 11 : i64} {
  func.func @_matmul_kernel(%arg0: i32, %arg1: i32, %arg2: i32, %arg3: memref<64x384xbf16, #tpu.memory_space<vmem>>, %arg4: memref<384x128xbf16, #tpu.memory_space<vmem>>, %arg5: memref<1x128xf32, #tpu.memory_space<vmem>>, %arg6: memref<64x128xf32, #tpu.memory_space<vmem>>, %arg7: memref<64x128xf32, #tpu.memory_space<vmem>>) attributes {dimension_semantics = [#tpu.dimension_semantics<parallel>, #tpu.dimension_semantics<parallel>, #tpu.dimension_semantics<arbitrary>], iteration_bounds = array<i64: 2, 1, 1>, scalar_prefetch = 0 : i64, scratch_operands = 1 : i64, tpu.core_type = #tpu.core_type<tc>, window_params = [{transform_indices = @transform_0, window_bounds = array<i64: 64, 384>}, {transform_indices = @transform_1, window_bounds = array<i64: 384, 128>}, {transform_indices = @transform_2, window_bounds = array<i64: 1, 128>}, {transform_indices = @transform_3, window_bounds = array<i64: 64, 128>}]} {
    %c0_i32 = arith.constant 0 : i32
    %0 = arith.cmpi eq, %arg2, %c0_i32 : i32
    %1 = arith.extui %0 : i1 to i32
    %c0_i32_0 = arith.constant 0 : i32
    %2 = arith.cmpi ne, %1, %c0_i32_0 : i32
    scf.if %2 {
      %cst_10 = arith.constant 0.000000e+00 : f32
      %12 = vector.broadcast %cst_10 : f32 to vector<64x128xf32>
      %c0_11 = arith.constant 0 : index
      %c0_12 = arith.constant 0 : index
      %13 = vector.load %arg7[%c0_11, %c0_12] : memref<64x128xf32, #tpu.memory_space<vmem>>, vector<64x128xf32>
      tpu.vector_store %arg7[%c0_11, %c0_12], %12 {strides = array<i32>} : memref<64x128xf32, #tpu.memory_space<vmem>>, vector<64x128xf32>,
    } else {
    }
    %c0 = arith.constant 0 : index
    %c0_1 = arith.constant 0 : index
    %3 = vector.load %arg3[%c0, %c0_1] : memref<64x384xbf16, #tpu.memory_space<vmem>>, vector<64x384xbf16>
    %c0_2 = arith.constant 0 : index
    %c0_3 = arith.constant 0 : index
    %4 = vector.load %arg7[%c0_2, %c0_3] : memref<64x128xf32, #tpu.memory_space<vmem>>, vector<64x128xf32>
    %c0_4 = arith.constant 0 : index
    %c0_5 = arith.constant 0 : index
    %5 = vector.load %arg4[%c0_4, %c0_5] : memref<384x128xbf16, #tpu.memory_space<vmem>>, vector<384x128xbf16>
    %cst = arith.constant dense<0.000000e+00> : vector<64x128xf32>
    %6 = tpu.matmul %3, %5, %cst {dimension_numbers = #tpu.dot_dimension_numbers<[1], [0], [0], [1], [0, 0, 1, 1], [], []>} : vector<64x384xbf16>, vector<384x128xbf16>, vector<64x128xf32> -> vector<64x128xf32>
    %7 = arith.addf %4, %6 : vector<64x128xf32>
    %c0_6 = arith.constant 0 : index
    %c0_7 = arith.constant 0 : index
    %8 = vector.load %arg7[%c0_6, %c0_7] : memref<64x128xf32, #tpu.memory_space<vmem>>, vector<64x128xf32>
    tpu.vector_store %arg7[%c0_6, %c0_7], %7 {strides = array<i32>} : memref<64x128xf32, #tpu.memory_space<vmem>>, vector<64x128xf32>,
    %c0_i32_8 = arith.constant 0 : i32
    %9 = arith.cmpi eq, %arg2, %c0_i32_8 : i32
    %10 = arith.extui %9 : i1 to i32
    %c0_i32_9 = arith.constant 0 : i32
    %11 = arith.cmpi ne, %10, %c0_i32_9 : i32
    scf.if %11 {
      %c0_10 = arith.constant 0 : index
      %c0_11 = arith.constant 0 : index
      %12 = vector.load %arg7[%c0_10, %c0_11] : memref<64x128xf32, #tpu.memory_space<vmem>>, vector<64x128xf32>
      %c0_12 = arith.constant 0 : index
      %c0_13 = arith.constant 0 : index
      %13 = vector.load %arg5[%c0_12, %c0_13] : memref<1x128xf32, #tpu.memory_space<vmem>>, vector<1x128xf32>
      %14 = vector.broadcast %13 : vector<1x128xf32> to vector<64x128xf32>
      %15 = arith.addf %12, %14 : vector<64x128xf32>
      %c0_14 = arith.constant 0 : index
      %c0_15 = arith.constant 0 : index
      %16 = vector.load %arg6[%c0_14, %c0_15] : memref<64x128xf32, #tpu.memory_space<vmem>>, vector<64x128xf32>
      tpu.vector_store %arg6[%c0_14, %c0_15], %15 {strides = array<i32>} : memref<64x128xf32, #tpu.memory_space<vmem>>, vector<64x128xf32>,
    } else {
    }
    return
  }
  func.func @transform_0(%arg0: i32, %arg1: i32, %arg2: i32) -> (i32, i32) {
    %c0_i32 = arith.constant 0 : i32
    return %arg0, %arg2 : i32, i32
  }
  func.func @transform_1(%arg0: i32, %arg1: i32, %arg2: i32) -> (i32, i32) {
    %c0_i32 = arith.constant 0 : i32
    return %arg2, %arg1 : i32, i32
  }
  func.func @transform_2(%arg0: i32, %arg1: i32, %arg2: i32) -> (i32, i32) {
    %c0_i32 = arith.constant 0 : i32
    %c0_i32_0 = arith.constant 0 : i32
    return %c0_i32, %arg1 : i32, i32
  }
  func.func @transform_3(%arg0: i32, %arg1: i32, %arg2: i32) -> (i32, i32) {
    %c0_i32 = arith.constant 0 : i32
    return %arg0, %arg1 : i32, i32
  }
}

module attributes {stable_mosaic.version = 11 : i64} {
  func.func @_matmul_kernel(%arg0: i32, %arg1: i32, %arg2: i32, %arg3: memref<256x128xbf16, #tpu.memory_space<vmem>>, %arg4: memref<128x128xbf16, #tpu.memory_space<vmem>>, %arg5: memref<1x128xf32, #tpu.memory_space<vmem>>, %arg6: memref<256x128xf32, #tpu.memory_space<vmem>>, %arg7: memref<256x128xf32, #tpu.memory_space<vmem>>) attributes {dimension_semantics = [#tpu.dimension_semantics<parallel>, #tpu.dimension_semantics<parallel>, #tpu.dimension_semantics<arbitrary>], iteration_bounds = array<i64: 2, 1, 1>, scalar_prefetch = 0 : i64, scratch_operands = 1 : i64, tpu.core_type = #tpu.core_type<tc>, window_params = [{transform_indices = @transform_0, window_bounds = array<i64: 256, 128>}, {transform_indices = @transform_1, window_bounds = array<i64: 128, 128>}, {transform_indices = @transform_2, window_bounds = array<i64: 1, 128>}, {transform_indices = @transform_3, window_bounds = array<i64: 256, 128>}]} {
    %c0_i32 = arith.constant 0 : i32
    %0 = arith.cmpi eq, %arg2, %c0_i32 : i32
    %1 = arith.extui %0 : i1 to i32
    %c0_i32_0 = arith.constant 0 : i32
    %2 = arith.cmpi ne, %1, %c0_i32_0 : i32
    scf.if %2 {
      %cst_10 = arith.constant 0.000000e+00 : f32
      %12 = vector.broadcast %cst_10 : f32 to vector<256x128xf32>
      %c0_11 = arith.constant 0 : index
      %c0_12 = arith.constant 0 : index
      %13 = vector.load %arg7[%c0_11, %c0_12] : memref<256x128xf32, #tpu.memory_space<vmem>>, vector<256x128xf32>
      tpu.vector_store %arg7[%c0_11, %c0_12], %12 {strides = array<i32>} : memref<256x128xf32, #tpu.memory_space<vmem>>, vector<256x128xf32>,
    } else {
    }
    %c0 = arith.constant 0 : index
    %c0_1 = arith.constant 0 : index
    %3 = vector.load %arg3[%c0, %c0_1] : memref<256x128xbf16, #tpu.memory_space<vmem>>, vector<256x128xbf16>
    %c0_2 = arith.constant 0 : index
    %c0_3 = arith.constant 0 : index
    %4 = vector.load %arg7[%c0_2, %c0_3] : memref<256x128xf32, #tpu.memory_space<vmem>>, vector<256x128xf32>
    %c0_4 = arith.constant 0 : index
    %c0_5 = arith.constant 0 : index
    %5 = vector.load %arg4[%c0_4, %c0_5] : memref<128x128xbf16, #tpu.memory_space<vmem>>, vector<128x128xbf16>
    %cst = arith.constant dense<0.000000e+00> : vector<256x128xf32>
    %6 = tpu.matmul %3, %5, %cst {dimension_numbers = #tpu.dot_dimension_numbers<[1], [0], [0], [1], [0, 0, 1, 1], [], []>} : vector<256x128xbf16>, vector<128x128xbf16>, vector<256x128xf32> -> vector<256x128xf32>
    %7 = arith.addf %4, %6 : vector<256x128xf32>
    %c0_6 = arith.constant 0 : index
    %c0_7 = arith.constant 0 : index
    %8 = vector.load %arg7[%c0_6, %c0_7] : memref<256x128xf32, #tpu.memory_space<vmem>>, vector<256x128xf32>
    tpu.vector_store %arg7[%c0_6, %c0_7], %7 {strides = array<i32>} : memref<256x128xf32, #tpu.memory_space<vmem>>, vector<256x128xf32>,
    %c0_i32_8 = arith.constant 0 : i32
    %9 = arith.cmpi eq, %arg2, %c0_i32_8 : i32
    %10 = arith.extui %9 : i1 to i32
    %c0_i32_9 = arith.constant 0 : i32
    %11 = arith.cmpi ne, %10, %c0_i32_9 : i32
    scf.if %11 {
      %c0_10 = arith.constant 0 : index
      %c0_11 = arith.constant 0 : index
      %12 = vector.load %arg7[%c0_10, %c0_11] : memref<256x128xf32, #tpu.memory_space<vmem>>, vector<256x128xf32>
      %c0_12 = arith.constant 0 : index
      %c0_13 = arith.constant 0 : index
      %13 = vector.load %arg5[%c0_12, %c0_13] : memref<1x128xf32, #tpu.memory_space<vmem>>, vector<1x128xf32>
      %14 = vector.broadcast %13 : vector<1x128xf32> to vector<256x128xf32>
      %15 = arith.addf %12, %14 : vector<256x128xf32>
      %c0_14 = arith.constant 0 : index
      %c0_15 = arith.constant 0 : index
      %16 = vector.load %arg6[%c0_14, %c0_15] : memref<256x128xf32, #tpu.memory_space<vmem>>, vector<256x128xf32>
      tpu.vector_store %arg6[%c0_14, %c0_15], %15 {strides = array<i32>} : memref<256x128xf32, #tpu.memory_space<vmem>>, vector<256x128xf32>,
    } else {
    }
    return
  }
  func.func @transform_0(%arg0: i32, %arg1: i32, %arg2: i32) -> (i32, i32) {
    %c0_i32 = arith.constant 0 : i32
    return %arg0, %arg2 : i32, i32
  }
  func.func @transform_1(%arg0: i32, %arg1: i32, %arg2: i32) -> (i32, i32) {
    %c0_i32 = arith.constant 0 : i32
    return %arg2, %arg1 : i32, i32
  }
  func.func @transform_2(%arg0: i32, %arg1: i32, %arg2: i32) -> (i32, i32) {
    %c0_i32 = arith.constant 0 : i32
    %c0_i32_0 = arith.constant 0 : i32
    return %c0_i32, %arg1 : i32, i32
  }
  func.func @transform_3(%arg0: i32, %arg1: i32, %arg2: i32) -> (i32, i32) {
    %c0_i32 = arith.constant 0 : i32
    return %arg0, %arg1 : i32, i32
  }
}

module attributes {stable_mosaic.version = 11 : i64} {
  func.func @_matmul_kernel(%arg0: i32, %arg1: i32, %arg2: i32, %arg3: memref<512x128xbf16, #tpu.memory_space<vmem>>, %arg4: memref<128x128xbf16, #tpu.memory_space<vmem>>, %arg5: memref<1x128xf32, #tpu.memory_space<vmem>>, %arg6: memref<512x128xf32, #tpu.memory_space<vmem>>, %arg7: memref<512x128xf32, #tpu.memory_space<vmem>>) attributes {dimension_semantics = [#tpu.dimension_semantics<parallel>, #tpu.dimension_semantics<parallel>, #tpu.dimension_semantics<arbitrary>], iteration_bounds = array<i64: 4, 1, 1>, scalar_prefetch = 0 : i64, scratch_operands = 1 : i64, tpu.core_type = #tpu.core_type<tc>, window_params = [{transform_indices = @transform_0, window_bounds = array<i64: 512, 128>}, {transform_indices = @transform_1, window_bounds = array<i64: 128, 128>}, {transform_indices = @transform_2, window_bounds = array<i64: 1, 128>}, {transform_indices = @transform_3, window_bounds = array<i64: 512, 128>}]} {
    %c0_i32 = arith.constant 0 : i32
    %0 = arith.cmpi eq, %arg2, %c0_i32 : i32
    %1 = arith.extui %0 : i1 to i32
    %c0_i32_0 = arith.constant 0 : i32
    %2 = arith.cmpi ne, %1, %c0_i32_0 : i32
    scf.if %2 {
      %cst_10 = arith.constant 0.000000e+00 : f32
      %12 = vector.broadcast %cst_10 : f32 to vector<512x128xf32>
      %c0_11 = arith.constant 0 : index
      %c0_12 = arith.constant 0 : index
      %13 = vector.load %arg7[%c0_11, %c0_12] : memref<512x128xf32, #tpu.memory_space<vmem>>, vector<512x128xf32>
      tpu.vector_store %arg7[%c0_11, %c0_12], %12 {strides = array<i32>} : memref<512x128xf32, #tpu.memory_space<vmem>>, vector<512x128xf32>,
    } else {
    }
    %c0 = arith.constant 0 : index
    %c0_1 = arith.constant 0 : index
    %3 = vector.load %arg3[%c0, %c0_1] : memref<512x128xbf16, #tpu.memory_space<vmem>>, vector<512x128xbf16>
    %c0_2 = arith.constant 0 : index
    %c0_3 = arith.constant 0 : index
    %4 = vector.load %arg7[%c0_2, %c0_3] : memref<512x128xf32, #tpu.memory_space<vmem>>, vector<512x128xf32>
    %c0_4 = arith.constant 0 : index
    %c0_5 = arith.constant 0 : index
    %5 = vector.load %arg4[%c0_4, %c0_5] : memref<128x128xbf16, #tpu.memory_space<vmem>>, vector<128x128xbf16>
    %cst = arith.constant dense<0.000000e+00> : vector<512x128xf32>
    %6 = tpu.matmul %3, %5, %cst {dimension_numbers = #tpu.dot_dimension_numbers<[1], [0], [0], [1], [0, 0, 1, 1], [], []>} : vector<512x128xbf16>, vector<128x128xbf16>, vector<512x128xf32> -> vector<512x128xf32>
    %7 = arith.addf %4, %6 : vector<512x128xf32>
    %c0_6 = arith.constant 0 : index
    %c0_7 = arith.constant 0 : index
    %8 = vector.load %arg7[%c0_6, %c0_7] : memref<512x128xf32, #tpu.memory_space<vmem>>, vector<512x128xf32>
    tpu.vector_store %arg7[%c0_6, %c0_7], %7 {strides = array<i32>} : memref<512x128xf32, #tpu.memory_space<vmem>>, vector<512x128xf32>,
    %c0_i32_8 = arith.constant 0 : i32
    %9 = arith.cmpi eq, %arg2, %c0_i32_8 : i32
    %10 = arith.extui %9 : i1 to i32
    %c0_i32_9 = arith.constant 0 : i32
    %11 = arith.cmpi ne, %10, %c0_i32_9 : i32
    scf.if %11 {
      %c0_10 = arith.constant 0 : index
      %c0_11 = arith.constant 0 : index
      %12 = vector.load %arg7[%c0_10, %c0_11] : memref<512x128xf32, #tpu.memory_space<vmem>>, vector<512x128xf32>
      %c0_12 = arith.constant 0 : index
      %c0_13 = arith.constant 0 : index
      %13 = vector.load %arg5[%c0_12, %c0_13] : memref<1x128xf32, #tpu.memory_space<vmem>>, vector<1x128xf32>
      %14 = vector.broadcast %13 : vector<1x128xf32> to vector<512x128xf32>
      %15 = arith.addf %12, %14 : vector<512x128xf32>
      %cst_14 = arith.constant 0.000000e+00 : f32
      %16 = vector.broadcast %cst_14 : f32 to vector<512x128xf32>
      %17 = arith.maximumf %15, %16 : vector<512x128xf32>
      %c0_15 = arith.constant 0 : index
      %c0_16 = arith.constant 0 : index
      %18 = vector.load %arg6[%c0_15, %c0_16] : memref<512x128xf32, #tpu.memory_space<vmem>>, vector<512x128xf32>
      tpu.vector_store %arg6[%c0_15, %c0_16], %17 {strides = array<i32>} : memref<512x128xf32, #tpu.memory_space<vmem>>, vector<512x128xf32>,
    } else {
    }
    return
  }
  func.func @transform_0(%arg0: i32, %arg1: i32, %arg2: i32) -> (i32, i32) {
    %c0_i32 = arith.constant 0 : i32
    return %arg0, %arg2 : i32, i32
  }
  func.func @transform_1(%arg0: i32, %arg1: i32, %arg2: i32) -> (i32, i32) {
    %c0_i32 = arith.constant 0 : i32
    return %arg2, %arg1 : i32, i32
  }
  func.func @transform_2(%arg0: i32, %arg1: i32, %arg2: i32) -> (i32, i32) {
    %c0_i32 = arith.constant 0 : i32
    %c0_i32_0 = arith.constant 0 : i32
    return %c0_i32, %arg1 : i32, i32
  }
  func.func @transform_3(%arg0: i32, %arg1: i32, %arg2: i32) -> (i32, i32) {
    %c0_i32 = arith.constant 0 : i32
    return %arg0, %arg1 : i32, i32
  }
}

</mosaic_0001>

<llo_original>
// kernel: _lambda_.17
$region0: #{_lambda_.17}
  #allocation0 [shape = 'u32[]', space=smem, size = 0x4, offset = 0x4, fixed_abs, tag = 'smem constant byte address 0x4 - core index']
  #allocation1 [shape = 'u32[72,128]{1,0:T(1,128)}', space=vmem, size = 0x9000, scoped, tag = 'internal scratch']
  #allocation2 [shape = 'f32[256,128]{1,0:T(8,128)}', space=vmem, size = 0x20000, scoped, tag = 'scratch operand']
  %s0 = inlined_call_operand.vmem [shape: bf16[512,128], index: 0, kind: input, shape index: {}]
  %s1 = inlined_call_operand.vmem [shape: bf16[128,128], index: 1, kind: input, shape index: {}]
  %s2 = inlined_call_operand.vmem [shape: f32[1,128], index: 2, kind: input, shape index: {}]
  %s3 = inlined_call_operand.vmem [shape: f32[512,128], index: 3, kind: output, shape index: {}]
  %s4 = sld [smem:[#allocation0]]
  $region53: #{_lambda_.17} parent=0
    _
  %s6 = ssub.s32 1, %s4
  %s7 = scalar_select 0, %s6, %s4
  loop: start=0, step=1, limit=4
  $region2: #{_lambda_.17} parent=0 // loop_pre_header
    _
  $region3: #{_lambda_.17} parent=0 // loop_header
    %s9 = sphi 0, %s13
    %p10 = scmp.ge.s32.totalorder %s9, 4
    %s16 = sphi 0, %s35
    %s17 = sphi 0, %s31
    %s18 = sphi 0, %s27
    %s19 = sphi 0, %s16
    %s20 = sphi 0, %s17
    %s21 = sphi 0, %s18
    %s22 = sphi 0, %s19
    %s23 = sphi 0, %s20
    %s24 = sphi 0, %s21
    %s40 = sphi 0, %s42
    %s43 = sphi 0, %s40
    %s44 = sphi 0, %s43
    %s60 = sphi 0, %s44
    %s68 = sphi 0, %s70
    %s71 = sphi 0, %s68
    %s72 = sphi 0, %s71
    %s88 = sphi 0, %s72
    %s94 = sphi 0, %s96
    %s97 = sphi 0, %s94
    %s98 = sphi 0, %s97
    %s114 = sphi 0, %s98
    %s122 = sphi 0, %s124
    %s125 = sphi 0, %s122
    %s126 = sphi 0, %s125
    %s142 = sphi 0, %s126
  $region4: #{_lambda_.17} parent=0 // loop_header_branch
    %12 = sbr.rel (%p10) target = $region8
  $region5: #{_lambda_.17} parent=0 // loop_body
    %s14 = ssub.s32 %s9, 1
    %s15 = ssub.s32 %s9, 2
    %s25 = sadd.s32 1, %s18
    %p26 = scmp.ge.s32.totalorder %s25, 1
    %s27 = scalar_select %p26, 0, %s25
    %s28 = sadd.s32 1, %s17
    %s29 = scalar_select %p26, %s28, %s17
    %p30 = scmp.ge.s32.totalorder %s29, 1
    %s31 = scalar_select %p30, 0, %s29
    %s32 = sadd.s32 1, %s16
    %s33 = scalar_select %p30, %s32, %s16
    %p34 = scmp.ge.s32.totalorder %s33, 2
    %s35 = scalar_select %p34, 0, %s33
    %s36 = ssub.s32 %s16, %s35
    %s37 = ssub.s32 %s18, %s27
    %s38 = sor.u32 %s36, %s37
    %p39 = scmp.eq.s32.totalorder %s38, 0
    %s41 = sadd.s32 %s40, 1
    %s42 = scalar_select %p39, %s40, %s41
    %p45 = pneg %p39
    %p46 = scmp.eq.s32.totalorder %s9, 1
    %p47 = por %p45, %p46
    %p48 = scmp.ne.s32.totalorder %s40, %s43
    %p49 = scmp.eq.s32.totalorder %s9, 0
    %p50 = por %p48, %p49
    %p51 = scmp.ne.s32.totalorder %s40, %s43
    %p52 = scmp.eq.s32.totalorder %s14, 1
    %p53 = por %p51, %p52
    %p54 = scmp.ne.s32.totalorder %s43, %s44
    %p55 = scmp.eq.s32.totalorder %s14, 0
    %p56 = por %p54, %p55
    %p57 = scmp.ne.s32.totalorder %s43, %s44
    %p58 = scmp.eq.s32.totalorder %s15, 1
    %p59 = por %p57, %p58
    %p61 = scmp.ne.s32.totalorder %s44, %s60
    %p62 = scmp.eq.s32.totalorder %s15, 0
    %p63 = por %p61, %p62
    %s64 = ssub.s32 %s18, %s27
    %s65 = ssub.s32 %s17, %s31
    %s66 = sor.u32 %s64, %s65
    %p67 = scmp.eq.s32.totalorder %s66, 0
    %s69 = sadd.s32 %s68, 1
    %s70 = scalar_select %p67, %s68, %s69
    %p73 = pneg %p67
    %p74 = scmp.eq.s32.totalorder %s9, 1
    %p75 = por %p73, %p74
    %p76 = scmp.ne.s32.totalorder %s68, %s71
    %p77 = scmp.eq.s32.totalorder %s9, 0
    %p78 = por %p76, %p77
    %p79 = scmp.ne.s32.totalorder %s68, %s71
    %p80 = scmp.eq.s32.totalorder %s14, 1
    %p81 = por %p79, %p80
    %p82 = scmp.ne.s32.totalorder %s71, %s72
    %p83 = scmp.eq.s32.totalorder %s14, 0
    %p84 = por %p82, %p83
    %p85 = scmp.ne.s32.totalorder %s71, %s72
    %p86 = scmp.eq.s32.totalorder %s15, 1
    %p87 = por %p85, %p86
    %p89 = scmp.ne.s32.totalorder %s72, %s88
    %p90 = scmp.eq.s32.totalorder %s15, 0
    %p91 = por %p89, %p90
    %s92 = ssub.s32 %s17, %s31
    %p93 = scmp.eq.s32.totalorder %s92, 0
    %s95 = sadd.s32 %s94, 1
    %s96 = scalar_select %p93, %s94, %s95
    %p99 = pneg %p93
    %p100 = scmp.eq.s32.totalorder %s9, 1
    %p101 = por %p99, %p100
    %p102 = scmp.ne.s32.totalorder %s94, %s97
    %p103 = scmp.eq.s32.totalorder %s9, 0
    %p104 = por %p102, %p103
    %p105 = scmp.ne.s32.totalorder %s94, %s97
    %p106 = scmp.eq.s32.totalorder %s14, 1
    %p107 = por %p105, %p106
    %p108 = scmp.ne.s32.totalorder %s97, %s98
    %p109 = scmp.eq.s32.totalorder %s14, 0
    %p110 = por %p108, %p109
    %p111 = scmp.ne.s32.totalorder %s97, %s98
    %p112 = scmp.eq.s32.totalorder %s15, 1
    %p113 = por %p111, %p112
    %p115 = scmp.ne.s32.totalorder %s98, %s114
    %p116 = scmp.eq.s32.totalorder %s15, 0
    %p117 = por %p115, %p116
    %s118 = ssub.s32 %s16, %s35
    %s119 = ssub.s32 %s17, %s31
    %s120 = sor.u32 %s118, %s119
    %p121 = scmp.eq.s32.totalorder %s120, 0
    %s123 = sadd.s32 %s122, 1
    %s124 = scalar_select %p121, %s122, %s123
    %p127 = pneg %p121
    %p128 = scmp.eq.s32.totalorder %s9, 1
    %p129 = por %p127, %p128
    %p130 = scmp.ne.s32.totalorder %s122, %s125
    %p131 = scmp.eq.s32.totalorder %s9, 0
    %p132 = por %p130, %p131
    %p133 = scmp.ne.s32.totalorder %s122, %s125
    %p134 = scmp.eq.s32.totalorder %s14, 1
    %p135 = por %p133, %p134
    %p136 = scmp.ne.s32.totalorder %s125, %s126
    %p137 = scmp.eq.s32.totalorder %s14, 0
    %p138 = por %p136, %p137
    %p139 = scmp.ne.s32.totalorder %s125, %s126
    %p140 = scmp.eq.s32.totalorder %s15, 1
    %p141 = por %p139, %p140
    %p143 = scmp.ne.s32.totalorder %s126, %s142
    %p144 = scmp.eq.s32.totalorder %s15, 0
    %p145 = por %p143, %p144
    %p146 = scmp.le.s32.totalorder 1, %s9
    %p147 = scmp.lt.s32.totalorder %s9, 3
    %p148 = pnand %p146, %p147
    %p149 = pneg %p148
    // Predicated region
    $region9: #{_lambda_.17} parent=5 // pred_check
      _
    $region10: #{_lambda_.17} parent=5 // pred_check_branch
      %151 = sbr.rel (%p148) target = $region12
    $region11: #{_lambda_.17} parent=5 // pred_region
      %s152 = ssub.s32 %s9, 1
      // Predicated region
      $region13: #{_lambda_.17} parent=11 // pred_check
        %p153 = pneg %p84
      $region14: #{_lambda_.17} parent=11 // pred_check_branch
        %155 = sbr.rel (%p153) target = $region16
      $region15: #{_lambda_.17} parent=11 // pred_region
        %s156 = smul.u32 16, %s21
        %p157 = scmp.lt.s32.totalorder %s156, 15
        %s158 = scalar_select %p157, %s156, 15
        %p159 = scmp.lt.s32.totalorder %s20, 0
        %s160 = scalar_select %p159, %s20, 0
        %s161 = sadd.s32 %s160, %s158
        %s162 = smul.addr %s161, 4
        %s163 = scalar_lea.vmem %s1, %s162
        %s164 = smul.u32 16, %s21
      $region16: #{_lambda_.17} parent=11 // pred_fallthru
        _
      // Predicated region
      $region17: #{_lambda_.17} parent=11 // pred_check
        %p165 = pneg %p110
      $region18: #{_lambda_.17} parent=11 // pred_check_branch
        %167 = sbr.rel (%p165) target = $region20
      $region19: #{_lambda_.17} parent=11 // pred_region
        %p168 = scmp.lt.s32.totalorder %s20, 0
        %s169 = scalar_select %p168, %s20, 0
        %s170 = scalar_lea.vmem %s2, %s169
      $region20: #{_lambda_.17} parent=11 // pred_fallthru
        _
    $region12: #{_lambda_.17} parent=5 // pred_fallthru
      _
    %p171 = scmp.lt.s32.totalorder %s9, 2
    // Predicated region
    $region21: #{_lambda_.17} parent=5 // pred_check
      %p172 = pneg %p171
    $region22: #{_lambda_.17} parent=5 // pred_check_branch
      %174 = sbr.rel (%p172) target = $region24
    $region23: #{_lambda_.17} parent=5 // pred_region
      // Predicated region
      $region25: #{_lambda_.17} parent=23 // pred_check
        %p175 = pneg %p50
      $region26: #{_lambda_.17} parent=23 // pred_check_branch
        %177 = sbr.rel (%p175) target = $region28
      $region27: #{_lambda_.17} parent=23 // pred_region
        %s178 = smul.u32 32, %s16
        %p179 = scmp.lt.s32.totalorder %s178, 63
        %s180 = scalar_select %p179, %s178, 63
        %p181 = scmp.lt.s32.totalorder %s18, 0
        %s182 = scalar_select %p181, %s18, 0
        %s183 = sadd.s32 %s182, %s180
        %s184 = smul.addr %s183, 4
        %s185 = scalar_lea.vmem %s0, %s184
        %s186 = smul.u32 32, %s16
      $region28: #{_lambda_.17} parent=23 // pred_fallthru
        _
    $region24: #{_lambda_.17} parent=5 // pred_fallthru
      _
    %p187 = scmp.le.s32.totalorder 1, %s9
    %p188 = scmp.lt.s32.totalorder %s9, 3
    %p189 = pnand %p187, %p188
    %p190 = pneg %p189
    // Predicated region
    $region29: #{_lambda_.17} parent=5 // pred_check
      _
    $region30: #{_lambda_.17} parent=5 // pred_check_branch
      %192 = sbr.rel (%p189) target = $region32
    $region31: #{_lambda_.17} parent=5 // pred_region
      %s193 = ssub.s32 %s9, 1
      %s194 = smul.u32 32, %s19
      %p195 = scmp.lt.s32.totalorder %s194, 63
      %s196 = scalar_select %p195, %s194, 63
      %p197 = scmp.lt.s32.totalorder %s21, 0
      %s198 = scalar_select %p197, %s21, 0
      %s199 = sadd.s32 %s198, %s196
      %s200 = smul.addr %s199, 4
      %s201 = scalar_lea.vmem %s0, %s200
      %p202 = pneg %p56
      %p203 = pneg %p53
      %s204 = smul.u32 16, %s21
      %p205 = scmp.lt.s32.totalorder %s204, 15
      %s206 = scalar_select %p205, %s204, 15
      %p207 = scmp.lt.s32.totalorder %s20, 0
      %s208 = scalar_select %p207, %s20, 0
      %s209 = sadd.s32 %s208, %s206
      %s210 = smul.addr %s209, 4
      %s211 = scalar_lea.vmem %s1, %s210
      %p212 = pneg %p84
      %p213 = pneg %p81
      %p214 = scmp.lt.s32.totalorder %s20, 0
      %s215 = scalar_select %p214, %s20, 0
      %s216 = scalar_lea.vmem %s2, %s215
      %p217 = pneg %p110
      %p218 = pneg %p107
      %p219 = pneg %p138
      %p220 = pneg %p135
      %s221 = smul.u32 32, %s19
      %p222 = scmp.lt.s32.totalorder %s221, 63
      %s223 = scalar_select %p222, %s221, 63
      %p224 = scmp.lt.s32.totalorder %s20, 0
      %s225 = scalar_select %p224, %s20, 0
      %s226 = sadd.s32 %s225, %s223
      %s227 = smul.addr %s226, 8
      %s228 = scalar_lea.vmem %s3, %s227
      %s229 = smul.u32 32, %s19
      %p230 = scmp.lt.s32.totalorder %s229, 63
      %s231 = scalar_select %p230, %s229, 63
      %p232 = scmp.lt.s32.totalorder %s21, 0
      %s233 = scalar_select %p232, %s21, 0
      %s234 = sadd.s32 %s233, %s231
      %s235 = smul.addr %s234, 4
      %s236 = scalar_lea.vmem %s0, %s235
      %s237 = smul.u32 32, %s19
      %s238 = smul.u32 16, %s21
      %p239 = scmp.lt.s32.totalorder %s238, 15
      %s240 = scalar_select %p239, %s238, 15
      %p241 = scmp.lt.s32.totalorder %s20, 0
      %s242 = scalar_select %p241, %s20, 0
      %s243 = sadd.s32 %s242, %s240
      %s244 = smul.addr %s243, 4
      %s245 = scalar_lea.vmem %s1, %s244
      %s246 = smul.u32 16, %s21
      %p247 = scmp.lt.s32.totalorder %s20, 0
      %s248 = scalar_select %p247, %s20, 0
      %s249 = scalar_lea.vmem %s2, %s248
      %s250 = smul.u32 32, %s19
      %p251 = scmp.lt.s32.totalorder %s250, 63
      %s252 = scalar_select %p251, %s250, 63
      %p253 = scmp.lt.s32.totalorder %s20, 0
      %s254 = scalar_select %p253, %s20, 0
      %s255 = sadd.s32 %s254, %s252
      %s256 = smul.addr %s255, 8
      %s257 = scalar_lea.vmem %s3, %s256
      %s258 = smul.u32 32, %s19
      %p259 = scmp.eq.s32.totalorder %s21, 0
      // Predicated region
      $region33: #{_lambda_.17} parent=31 // pred_check
        %p260 = pneg %p259
      $region34: #{_lambda_.17} parent=31 // pred_check_branch
        %262 = sbr.rel (%p260) target = $region36
      $region35: #{_lambda_.17} parent=31 // pred_region
        %263 = vst [vmem:[#allocation2] sm:$0xff] 0.0
        %264 = vst [vmem:[#allocation2 + $0x8] sm:$0xff] 0.0
        %265 = vst [vmem:[#allocation2 + $0x10] sm:$0xff] 0.0
        %266 = vst [vmem:[#allocation2 + $0x18] sm:$0xff] 0.0
        %267 = vst [vmem:[#allocation2 + $0x20] sm:$0xff] 0.0
        %268 = vst [vmem:[#allocation2 + $0x28] sm:$0xff] 0.0
        %269 = vst [vmem:[#allocation2 + $0x30] sm:$0xff] 0.0
        %270 = vst [vmem:[#allocation2 + $0x38] sm:$0xff] 0.0
        %271 = vst [vmem:[#allocation2 + $0x40] sm:$0xff] 0.0
        %272 = vst [vmem:[#allocation2 + $0x48] sm:$0xff] 0.0
        %273 = vst [vmem:[#allocation2 + $0x50] sm:$0xff] 0.0
        %274 = vst [vmem:[#allocation2 + $0x58] sm:$0xff] 0.0
        %275 = vst [vmem:[#allocation2 + $0x60] sm:$0xff] 0.0
        %276 = vst [vmem:[#allocation2 + $0x68] sm:$0xff] 0.0
        %277 = vst [vmem:[#allocation2 + $0x70] sm:$0xff] 0.0
        %278 = vst [vmem:[#allocation2 + $0x78] sm:$0xff] 0.0
        %279 = vst [vmem:[#allocation2 + $0x80] sm:$0xff] 0.0
        %280 = vst [vmem:[#allocation2 + $0x88] sm:$0xff] 0.0
        %281 = vst [vmem:[#allocation2 + $0x90] sm:$0xff] 0.0
        %282 = vst [vmem:[#allocation2 + $0x98] sm:$0xff] 0.0
        %283 = vst [vmem:[#allocation2 + $0xa0] sm:$0xff] 0.0
        %284 = vst [vmem:[#allocation2 + $0xa8] sm:$0xff] 0.0
        %285 = vst [vmem:[#allocation2 + $0xb0] sm:$0xff] 0.0
        %286 = vst [vmem:[#allocation2 + $0xb8] sm:$0xff] 0.0
        %287 = vst [vmem:[#allocation2 + $0xc0] sm:$0xff] 0.0
        %288 = vst [vmem:[#allocation2 + $0xc8] sm:$0xff] 0.0
        %289 = vst [vmem:[#allocation2 + $0xd0] sm:$0xff] 0.0
        %290 = vst [vmem:[#allocation2 + $0xd8] sm:$0xff] 0.0
        %291 = vst [vmem:[#allocation2 + $0xe0] sm:$0xff] 0.0
        %292 = vst [vmem:[#allocation2 + $0xe8] sm:$0xff] 0.0
        %293 = vst [vmem:[#allocation2 + $0xf0] sm:$0xff] 0.0
        %294 = vst [vmem:[#allocation2 + $0xf8] sm:$0xff] 0.0
      $region36: #{_lambda_.17} parent=31 // pred_fallthru
        _
      %v295 = vld [vmem:[%s236] sm:$0xf]
      %v296 = vld [vmem:[%s236 + $0x4] sm:$0xf]
      %v297 = vld [vmem:[%s236 + $0x8] sm:$0xf]
      %v298 = vld [vmem:[%s236 + $0xc] sm:$0xf]
      %v299 = vld [vmem:[%s236 + $0x10] sm:$0xf]
      %v300 = vld [vmem:[%s236 + $0x14] sm:$0xf]
      %v301 = vld [vmem:[%s236 + $0x18] sm:$0xf]
      %v302 = vld [vmem:[%s236 + $0x1c] sm:$0xf]
      %v303 = vld [vmem:[%s236 + $0x20] sm:$0xf]
      %v304 = vld [vmem:[%s236 + $0x24] sm:$0xf]
      %v305 = vld [vmem:[%s236 + $0x28] sm:$0xf]
      %v306 = vld [vmem:[%s236 + $0x2c] sm:$0xf]
      %v307 = vld [vmem:[%s236 + $0x30] sm:$0xf]
      %v308 = vld [vmem:[%s236 + $0x34] sm:$0xf]
      %v309 = vld [vmem:[%s236 + $0x38] sm:$0xf]
      %v310 = vld [vmem:[%s236 + $0x3c] sm:$0xf]
      %v311 = vld [vmem:[%s236 + $0x40] sm:$0xf]
      %v312 = vld [vmem:[%s236 + $0x44] sm:$0xf]
      %v313 = vld [vmem:[%s236 + $0x48] sm:$0xf]
      %v314 = vld [vmem:[%s236 + $0x4c] sm:$0xf]
      %v315 = vld [vmem:[%s236 + $0x50] sm:$0xf]
      %v316 = vld [vmem:[%s236 + $0x54] sm:$0xf]
      %v317 = vld [vmem:[%s236 + $0x58] sm:$0xf]
      %v318 = vld [vmem:[%s236 + $0x5c] sm:$0xf]
      %v319 = vld [vmem:[%s236 + $0x60] sm:$0xf]
      %v320 = vld [vmem:[%s236 + $0x64] sm:$0xf]
      %v321 = vld [vmem:[%s236 + $0x68] sm:$0xf]
      %v322 = vld [vmem:[%s236 + $0x6c] sm:$0xf]
      %v323 = vld [vmem:[%s236 + $0x70] sm:$0xf]
      %v324 = vld [vmem:[%s236 + $0x74] sm:$0xf]
      %v325 = vld [vmem:[%s236 + $0x78] sm:$0xf]
      %v326 = vld [vmem:[%s236 + $0x7c] sm:$0xf]
      %v327 = vld [vmem:[#allocation2] sm:$0xff]
      %v328 = vld [vmem:[#allocation2 + $0x8] sm:$0xff]
      %v329 = vld [vmem:[#allocation2 + $0x10] sm:$0xff]
      %v330 = vld [vmem:[#allocation2 + $0x18] sm:$0xff]
      %v331 = vld [vmem:[#allocation2 + $0x20] sm:$0xff]
      %v332 = vld [vmem:[#allocation2 + $0x28] sm:$0xff]
      %v333 = vld [vmem:[#allocation2 + $0x30] sm:$0xff]
      %v334 = vld [vmem:[#allocation2 + $0x38] sm:$0xff]
      %v335 = vld [vmem:[#allocation2 + $0x40] sm:$0xff]
      %v336 = vld [vmem:[#allocation2 + $0x48] sm:$0xff]
      %v337 = vld [vmem:[#allocation2 + $0x50] sm:$0xff]
      %v338 = vld [vmem:[#allocation2 + $0x58] sm:$0xff]
      %v339 = vld [vmem:[#allocation2 + $0x60] sm:$0xff]
      %v340 = vld [vmem:[#allocation2 + $0x68] sm:$0xff]
      %v341 = vld [vmem:[#allocation2 + $0x70] sm:$0xff]
      %v342 = vld [vmem:[#allocation2 + $0x78] sm:$0xff]
      %v343 = vld [vmem:[#allocation2 + $0x80] sm:$0xff]
      %v344 = vld [vmem:[#allocation2 + $0x88] sm:$0xff]
      %v345 = vld [vmem:[#allocation2 + $0x90] sm:$0xff]
      %v346 = vld [vmem:[#allocation2 + $0x98] sm:$0xff]
      %v347 = vld [vmem:[#allocation2 + $0xa0] sm:$0xff]
      %v348 = vld [vmem:[#allocation2 + $0xa8] sm:$0xff]
      %v349 = vld [vmem:[#allocation2 + $0xb0] sm:$0xff]
      %v350 = vld [vmem:[#allocation2 + $0xb8] sm:$0xff]
      %v351 = vld [vmem:[#allocation2 + $0xc0] sm:$0xff]
      %v352 = vld [vmem:[#allocation2 + $0xc8] sm:$0xff]
      %v353 = vld [vmem:[#allocation2 + $0xd0] sm:$0xff]
      %v354 = vld [vmem:[#allocation2 + $0xd8] sm:$0xff]
      %v355 = vld [vmem:[#allocation2 + $0xe0] sm:$0xff]
      %v356 = vld [vmem:[#allocation2 + $0xe8] sm:$0xff]
      %v357 = vld [vmem:[#allocation2 + $0xf0] sm:$0xff]
      %v358 = vld [vmem:[#allocation2 + $0xf8] sm:$0xff]
      %v359 = vld [vmem:[%s245] sm:$0xf]
      %v360 = vld [vmem:[%s245 + $0x4] sm:$0xf]
      %v361 = vld [vmem:[%s245 + $0x8] sm:$0xf]
      %v362 = vld [vmem:[%s245 + $0xc] sm:$0xf]
      %v363 = vld [vmem:[%s245 + $0x10] sm:$0xf]
      %v364 = vld [vmem:[%s245 + $0x14] sm:$0xf]
      %v365 = vld [vmem:[%s245 + $0x18] sm:$0xf]
      %v366 = vld [vmem:[%s245 + $0x1c] sm:$0xf]
      %v367 = vld [vmem:[%s245 + $0x20] sm:$0xf]
      %v368 = vld [vmem:[%s245 + $0x24] sm:$0xf]
      %v369 = vld [vmem:[%s245 + $0x28] sm:$0xf]
      %v370 = vld [vmem:[%s245 + $0x2c] sm:$0xf]
      %v371 = vld [vmem:[%s245 + $0x30] sm:$0xf]
      %v372 = vld [vmem:[%s245 + $0x34] sm:$0xf]
      %v373 = vld [vmem:[%s245 + $0x38] sm:$0xf]
      %v374 = vld [vmem:[%s245 + $0x3c] sm:$0xf]
      %v407 = vunpack.c.l.b16 %v295
      %v408 = vunpack.c.l.b16 %v296
      %v409 = vunpack.c.l.b16 %v297
      %v410 = vunpack.c.l.b16 %v298
      %v411 = vunpack.c.l.b16 %v299
      %v412 = vunpack.c.l.b16 %v300
      %v413 = vunpack.c.l.b16 %v301
      %v414 = vunpack.c.l.b16 %v302
      %v415 = vunpack.c.l.b16 %v303
      %v416 = vunpack.c.l.b16 %v304
      %v417 = vunpack.c.l.b16 %v305
      %v418 = vunpack.c.l.b16 %v306
      %v419 = vunpack.c.l.b16 %v307
      %v420 = vunpack.c.l.b16 %v308
      %v421 = vunpack.c.l.b16 %v309
      %v422 = vunpack.c.l.b16 %v310
      %v423 = vunpack.c.l.b16 %v311
      %v424 = vunpack.c.l.b16 %v312
      %v425 = vunpack.c.l.b16 %v313
      %v426 = vunpack.c.l.b16 %v314
      %v427 = vunpack.c.l.b16 %v315
      %v428 = vunpack.c.l.b16 %v316
      %v429 = vunpack.c.l.b16 %v317
      %v430 = vunpack.c.l.b16 %v318
      %v431 = vunpack.c.l.b16 %v319
      %v432 = vunpack.c.l.b16 %v320
      %v433 = vunpack.c.l.b16 %v321
      %v434 = vunpack.c.l.b16 %v322
      %v435 = vunpack.c.l.b16 %v323
      %v436 = vunpack.c.l.b16 %v324
      %v437 = vunpack.c.l.b16 %v325
      %v438 = vunpack.c.l.b16 %v326
      %v439 = vpack.c.b16 %v408, %v407
      %v440 = vpack.c.b16 %v410, %v409
      %v441 = vpack.c.b16 %v412, %v411
      %v442 = vpack.c.b16 %v414, %v413
      %v443 = vpack.c.b16 %v416, %v415
      %v444 = vpack.c.b16 %v418, %v417
      %v445 = vpack.c.b16 %v420, %v419
      %v446 = vpack.c.b16 %v422, %v421
      %v447 = vpack.c.b16 %v424, %v423
      %v448 = vpack.c.b16 %v426, %v425
      %v449 = vpack.c.b16 %v428, %v427
      %v450 = vpack.c.b16 %v430, %v429
      %v451 = vpack.c.b16 %v432, %v431
      %v452 = vpack.c.b16 %v434, %v433
      %v453 = vpack.c.b16 %v436, %v435
      %v454 = vpack.c.b16 %v438, %v437
      %v487 = vunpack.c.l.b16 %v359
      %v488 = vunpack.c.l.b16 %v360
      %v489 = vunpack.c.l.b16 %v361
      %v490 = vunpack.c.l.b16 %v362
      %v491 = vunpack.c.l.b16 %v363
      %v492 = vunpack.c.l.b16 %v364
      %v493 = vunpack.c.l.b16 %v365
      %v494 = vunpack.c.l.b16 %v366
      %v495 = vunpack.c.l.b16 %v367
      %v496 = vunpack.c.l.b16 %v368
      %v497 = vunpack.c.l.b16 %v369
      %v498 = vunpack.c.l.b16 %v370
      %v499 = vunpack.c.l.b16 %v371
      %v500 = vunpack.c.l.b16 %v372
      %v501 = vunpack.c.l.b16 %v373
      %v502 = vunpack.c.l.b16 %v374
      %v503 = vpack.c.b16 %v488, %v487
      %v504 = vpack.c.b16 %v490, %v489
      %v505 = vpack.c.b16 %v492, %v491
      %v506 = vpack.c.b16 %v494, %v493
      %v507 = vpack.c.b16 %v496, %v495
      %v508 = vpack.c.b16 %v498, %v497
      %v509 = vpack.c.b16 %v500, %v499
      %v510 = vpack.c.b16 %v502, %v501
      %519 = vmatpush.bf16.msra.mxu0 %v510
      %520 = vmatpush.bf16.msra.mxu0 %v509
      %521 = vmatpush.bf16.msra.mxu0 %v508
      %522 = vmatpush.bf16.msra.mxu0 %v507
      %523 = vmatpush.bf16.msra.mxu0 %v506
      %524 = vmatpush.bf16.msra.mxu0 %v505
      %525 = vmatpush.bf16.msra.mxu0 %v504
      %526 = vmatpush.bf16.msra.mxu0 %v503
      %527 = vmatmul.bf16.gmra.mxu0 %v439
      %v528 = vpop.f32.mrf.mxu0
      %v529 = vadd.f32 0.0, %v528
      %v530 = vpop.f32.mrf.mxu0
      %v531 = vadd.f32 0.0, %v530
      %532 = vmatmul.bf16.gmra.mxu0 %v440
      %v533 = vpop.f32.mrf.mxu0
      %v534 = vadd.f32 0.0, %v533
      %v535 = vpop.f32.mrf.mxu0
      %v536 = vadd.f32 0.0, %v535
      %537 = vmatmul.bf16.gmra.mxu0 %v441
      %v538 = vpop.f32.mrf.mxu0
      %v539 = vadd.f32 0.0, %v538
      %v540 = vpop.f32.mrf.mxu0
      %v541 = vadd.f32 0.0, %v540
      %542 = vmatmul.bf16.gmra.mxu0 %v442
      %v543 = vpop.f32.mrf.mxu0
      %v544 = vadd.f32 0.0, %v543
      %v545 = vpop.f32.mrf.mxu0
      %v546 = vadd.f32 0.0, %v545
      %547 = vmatmul.bf16.gmra.mxu0 %v443
      %v548 = vpop.f32.mrf.mxu0
      %v549 = vadd.f32 0.0, %v548
      %v550 = vpop.f32.mrf.mxu0
      %v551 = vadd.f32 0.0, %v550
      %552 = vmatmul.bf16.gmra.mxu0 %v444
      %v553 = vpop.f32.mrf.mxu0
      %v554 = vadd.f32 0.0, %v553
      %v555 = vpop.f32.mrf.mxu0
      %v556 = vadd.f32 0.0, %v555
      %557 = vmatmul.bf16.gmra.mxu0 %v445
      %v558 = vpop.f32.mrf.mxu0
      %v559 = vadd.f32 0.0, %v558
      %v560 = vpop.f32.mrf.mxu0
      %v561 = vadd.f32 0.0, %v560
      %562 = vmatmul.bf16.gmra.mxu0 %v446
      %v563 = vpop.f32.mrf.mxu0
      %v564 = vadd.f32 0.0, %v563
      %v565 = vpop.f32.mrf.mxu0
      %v566 = vadd.f32 0.0, %v565
      %567 = vmatmul.bf16.gmra.mxu0 %v447
      %v568 = vpop.f32.mrf.mxu0
      %v569 = vadd.f32 0.0, %v568
      %v570 = vpop.f32.mrf.mxu0
      %v571 = vadd.f32 0.0, %v570
      %572 = vmatmul.bf16.gmra.mxu0 %v448
      %v573 = vpop.f32.mrf.mxu0
      %v574 = vadd.f32 0.0, %v573
      %v575 = vpop.f32.mrf.mxu0
      %v576 = vadd.f32 0.0, %v575
      %577 = vmatmul.bf16.gmra.mxu0 %v449
      %v578 = vpop.f32.mrf.mxu0
      %v579 = vadd.f32 0.0, %v578
      %v580 = vpop.f32.mrf.mxu0
      %v581 = vadd.f32 0.0, %v580
      %582 = vmatmul.bf16.gmra.mxu0 %v450
      %v583 = vpop.f32.mrf.mxu0
      %v584 = vadd.f32 0.0, %v583
      %v585 = vpop.f32.mrf.mxu0
      %v586 = vadd.f32 0.0, %v585
      %587 = vmatmul.bf16.gmra.mxu0 %v451
      %v588 = vpop.f32.mrf.mxu0
      %v589 = vadd.f32 0.0, %v588
      %v590 = vpop.f32.mrf.mxu0
      %v591 = vadd.f32 0.0, %v590
      %592 = vmatmul.bf16.gmra.mxu0 %v452
      %v593 = vpop.f32.mrf.mxu0
      %v594 = vadd.f32 0.0, %v593
      %v595 = vpop.f32.mrf.mxu0
      %v596 = vadd.f32 0.0, %v595
      %597 = vmatmul.bf16.gmra.mxu0 %v453
      %v598 = vpop.f32.mrf.mxu0
      %v599 = vadd.f32 0.0, %v598
      %v600 = vpop.f32.mrf.mxu0
      %v601 = vadd.f32 0.0, %v600
      %602 = vmatmul.bf16.gmra.mxu0 %v454
      %v603 = vpop.f32.mrf.mxu0
      %v604 = vadd.f32 0.0, %v603
      %v605 = vpop.f32.mrf.mxu0
      %v606 = vadd.f32 0.0, %v605
      %607 = vdwg.mxu0
      %v608 = vadd.f32 %v327, %v529
      %v609 = vadd.f32 %v328, %v531
      %v610 = vadd.f32 %v329, %v534
      %v611 = vadd.f32 %v330, %v536
      %v612 = vadd.f32 %v331, %v539
      %v613 = vadd.f32 %v332, %v541
      %v614 = vadd.f32 %v333, %v544
      %v615 = vadd.f32 %v334, %v546
      %v616 = vadd.f32 %v335, %v549
      %v617 = vadd.f32 %v336, %v551
      %v618 = vadd.f32 %v337, %v554
      %v619 = vadd.f32 %v338, %v556
      %v620 = vadd.f32 %v339, %v559
      %v621 = vadd.f32 %v340, %v561
      %v622 = vadd.f32 %v341, %v564
      %v623 = vadd.f32 %v342, %v566
      %v624 = vadd.f32 %v343, %v569
      %v625 = vadd.f32 %v344, %v571
      %v626 = vadd.f32 %v345, %v574
      %v627 = vadd.f32 %v346, %v576
      %v628 = vadd.f32 %v347, %v579
      %v629 = vadd.f32 %v348, %v581
      %v630 = vadd.f32 %v349, %v584
      %v631 = vadd.f32 %v350, %v586
      %v632 = vadd.f32 %v351, %v589
      %v633 = vadd.f32 %v352, %v591
      %v634 = vadd.f32 %v353, %v594
      %v635 = vadd.f32 %v354, %v596
      %v636 = vadd.f32 %v355, %v599
      %v637 = vadd.f32 %v356, %v601
      %v638 = vadd.f32 %v357, %v604
      %v639 = vadd.f32 %v358, %v606
      %640 = vst [vmem:[#allocation2] sm:$0xff] %v608
      %641 = vst [vmem:[#allocation2 + $0x8] sm:$0xff] %v609
      %642 = vst [vmem:[#allocation2 + $0x10] sm:$0xff] %v610
      %643 = vst [vmem:[#allocation2 + $0x18] sm:$0xff] %v611
      %644 = vst [vmem:[#allocation2 + $0x20] sm:$0xff] %v612
      %645 = vst [vmem:[#allocation2 + $0x28] sm:$0xff] %v613
      %646 = vst [vmem:[#allocation2 + $0x30] sm:$0xff] %v614
      %647 = vst [vmem:[#allocation2 + $0x38] sm:$0xff] %v615
      %648 = vst [vmem:[#allocation2 + $0x40] sm:$0xff] %v616
      %649 = vst [vmem:[#allocation2 + $0x48] sm:$0xff] %v617
      %650 = vst [vmem:[#allocation2 + $0x50] sm:$0xff] %v618
      %651 = vst [vmem:[#allocation2 + $0x58] sm:$0xff] %v619
      %652 = vst [vmem:[#allocation2 + $0x60] sm:$0xff] %v620
      %653 = vst [vmem:[#allocation2 + $0x68] sm:$0xff] %v621
      %654 = vst [vmem:[#allocation2 + $0x70] sm:$0xff] %v622
      %655 = vst [vmem:[#allocation2 + $0x78] sm:$0xff] %v623
      %656 = vst [vmem:[#allocation2 + $0x80] sm:$0xff] %v624
      %657 = vst [vmem:[#allocation2 + $0x88] sm:$0xff] %v625
      %658 = vst [vmem:[#allocation2 + $0x90] sm:$0xff] %v626
      %659 = vst [vmem:[#allocation2 + $0x98] sm:$0xff] %v627
      %660 = vst [vmem:[#allocation2 + $0xa0] sm:$0xff] %v628
      %661 = vst [vmem:[#allocation2 + $0xa8] sm:$0xff] %v629
      %662 = vst [vmem:[#allocation2 + $0xb0] sm:$0xff] %v630
      %663 = vst [vmem:[#allocation2 + $0xb8] sm:$0xff] %v631
      %664 = vst [vmem:[#allocation2 + $0xc0] sm:$0xff] %v632
      %665 = vst [vmem:[#allocation2 + $0xc8] sm:$0xff] %v633
      %666 = vst [vmem:[#allocation2 + $0xd0] sm:$0xff] %v634
      %667 = vst [vmem:[#allocation2 + $0xd8] sm:$0xff] %v635
      %668 = vst [vmem:[#allocation2 + $0xe0] sm:$0xff] %v636
      %669 = vst [vmem:[#allocation2 + $0xe8] sm:$0xff] %v637
      %670 = vst [vmem:[#allocation2 + $0xf0] sm:$0xff] %v638
      %671 = vst [vmem:[#allocation2 + $0xf8] sm:$0xff] %v639
      // Predicated region
      $region37: #{_lambda_.17} parent=31 // pred_check
        %p672 = pneg %p259
      $region38: #{_lambda_.17} parent=31 // pred_check_branch
        %674 = sbr.rel (%p672) target = $region40
      $region39: #{_lambda_.17} parent=31 // pred_region
        %v675 = vld [vmem:[#allocation2] sm:$0xff]
        %v676 = vld [vmem:[#allocation2 + $0x8] sm:$0xff]
        %v677 = vld [vmem:[#allocation2 + $0x10] sm:$0xff]
        %v678 = vld [vmem:[#allocation2 + $0x18] sm:$0xff]
        %v679 = vld [vmem:[#allocation2 + $0x20] sm:$0xff]
        %v680 = vld [vmem:[#allocation2 + $0x28] sm:$0xff]
        %v681 = vld [vmem:[#allocation2 + $0x30] sm:$0xff]
        %v682 = vld [vmem:[#allocation2 + $0x38] sm:$0xff]
        %v683 = vld [vmem:[#allocation2 + $0x40] sm:$0xff]
        %v684 = vld [vmem:[#allocation2 + $0x48] sm:$0xff]
        %v685 = vld [vmem:[#allocation2 + $0x50] sm:$0xff]
        %v686 = vld [vmem:[#allocation2 + $0x58] sm:$0xff]
        %v687 = vld [vmem:[#allocation2 + $0x60] sm:$0xff]
        %v688 = vld [vmem:[#allocation2 + $0x68] sm:$0xff]
        %v689 = vld [vmem:[#allocation2 + $0x70] sm:$0xff]
        %v690 = vld [vmem:[#allocation2 + $0x78] sm:$0xff]
        %v691 = vld [vmem:[#allocation2 + $0x80] sm:$0xff]
        %v692 = vld [vmem:[#allocation2 + $0x88] sm:$0xff]
        %v693 = vld [vmem:[#allocation2 + $0x90] sm:$0xff]
        %v694 = vld [vmem:[#allocation2 + $0x98] sm:$0xff]
        %v695 = vld [vmem:[#allocation2 + $0xa0] sm:$0xff]
        %v696 = vld [vmem:[#allocation2 + $0xa8] sm:$0xff]
        %v697 = vld [vmem:[#allocation2 + $0xb0] sm:$0xff]
        %v698 = vld [vmem:[#allocation2 + $0xb8] sm:$0xff]
        %v699 = vld [vmem:[#allocation2 + $0xc0] sm:$0xff]
        %v700 = vld [vmem:[#allocation2 + $0xc8] sm:$0xff]
        %v701 = vld [vmem:[#allocation2 + $0xd0] sm:$0xff]
        %v702 = vld [vmem:[#allocation2 + $0xd8] sm:$0xff]
        %v703 = vld [vmem:[#allocation2 + $0xe0] sm:$0xff]
        %v704 = vld [vmem:[#allocation2 + $0xe8] sm:$0xff]
        %v705 = vld [vmem:[#allocation2 + $0xf0] sm:$0xff]
        %v706 = vld [vmem:[#allocation2 + $0xf8] sm:$0xff]
        %v707 = vld [vmem:[%s249] sm:$0x1]
        %v709 = vperm.slane %v707, 0
        %v711 = vadd.f32 %v675, %v709
        %v712 = vadd.f32 %v676, %v709
        %v713 = vadd.f32 %v677, %v709
        %v714 = vadd.f32 %v678, %v709
        %v715 = vadd.f32 %v679, %v709
        %v716 = vadd.f32 %v680, %v709
        %v717 = vadd.f32 %v681, %v709
        %v718 = vadd.f32 %v682, %v709
        %v719 = vadd.f32 %v683, %v709
        %v720 = vadd.f32 %v684, %v709
        %v721 = vadd.f32 %v685, %v709
        %v722 = vadd.f32 %v686, %v709
        %v723 = vadd.f32 %v687, %v709
        %v724 = vadd.f32 %v688, %v709
        %v725 = vadd.f32 %v689, %v709
        %v726 = vadd.f32 %v690, %v709
        %v727 = vadd.f32 %v691, %v709
        %v728 = vadd.f32 %v692, %v709
        %v729 = vadd.f32 %v693, %v709
        %v730 = vadd.f32 %v694, %v709
        %v731 = vadd.f32 %v695, %v709
        %v732 = vadd.f32 %v696, %v709
        %v733 = vadd.f32 %v697, %v709
        %v734 = vadd.f32 %v698, %v709
        %v735 = vadd.f32 %v699, %v709
        %v736 = vadd.f32 %v700, %v709
        %v737 = vadd.f32 %v701, %v709
        %v738 = vadd.f32 %v702, %v709
        %v739 = vadd.f32 %v703, %v709
        %v740 = vadd.f32 %v704, %v709
        %v741 = vadd.f32 %v705, %v709
        %v742 = vadd.f32 %v706, %v709
        %v743 = vmax.f32 %v711, 0.0
        %v744 = vmax.f32 %v712, 0.0
        %v745 = vmax.f32 %v713, 0.0
        %v746 = vmax.f32 %v714, 0.0
        %v747 = vmax.f32 %v715, 0.0
        %v748 = vmax.f32 %v716, 0.0
        %v749 = vmax.f32 %v717, 0.0
        %v750 = vmax.f32 %v718, 0.0
        %v751 = vmax.f32 %v719, 0.0
        %v752 = vmax.f32 %v720, 0.0
        %v753 = vmax.f32 %v721, 0.0
        %v754 = vmax.f32 %v722, 0.0
        %v755 = vmax.f32 %v723, 0.0
        %v756 = vmax.f32 %v724, 0.0
        %v757 = vmax.f32 %v725, 0.0
        %v758 = vmax.f32 %v726, 0.0
        %v759 = vmax.f32 %v727, 0.0
        %v760 = vmax.f32 %v728, 0.0
        %v761 = vmax.f32 %v729, 0.0
        %v762 = vmax.f32 %v730, 0.0
        %v763 = vmax.f32 %v731, 0.0
        %v764 = vmax.f32 %v732, 0.0
        %v765 = vmax.f32 %v733, 0.0
        %v766 = vmax.f32 %v734, 0.0
        %v767 = vmax.f32 %v735, 0.0
        %v768 = vmax.f32 %v736, 0.0
        %v769 = vmax.f32 %v737, 0.0
        %v770 = vmax.f32 %v738, 0.0
        %v771 = vmax.f32 %v739, 0.0
        %v772 = vmax.f32 %v740, 0.0
        %v773 = vmax.f32 %v741, 0.0
        %v774 = vmax.f32 %v742, 0.0
        %775 = vst [vmem:[%s257] sm:$0xff] %v743
        %776 = vst [vmem:[%s257 + $0x8] sm:$0xff] %v744
        %777 = vst [vmem:[%s257 + $0x10] sm:$0xff] %v745
        %778 = vst [vmem:[%s257 + $0x18] sm:$0xff] %v746
        %779 = vst [vmem:[%s257 + $0x20] sm:$0xff] %v747
        %780 = vst [vmem:[%s257 + $0x28] sm:$0xff] %v748
        %781 = vst [vmem:[%s257 + $0x30] sm:$0xff] %v749
        %782 = vst [vmem:[%s257 + $0x38] sm:$0xff] %v750
        %783 = vst [vmem:[%s257 + $0x40] sm:$0xff] %v751
        %784 = vst [vmem:[%s257 + $0x48] sm:$0xff] %v752
        %785 = vst [vmem:[%s257 + $0x50] sm:$0xff] %v753
        %786 = vst [vmem:[%s257 + $0x58] sm:$0xff] %v754
        %787 = vst [vmem:[%s257 + $0x60] sm:$0xff] %v755
        %788 = vst [vmem:[%s257 + $0x68] sm:$0xff] %v756
        %789 = vst [vmem:[%s257 + $0x70] sm:$0xff] %v757
        %790 = vst [vmem:[%s257 + $0x78] sm:$0xff] %v758
        %791 = vst [vmem:[%s257 + $0x80] sm:$0xff] %v759
        %792 = vst [vmem:[%s257 + $0x88] sm:$0xff] %v760
        %793 = vst [vmem:[%s257 + $0x90] sm:$0xff] %v761
        %794 = vst [vmem:[%s257 + $0x98] sm:$0xff] %v762
        %795 = vst [vmem:[%s257 + $0xa0] sm:$0xff] %v763
        %796 = vst [vmem:[%s257 + $0xa8] sm:$0xff] %v764
        %797 = vst [vmem:[%s257 + $0xb0] sm:$0xff] %v765
        %798 = vst [vmem:[%s257 + $0xb8] sm:$0xff] %v766
        %799 = vst [vmem:[%s257 + $0xc0] sm:$0xff] %v767
        %800 = vst [vmem:[%s257 + $0xc8] sm:$0xff] %v768
        %801 = vst [vmem:[%s257 + $0xd0] sm:$0xff] %v769
        %802 = vst [vmem:[%s257 + $0xd8] sm:$0xff] %v770
        %803 = vst [vmem:[%s257 + $0xe0] sm:$0xff] %v771
        %804 = vst [vmem:[%s257 + $0xe8] sm:$0xff] %v772
        %805 = vst [vmem:[%s257 + $0xf0] sm:$0xff] %v773
        %806 = vst [vmem:[%s257 + $0xf8] sm:$0xff] %v774
      $region40: #{_lambda_.17} parent=31 // pred_fallthru
        _
      %s807 = smul.u32 32, %s19
      %p808 = scmp.lt.s32.totalorder %s807, 63
      %s809 = scalar_select %p808, %s807, 63
      %p810 = scmp.lt.s32.totalorder %s20, 0
      %s811 = scalar_select %p810, %s20, 0
      %s812 = sadd.s32 %s811, %s809
      %s813 = smul.addr %s812, 8
      %s814 = scalar_lea.vmem %s3, %s813
      // Predicated region
      $region41: #{_lambda_.17} parent=31 // pred_check
        %p815 = pneg %p135
      $region42: #{_lambda_.17} parent=31 // pred_check_branch
        %817 = sbr.rel (%p815) target = $region44
      $region43: #{_lambda_.17} parent=31 // pred_region
        %s818 = smul.u32 32, %s19
      $region44: #{_lambda_.17} parent=31 // pred_fallthru
        _
    $region32: #{_lambda_.17} parent=5 // pred_fallthru
      _
    %p819 = scmp.le.s32.totalorder 2, %s9
    // Predicated region
    $region45: #{_lambda_.17} parent=5 // pred_check
      %p820 = pneg %p819
    $region46: #{_lambda_.17} parent=5 // pred_check_branch
      %822 = sbr.rel (%p820) target = $region48
    $region47: #{_lambda_.17} parent=5 // pred_region
      %s823 = ssub.s32 %s9, 2
      // Predicated region
      $region49: #{_lambda_.17} parent=47 // pred_check
        %p824 = pneg %p141
      $region50: #{_lambda_.17} parent=47 // pred_check_branch
        %826 = sbr.rel (%p824) target = $region52
      $region51: #{_lambda_.17} parent=47 // pred_region
        %s827 = smul.u32 32, %s22
        %p828 = scmp.lt.s32.totalorder %s827, 63
        %s829 = scalar_select %p828, %s827, 63
        %p830 = scmp.lt.s32.totalorder %s23, 0
        %s831 = scalar_select %p830, %s23, 0
        %s832 = sadd.s32 %s831, %s829
        %s833 = smul.addr %s832, 8
        %s834 = scalar_lea.vmem %s3, %s833
      $region52: #{_lambda_.17} parent=47 // pred_fallthru
        _
    $region48: #{_lambda_.17} parent=5 // pred_fallthru
      _
  $region6: #{_lambda_.17} parent=0 // loop_footer
    %s13 = sadd.s32 1, %s9
  $region7: #{_lambda_.17} parent=0 // loop_footer_branch
    %8 = sbr.rel target = $region3
  $region8: #{_lambda_.17} parent=0 // loop_exit
    _

// kernel: _lambda_.19
$region0: #{_lambda_.19}
  #allocation0 [shape = 'u32[]', space=smem, size = 0x4, offset = 0x4, fixed_abs, tag = 'smem constant byte address 0x4 - core index']
  #allocation1 [shape = 'u32[72,128]{1,0:T(1,128)}', space=vmem, size = 0x9000, scoped, tag = 'internal scratch']
  #allocation2 [shape = 'f32[256,128]{1,0:T(8,128)}', space=vmem, size = 0x20000, scoped, tag = 'scratch operand']
  %s0 = inlined_call_operand.vmem [shape: bf16[512,256], index: 0, kind: input, shape index: {}]
  %s1 = inlined_call_operand.vmem [shape: bf16[256,128], index: 1, kind: input, shape index: {}]
  %s2 = inlined_call_operand.vmem [shape: f32[1,128], index: 2, kind: input, shape index: {}]
  %s3 = inlined_call_operand.vmem [shape: f32[512,128], index: 3, kind: output, shape index: {}]
  %s4 = sld [smem:[#allocation0]]
  $region53: #{_lambda_.19} parent=0
    _
  %s6 = ssub.s32 1, %s4
  %s7 = scalar_select 0, %s6, %s4
  loop: start=0, step=1, limit=4
  $region2: #{_lambda_.19} parent=0 // loop_pre_header
    _
  $region3: #{_lambda_.19} parent=0 // loop_header
    %s9 = sphi 0, %s13
    %p10 = scmp.ge.s32.totalorder %s9, 4
    %s16 = sphi 0, %s35
    %s17 = sphi 0, %s31
    %s18 = sphi 0, %s27
    %s19 = sphi 0, %s16
    %s20 = sphi 0, %s17
    %s21 = sphi 0, %s18
    %s22 = sphi 0, %s19
    %s23 = sphi 0, %s20
    %s24 = sphi 0, %s21
    %s40 = sphi 0, %s42
    %s43 = sphi 0, %s40
    %s44 = sphi 0, %s43
    %s60 = sphi 0, %s44
    %s68 = sphi 0, %s70
    %s71 = sphi 0, %s68
    %s72 = sphi 0, %s71
    %s88 = sphi 0, %s72
    %s94 = sphi 0, %s96
    %s97 = sphi 0, %s94
    %s98 = sphi 0, %s97
    %s114 = sphi 0, %s98
    %s122 = sphi 0, %s124
    %s125 = sphi 0, %s122
    %s126 = sphi 0, %s125
    %s142 = sphi 0, %s126
  $region4: #{_lambda_.19} parent=0 // loop_header_branch
    %12 = sbr.rel (%p10) target = $region8
  $region5: #{_lambda_.19} parent=0 // loop_body
    %s14 = ssub.s32 %s9, 1
    %s15 = ssub.s32 %s9, 2
    %s25 = sadd.s32 1, %s18
    %p26 = scmp.ge.s32.totalorder %s25, 1
    %s27 = scalar_select %p26, 0, %s25
    %s28 = sadd.s32 1, %s17
    %s29 = scalar_select %p26, %s28, %s17
    %p30 = scmp.ge.s32.totalorder %s29, 1
    %s31 = scalar_select %p30, 0, %s29
    %s32 = sadd.s32 1, %s16
    %s33 = scalar_select %p30, %s32, %s16
    %p34 = scmp.ge.s32.totalorder %s33, 2
    %s35 = scalar_select %p34, 0, %s33
    %s36 = ssub.s32 %s16, %s35
    %s37 = ssub.s32 %s18, %s27
    %s38 = sor.u32 %s36, %s37
    %p39 = scmp.eq.s32.totalorder %s38, 0
    %s41 = sadd.s32 %s40, 1
    %s42 = scalar_select %p39, %s40, %s41
    %p45 = pneg %p39
    %p46 = scmp.eq.s32.totalorder %s9, 1
    %p47 = por %p45, %p46
    %p48 = scmp.ne.s32.totalorder %s40, %s43
    %p49 = scmp.eq.s32.totalorder %s9, 0
    %p50 = por %p48, %p49
    %p51 = scmp.ne.s32.totalorder %s40, %s43
    %p52 = scmp.eq.s32.totalorder %s14, 1
    %p53 = por %p51, %p52
    %p54 = scmp.ne.s32.totalorder %s43, %s44
    %p55 = scmp.eq.s32.totalorder %s14, 0
    %p56 = por %p54, %p55
    %p57 = scmp.ne.s32.totalorder %s43, %s44
    %p58 = scmp.eq.s32.totalorder %s15, 1
    %p59 = por %p57, %p58
    %p61 = scmp.ne.s32.totalorder %s44, %s60
    %p62 = scmp.eq.s32.totalorder %s15, 0
    %p63 = por %p61, %p62
    %s64 = ssub.s32 %s18, %s27
    %s65 = ssub.s32 %s17, %s31
    %s66 = sor.u32 %s64, %s65
    %p67 = scmp.eq.s32.totalorder %s66, 0
    %s69 = sadd.s32 %s68, 1
    %s70 = scalar_select %p67, %s68, %s69
    %p73 = pneg %p67
    %p74 = scmp.eq.s32.totalorder %s9, 1
    %p75 = por %p73, %p74
    %p76 = scmp.ne.s32.totalorder %s68, %s71
    %p77 = scmp.eq.s32.totalorder %s9, 0
    %p78 = por %p76, %p77
    %p79 = scmp.ne.s32.totalorder %s68, %s71
    %p80 = scmp.eq.s32.totalorder %s14, 1
    %p81 = por %p79, %p80
    %p82 = scmp.ne.s32.totalorder %s71, %s72
    %p83 = scmp.eq.s32.totalorder %s14, 0
    %p84 = por %p82, %p83
    %p85 = scmp.ne.s32.totalorder %s71, %s72
    %p86 = scmp.eq.s32.totalorder %s15, 1
    %p87 = por %p85, %p86
    %p89 = scmp.ne.s32.totalorder %s72, %s88
    %p90 = scmp.eq.s32.totalorder %s15, 0
    %p91 = por %p89, %p90
    %s92 = ssub.s32 %s17, %s31
    %p93 = scmp.eq.s32.totalorder %s92, 0
    %s95 = sadd.s32 %s94, 1
    %s96 = scalar_select %p93, %s94, %s95
    %p99 = pneg %p93
    %p100 = scmp.eq.s32.totalorder %s9, 1
    %p101 = por %p99, %p100
    %p102 = scmp.ne.s32.totalorder %s94, %s97
    %p103 = scmp.eq.s32.totalorder %s9, 0
    %p104 = por %p102, %p103
    %p105 = scmp.ne.s32.totalorder %s94, %s97
    %p106 = scmp.eq.s32.totalorder %s14, 1
    %p107 = por %p105, %p106
    %p108 = scmp.ne.s32.totalorder %s97, %s98
    %p109 = scmp.eq.s32.totalorder %s14, 0
    %p110 = por %p108, %p109
    %p111 = scmp.ne.s32.totalorder %s97, %s98
    %p112 = scmp.eq.s32.totalorder %s15, 1
    %p113 = por %p111, %p112
    %p115 = scmp.ne.s32.totalorder %s98, %s114
    %p116 = scmp.eq.s32.totalorder %s15, 0
    %p117 = por %p115, %p116
    %s118 = ssub.s32 %s16, %s35
    %s119 = ssub.s32 %s17, %s31
    %s120 = sor.u32 %s118, %s119
    %p121 = scmp.eq.s32.totalorder %s120, 0
    %s123 = sadd.s32 %s122, 1
    %s124 = scalar_select %p121, %s122, %s123
    %p127 = pneg %p121
    %p128 = scmp.eq.s32.totalorder %s9, 1
    %p129 = por %p127, %p128
    %p130 = scmp.ne.s32.totalorder %s122, %s125
    %p131 = scmp.eq.s32.totalorder %s9, 0
    %p132 = por %p130, %p131
    %p133 = scmp.ne.s32.totalorder %s122, %s125
    %p134 = scmp.eq.s32.totalorder %s14, 1
    %p135 = por %p133, %p134
    %p136 = scmp.ne.s32.totalorder %s125, %s126
    %p137 = scmp.eq.s32.totalorder %s14, 0
    %p138 = por %p136, %p137
    %p139 = scmp.ne.s32.totalorder %s125, %s126
    %p140 = scmp.eq.s32.totalorder %s15, 1
    %p141 = por %p139, %p140
    %p143 = scmp.ne.s32.totalorder %s126, %s142
    %p144 = scmp.eq.s32.totalorder %s15, 0
    %p145 = por %p143, %p144
    %p146 = scmp.le.s32.totalorder 1, %s9
    %p147 = scmp.lt.s32.totalorder %s9, 3
    %p148 = pnand %p146, %p147
    %p149 = pneg %p148
    // Predicated region
    $region9: #{_lambda_.19} parent=5 // pred_check
      _
    $region10: #{_lambda_.19} parent=5 // pred_check_branch
      %151 = sbr.rel (%p148) target = $region12
    $region11: #{_lambda_.19} parent=5 // pred_region
      %s152 = ssub.s32 %s9, 1
      // Predicated region
      $region13: #{_lambda_.19} parent=11 // pred_check
        %p153 = pneg %p84
      $region14: #{_lambda_.19} parent=11 // pred_check_branch
        %155 = sbr.rel (%p153) target = $region16
      $region15: #{_lambda_.19} parent=11 // pred_region
        %s156 = smul.u32 32, %s21
        %p157 = scmp.lt.s32.totalorder %s156, 31
        %s158 = scalar_select %p157, %s156, 31
        %p159 = scmp.lt.s32.totalorder %s20, 0
        %s160 = scalar_select %p159, %s20, 0
        %s161 = sadd.s32 %s160, %s158
        %s162 = smul.addr %s161, 4
        %s163 = scalar_lea.vmem %s1, %s162
        %s164 = smul.u32 32, %s21
      $region16: #{_lambda_.19} parent=11 // pred_fallthru
        _
      // Predicated region
      $region17: #{_lambda_.19} parent=11 // pred_check
        %p165 = pneg %p110
      $region18: #{_lambda_.19} parent=11 // pred_check_branch
        %167 = sbr.rel (%p165) target = $region20
      $region19: #{_lambda_.19} parent=11 // pred_region
        %p168 = scmp.lt.s32.totalorder %s20, 0
        %s169 = scalar_select %p168, %s20, 0
        %s170 = scalar_lea.vmem %s2, %s169
      $region20: #{_lambda_.19} parent=11 // pred_fallthru
        _
    $region12: #{_lambda_.19} parent=5 // pred_fallthru
      _
    %p171 = scmp.lt.s32.totalorder %s9, 2
    // Predicated region
    $region21: #{_lambda_.19} parent=5 // pred_check
      %p172 = pneg %p171
    $region22: #{_lambda_.19} parent=5 // pred_check_branch
      %174 = sbr.rel (%p172) target = $region24
    $region23: #{_lambda_.19} parent=5 // pred_region
      // Predicated region
      $region25: #{_lambda_.19} parent=23 // pred_check
        %p175 = pneg %p50
      $region26: #{_lambda_.19} parent=23 // pred_check_branch
        %177 = sbr.rel (%p175) target = $region28
      $region27: #{_lambda_.19} parent=23 // pred_region
        %s178 = smul.u32 32, %s16
        %s179 = smul.u32 2, %s18
        %p180 = scmp.lt.s32.totalorder %s178, 63
        %s181 = scalar_select %p180, %s178, 63
        %p182 = scmp.lt.s32.totalorder %s179, 1
        %s183 = scalar_select %p182, %s179, 1
        %s184 = smul.addr %s181, 2
        %s185 = sadd.s32 %s183, %s184
        %s186 = smul.addr %s185, 4
        %s187 = scalar_lea.vmem %s0, %s186
        %s188 = smul.u32 32, %s16
        %s189 = smul.u32 2, %s18
      $region28: #{_lambda_.19} parent=23 // pred_fallthru
        _
    $region24: #{_lambda_.19} parent=5 // pred_fallthru
      _
    %p190 = scmp.le.s32.totalorder 1, %s9
    %p191 = scmp.lt.s32.totalorder %s9, 3
    %p192 = pnand %p190, %p191
    %p193 = pneg %p192
    // Predicated region
    $region29: #{_lambda_.19} parent=5 // pred_check
      _
    $region30: #{_lambda_.19} parent=5 // pred_check_branch
      %195 = sbr.rel (%p192) target = $region32
    $region31: #{_lambda_.19} parent=5 // pred_region
      %s196 = ssub.s32 %s9, 1
      %s197 = smul.u32 32, %s19
      %s198 = smul.u32 2, %s21
      %p199 = scmp.lt.s32.totalorder %s197, 63
      %s200 = scalar_select %p199, %s197, 63
      %p201 = scmp.lt.s32.totalorder %s198, 1
      %s202 = scalar_select %p201, %s198, 1
      %s203 = smul.addr %s200, 2
      %s204 = sadd.s32 %s202, %s203
      %s205 = smul.addr %s204, 4
      %s206 = scalar_lea.vmem %s0, %s205
      %p207 = pneg %p56
      %p208 = pneg %p53
      %s209 = smul.u32 32, %s21
      %p210 = scmp.lt.s32.totalorder %s209, 31
      %s211 = scalar_select %p210, %s209, 31
      %p212 = scmp.lt.s32.totalorder %s20, 0
      %s213 = scalar_select %p212, %s20, 0
      %s214 = sadd.s32 %s213, %s211
      %s215 = smul.addr %s214, 4
      %s216 = scalar_lea.vmem %s1, %s215
      %p217 = pneg %p84
      %p218 = pneg %p81
      %p219 = scmp.lt.s32.totalorder %s20, 0
      %s220 = scalar_select %p219, %s20, 0
      %s221 = scalar_lea.vmem %s2, %s220
      %p222 = pneg %p110
      %p223 = pneg %p107
      %p224 = pneg %p138
      %p225 = pneg %p135
      %s226 = smul.u32 32, %s19
      %p227 = scmp.lt.s32.totalorder %s226, 63
      %s228 = scalar_select %p227, %s226, 63
      %p229 = scmp.lt.s32.totalorder %s20, 0
      %s230 = scalar_select %p229, %s20, 0
      %s231 = sadd.s32 %s230, %s228
      %s232 = smul.addr %s231, 8
      %s233 = scalar_lea.vmem %s3, %s232
      %s234 = smul.u32 32, %s19
      %s235 = smul.u32 2, %s21
      %p236 = scmp.lt.s32.totalorder %s234, 63
      %s237 = scalar_select %p236, %s234, 63
      %p238 = scmp.lt.s32.totalorder %s235, 1
      %s239 = scalar_select %p238, %s235, 1
      %s240 = smul.addr %s237, 2
      %s241 = sadd.s32 %s239, %s240
      %s242 = smul.addr %s241, 4
      %s243 = scalar_lea.vmem %s0, %s242
      %s244 = smul.u32 32, %s19
      %s245 = smul.u32 2, %s21
      %s246 = smul.u32 32, %s21
      %p247 = scmp.lt.s32.totalorder %s246, 31
      %s248 = scalar_select %p247, %s246, 31
      %p249 = scmp.lt.s32.totalorder %s20, 0
      %s250 = scalar_select %p249, %s20, 0
      %s251 = sadd.s32 %s250, %s248
      %s252 = smul.addr %s251, 4
      %s253 = scalar_lea.vmem %s1, %s252
      %s254 = smul.u32 32, %s21
      %p255 = scmp.lt.s32.totalorder %s20, 0
      %s256 = scalar_select %p255, %s20, 0
      %s257 = scalar_lea.vmem %s2, %s256
      %s258 = smul.u32 32, %s19
      %p259 = scmp.lt.s32.totalorder %s258, 63
      %s260 = scalar_select %p259, %s258, 63
      %p261 = scmp.lt.s32.totalorder %s20, 0
      %s262 = scalar_select %p261, %s20, 0
      %s263 = sadd.s32 %s262, %s260
      %s264 = smul.addr %s263, 8
      %s265 = scalar_lea.vmem %s3, %s264
      %s266 = smul.u32 32, %s19
      %p267 = scmp.eq.s32.totalorder %s21, 0
      // Predicated region
      $region33: #{_lambda_.19} parent=31 // pred_check
        %p268 = pneg %p267
      $region34: #{_lambda_.19} parent=31 // pred_check_branch
        %270 = sbr.rel (%p268) target = $region36
      $region35: #{_lambda_.19} parent=31 // pred_region
        %271 = vst [vmem:[#allocation2] sm:$0xff] 0.0
        %272 = vst [vmem:[#allocation2 + $0x8] sm:$0xff] 0.0
        %273 = vst [vmem:[#allocation2 + $0x10] sm:$0xff] 0.0
        %274 = vst [vmem:[#allocation2 + $0x18] sm:$0xff] 0.0
        %275 = vst [vmem:[#allocation2 + $0x20] sm:$0xff] 0.0
        %276 = vst [vmem:[#allocation2 + $0x28] sm:$0xff] 0.0
        %277 = vst [vmem:[#allocation2 + $0x30] sm:$0xff] 0.0
        %278 = vst [vmem:[#allocation2 + $0x38] sm:$0xff] 0.0
        %279 = vst [vmem:[#allocation2 + $0x40] sm:$0xff] 0.0
        %280 = vst [vmem:[#allocation2 + $0x48] sm:$0xff] 0.0
        %281 = vst [vmem:[#allocation2 + $0x50] sm:$0xff] 0.0
        %282 = vst [vmem:[#allocation2 + $0x58] sm:$0xff] 0.0
        %283 = vst [vmem:[#allocation2 + $0x60] sm:$0xff] 0.0
        %284 = vst [vmem:[#allocation2 + $0x68] sm:$0xff] 0.0
        %285 = vst [vmem:[#allocation2 + $0x70] sm:$0xff] 0.0
        %286 = vst [vmem:[#allocation2 + $0x78] sm:$0xff] 0.0
        %287 = vst [vmem:[#allocation2 + $0x80] sm:$0xff] 0.0
        %288 = vst [vmem:[#allocation2 + $0x88] sm:$0xff] 0.0
        %289 = vst [vmem:[#allocation2 + $0x90] sm:$0xff] 0.0
        %290 = vst [vmem:[#allocation2 + $0x98] sm:$0xff] 0.0
        %291 = vst [vmem:[#allocation2 + $0xa0] sm:$0xff] 0.0
        %292 = vst [vmem:[#allocation2 + $0xa8] sm:$0xff] 0.0
        %293 = vst [vmem:[#allocation2 + $0xb0] sm:$0xff] 0.0
        %294 = vst [vmem:[#allocation2 + $0xb8] sm:$0xff] 0.0
        %295 = vst [vmem:[#allocation2 + $0xc0] sm:$0xff] 0.0
        %296 = vst [vmem:[#allocation2 + $0xc8] sm:$0xff] 0.0
        %297 = vst [vmem:[#allocation2 + $0xd0] sm:$0xff] 0.0
        %298 = vst [vmem:[#allocation2 + $0xd8] sm:$0xff] 0.0
        %299 = vst [vmem:[#allocation2 + $0xe0] sm:$0xff] 0.0
        %300 = vst [vmem:[#allocation2 + $0xe8] sm:$0xff] 0.0
        %301 = vst [vmem:[#allocation2 + $0xf0] sm:$0xff] 0.0
        %302 = vst [vmem:[#allocation2 + $0xf8] sm:$0xff] 0.0
      $region36: #{_lambda_.19} parent=31 // pred_fallthru
        _
      %v303 = vld [vmem:[%s243] sm:$0xff]
      %v304 = vld [vmem:[%s243 + $0x8] sm:$0xff]
      %v305 = vld [vmem:[%s243 + $0x10] sm:$0xff]
      %v306 = vld [vmem:[%s243 + $0x18] sm:$0xff]
      %v307 = vld [vmem:[%s243 + $0x20] sm:$0xff]
      %v308 = vld [vmem:[%s243 + $0x28] sm:$0xff]
      %v309 = vld [vmem:[%s243 + $0x30] sm:$0xff]
      %v310 = vld [vmem:[%s243 + $0x38] sm:$0xff]
      %v311 = vld [vmem:[%s243 + $0x40] sm:$0xff]
      %v312 = vld [vmem:[%s243 + $0x48] sm:$0xff]
      %v313 = vld [vmem:[%s243 + $0x50] sm:$0xff]
      %v314 = vld [vmem:[%s243 + $0x58] sm:$0xff]
      %v315 = vld [vmem:[%s243 + $0x60] sm:$0xff]
      %v316 = vld [vmem:[%s243 + $0x68] sm:$0xff]
      %v317 = vld [vmem:[%s243 + $0x70] sm:$0xff]
      %v318 = vld [vmem:[%s243 + $0x78] sm:$0xff]
      %v319 = vld [vmem:[%s243 + $0x80] sm:$0xff]
      %v320 = vld [vmem:[%s243 + $0x88] sm:$0xff]
      %v321 = vld [vmem:[%s243 + $0x90] sm:$0xff]
      %v322 = vld [vmem:[%s243 + $0x98] sm:$0xff]
      %v323 = vld [vmem:[%s243 + $0xa0] sm:$0xff]
      %v324 = vld [vmem:[%s243 + $0xa8] sm:$0xff]
      %v325 = vld [vmem:[%s243 + $0xb0] sm:$0xff]
      %v326 = vld [vmem:[%s243 + $0xb8] sm:$0xff]
      %v327 = vld [vmem:[%s243 + $0xc0] sm:$0xff]
      %v328 = vld [vmem:[%s243 + $0xc8] sm:$0xff]
      %v329 = vld [vmem:[%s243 + $0xd0] sm:$0xff]
      %v330 = vld [vmem:[%s243 + $0xd8] sm:$0xff]
      %v331 = vld [vmem:[%s243 + $0xe0] sm:$0xff]
      %v332 = vld [vmem:[%s243 + $0xe8] sm:$0xff]
      %v333 = vld [vmem:[%s243 + $0xf0] sm:$0xff]
      %v334 = vld [vmem:[%s243 + $0xf8] sm:$0xff]
      %v335 = vld [vmem:[#allocation2] sm:$0xff]
      %v336 = vld [vmem:[#allocation2 + $0x8] sm:$0xff]
      %v337 = vld [vmem:[#allocation2 + $0x10] sm:$0xff]
      %v338 = vld [vmem:[#allocation2 + $0x18] sm:$0xff]
      %v339 = vld [vmem:[#allocation2 + $0x20] sm:$0xff]
      %v340 = vld [vmem:[#allocation2 + $0x28] sm:$0xff]
      %v341 = vld [vmem:[#allocation2 + $0x30] sm:$0xff]
      %v342 = vld [vmem:[#allocation2 + $0x38] sm:$0xff]
      %v343 = vld [vmem:[#allocation2 + $0x40] sm:$0xff]
      %v344 = vld [vmem:[#allocation2 + $0x48] sm:$0xff]
      %v345 = vld [vmem:[#allocation2 + $0x50] sm:$0xff]
      %v346 = vld [vmem:[#allocation2 + $0x58] sm:$0xff]
      %v347 = vld [vmem:[#allocation2 + $0x60] sm:$0xff]
      %v348 = vld [vmem:[#allocation2 + $0x68] sm:$0xff]
      %v349 = vld [vmem:[#allocation2 + $0x70] sm:$0xff]
      %v350 = vld [vmem:[#allocation2 + $0x78] sm:$0xff]
      %v351 = vld [vmem:[#allocation2 + $0x80] sm:$0xff]
      %v352 = vld [vmem:[#allocation2 + $0x88] sm:$0xff]
      %v353 = vld [vmem:[#allocation2 + $0x90] sm:$0xff]
      %v354 = vld [vmem:[#allocation2 + $0x98] sm:$0xff]
      %v355 = vld [vmem:[#allocation2 + $0xa0] sm:$0xff]
      %v356 = vld [vmem:[#allocation2 + $0xa8] sm:$0xff]
      %v357 = vld [vmem:[#allocation2 + $0xb0] sm:$0xff]
      %v358 = vld [vmem:[#allocation2 + $0xb8] sm:$0xff]
      %v359 = vld [vmem:[#allocation2 + $0xc0] sm:$0xff]
      %v360 = vld [vmem:[#allocation2 + $0xc8] sm:$0xff]
      %v361 = vld [vmem:[#allocation2 + $0xd0] sm:$0xff]
      %v362 = vld [vmem:[#allocation2 + $0xd8] sm:$0xff]
      %v363 = vld [vmem:[#allocation2 + $0xe0] sm:$0xff]
      %v364 = vld [vmem:[#allocation2 + $0xe8] sm:$0xff]
      %v365 = vld [vmem:[#allocation2 + $0xf0] sm:$0xff]
      %v366 = vld [vmem:[#allocation2 + $0xf8] sm:$0xff]
      %v367 = vld [vmem:[%s253] sm:$0xf]
      %v368 = vld [vmem:[%s253 + $0x4] sm:$0xf]
      %v369 = vld [vmem:[%s253 + $0x8] sm:$0xf]
      %v370 = vld [vmem:[%s253 + $0xc] sm:$0xf]
      %v371 = vld [vmem:[%s253 + $0x10] sm:$0xf]
      %v372 = vld [vmem:[%s253 + $0x14] sm:$0xf]
      %v373 = vld [vmem:[%s253 + $0x18] sm:$0xf]
      %v374 = vld [vmem:[%s253 + $0x1c] sm:$0xf]
      %v375 = vld [vmem:[%s253 + $0x20] sm:$0xf]
      %v376 = vld [vmem:[%s253 + $0x24] sm:$0xf]
      %v377 = vld [vmem:[%s253 + $0x28] sm:$0xf]
      %v378 = vld [vmem:[%s253 + $0x2c] sm:$0xf]
      %v379 = vld [vmem:[%s253 + $0x30] sm:$0xf]
      %v380 = vld [vmem:[%s253 + $0x34] sm:$0xf]
      %v381 = vld [vmem:[%s253 + $0x38] sm:$0xf]
      %v382 = vld [vmem:[%s253 + $0x3c] sm:$0xf]
      %v383 = vld [vmem:[%s253 + $0x40] sm:$0xf]
      %v384 = vld [vmem:[%s253 + $0x44] sm:$0xf]
      %v385 = vld [vmem:[%s253 + $0x48] sm:$0xf]
      %v386 = vld [vmem:[%s253 + $0x4c] sm:$0xf]
      %v387 = vld [vmem:[%s253 + $0x50] sm:$0xf]
      %v388 = vld [vmem:[%s253 + $0x54] sm:$0xf]
      %v389 = vld [vmem:[%s253 + $0x58] sm:$0xf]
      %v390 = vld [vmem:[%s253 + $0x5c] sm:$0xf]
      %v391 = vld [vmem:[%s253 + $0x60] sm:$0xf]
      %v392 = vld [vmem:[%s253 + $0x64] sm:$0xf]
      %v393 = vld [vmem:[%s253 + $0x68] sm:$0xf]
      %v394 = vld [vmem:[%s253 + $0x6c] sm:$0xf]
      %v395 = vld [vmem:[%s253 + $0x70] sm:$0xf]
      %v396 = vld [vmem:[%s253 + $0x74] sm:$0xf]
      %v397 = vld [vmem:[%s253 + $0x78] sm:$0xf]
      %v398 = vld [vmem:[%s253 + $0x7c] sm:$0xf]
      %v431 = vunpack.c.l.b16 %v303
      %v432 = vunpack.c.h.b16 %v303
      %v433 = vunpack.c.l.b16 %v304
      %v434 = vunpack.c.h.b16 %v304
      %v435 = vunpack.c.l.b16 %v305
      %v436 = vunpack.c.h.b16 %v305
      %v437 = vunpack.c.l.b16 %v306
      %v438 = vunpack.c.h.b16 %v306
      %v439 = vunpack.c.l.b16 %v307
      %v440 = vunpack.c.h.b16 %v307
      %v441 = vunpack.c.l.b16 %v308
      %v442 = vunpack.c.h.b16 %v308
      %v443 = vunpack.c.l.b16 %v309
      %v444 = vunpack.c.h.b16 %v309
      %v445 = vunpack.c.l.b16 %v310
      %v446 = vunpack.c.h.b16 %v310
      %v447 = vunpack.c.l.b16 %v311
      %v448 = vunpack.c.h.b16 %v311
      %v449 = vunpack.c.l.b16 %v312
      %v450 = vunpack.c.h.b16 %v312
      %v451 = vunpack.c.l.b16 %v313
      %v452 = vunpack.c.h.b16 %v313
      %v453 = vunpack.c.l.b16 %v314
      %v454 = vunpack.c.h.b16 %v314
      %v455 = vunpack.c.l.b16 %v315
      %v456 = vunpack.c.h.b16 %v315
      %v457 = vunpack.c.l.b16 %v316
      %v458 = vunpack.c.h.b16 %v316
      %v459 = vunpack.c.l.b16 %v317
      %v460 = vunpack.c.h.b16 %v317
      %v461 = vunpack.c.l.b16 %v318
      %v462 = vunpack.c.h.b16 %v318
      %v463 = vunpack.c.l.b16 %v319
      %v464 = vunpack.c.h.b16 %v319
      %v465 = vunpack.c.l.b16 %v320
      %v466 = vunpack.c.h.b16 %v320
      %v467 = vunpack.c.l.b16 %v321
      %v468 = vunpack.c.h.b16 %v321
      %v469 = vunpack.c.l.b16 %v322
      %v470 = vunpack.c.h.b16 %v322
      %v471 = vunpack.c.l.b16 %v323
      %v472 = vunpack.c.h.b16 %v323
      %v473 = vunpack.c.l.b16 %v324
      %v474 = vunpack.c.h.b16 %v324
      %v475 = vunpack.c.l.b16 %v325
      %v476 = vunpack.c.h.b16 %v325
      %v477 = vunpack.c.l.b16 %v326
      %v478 = vunpack.c.h.b16 %v326
      %v479 = vunpack.c.l.b16 %v327
      %v480 = vunpack.c.h.b16 %v327
      %v481 = vunpack.c.l.b16 %v328
      %v482 = vunpack.c.h.b16 %v328
      %v483 = vunpack.c.l.b16 %v329
      %v484 = vunpack.c.h.b16 %v329
      %v485 = vunpack.c.l.b16 %v330
      %v486 = vunpack.c.h.b16 %v330
      %v487 = vunpack.c.l.b16 %v331
      %v488 = vunpack.c.h.b16 %v331
      %v489 = vunpack.c.l.b16 %v332
      %v490 = vunpack.c.h.b16 %v332
      %v491 = vunpack.c.l.b16 %v333
      %v492 = vunpack.c.h.b16 %v333
      %v493 = vunpack.c.l.b16 %v334
      %v494 = vunpack.c.h.b16 %v334
      %v495 = vpack.c.b16 %v433, %v431
      %v496 = vpack.c.b16 %v434, %v432
      %v497 = vpack.c.b16 %v437, %v435
      %v498 = vpack.c.b16 %v438, %v436
      %v499 = vpack.c.b16 %v441, %v439
      %v500 = vpack.c.b16 %v442, %v440
      %v501 = vpack.c.b16 %v445, %v443
      %v502 = vpack.c.b16 %v446, %v444
      %v503 = vpack.c.b16 %v449, %v447
      %v504 = vpack.c.b16 %v450, %v448
      %v505 = vpack.c.b16 %v453, %v451
      %v506 = vpack.c.b16 %v454, %v452
      %v507 = vpack.c.b16 %v457, %v455
      %v508 = vpack.c.b16 %v458, %v456
      %v509 = vpack.c.b16 %v461, %v459
      %v510 = vpack.c.b16 %v462, %v460
      %v511 = vpack.c.b16 %v465, %v463
      %v512 = vpack.c.b16 %v466, %v464
      %v513 = vpack.c.b16 %v469, %v467
      %v514 = vpack.c.b16 %v470, %v468
      %v515 = vpack.c.b16 %v473, %v471
      %v516 = vpack.c.b16 %v474, %v472
      %v517 = vpack.c.b16 %v477, %v475
      %v518 = vpack.c.b16 %v478, %v476
      %v519 = vpack.c.b16 %v481, %v479
      %v520 = vpack.c.b16 %v482, %v480
      %v521 = vpack.c.b16 %v485, %v483
      %v522 = vpack.c.b16 %v486, %v484
      %v523 = vpack.c.b16 %v489, %v487
      %v524 = vpack.c.b16 %v490, %v488
      %v525 = vpack.c.b16 %v493, %v491
      %v526 = vpack.c.b16 %v494, %v492
      %v591 = vunpack.c.l.b16 %v367
      %v592 = vunpack.c.l.b16 %v368
      %v593 = vunpack.c.l.b16 %v369
      %v594 = vunpack.c.l.b16 %v370
      %v595 = vunpack.c.l.b16 %v371
      %v596 = vunpack.c.l.b16 %v372
      %v597 = vunpack.c.l.b16 %v373
      %v598 = vunpack.c.l.b16 %v374
      %v599 = vunpack.c.l.b16 %v375
      %v600 = vunpack.c.l.b16 %v376
      %v601 = vunpack.c.l.b16 %v377
      %v602 = vunpack.c.l.b16 %v378
      %v603 = vunpack.c.l.b16 %v379
      %v604 = vunpack.c.l.b16 %v380
      %v605 = vunpack.c.l.b16 %v381
      %v606 = vunpack.c.l.b16 %v382
      %v607 = vunpack.c.l.b16 %v383
      %v608 = vunpack.c.l.b16 %v384
      %v609 = vunpack.c.l.b16 %v385
      %v610 = vunpack.c.l.b16 %v386
      %v611 = vunpack.c.l.b16 %v387
      %v612 = vunpack.c.l.b16 %v388
      %v613 = vunpack.c.l.b16 %v389
      %v614 = vunpack.c.l.b16 %v390
      %v615 = vunpack.c.l.b16 %v391
      %v616 = vunpack.c.l.b16 %v392
      %v617 = vunpack.c.l.b16 %v393
      %v618 = vunpack.c.l.b16 %v394
      %v619 = vunpack.c.l.b16 %v395
      %v620 = vunpack.c.l.b16 %v396
      %v621 = vunpack.c.l.b16 %v397
      %v622 = vunpack.c.l.b16 %v398
      %v623 = vpack.c.b16 %v592, %v591
      %v624 = vpack.c.b16 %v594, %v593
      %v625 = vpack.c.b16 %v596, %v595
      %v626 = vpack.c.b16 %v598, %v597
      %v627 = vpack.c.b16 %v600, %v599
      %v628 = vpack.c.b16 %v602, %v601
      %v629 = vpack.c.b16 %v604, %v603
      %v630 = vpack.c.b16 %v606, %v605
      %v631 = vpack.c.b16 %v608, %v607
      %v632 = vpack.c.b16 %v610, %v609
      %v633 = vpack.c.b16 %v612, %v611
      %v634 = vpack.c.b16 %v614, %v613
      %v635 = vpack.c.b16 %v616, %v615
      %v636 = vpack.c.b16 %v618, %v617
      %v637 = vpack.c.b16 %v620, %v619
      %v638 = vpack.c.b16 %v622, %v621
      %655 = vmatpush.bf16.msra.mxu0 %v630
      %656 = vmatpush.bf16.msra.mxu0 %v629
      %657 = vmatpush.bf16.msra.mxu0 %v628
      %658 = vmatpush.bf16.msra.mxu0 %v627
      %659 = vmatpush.bf16.msra.mxu0 %v626
      %660 = vmatpush.bf16.msra.mxu0 %v625
      %661 = vmatpush.bf16.msra.mxu0 %v624
      %662 = vmatpush.bf16.msra.mxu0 %v623
      %663 = vmatmul.bf16.gmra.mxu0 %v495
      %v664 = vpop.f32.mrf.mxu0
      %v665 = vadd.f32 0.0, %v664
      %v666 = vpop.f32.mrf.mxu0
      %v667 = vadd.f32 0.0, %v666
      %668 = vmatmul.bf16.gmra.mxu0 %v497
      %v669 = vpop.f32.mrf.mxu0
      %v670 = vadd.f32 0.0, %v669
      %v671 = vpop.f32.mrf.mxu0
      %v672 = vadd.f32 0.0, %v671
      %673 = vmatmul.bf16.gmra.mxu0 %v499
      %v674 = vpop.f32.mrf.mxu0
      %v675 = vadd.f32 0.0, %v674
      %v676 = vpop.f32.mrf.mxu0
      %v677 = vadd.f32 0.0, %v676
      %678 = vmatmul.bf16.gmra.mxu0 %v501
      %v679 = vpop.f32.mrf.mxu0
      %v680 = vadd.f32 0.0, %v679
      %v681 = vpop.f32.mrf.mxu0
      %v682 = vadd.f32 0.0, %v681
      %683 = vmatmul.bf16.gmra.mxu0 %v503
      %v684 = vpop.f32.mrf.mxu0
      %v685 = vadd.f32 0.0, %v684
      %v686 = vpop.f32.mrf.mxu0
      %v687 = vadd.f32 0.0, %v686
      %688 = vmatmul.bf16.gmra.mxu0 %v505
      %v689 = vpop.f32.mrf.mxu0
      %v690 = vadd.f32 0.0, %v689
      %v691 = vpop.f32.mrf.mxu0
      %v692 = vadd.f32 0.0, %v691
      %693 = vmatmul.bf16.gmra.mxu0 %v507
      %v694 = vpop.f32.mrf.mxu0
      %v695 = vadd.f32 0.0, %v694
      %v696 = vpop.f32.mrf.mxu0
      %v697 = vadd.f32 0.0, %v696
      %698 = vmatmul.bf16.gmra.mxu0 %v509
      %v699 = vpop.f32.mrf.mxu0
      %v700 = vadd.f32 0.0, %v699
      %v701 = vpop.f32.mrf.mxu0
      %v702 = vadd.f32 0.0, %v701
      %703 = vmatmul.bf16.gmra.mxu0 %v511
      %v704 = vpop.f32.mrf.mxu0
      %v705 = vadd.f32 0.0, %v704
      %v706 = vpop.f32.mrf.mxu0
      %v707 = vadd.f32 0.0, %v706
      %708 = vmatmul.bf16.gmra.mxu0 %v513
      %v709 = vpop.f32.mrf.mxu0
      %v710 = vadd.f32 0.0, %v709
      %v711 = vpop.f32.mrf.mxu0
      %v712 = vadd.f32 0.0, %v711
      %713 = vmatmul.bf16.gmra.mxu0 %v515
      %v714 = vpop.f32.mrf.mxu0
      %v715 = vadd.f32 0.0, %v714
      %v716 = vpop.f32.mrf.mxu0
      %v717 = vadd.f32 0.0, %v716
      %718 = vmatmul.bf16.gmra.mxu0 %v517
      %v719 = vpop.f32.mrf.mxu0
      %v720 = vadd.f32 0.0, %v719
      %v721 = vpop.f32.mrf.mxu0
      %v722 = vadd.f32 0.0, %v721
      %723 = vmatmul.bf16.gmra.mxu0 %v519
      %v724 = vpop.f32.mrf.mxu0
      %v725 = vadd.f32 0.0, %v724
      %v726 = vpop.f32.mrf.mxu0
      %v727 = vadd.f32 0.0, %v726
      %728 = vmatmul.bf16.gmra.mxu0 %v521
      %v729 = vpop.f32.mrf.mxu0
      %v730 = vadd.f32 0.0, %v729
      %v731 = vpop.f32.mrf.mxu0
      %v732 = vadd.f32 0.0, %v731
      %733 = vmatmul.bf16.gmra.mxu0 %v523
      %v734 = vpop.f32.mrf.mxu0
      %v735 = vadd.f32 0.0, %v734
      %v736 = vpop.f32.mrf.mxu0
      %v737 = vadd.f32 0.0, %v736
      %738 = vmatmul.bf16.gmra.mxu0 %v525
      %v739 = vpop.f32.mrf.mxu0
      %v740 = vadd.f32 0.0, %v739
      %v741 = vpop.f32.mrf.mxu0
      %v742 = vadd.f32 0.0, %v741
      %743 = vdwg.mxu0
      %744 = vmatpush.bf16.msra.mxu0 %v638
      %745 = vmatpush.bf16.msra.mxu0 %v637
      %746 = vmatpush.bf16.msra.mxu0 %v636
      %747 = vmatpush.bf16.msra.mxu0 %v635
      %748 = vmatpush.bf16.msra.mxu0 %v634
      %749 = vmatpush.bf16.msra.mxu0 %v633
      %750 = vmatpush.bf16.msra.mxu0 %v632
      %751 = vmatpush.bf16.msra.mxu0 %v631
      %752 = vmatmul.bf16.gmra.mxu0 %v496
      %v753 = vpop.f32.mrf.mxu0
      %v754 = vadd.f32 %v665, %v753
      %v755 = vpop.f32.mrf.mxu0
      %v756 = vadd.f32 %v667, %v755
      %757 = vmatmul.bf16.gmra.mxu0 %v498
      %v758 = vpop.f32.mrf.mxu0
      %v759 = vadd.f32 %v670, %v758
      %v760 = vpop.f32.mrf.mxu0
      %v761 = vadd.f32 %v672, %v760
      %762 = vmatmul.bf16.gmra.mxu0 %v500
      %v763 = vpop.f32.mrf.mxu0
      %v764 = vadd.f32 %v675, %v763
      %v765 = vpop.f32.mrf.mxu0
      %v766 = vadd.f32 %v677, %v765
      %767 = vmatmul.bf16.gmra.mxu0 %v502
      %v768 = vpop.f32.mrf.mxu0
      %v769 = vadd.f32 %v680, %v768
      %v770 = vpop.f32.mrf.mxu0
      %v771 = vadd.f32 %v682, %v770
      %772 = vmatmul.bf16.gmra.mxu0 %v504
      %v773 = vpop.f32.mrf.mxu0
      %v774 = vadd.f32 %v685, %v773
      %v775 = vpop.f32.mrf.mxu0
      %v776 = vadd.f32 %v687, %v775
      %777 = vmatmul.bf16.gmra.mxu0 %v506
      %v778 = vpop.f32.mrf.mxu0
      %v779 = vadd.f32 %v690, %v778
      %v780 = vpop.f32.mrf.mxu0
      %v781 = vadd.f32 %v692, %v780
      %782 = vmatmul.bf16.gmra.mxu0 %v508
      %v783 = vpop.f32.mrf.mxu0
      %v784 = vadd.f32 %v695, %v783
      %v785 = vpop.f32.mrf.mxu0
      %v786 = vadd.f32 %v697, %v785
      %787 = vmatmul.bf16.gmra.mxu0 %v510
      %v788 = vpop.f32.mrf.mxu0
      %v789 = vadd.f32 %v700, %v788
      %v790 = vpop.f32.mrf.mxu0
      %v791 = vadd.f32 %v702, %v790
      %792 = vmatmul.bf16.gmra.mxu0 %v512
      %v793 = vpop.f32.mrf.mxu0
      %v794 = vadd.f32 %v705, %v793
      %v795 = vpop.f32.mrf.mxu0
      %v796 = vadd.f32 %v707, %v795
      %797 = vmatmul.bf16.gmra.mxu0 %v514
      %v798 = vpop.f32.mrf.mxu0
      %v799 = vadd.f32 %v710, %v798
      %v800 = vpop.f32.mrf.mxu0
      %v801 = vadd.f32 %v712, %v800
      %802 = vmatmul.bf16.gmra.mxu0 %v516
      %v803 = vpop.f32.mrf.mxu0
      %v804 = vadd.f32 %v715, %v803
      %v805 = vpop.f32.mrf.mxu0
      %v806 = vadd.f32 %v717, %v805
      %807 = vmatmul.bf16.gmra.mxu0 %v518
      %v808 = vpop.f32.mrf.mxu0
      %v809 = vadd.f32 %v720, %v808
      %v810 = vpop.f32.mrf.mxu0
      %v811 = vadd.f32 %v722, %v810
      %812 = vmatmul.bf16.gmra.mxu0 %v520
      %v813 = vpop.f32.mrf.mxu0
      %v814 = vadd.f32 %v725, %v813
      %v815 = vpop.f32.mrf.mxu0
      %v816 = vadd.f32 %v727, %v815
      %817 = vmatmul.bf16.gmra.mxu0 %v522
      %v818 = vpop.f32.mrf.mxu0
      %v819 = vadd.f32 %v730, %v818
      %v820 = vpop.f32.mrf.mxu0
      %v821 = vadd.f32 %v732, %v820
      %822 = vmatmul.bf16.gmra.mxu0 %v524
      %v823 = vpop.f32.mrf.mxu0
      %v824 = vadd.f32 %v735, %v823
      %v825 = vpop.f32.mrf.mxu0
      %v826 = vadd.f32 %v737, %v825
      %827 = vmatmul.bf16.gmra.mxu0 %v526
      %v828 = vpop.f32.mrf.mxu0
      %v829 = vadd.f32 %v740, %v828
      %v830 = vpop.f32.mrf.mxu0
      %v831 = vadd.f32 %v742, %v830
      %832 = vdwg.mxu0
      %v833 = vadd.f32 %v335, %v754
      %v834 = vadd.f32 %v336, %v756
      %v835 = vadd.f32 %v337, %v759
      %v836 = vadd.f32 %v338, %v761
      %v837 = vadd.f32 %v339, %v764
      %v838 = vadd.f32 %v340, %v766
      %v839 = vadd.f32 %v341, %v769
      %v840 = vadd.f32 %v342, %v771
      %v841 = vadd.f32 %v343, %v774
      %v842 = vadd.f32 %v344, %v776
      %v843 = vadd.f32 %v345, %v779
      %v844 = vadd.f32 %v346, %v781
      %v845 = vadd.f32 %v347, %v784
      %v846 = vadd.f32 %v348, %v786
      %v847 = vadd.f32 %v349, %v789
      %v848 = vadd.f32 %v350, %v791
      %v849 = vadd.f32 %v351, %v794
      %v850 = vadd.f32 %v352, %v796
      %v851 = vadd.f32 %v353, %v799
      %v852 = vadd.f32 %v354, %v801
      %v853 = vadd.f32 %v355, %v804
      %v854 = vadd.f32 %v356, %v806
      %v855 = vadd.f32 %v357, %v809
      %v856 = vadd.f32 %v358, %v811
      %v857 = vadd.f32 %v359, %v814
      %v858 = vadd.f32 %v360, %v816
      %v859 = vadd.f32 %v361, %v819
      %v860 = vadd.f32 %v362, %v821
      %v861 = vadd.f32 %v363, %v824
      %v862 = vadd.f32 %v364, %v826
      %v863 = vadd.f32 %v365, %v829
      %v864 = vadd.f32 %v366, %v831
      %865 = vst [vmem:[#allocation2] sm:$0xff] %v833
      %866 = vst [vmem:[#allocation2 + $0x8] sm:$0xff] %v834
      %867 = vst [vmem:[#allocation2 + $0x10] sm:$0xff] %v835
      %868 = vst [vmem:[#allocation2 + $0x18] sm:$0xff] %v836
      %869 = vst [vmem:[#allocation2 + $0x20] sm:$0xff] %v837
      %870 = vst [vmem:[#allocation2 + $0x28] sm:$0xff] %v838
      %871 = vst [vmem:[#allocation2 + $0x30] sm:$0xff] %v839
      %872 = vst [vmem:[#allocation2 + $0x38] sm:$0xff] %v840
      %873 = vst [vmem:[#allocation2 + $0x40] sm:$0xff] %v841
      %874 = vst [vmem:[#allocation2 + $0x48] sm:$0xff] %v842
      %875 = vst [vmem:[#allocation2 + $0x50] sm:$0xff] %v843
      %876 = vst [vmem:[#allocation2 + $0x58] sm:$0xff] %v844
      %877 = vst [vmem:[#allocation2 + $0x60] sm:$0xff] %v845
      %878 = vst [vmem:[#allocation2 + $0x68] sm:$0xff] %v846
      %879 = vst [vmem:[#allocation2 + $0x70] sm:$0xff] %v847
      %880 = vst [vmem:[#allocation2 + $0x78] sm:$0xff] %v848
      %881 = vst [vmem:[#allocation2 + $0x80] sm:$0xff] %v849
      %882 = vst [vmem:[#allocation2 + $0x88] sm:$0xff] %v850
      %883 = vst [vmem:[#allocation2 + $0x90] sm:$0xff] %v851
      %884 = vst [vmem:[#allocation2 + $0x98] sm:$0xff] %v852
      %885 = vst [vmem:[#allocation2 + $0xa0] sm:$0xff] %v853
      %886 = vst [vmem:[#allocation2 + $0xa8] sm:$0xff] %v854
      %887 = vst [vmem:[#allocation2 + $0xb0] sm:$0xff] %v855
      %888 = vst [vmem:[#allocation2 + $0xb8] sm:$0xff] %v856
      %889 = vst [vmem:[#allocation2 + $0xc0] sm:$0xff] %v857
      %890 = vst [vmem:[#allocation2 + $0xc8] sm:$0xff] %v858
      %891 = vst [vmem:[#allocation2 + $0xd0] sm:$0xff] %v859
      %892 = vst [vmem:[#allocation2 + $0xd8] sm:$0xff] %v860
      %893 = vst [vmem:[#allocation2 + $0xe0] sm:$0xff] %v861
      %894 = vst [vmem:[#allocation2 + $0xe8] sm:$0xff] %v862
      %895 = vst [vmem:[#allocation2 + $0xf0] sm:$0xff] %v863
      %896 = vst [vmem:[#allocation2 + $0xf8] sm:$0xff] %v864
      // Predicated region
      $region37: #{_lambda_.19} parent=31 // pred_check
        %p897 = pneg %p267
      $region38: #{_lambda_.19} parent=31 // pred_check_branch
        %899 = sbr.rel (%p897) target = $region40
      $region39: #{_lambda_.19} parent=31 // pred_region
        %v900 = vld [vmem:[#allocation2] sm:$0xff]
        %v901 = vld [vmem:[#allocation2 + $0x8] sm:$0xff]
        %v902 = vld [vmem:[#allocation2 + $0x10] sm:$0xff]
        %v903 = vld [vmem:[#allocation2 + $0x18] sm:$0xff]
        %v904 = vld [vmem:[#allocation2 + $0x20] sm:$0xff]
        %v905 = vld [vmem:[#allocation2 + $0x28] sm:$0xff]
        %v906 = vld [vmem:[#allocation2 + $0x30] sm:$0xff]
        %v907 = vld [vmem:[#allocation2 + $0x38] sm:$0xff]
        %v908 = vld [vmem:[#allocation2 + $0x40] sm:$0xff]
        %v909 = vld [vmem:[#allocation2 + $0x48] sm:$0xff]
        %v910 = vld [vmem:[#allocation2 + $0x50] sm:$0xff]
        %v911 = vld [vmem:[#allocation2 + $0x58] sm:$0xff]
        %v912 = vld [vmem:[#allocation2 + $0x60] sm:$0xff]
        %v913 = vld [vmem:[#allocation2 + $0x68] sm:$0xff]
        %v914 = vld [vmem:[#allocation2 + $0x70] sm:$0xff]
        %v915 = vld [vmem:[#allocation2 + $0x78] sm:$0xff]
        %v916 = vld [vmem:[#allocation2 + $0x80] sm:$0xff]
        %v917 = vld [vmem:[#allocation2 + $0x88] sm:$0xff]
        %v918 = vld [vmem:[#allocation2 + $0x90] sm:$0xff]
        %v919 = vld [vmem:[#allocation2 + $0x98] sm:$0xff]
        %v920 = vld [vmem:[#allocation2 + $0xa0] sm:$0xff]
        %v921 = vld [vmem:[#allocation2 + $0xa8] sm:$0xff]
        %v922 = vld [vmem:[#allocation2 + $0xb0] sm:$0xff]
        %v923 = vld [vmem:[#allocation2 + $0xb8] sm:$0xff]
        %v924 = vld [vmem:[#allocation2 + $0xc0] sm:$0xff]
        %v925 = vld [vmem:[#allocation2 + $0xc8] sm:$0xff]
        %v926 = vld [vmem:[#allocation2 + $0xd0] sm:$0xff]
        %v927 = vld [vmem:[#allocation2 + $0xd8] sm:$0xff]
        %v928 = vld [vmem:[#allocation2 + $0xe0] sm:$0xff]
        %v929 = vld [vmem:[#allocation2 + $0xe8] sm:$0xff]
        %v930 = vld [vmem:[#allocation2 + $0xf0] sm:$0xff]
        %v931 = vld [vmem:[#allocation2 + $0xf8] sm:$0xff]
        %v932 = vld [vmem:[%s257] sm:$0x1]
        %v934 = vperm.slane %v932, 0
        %v936 = vadd.f32 %v900, %v934
        %v937 = vadd.f32 %v901, %v934
        %v938 = vadd.f32 %v902, %v934
        %v939 = vadd.f32 %v903, %v934
        %v940 = vadd.f32 %v904, %v934
        %v941 = vadd.f32 %v905, %v934
        %v942 = vadd.f32 %v906, %v934
        %v943 = vadd.f32 %v907, %v934
        %v944 = vadd.f32 %v908, %v934
        %v945 = vadd.f32 %v909, %v934
        %v946 = vadd.f32 %v910, %v934
        %v947 = vadd.f32 %v911, %v934
        %v948 = vadd.f32 %v912, %v934
        %v949 = vadd.f32 %v913, %v934
        %v950 = vadd.f32 %v914, %v934
        %v951 = vadd.f32 %v915, %v934
        %v952 = vadd.f32 %v916, %v934
        %v953 = vadd.f32 %v917, %v934
        %v954 = vadd.f32 %v918, %v934
        %v955 = vadd.f32 %v919, %v934
        %v956 = vadd.f32 %v920, %v934
        %v957 = vadd.f32 %v921, %v934
        %v958 = vadd.f32 %v922, %v934
        %v959 = vadd.f32 %v923, %v934
        %v960 = vadd.f32 %v924, %v934
        %v961 = vadd.f32 %v925, %v934
        %v962 = vadd.f32 %v926, %v934
        %v963 = vadd.f32 %v927, %v934
        %v964 = vadd.f32 %v928, %v934
        %v965 = vadd.f32 %v929, %v934
        %v966 = vadd.f32 %v930, %v934
        %v967 = vadd.f32 %v931, %v934
        %v968 = vmax.f32 %v936, 0.0
        %v969 = vmax.f32 %v937, 0.0
        %v970 = vmax.f32 %v938, 0.0
        %v971 = vmax.f32 %v939, 0.0
        %v972 = vmax.f32 %v940, 0.0
        %v973 = vmax.f32 %v941, 0.0
        %v974 = vmax.f32 %v942, 0.0
        %v975 = vmax.f32 %v943, 0.0
        %v976 = vmax.f32 %v944, 0.0
        %v977 = vmax.f32 %v945, 0.0
        %v978 = vmax.f32 %v946, 0.0
        %v979 = vmax.f32 %v947, 0.0
        %v980 = vmax.f32 %v948, 0.0
        %v981 = vmax.f32 %v949, 0.0
        %v982 = vmax.f32 %v950, 0.0
        %v983 = vmax.f32 %v951, 0.0
        %v984 = vmax.f32 %v952, 0.0
        %v985 = vmax.f32 %v953, 0.0
        %v986 = vmax.f32 %v954, 0.0
        %v987 = vmax.f32 %v955, 0.0
        %v988 = vmax.f32 %v956, 0.0
        %v989 = vmax.f32 %v957, 0.0
        %v990 = vmax.f32 %v958, 0.0
        %v991 = vmax.f32 %v959, 0.0
        %v992 = vmax.f32 %v960, 0.0
        %v993 = vmax.f32 %v961, 0.0
        %v994 = vmax.f32 %v962, 0.0
        %v995 = vmax.f32 %v963, 0.0
        %v996 = vmax.f32 %v964, 0.0
        %v997 = vmax.f32 %v965, 0.0
        %v998 = vmax.f32 %v966, 0.0
        %v999 = vmax.f32 %v967, 0.0
        %1000 = vst [vmem:[%s265] sm:$0xff] %v968
        %1001 = vst [vmem:[%s265 + $0x8] sm:$0xff] %v969
        %1002 = vst [vmem:[%s265 + $0x10] sm:$0xff] %v970
        %1003 = vst [vmem:[%s265 + $0x18] sm:$0xff] %v971
        %1004 = vst [vmem:[%s265 + $0x20] sm:$0xff] %v972
        %1005 = vst [vmem:[%s265 + $0x28] sm:$0xff] %v973
        %1006 = vst [vmem:[%s265 + $0x30] sm:$0xff] %v974
        %1007 = vst [vmem:[%s265 + $0x38] sm:$0xff] %v975
        %1008 = vst [vmem:[%s265 + $0x40] sm:$0xff] %v976
        %1009 = vst [vmem:[%s265 + $0x48] sm:$0xff] %v977
        %1010 = vst [vmem:[%s265 + $0x50] sm:$0xff] %v978
        %1011 = vst [vmem:[%s265 + $0x58] sm:$0xff] %v979
        %1012 = vst [vmem:[%s265 + $0x60] sm:$0xff] %v980
        %1013 = vst [vmem:[%s265 + $0x68] sm:$0xff] %v981
        %1014 = vst [vmem:[%s265 + $0x70] sm:$0xff] %v982
        %1015 = vst [vmem:[%s265 + $0x78] sm:$0xff] %v983
        %1016 = vst [vmem:[%s265 + $0x80] sm:$0xff] %v984
        %1017 = vst [vmem:[%s265 + $0x88] sm:$0xff] %v985
        %1018 = vst [vmem:[%s265 + $0x90] sm:$0xff] %v986
        %1019 = vst [vmem:[%s265 + $0x98] sm:$0xff] %v987
        %1020 = vst [vmem:[%s265 + $0xa0] sm:$0xff] %v988
        %1021 = vst [vmem:[%s265 + $0xa8] sm:$0xff] %v989
        %1022 = vst [vmem:[%s265 + $0xb0] sm:$0xff] %v990
        %1023 = vst [vmem:[%s265 + $0xb8] sm:$0xff] %v991
        %1024 = vst [vmem:[%s265 + $0xc0] sm:$0xff] %v992
        %1025 = vst [vmem:[%s265 + $0xc8] sm:$0xff] %v993
        %1026 = vst [vmem:[%s265 + $0xd0] sm:$0xff] %v994
        %1027 = vst [vmem:[%s265 + $0xd8] sm:$0xff] %v995
        %1028 = vst [vmem:[%s265 + $0xe0] sm:$0xff] %v996
        %1029 = vst [vmem:[%s265 + $0xe8] sm:$0xff] %v997
        %1030 = vst [vmem:[%s265 + $0xf0] sm:$0xff] %v998
        %1031 = vst [vmem:[%s265 + $0xf8] sm:$0xff] %v999
      $region40: #{_lambda_.19} parent=31 // pred_fallthru
        _
      %s1032 = smul.u32 32, %s19
      %p1033 = scmp.lt.s32.totalorder %s1032, 63
      %s1034 = scalar_select %p1033, %s1032, 63
      %p1035 = scmp.lt.s32.totalorder %s20, 0
      %s1036 = scalar_select %p1035, %s20, 0
      %s1037 = sadd.s32 %s1036, %s1034
      %s1038 = smul.addr %s1037, 8
      %s1039 = scalar_lea.vmem %s3, %s1038
      // Predicated region
      $region41: #{_lambda_.19} parent=31 // pred_check
        %p1040 = pneg %p135
      $region42: #{_lambda_.19} parent=31 // pred_check_branch
        %1042 = sbr.rel (%p1040) target = $region44
      $region43: #{_lambda_.19} parent=31 // pred_region
        %s1043 = smul.u32 32, %s19
      $region44: #{_lambda_.19} parent=31 // pred_fallthru
        _
    $region32: #{_lambda_.19} parent=5 // pred_fallthru
      _
    %p1044 = scmp.le.s32.totalorder 2, %s9
    // Predicated region
    $region45: #{_lambda_.19} parent=5 // pred_check
      %p1045 = pneg %p1044
    $region46: #{_lambda_.19} parent=5 // pred_check_branch
      %1047 = sbr.rel (%p1045) target = $region48
    $region47: #{_lambda_.19} parent=5 // pred_region
      %s1048 = ssub.s32 %s9, 2
      // Predicated region
      $region49: #{_lambda_.19} parent=47 // pred_check
        %p1049 = pneg %p141
      $region50: #{_lambda_.19} parent=47 // pred_check_branch
        %1051 = sbr.rel (%p1049) target = $region52
      $region51: #{_lambda_.19} parent=47 // pred_region
        %s1052 = smul.u32 32, %s22
        %p1053 = scmp.lt.s32.totalorder %s1052, 63
        %s1054 = scalar_select %p1053, %s1052, 63
        %p1055 = scmp.lt.s32.totalorder %s23, 0
        %s1056 = scalar_select %p1055, %s23, 0
        %s1057 = sadd.s32 %s1056, %s1054
        %s1058 = smul.addr %s1057, 8
        %s1059 = scalar_lea.vmem %s3, %s1058
      $region52: #{_lambda_.19} parent=47 // pred_fallthru
        _
    $region48: #{_lambda_.19} parent=5 // pred_fallthru
      _
  $region6: #{_lambda_.19} parent=0 // loop_footer
    %s13 = sadd.s32 1, %s9
  $region7: #{_lambda_.19} parent=0 // loop_footer_branch
    %8 = sbr.rel target = $region3
  $region8: #{_lambda_.19} parent=0 // loop_exit
    _

// kernel: _lambda_.20
$region0: #{_lambda_.20}
  #allocation0 [shape = 'u32[]', space=smem, size = 0x4, offset = 0x4, fixed_abs, tag = 'smem constant byte address 0x4 - core index']
  #allocation1 [shape = 'u32[72,128]{1,0:T(1,128)}', space=vmem, size = 0x9000, scoped, tag = 'internal scratch']
  #allocation2 [shape = 'f32[64,128]{1,0:T(8,128)}', space=vmem, size = 0x8000, scoped, tag = 'scratch operand']
  %s0 = inlined_call_operand.vmem [shape: f32[128,128], index: 0, kind: input, shape index: {}]
  %s1 = inlined_call_operand.vmem [shape: bf16[128,128], index: 1, kind: input, shape index: {}]
  %s2 = inlined_call_operand.vmem [shape: f32[1,128], index: 2, kind: input, shape index: {}]
  %s3 = inlined_call_operand.vmem [shape: f32[1,128], index: 3, kind: input, shape index: {}]
  %s4 = inlined_call_operand.vmem [shape: f32[1,128], index: 4, kind: input, shape index: {}]
  %s5 = inlined_call_operand.vmem [shape: f32[128,128], index: 5, kind: output, shape index: {}]
  %s6 = sld [smem:[#allocation0]]
  $region61: #{_lambda_.20} parent=0
    _
  %s8 = ssub.s32 1, %s6
  %s9 = scalar_select 0, %s8, %s6
  loop: start=0, step=1, limit=4
  $region2: #{_lambda_.20} parent=0 // loop_pre_header
    _
  $region3: #{_lambda_.20} parent=0 // loop_header
    %s11 = sphi 0, %s15
    %p12 = scmp.ge.s32.totalorder %s11, 4
    %s18 = sphi 0, %s37
    %s19 = sphi 0, %s33
    %s20 = sphi 0, %s29
    %s21 = sphi 0, %s18
    %s22 = sphi 0, %s19
    %s23 = sphi 0, %s20
    %s24 = sphi 0, %s21
    %s25 = sphi 0, %s22
    %s26 = sphi 0, %s23
    %s42 = sphi 0, %s44
    %s45 = sphi 0, %s42
    %s46 = sphi 0, %s45
    %s62 = sphi 0, %s46
    %s70 = sphi 0, %s72
    %s73 = sphi 0, %s70
    %s74 = sphi 0, %s73
    %s90 = sphi 0, %s74
    %s96 = sphi 0, %s98
    %s99 = sphi 0, %s96
    %s100 = sphi 0, %s99
    %s116 = sphi 0, %s100
    %s122 = sphi 0, %s124
    %s125 = sphi 0, %s122
    %s126 = sphi 0, %s125
    %s142 = sphi 0, %s126
    %s148 = sphi 0, %s150
    %s151 = sphi 0, %s148
    %s152 = sphi 0, %s151
    %s168 = sphi 0, %s152
    %s176 = sphi 0, %s178
    %s179 = sphi 0, %s176
    %s180 = sphi 0, %s179
    %s196 = sphi 0, %s180
  $region4: #{_lambda_.20} parent=0 // loop_header_branch
    %14 = sbr.rel (%p12) target = $region8
  $region5: #{_lambda_.20} parent=0 // loop_body
    %s16 = ssub.s32 %s11, 1
    %s17 = ssub.s32 %s11, 2
    %s27 = sadd.s32 1, %s20
    %p28 = scmp.ge.s32.totalorder %s27, 1
    %s29 = scalar_select %p28, 0, %s27
    %s30 = sadd.s32 1, %s19
    %s31 = scalar_select %p28, %s30, %s19
    %p32 = scmp.ge.s32.totalorder %s31, 1
    %s33 = scalar_select %p32, 0, %s31
    %s34 = sadd.s32 1, %s18
    %s35 = scalar_select %p32, %s34, %s18
    %p36 = scmp.ge.s32.totalorder %s35, 2
    %s37 = scalar_select %p36, 0, %s35
    %s38 = ssub.s32 %s18, %s37
    %s39 = ssub.s32 %s20, %s29
    %s40 = sor.u32 %s38, %s39
    %p41 = scmp.eq.s32.totalorder %s40, 0
    %s43 = sadd.s32 %s42, 1
    %s44 = scalar_select %p41, %s42, %s43
    %p47 = pneg %p41
    %p48 = scmp.eq.s32.totalorder %s11, 1
    %p49 = por %p47, %p48
    %p50 = scmp.ne.s32.totalorder %s42, %s45
    %p51 = scmp.eq.s32.totalorder %s11, 0
    %p52 = por %p50, %p51
    %p53 = scmp.ne.s32.totalorder %s42, %s45
    %p54 = scmp.eq.s32.totalorder %s16, 1
    %p55 = por %p53, %p54
    %p56 = scmp.ne.s32.totalorder %s45, %s46
    %p57 = scmp.eq.s32.totalorder %s16, 0
    %p58 = por %p56, %p57
    %p59 = scmp.ne.s32.totalorder %s45, %s46
    %p60 = scmp.eq.s32.totalorder %s17, 1
    %p61 = por %p59, %p60
    %p63 = scmp.ne.s32.totalorder %s46, %s62
    %p64 = scmp.eq.s32.totalorder %s17, 0
    %p65 = por %p63, %p64
    %s66 = ssub.s32 %s20, %s29
    %s67 = ssub.s32 %s19, %s33
    %s68 = sor.u32 %s66, %s67
    %p69 = scmp.eq.s32.totalorder %s68, 0
    %s71 = sadd.s32 %s70, 1
    %s72 = scalar_select %p69, %s70, %s71
    %p75 = pneg %p69
    %p76 = scmp.eq.s32.totalorder %s11, 1
    %p77 = por %p75, %p76
    %p78 = scmp.ne.s32.totalorder %s70, %s73
    %p79 = scmp.eq.s32.totalorder %s11, 0
    %p80 = por %p78, %p79
    %p81 = scmp.ne.s32.totalorder %s70, %s73
    %p82 = scmp.eq.s32.totalorder %s16, 1
    %p83 = por %p81, %p82
    %p84 = scmp.ne.s32.totalorder %s73, %s74
    %p85 = scmp.eq.s32.totalorder %s16, 0
    %p86 = por %p84, %p85
    %p87 = scmp.ne.s32.totalorder %s73, %s74
    %p88 = scmp.eq.s32.totalorder %s17, 1
    %p89 = por %p87, %p88
    %p91 = scmp.ne.s32.totalorder %s74, %s90
    %p92 = scmp.eq.s32.totalorder %s17, 0
    %p93 = por %p91, %p92
    %s94 = ssub.s32 %s19, %s33
    %p95 = scmp.eq.s32.totalorder %s94, 0
    %s97 = sadd.s32 %s96, 1
    %s98 = scalar_select %p95, %s96, %s97
    %p101 = pneg %p95
    %p102 = scmp.eq.s32.totalorder %s11, 1
    %p103 = por %p101, %p102
    %p104 = scmp.ne.s32.totalorder %s96, %s99
    %p105 = scmp.eq.s32.totalorder %s11, 0
    %p106 = por %p104, %p105
    %p107 = scmp.ne.s32.totalorder %s96, %s99
    %p108 = scmp.eq.s32.totalorder %s16, 1
    %p109 = por %p107, %p108
    %p110 = scmp.ne.s32.totalorder %s99, %s100
    %p111 = scmp.eq.s32.totalorder %s16, 0
    %p112 = por %p110, %p111
    %p113 = scmp.ne.s32.totalorder %s99, %s100
    %p114 = scmp.eq.s32.totalorder %s17, 1
    %p115 = por %p113, %p114
    %p117 = scmp.ne.s32.totalorder %s100, %s116
    %p118 = scmp.eq.s32.totalorder %s17, 0
    %p119 = por %p117, %p118
    %s120 = ssub.s32 %s20, %s29
    %p121 = scmp.eq.s32.totalorder %s120, 0
    %s123 = sadd.s32 %s122, 1
    %s124 = scalar_select %p121, %s122, %s123
    %p127 = pneg %p121
    %p128 = scmp.eq.s32.totalorder %s11, 1
    %p129 = por %p127, %p128
    %p130 = scmp.ne.s32.totalorder %s122, %s125
    %p131 = scmp.eq.s32.totalorder %s11, 0
    %p132 = por %p130, %p131
    %p133 = scmp.ne.s32.totalorder %s122, %s125
    %p134 = scmp.eq.s32.totalorder %s16, 1
    %p135 = por %p133, %p134
    %p136 = scmp.ne.s32.totalorder %s125, %s126
    %p137 = scmp.eq.s32.totalorder %s16, 0
    %p138 = por %p136, %p137
    %p139 = scmp.ne.s32.totalorder %s125, %s126
    %p140 = scmp.eq.s32.totalorder %s17, 1
    %p141 = por %p139, %p140
    %p143 = scmp.ne.s32.totalorder %s126, %s142
    %p144 = scmp.eq.s32.totalorder %s17, 0
    %p145 = por %p143, %p144
    %s146 = ssub.s32 %s20, %s29
    %p147 = scmp.eq.s32.totalorder %s146, 0
    %s149 = sadd.s32 %s148, 1
    %s150 = scalar_select %p147, %s148, %s149
    %p153 = pneg %p147
    %p154 = scmp.eq.s32.totalorder %s11, 1
    %p155 = por %p153, %p154
    %p156 = scmp.ne.s32.totalorder %s148, %s151
    %p157 = scmp.eq.s32.totalorder %s11, 0
    %p158 = por %p156, %p157
    %p159 = scmp.ne.s32.totalorder %s148, %s151
    %p160 = scmp.eq.s32.totalorder %s16, 1
    %p161 = por %p159, %p160
    %p162 = scmp.ne.s32.totalorder %s151, %s152
    %p163 = scmp.eq.s32.totalorder %s16, 0
    %p164 = por %p162, %p163
    %p165 = scmp.ne.s32.totalorder %s151, %s152
    %p166 = scmp.eq.s32.totalorder %s17, 1
    %p167 = por %p165, %p166
    %p169 = scmp.ne.s32.totalorder %s152, %s168
    %p170 = scmp.eq.s32.totalorder %s17, 0
    %p171 = por %p169, %p170
    %s172 = ssub.s32 %s18, %s37
    %s173 = ssub.s32 %s19, %s33
    %s174 = sor.u32 %s172, %s173
    %p175 = scmp.eq.s32.totalorder %s174, 0
    %s177 = sadd.s32 %s176, 1
    %s178 = scalar_select %p175, %s176, %s177
    %p181 = pneg %p175
    %p182 = scmp.eq.s32.totalorder %s11, 1
    %p183 = por %p181, %p182
    %p184 = scmp.ne.s32.totalorder %s176, %s179
    %p185 = scmp.eq.s32.totalorder %s11, 0
    %p186 = por %p184, %p185
    %p187 = scmp.ne.s32.totalorder %s176, %s179
    %p188 = scmp.eq.s32.totalorder %s16, 1
    %p189 = por %p187, %p188
    %p190 = scmp.ne.s32.totalorder %s179, %s180
    %p191 = scmp.eq.s32.totalorder %s16, 0
    %p192 = por %p190, %p191
    %p193 = scmp.ne.s32.totalorder %s179, %s180
    %p194 = scmp.eq.s32.totalorder %s17, 1
    %p195 = por %p193, %p194
    %p197 = scmp.ne.s32.totalorder %s180, %s196
    %p198 = scmp.eq.s32.totalorder %s17, 0
    %p199 = por %p197, %p198
    %p200 = scmp.le.s32.totalorder 1, %s11
    %p201 = scmp.lt.s32.totalorder %s11, 3
    %p202 = pnand %p200, %p201
    %p203 = pneg %p202
    // Predicated region
    $region9: #{_lambda_.20} parent=5 // pred_check
      _
    $region10: #{_lambda_.20} parent=5 // pred_check_branch
      %205 = sbr.rel (%p202) target = $region12
    $region11: #{_lambda_.20} parent=5 // pred_region
      %s206 = ssub.s32 %s11, 1
      // Predicated region
      $region13: #{_lambda_.20} parent=11 // pred_check
        %p207 = pneg %p86
      $region14: #{_lambda_.20} parent=11 // pred_check_branch
        %209 = sbr.rel (%p207) target = $region16
      $region15: #{_lambda_.20} parent=11 // pred_region
        %s210 = smul.u32 16, %s23
        %p211 = scmp.lt.s32.totalorder %s210, 15
        %s212 = scalar_select %p211, %s210, 15
        %p213 = scmp.lt.s32.totalorder %s22, 0
        %s214 = scalar_select %p213, %s22, 0
        %s215 = sadd.s32 %s214, %s212
        %s216 = smul.addr %s215, 4
        %s217 = scalar_lea.vmem %s1, %s216
        %s218 = smul.u32 16, %s23
      $region16: #{_lambda_.20} parent=11 // pred_fallthru
        _
      // Predicated region
      $region17: #{_lambda_.20} parent=11 // pred_check
        %p219 = pneg %p112
      $region18: #{_lambda_.20} parent=11 // pred_check_branch
        %221 = sbr.rel (%p219) target = $region20
      $region19: #{_lambda_.20} parent=11 // pred_region
        %p222 = scmp.lt.s32.totalorder %s22, 0
        %s223 = scalar_select %p222, %s22, 0
        %s224 = scalar_lea.vmem %s2, %s223
      $region20: #{_lambda_.20} parent=11 // pred_fallthru
        _
      // Predicated region
      $region21: #{_lambda_.20} parent=11 // pred_check
        %p225 = pneg %p138
      $region22: #{_lambda_.20} parent=11 // pred_check_branch
        %227 = sbr.rel (%p225) target = $region24
      $region23: #{_lambda_.20} parent=11 // pred_region
        %p228 = scmp.lt.s32.totalorder %s23, 0
        %s229 = scalar_select %p228, %s23, 0
        %s230 = scalar_lea.vmem %s3, %s229
      $region24: #{_lambda_.20} parent=11 // pred_fallthru
        _
      // Predicated region
      $region25: #{_lambda_.20} parent=11 // pred_check
        %p231 = pneg %p164
      $region26: #{_lambda_.20} parent=11 // pred_check_branch
        %233 = sbr.rel (%p231) target = $region28
      $region27: #{_lambda_.20} parent=11 // pred_region
        %p234 = scmp.lt.s32.totalorder %s23, 0
        %s235 = scalar_select %p234, %s23, 0
        %s236 = scalar_lea.vmem %s4, %s235
      $region28: #{_lambda_.20} parent=11 // pred_fallthru
        _
    $region12: #{_lambda_.20} parent=5 // pred_fallthru
      _
    %p237 = scmp.lt.s32.totalorder %s11, 2
    // Predicated region
    $region29: #{_lambda_.20} parent=5 // pred_check
      %p238 = pneg %p237
    $region30: #{_lambda_.20} parent=5 // pred_check_branch
      %240 = sbr.rel (%p238) target = $region32
    $region31: #{_lambda_.20} parent=5 // pred_region
      // Predicated region
      $region33: #{_lambda_.20} parent=31 // pred_check
        %p241 = pneg %p52
      $region34: #{_lambda_.20} parent=31 // pred_check_branch
        %243 = sbr.rel (%p241) target = $region36
      $region35: #{_lambda_.20} parent=31 // pred_region
        %s244 = smul.u32 8, %s18
        %p245 = scmp.lt.s32.totalorder %s244, 15
        %s246 = scalar_select %p245, %s244, 15
        %p247 = scmp.lt.s32.totalorder %s20, 0
        %s248 = scalar_select %p247, %s20, 0
        %s249 = sadd.s32 %s248, %s246
        %s250 = smul.addr %s249, 8
        %s251 = scalar_lea.vmem %s0, %s250
        %s252 = smul.u32 8, %s18
      $region36: #{_lambda_.20} parent=31 // pred_fallthru
        _
    $region32: #{_lambda_.20} parent=5 // pred_fallthru
      _
    %p253 = scmp.le.s32.totalorder 1, %s11
    %p254 = scmp.lt.s32.totalorder %s11, 3
    %p255 = pnand %p253, %p254
    %p256 = pneg %p255
    // Predicated region
    $region37: #{_lambda_.20} parent=5 // pred_check
      _
    $region38: #{_lambda_.20} parent=5 // pred_check_branch
      %258 = sbr.rel (%p255) target = $region40
    $region39: #{_lambda_.20} parent=5 // pred_region
      %s259 = ssub.s32 %s11, 1
      %s260 = smul.u32 8, %s21
      %p261 = scmp.lt.s32.totalorder %s260, 15
      %s262 = scalar_select %p261, %s260, 15
      %p263 = scmp.lt.s32.totalorder %s23, 0
      %s264 = scalar_select %p263, %s23, 0
      %s265 = sadd.s32 %s264, %s262
      %s266 = smul.addr %s265, 8
      %s267 = scalar_lea.vmem %s0, %s266
      %p268 = pneg %p58
      %p269 = pneg %p55
      %s270 = smul.u32 16, %s23
      %p271 = scmp.lt.s32.totalorder %s270, 15
      %s272 = scalar_select %p271, %s270, 15
      %p273 = scmp.lt.s32.totalorder %s22, 0
      %s274 = scalar_select %p273, %s22, 0
      %s275 = sadd.s32 %s274, %s272
      %s276 = smul.addr %s275, 4
      %s277 = scalar_lea.vmem %s1, %s276
      %p278 = pneg %p86
      %p279 = pneg %p83
      %p280 = scmp.lt.s32.totalorder %s22, 0
      %s281 = scalar_select %p280, %s22, 0
      %s282 = scalar_lea.vmem %s2, %s281
      %p283 = pneg %p112
      %p284 = pneg %p109
      %p285 = scmp.lt.s32.totalorder %s23, 0
      %s286 = scalar_select %p285, %s23, 0
      %s287 = scalar_lea.vmem %s3, %s286
      %p288 = pneg %p138
      %p289 = pneg %p135
      %p290 = scmp.lt.s32.totalorder %s23, 0
      %s291 = scalar_select %p290, %s23, 0
      %s292 = scalar_lea.vmem %s4, %s291
      %p293 = pneg %p164
      %p294 = pneg %p161
      %p295 = pneg %p192
      %p296 = pneg %p189
      %s297 = smul.u32 8, %s21
      %p298 = scmp.lt.s32.totalorder %s297, 15
      %s299 = scalar_select %p298, %s297, 15
      %p300 = scmp.lt.s32.totalorder %s22, 0
      %s301 = scalar_select %p300, %s22, 0
      %s302 = sadd.s32 %s301, %s299
      %s303 = smul.addr %s302, 8
      %s304 = scalar_lea.vmem %s5, %s303
      %s305 = smul.u32 8, %s21
      %p306 = scmp.lt.s32.totalorder %s305, 15
      %s307 = scalar_select %p306, %s305, 15
      %p308 = scmp.lt.s32.totalorder %s23, 0
      %s309 = scalar_select %p308, %s23, 0
      %s310 = sadd.s32 %s309, %s307
      %s311 = smul.addr %s310, 8
      %s312 = scalar_lea.vmem %s0, %s311
      %s313 = smul.u32 8, %s21
      %s314 = smul.u32 16, %s23
      %p315 = scmp.lt.s32.totalorder %s314, 15
      %s316 = scalar_select %p315, %s314, 15
      %p317 = scmp.lt.s32.totalorder %s22, 0
      %s318 = scalar_select %p317, %s22, 0
      %s319 = sadd.s32 %s318, %s316
      %s320 = smul.addr %s319, 4
      %s321 = scalar_lea.vmem %s1, %s320
      %s322 = smul.u32 16, %s23
      %p323 = scmp.lt.s32.totalorder %s22, 0
      %s324 = scalar_select %p323, %s22, 0
      %s325 = scalar_lea.vmem %s2, %s324
      %p326 = scmp.lt.s32.totalorder %s23, 0
      %s327 = scalar_select %p326, %s23, 0
      %s328 = scalar_lea.vmem %s3, %s327
      %p329 = scmp.lt.s32.totalorder %s23, 0
      %s330 = scalar_select %p329, %s23, 0
      %s331 = scalar_lea.vmem %s4, %s330
      %s332 = smul.u32 8, %s21
      %p333 = scmp.lt.s32.totalorder %s332, 15
      %s334 = scalar_select %p333, %s332, 15
      %p335 = scmp.lt.s32.totalorder %s22, 0
      %s336 = scalar_select %p335, %s22, 0
      %s337 = sadd.s32 %s336, %s334
      %s338 = smul.addr %s337, 8
      %s339 = scalar_lea.vmem %s5, %s338
      %s340 = smul.u32 8, %s21
      %p341 = scmp.eq.s32.totalorder %s23, 0
      // Predicated region
      $region41: #{_lambda_.20} parent=39 // pred_check
        %p342 = pneg %p341
      $region42: #{_lambda_.20} parent=39 // pred_check_branch
        %344 = sbr.rel (%p342) target = $region44
      $region43: #{_lambda_.20} parent=39 // pred_region
        %345 = vst [vmem:[#allocation2] sm:$0xff] 0.0
        %346 = vst [vmem:[#allocation2 + $0x8] sm:$0xff] 0.0
        %347 = vst [vmem:[#allocation2 + $0x10] sm:$0xff] 0.0
        %348 = vst [vmem:[#allocation2 + $0x18] sm:$0xff] 0.0
        %349 = vst [vmem:[#allocation2 + $0x20] sm:$0xff] 0.0
        %350 = vst [vmem:[#allocation2 + $0x28] sm:$0xff] 0.0
        %351 = vst [vmem:[#allocation2 + $0x30] sm:$0xff] 0.0
        %352 = vst [vmem:[#allocation2 + $0x38] sm:$0xff] 0.0
      $region44: #{_lambda_.20} parent=39 // pred_fallthru
        _
      %v353 = vld [vmem:[%s312] sm:$0xff]
      %v354 = vld [vmem:[%s312 + $0x8] sm:$0xff]
      %v355 = vld [vmem:[%s312 + $0x10] sm:$0xff]
      %v356 = vld [vmem:[%s312 + $0x18] sm:$0xff]
      %v357 = vld [vmem:[%s312 + $0x20] sm:$0xff]
      %v358 = vld [vmem:[%s312 + $0x28] sm:$0xff]
      %v359 = vld [vmem:[%s312 + $0x30] sm:$0xff]
      %v360 = vld [vmem:[%s312 + $0x38] sm:$0xff]
      %v361 = vlaneseq
      %v362 = vand.u32 %v361, 127
      %vm363 = vcmp.lt.s32.totalorder %v362, 32
      %v364 = vsel %vm363, 1, 0
      %v365 = vcvt.s32.f32 %v364
      %366 = vadd.xlane.f32.xlu0 %v353
      %v367 = vpop.xlane.xlu0 %366
      %368 = vadd.xlane.f32.xlu0 %v354
      %v369 = vpop.xlane.xlu0 %368
      %370 = vadd.xlane.f32.xlu0 %v355
      %v371 = vpop.xlane.xlu0 %370
      %372 = vadd.xlane.f32.xlu0 %v356
      %v373 = vpop.xlane.xlu0 %372
      %374 = vadd.xlane.f32.xlu0 %v357
      %v375 = vpop.xlane.xlu0 %374
      %376 = vadd.xlane.f32.xlu0 %v358
      %v377 = vpop.xlane.xlu0 %376
      %378 = vadd.xlane.f32.xlu0 %v359
      %v379 = vpop.xlane.xlu0 %378
      %380 = vadd.xlane.f32.xlu0 %v360
      %v381 = vpop.xlane.xlu0 %380
      %v382 = vmul.f32 %v367, 0.03125
      %v383 = vmul.f32 %v369, 0.03125
      %v384 = vmul.f32 %v371, 0.03125
      %v385 = vmul.f32 %v373, 0.03125
      %v386 = vmul.f32 %v375, 0.03125
      %v387 = vmul.f32 %v377, 0.03125
      %v388 = vmul.f32 %v379, 0.03125
      %v389 = vmul.f32 %v381, 0.03125
      %v390 = vsub.f32 %v353, %v382
      %v391 = vsub.f32 %v354, %v383
      %v392 = vsub.f32 %v355, %v384
      %v393 = vsub.f32 %v356, %v385
      %v394 = vsub.f32 %v357, %v386
      %v395 = vsub.f32 %v358, %v387
      %v396 = vsub.f32 %v359, %v388
      %v397 = vsub.f32 %v360, %v389
      %v398 = vmul.f32 %v390, %v365
      %v399 = vmul.f32 %v391, %v365
      %v400 = vmul.f32 %v392, %v365
      %v401 = vmul.f32 %v393, %v365
      %v402 = vmul.f32 %v394, %v365
      %v403 = vmul.f32 %v395, %v365
      %v404 = vmul.f32 %v396, %v365
      %v405 = vmul.f32 %v397, %v365
      %v406 = vmul.f32 %v398, %v398
      %v407 = vmul.f32 %v399, %v399
      %v408 = vmul.f32 %v400, %v400
      %v409 = vmul.f32 %v401, %v401
      %v410 = vmul.f32 %v402, %v402
      %v411 = vmul.f32 %v403, %v403
      %v412 = vmul.f32 %v404, %v404
      %v413 = vmul.f32 %v405, %v405
      %414 = vadd.xlane.f32.xlu0 %v406
      %v415 = vpop.xlane.xlu0 %414
      %416 = vadd.xlane.f32.xlu0 %v407
      %v417 = vpop.xlane.xlu0 %416
      %418 = vadd.xlane.f32.xlu0 %v408
      %v419 = vpop.xlane.xlu0 %418
      %420 = vadd.xlane.f32.xlu0 %v409
      %v421 = vpop.xlane.xlu0 %420
      %422 = vadd.xlane.f32.xlu0 %v410
      %v423 = vpop.xlane.xlu0 %422
      %424 = vadd.xlane.f32.xlu0 %v411
      %v425 = vpop.xlane.xlu0 %424
      %426 = vadd.xlane.f32.xlu0 %v412
      %v427 = vpop.xlane.xlu0 %426
      %428 = vadd.xlane.f32.xlu0 %v413
      %v429 = vpop.xlane.xlu0 %428
      %v430 = vmul.f32 %v415, 0.03125
      %v431 = vmul.f32 %v417, 0.03125
      %v432 = vmul.f32 %v419, 0.03125
      %v433 = vmul.f32 %v421, 0.03125
      %v434 = vmul.f32 %v423, 0.03125
      %v435 = vmul.f32 %v425, 0.03125
      %v436 = vmul.f32 %v427, 0.03125
      %v437 = vmul.f32 %v429, 0.03125
      %v438 = vadd.f32 %v430, 1e-05
      %v439 = vadd.f32 %v431, 1e-05
      %v440 = vadd.f32 %v432, 1e-05
      %v441 = vadd.f32 %v433, 1e-05
      %v442 = vadd.f32 %v434, 1e-05
      %v443 = vadd.f32 %v435, 1e-05
      %v444 = vadd.f32 %v436, 1e-05
      %v445 = vadd.f32 %v437, 1e-05
      %v446 = vrsqrt.pop %v438
      %v447 = vmul.f32 %v446, %v438
      %v448 = vmul.f32 %v447, %v446
      %v449 = vmul.f32 0.5, %v448
      %v450 = vsub.f32 1.5, %v449
      %v451 = vmul.f32 %v446, %v450
      %vm452 = vweird.f32 %v438
      %vm453 = vweird.f32 %v446
      %vm454 = vmor %vm452, %vm453
      %v455 = vsel %vm454, %v446, %v451
      %v456 = vrsqrt.pop %v439
      %v457 = vmul.f32 %v456, %v439
      %v458 = vmul.f32 %v457, %v456
      %v459 = vmul.f32 0.5, %v458
      %v460 = vsub.f32 1.5, %v459
      %v461 = vmul.f32 %v456, %v460
      %vm462 = vweird.f32 %v439
      %vm463 = vweird.f32 %v456
      %vm464 = vmor %vm462, %vm463
      %v465 = vsel %vm464, %v456, %v461
      %v466 = vrsqrt.pop %v440
      %v467 = vmul.f32 %v466, %v440
      %v468 = vmul.f32 %v467, %v466
      %v469 = vmul.f32 0.5, %v468
      %v470 = vsub.f32 1.5, %v469
      %v471 = vmul.f32 %v466, %v470
      %vm472 = vweird.f32 %v440
      %vm473 = vweird.f32 %v466
      %vm474 = vmor %vm472, %vm473
      %v475 = vsel %vm474, %v466, %v471
      %v476 = vrsqrt.pop %v441
      %v477 = vmul.f32 %v476, %v441
      %v478 = vmul.f32 %v477, %v476
      %v479 = vmul.f32 0.5, %v478
      %v480 = vsub.f32 1.5, %v479
      %v481 = vmul.f32 %v476, %v480
      %vm482 = vweird.f32 %v441
      %vm483 = vweird.f32 %v476
      %vm484 = vmor %vm482, %vm483
      %v485 = vsel %vm484, %v476, %v481
      %v486 = vrsqrt.pop %v442
      %v487 = vmul.f32 %v486, %v442
      %v488 = vmul.f32 %v487, %v486
      %v489 = vmul.f32 0.5, %v488
      %v490 = vsub.f32 1.5, %v489
      %v491 = vmul.f32 %v486, %v490
      %vm492 = vweird.f32 %v442
      %vm493 = vweird.f32 %v486
      %vm494 = vmor %vm492, %vm493
      %v495 = vsel %vm494, %v486, %v491
      %v496 = vrsqrt.pop %v443
      %v497 = vmul.f32 %v496, %v443
      %v498 = vmul.f32 %v497, %v496
      %v499 = vmul.f32 0.5, %v498
      %v500 = vsub.f32 1.5, %v499
      %v501 = vmul.f32 %v496, %v500
      %vm502 = vweird.f32 %v443
      %vm503 = vweird.f32 %v496
      %vm504 = vmor %vm502, %vm503
      %v505 = vsel %vm504, %v496, %v501
      %v506 = vrsqrt.pop %v444
      %v507 = vmul.f32 %v506, %v444
      %v508 = vmul.f32 %v507, %v506
      %v509 = vmul.f32 0.5, %v508
      %v510 = vsub.f32 1.5, %v509
      %v511 = vmul.f32 %v506, %v510
      %vm512 = vweird.f32 %v444
      %vm513 = vweird.f32 %v506
      %vm514 = vmor %vm512, %vm513
      %v515 = vsel %vm514, %v506, %v511
      %v516 = vrsqrt.pop %v445
      %v517 = vmul.f32 %v516, %v445
      %v518 = vmul.f32 %v517, %v516
      %v519 = vmul.f32 0.5, %v518
      %v520 = vsub.f32 1.5, %v519
      %v521 = vmul.f32 %v516, %v520
      %vm522 = vweird.f32 %v445
      %vm523 = vweird.f32 %v516
      %vm524 = vmor %vm522, %vm523
      %v525 = vsel %vm524, %v516, %v521
      %v526 = vmul.f32 %v398, %v455
      %v527 = vmul.f32 %v399, %v465
      %v528 = vmul.f32 %v400, %v475
      %v529 = vmul.f32 %v401, %v485
      %v530 = vmul.f32 %v402, %v495
      %v531 = vmul.f32 %v403, %v505
      %v532 = vmul.f32 %v404, %v515
      %v533 = vmul.f32 %v405, %v525
      %v534 = vld [vmem:[%s328] sm:$0x1]
      %v536 = vperm.slane %v534, 0
      %v538 = vmul.f32 %v526, %v536
      %v539 = vmul.f32 %v527, %v536
      %v540 = vmul.f32 %v528, %v536
      %v541 = vmul.f32 %v529, %v536
      %v542 = vmul.f32 %v530, %v536
      %v543 = vmul.f32 %v531, %v536
      %v544 = vmul.f32 %v532, %v536
      %v545 = vmul.f32 %v533, %v536
      %v546 = vld [vmem:[%s331] sm:$0x1]
      %v548 = vperm.slane %v546, 0
      %v550 = vadd.f32 %v538, %v548
      %v551 = vadd.f32 %v539, %v548
      %v552 = vadd.f32 %v540, %v548
      %v553 = vadd.f32 %v541, %v548
      %v554 = vadd.f32 %v542, %v548
      %v555 = vadd.f32 %v543, %v548
      %v556 = vadd.f32 %v544, %v548
      %v557 = vadd.f32 %v545, %v548
      %v558 = vld [vmem:[#allocation2] sm:$0xff]
      %v559 = vld [vmem:[#allocation2 + $0x8] sm:$0xff]
      %v560 = vld [vmem:[#allocation2 + $0x10] sm:$0xff]
      %v561 = vld [vmem:[#allocation2 + $0x18] sm:$0xff]
      %v562 = vld [vmem:[#allocation2 + $0x20] sm:$0xff]
      %v563 = vld [vmem:[#allocation2 + $0x28] sm:$0xff]
      %v564 = vld [vmem:[#allocation2 + $0x30] sm:$0xff]
      %v565 = vld [vmem:[#allocation2 + $0x38] sm:$0xff]
      %v566 = vpack.c.bf16 %v551, %v550
      %v567 = vpack.c.bf16 %v553, %v552
      %v568 = vpack.c.bf16 %v555, %v554
      %v569 = vpack.c.bf16 %v557, %v556
      %v570 = vld [vmem:[%s321] sm:$0xf]
      %v571 = vld [vmem:[%s321 + $0x4] sm:$0xf]
      %v572 = vld [vmem:[%s321 + $0x8] sm:$0xf]
      %v573 = vld [vmem:[%s321 + $0xc] sm:$0xf]
      %v574 = vld [vmem:[%s321 + $0x10] sm:$0xf]
      %v575 = vld [vmem:[%s321 + $0x14] sm:$0xf]
      %v576 = vld [vmem:[%s321 + $0x18] sm:$0xf]
      %v577 = vld [vmem:[%s321 + $0x1c] sm:$0xf]
      %v578 = vld [vmem:[%s321 + $0x20] sm:$0xf]
      %v579 = vld [vmem:[%s321 + $0x24] sm:$0xf]
      %v580 = vld [vmem:[%s321 + $0x28] sm:$0xf]
      %v581 = vld [vmem:[%s321 + $0x2c] sm:$0xf]
      %v582 = vld [vmem:[%s321 + $0x30] sm:$0xf]
      %v583 = vld [vmem:[%s321 + $0x34] sm:$0xf]
      %v584 = vld [vmem:[%s321 + $0x38] sm:$0xf]
      %v585 = vld [vmem:[%s321 + $0x3c] sm:$0xf]
      %v602 = vunpack.c.l.b16 %v570
      %v603 = vunpack.c.l.b16 %v571
      %v604 = vunpack.c.l.b16 %v572
      %v605 = vunpack.c.l.b16 %v573
      %v606 = vunpack.c.l.b16 %v574
      %v607 = vunpack.c.l.b16 %v575
      %v608 = vunpack.c.l.b16 %v576
      %v609 = vunpack.c.l.b16 %v577
      %v610 = vunpack.c.l.b16 %v578
      %v611 = vunpack.c.l.b16 %v579
      %v612 = vunpack.c.l.b16 %v580
      %v613 = vunpack.c.l.b16 %v581
      %v614 = vunpack.c.l.b16 %v582
      %v615 = vunpack.c.l.b16 %v583
      %v616 = vunpack.c.l.b16 %v584
      %v617 = vunpack.c.l.b16 %v585
      %v618 = vpack.c.b16 %v603, %v602
      %v619 = vpack.c.b16 %v605, %v604
      %v620 = vpack.c.b16 %v607, %v606
      %v621 = vpack.c.b16 %v609, %v608
      %v622 = vpack.c.b16 %v611, %v610
      %v623 = vpack.c.b16 %v613, %v612
      %v624 = vpack.c.b16 %v615, %v614
      %v625 = vpack.c.b16 %v617, %v616
      %634 = vmatpush.bf16.msra.mxu0 %v625
      %635 = vmatpush.bf16.msra.mxu0 %v624
      %636 = vmatpush.bf16.msra.mxu0 %v623
      %637 = vmatpush.bf16.msra.mxu0 %v622
      %638 = vmatpush.bf16.msra.mxu0 %v621
      %639 = vmatpush.bf16.msra.mxu0 %v620
      %640 = vmatpush.bf16.msra.mxu0 %v619
      %641 = vmatpush.bf16.msra.mxu0 %v618
      %642 = vmatmul.bf16.gmra.mxu0 %v566
      %v643 = vpop.f32.mrf.mxu0
      %v644 = vadd.f32 0.0, %v643
      %v645 = vpop.f32.mrf.mxu0
      %v646 = vadd.f32 0.0, %v645
      %647 = vmatmul.bf16.gmra.mxu0 %v567
      %v648 = vpop.f32.mrf.mxu0
      %v649 = vadd.f32 0.0, %v648
      %v650 = vpop.f32.mrf.mxu0
      %v651 = vadd.f32 0.0, %v650
      %652 = vmatmul.bf16.gmra.mxu0 %v568
      %v653 = vpop.f32.mrf.mxu0
      %v654 = vadd.f32 0.0, %v653
      %v655 = vpop.f32.mrf.mxu0
      %v656 = vadd.f32 0.0, %v655
      %657 = vmatmul.bf16.gmra.mxu0 %v569
      %v658 = vpop.f32.mrf.mxu0
      %v659 = vadd.f32 0.0, %v658
      %v660 = vpop.f32.mrf.mxu0
      %v661 = vadd.f32 0.0, %v660
      %662 = vdwg.mxu0
      %v663 = vadd.f32 %v558, %v644
      %v664 = vadd.f32 %v559, %v646
      %v665 = vadd.f32 %v560, %v649
      %v666 = vadd.f32 %v561, %v651
      %v667 = vadd.f32 %v562, %v654
      %v668 = vadd.f32 %v563, %v656
      %v669 = vadd.f32 %v564, %v659
      %v670 = vadd.f32 %v565, %v661
      %671 = vst [vmem:[#allocation2] sm:$0xff] %v663
      %672 = vst [vmem:[#allocation2 + $0x8] sm:$0xff] %v664
      %673 = vst [vmem:[#allocation2 + $0x10] sm:$0xff] %v665
      %674 = vst [vmem:[#allocation2 + $0x18] sm:$0xff] %v666
      %675 = vst [vmem:[#allocation2 + $0x20] sm:$0xff] %v667
      %676 = vst [vmem:[#allocation2 + $0x28] sm:$0xff] %v668
      %677 = vst [vmem:[#allocation2 + $0x30] sm:$0xff] %v669
      %678 = vst [vmem:[#allocation2 + $0x38] sm:$0xff] %v670
      // Predicated region
      $region45: #{_lambda_.20} parent=39 // pred_check
        %p679 = pneg %p341
      $region46: #{_lambda_.20} parent=39 // pred_check_branch
        %681 = sbr.rel (%p679) target = $region48
      $region47: #{_lambda_.20} parent=39 // pred_region
        %v682 = vld [vmem:[#allocation2] sm:$0xff]
        %v683 = vld [vmem:[#allocation2 + $0x8] sm:$0xff]
        %v684 = vld [vmem:[#allocation2 + $0x10] sm:$0xff]
        %v685 = vld [vmem:[#allocation2 + $0x18] sm:$0xff]
        %v686 = vld [vmem:[#allocation2 + $0x20] sm:$0xff]
        %v687 = vld [vmem:[#allocation2 + $0x28] sm:$0xff]
        %v688 = vld [vmem:[#allocation2 + $0x30] sm:$0xff]
        %v689 = vld [vmem:[#allocation2 + $0x38] sm:$0xff]
        %v690 = vld [vmem:[%s325] sm:$0x1]
        %v692 = vperm.slane %v690, 0
        %v694 = vadd.f32 %v682, %v692
        %v695 = vadd.f32 %v683, %v692
        %v696 = vadd.f32 %v684, %v692
        %v697 = vadd.f32 %v685, %v692
        %v698 = vadd.f32 %v686, %v692
        %v699 = vadd.f32 %v687, %v692
        %v700 = vadd.f32 %v688, %v692
        %v701 = vadd.f32 %v689, %v692
        %702 = vst [vmem:[%s339] sm:$0xff] %v694
        %703 = vst [vmem:[%s339 + $0x8] sm:$0xff] %v695
        %704 = vst [vmem:[%s339 + $0x10] sm:$0xff] %v696
        %705 = vst [vmem:[%s339 + $0x18] sm:$0xff] %v697
        %706 = vst [vmem:[%s339 + $0x20] sm:$0xff] %v698
        %707 = vst [vmem:[%s339 + $0x28] sm:$0xff] %v699
        %708 = vst [vmem:[%s339 + $0x30] sm:$0xff] %v700
        %709 = vst [vmem:[%s339 + $0x38] sm:$0xff] %v701
      $region48: #{_lambda_.20} parent=39 // pred_fallthru
        _
      %s710 = smul.u32 8, %s21
      %p711 = scmp.lt.s32.totalorder %s710, 15
      %s712 = scalar_select %p711, %s710, 15
      %p713 = scmp.lt.s32.totalorder %s22, 0
      %s714 = scalar_select %p713, %s22, 0
      %s715 = sadd.s32 %s714, %s712
      %s716 = smul.addr %s715, 8
      %s717 = scalar_lea.vmem %s5, %s716
      // Predicated region
      $region49: #{_lambda_.20} parent=39 // pred_check
        %p718 = pneg %p189
      $region50: #{_lambda_.20} parent=39 // pred_check_branch
        %720 = sbr.rel (%p718) target = $region52
      $region51: #{_lambda_.20} parent=39 // pred_region
        %s721 = smul.u32 8, %s21
      $region52: #{_lambda_.20} parent=39 // pred_fallthru
        _
    $region40: #{_lambda_.20} parent=5 // pred_fallthru
      _
    %p722 = scmp.le.s32.totalorder 2, %s11
    // Predicated region
    $region53: #{_lambda_.20} parent=5 // pred_check
      %p723 = pneg %p722
    $region54: #{_lambda_.20} parent=5 // pred_check_branch
      %725 = sbr.rel (%p723) target = $region56
    $region55: #{_lambda_.20} parent=5 // pred_region
      %s726 = ssub.s32 %s11, 2
      // Predicated region
      $region57: #{_lambda_.20} parent=55 // pred_check
        %p727 = pneg %p195
      $region58: #{_lambda_.20} parent=55 // pred_check_branch
        %729 = sbr.rel (%p727) target = $region60
      $region59: #{_lambda_.20} parent=55 // pred_region
        %s730 = smul.u32 8, %s24
        %p731 = scmp.lt.s32.totalorder %s730, 15
        %s732 = scalar_select %p731, %s730, 15
        %p733 = scmp.lt.s32.totalorder %s25, 0
        %s734 = scalar_select %p733, %s25, 0
        %s735 = sadd.s32 %s734, %s732
        %s736 = smul.addr %s735, 8
        %s737 = scalar_lea.vmem %s5, %s736
      $region60: #{_lambda_.20} parent=55 // pred_fallthru
        _
    $region56: #{_lambda_.20} parent=5 // pred_fallthru
      _
  $region6: #{_lambda_.20} parent=0 // loop_footer
    %s15 = sadd.s32 1, %s11
  $region7: #{_lambda_.20} parent=0 // loop_footer_branch
    %10 = sbr.rel target = $region3
  $region8: #{_lambda_.20} parent=0 // loop_exit
    _

// kernel: _lambda_.21
$region0: #{_lambda_.21}
  #allocation0 [shape = 'u32[]', space=smem, size = 0x4, offset = 0x4, fixed_abs, tag = 'smem constant byte address 0x4 - core index']
  #allocation1 [shape = 'u32[72,128]{1,0:T(1,128)}', space=vmem, size = 0x9000, scoped, tag = 'internal scratch']
  %s0 = inlined_call_operand.vmem [shape: f32[2,8,256], index: 0, kind: input, shape index: {}]
  %s1 = inlined_call_operand.vmem [shape: f32[2,8,256], index: 1, kind: input, shape index: {}]
  %s2 = inlined_call_operand.vmem [shape: f32[2,8,256], index: 2, kind: input, shape index: {}]
  %s3 = inlined_call_operand.vmem [shape: f32[2,8,256], index: 3, kind: output, shape index: {}]
  %s4 = sld [smem:[#allocation0]]
  $region193: #{_lambda_.21} parent=0
    _
  %s6 = ssub.s32 1, %s4
  %s7 = scalar_select 0, %s6, %s4
  $region1: #{_lambda_.21} parent=0
    #allocation2 [shape = 'u8[16384]{0}', space=vmem, size = 0x4000, scoped, tag = 'input window, operand 0']
    #allocation3 [shape = 'u8[16384]{0}', space=vmem, size = 0x4000, scoped, tag = 'input window, operand 1']
    #allocation4 [shape = 'u8[16384]{0}', space=vmem, size = 0x4000, scoped, tag = 'input window, operand 2']
    #allocation5 [shape = 'u8[16384]{0}', space=vmem, size = 0x4000, scoped, tag = 'output window, operand 0']
    loop: start=0, step=1, limit=4
    $region2: #{_lambda_.21} parent=1 // loop_pre_header
      _
    $region3: #{_lambda_.21} parent=1 // loop_header
      %s9 = sphi 0, %s13
      %p10 = scmp.ge.s32.totalorder %s9, 4
      %s19 = sphi 0, %s21
      %s22 = sphi 0, %s19
      %s23 = sphi 0, %s22
      %s39 = sphi 0, %s23
      %s45 = sphi 0, %s47
      %s48 = sphi 0, %s45
      %s49 = sphi 0, %s48
      %s65 = sphi 0, %s49
      %s71 = sphi 0, %s73
      %s74 = sphi 0, %s71
      %s75 = sphi 0, %s74
      %s91 = sphi 0, %s75
      %s97 = sphi 0, %s99
      %s100 = sphi 0, %s97
      %s101 = sphi 0, %s100
      %s117 = sphi 0, %s101
    $region4: #{_lambda_.21} parent=1 // loop_header_branch
      %12 = sbr.rel (%p10) target = $region8
    $region5: #{_lambda_.21} parent=1 // loop_body
      %s14 = ssub.s32 %s9, 1
      %s15 = ssub.s32 %s9, 2
      %s16 = sadd.s32 %s9, 1
      %s17 = ssub.s32 %s9, %s16
      %p18 = scmp.eq.s32.totalorder %s17, 0
      %s20 = sadd.s32 %s19, 1
      %s21 = scalar_select %p18, %s19, %s20
      %p24 = pneg %p18
      %p25 = scmp.eq.s32.totalorder %s9, 1
      %p26 = por %p24, %p25
      %p27 = scmp.ne.s32.totalorder %s19, %s22
      %p28 = scmp.eq.s32.totalorder %s9, 0
      %p29 = por %p27, %p28
      %p30 = scmp.ne.s32.totalorder %s19, %s22
      %p31 = scmp.eq.s32.totalorder %s14, 1
      %p32 = por %p30, %p31
      %p33 = scmp.ne.s32.totalorder %s22, %s23
      %p34 = scmp.eq.s32.totalorder %s14, 0
      %p35 = por %p33, %p34
      %p36 = scmp.ne.s32.totalorder %s22, %s23
      %p37 = scmp.eq.s32.totalorder %s15, 1
      %p38 = por %p36, %p37
      %p40 = scmp.ne.s32.totalorder %s23, %s39
      %p41 = scmp.eq.s32.totalorder %s15, 0
      %p42 = por %p40, %p41
      %s43 = ssub.s32 %s9, %s16
      %p44 = scmp.eq.s32.totalorder %s43, 0
      %s46 = sadd.s32 %s45, 1
      %s47 = scalar_select %p44, %s45, %s46
      %p50 = pneg %p44
      %p51 = scmp.eq.s32.totalorder %s9, 1
      %p52 = por %p50, %p51
      %p53 = scmp.ne.s32.totalorder %s45, %s48
      %p54 = scmp.eq.s32.totalorder %s9, 0
      %p55 = por %p53, %p54
      %p56 = scmp.ne.s32.totalorder %s45, %s48
      %p57 = scmp.eq.s32.totalorder %s14, 1
      %p58 = por %p56, %p57
      %p59 = scmp.ne.s32.totalorder %s48, %s49
      %p60 = scmp.eq.s32.totalorder %s14, 0
      %p61 = por %p59, %p60
      %p62 = scmp.ne.s32.totalorder %s48, %s49
      %p63 = scmp.eq.s32.totalorder %s15, 1
      %p64 = por %p62, %p63
      %p66 = scmp.ne.s32.totalorder %s49, %s65
      %p67 = scmp.eq.s32.totalorder %s15, 0
      %p68 = por %p66, %p67
      %s69 = ssub.s32 %s9, %s16
      %p70 = scmp.eq.s32.totalorder %s69, 0
      %s72 = sadd.s32 %s71, 1
      %s73 = scalar_select %p70, %s71, %s72
      %p76 = pneg %p70
      %p77 = scmp.eq.s32.totalorder %s9, 1
      %p78 = por %p76, %p77
      %p79 = scmp.ne.s32.totalorder %s71, %s74
      %p80 = scmp.eq.s32.totalorder %s9, 0
      %p81 = por %p79, %p80
      %p82 = scmp.ne.s32.totalorder %s71, %s74
      %p83 = scmp.eq.s32.totalorder %s14, 1
      %p84 = por %p82, %p83
      %p85 = scmp.ne.s32.totalorder %s74, %s75
      %p86 = scmp.eq.s32.totalorder %s14, 0
      %p87 = por %p85, %p86
      %p88 = scmp.ne.s32.totalorder %s74, %s75
      %p89 = scmp.eq.s32.totalorder %s15, 1
      %p90 = por %p88, %p89
      %p92 = scmp.ne.s32.totalorder %s75, %s91
      %p93 = scmp.eq.s32.totalorder %s15, 0
      %p94 = por %p92, %p93
      %s95 = ssub.s32 %s9, %s16
      %p96 = scmp.eq.s32.totalorder %s95, 0
      %s98 = sadd.s32 %s97, 1
      %s99 = scalar_select %p96, %s97, %s98
      %p102 = pneg %p96
      %p103 = scmp.eq.s32.totalorder %s9, 1
      %p104 = por %p102, %p103
      %p105 = scmp.ne.s32.totalorder %s97, %s100
      %p106 = scmp.eq.s32.totalorder %s9, 0
      %p107 = por %p105, %p106
      %p108 = scmp.ne.s32.totalorder %s97, %s100
      %p109 = scmp.eq.s32.totalorder %s14, 1
      %p110 = por %p108, %p109
      %p111 = scmp.ne.s32.totalorder %s100, %s101
      %p112 = scmp.eq.s32.totalorder %s14, 0
      %p113 = por %p111, %p112
      %p114 = scmp.ne.s32.totalorder %s100, %s101
      %p115 = scmp.eq.s32.totalorder %s15, 1
      %p116 = por %p114, %p115
      %p118 = scmp.ne.s32.totalorder %s101, %s117
      %p119 = scmp.eq.s32.totalorder %s15, 0
      %p120 = por %p118, %p119
      %p121 = scmp.le.s32.totalorder 1, %s9
      %p122 = scmp.lt.s32.totalorder %s9, 3
      %p123 = pnand %p121, %p122
      %p124 = pneg %p123
      // Predicated region
      $region9: #{_lambda_.21} parent=5 // pred_check
        _
      $region10: #{_lambda_.21} parent=5 // pred_check_branch
        %126 = sbr.rel (%p123) target = $region12
      $region11: #{_lambda_.21} parent=5 // pred_region
        %s127 = ssub.s32 %s9, 1
      $region12: #{_lambda_.21} parent=5 // pred_fallthru
        _
      %p128 = scmp.lt.s32.totalorder %s9, 2
      // Predicated region
      $region13: #{_lambda_.21} parent=5 // pred_check
        %p129 = pneg %p128
      $region14: #{_lambda_.21} parent=5 // pred_check_branch
        %131 = sbr.rel (%p129) target = $region16
      $region15: #{_lambda_.21} parent=5 // pred_region
        // Predicated region
        $region17: #{_lambda_.21} parent=15 // pred_check
          %p132 = pneg %p29
        $region18: #{_lambda_.21} parent=15 // pred_check_branch
          %134 = sbr.rel (%p132) target = $region20
        $region19: #{_lambda_.21} parent=15 // pred_region
          %s135 = sand.u32 %s19, 1
          %s136 = sand.u32 %s19, 1
          %s137 = smul.addr %s136, 16
          %s138 = scalar_lea.vmem [#allocation2], %s137
          %s139 = smul.addr %s9, 8
          %s140 = scalar_lea.vmem %s0, %s139
          // Predicated region
          $region21: #{_lambda_.21} parent=19 // pred_check
            _
          $region22: #{_lambda_.21} parent=19 // pred_check_branch
            %142 = sbr.rel (0) target = $region24
          $region23: #{_lambda_.21} parent=19 // pred_region
            // Predicated region
            $region25: #{_lambda_.21} parent=23 // pred_check
              _
            $region26: #{_lambda_.21} parent=23 // pred_check_branch
              %144 = sbr.rel (0) target = $region28
            $region27: #{_lambda_.21} parent=23 // pred_region
              // Predicated region
              $region40: #{_lambda_.21} parent=27 // pred_check
                _
              $region41: #{_lambda_.21} parent=27 // pred_check_branch
                %162 = sbr.rel (0) target = $region43
              $region42: #{_lambda_.21} parent=27 // pred_region
                loop: start=0, step=1, limit=1
                $region44: #{_lambda_.21} parent=42 // loop_pre_header
                  _
                $region45: #{_lambda_.21} parent=42 // loop_header
                  %s164 = sphi 0, %s168
                  %p165 = scmp.ge.s32.totalorder %s164, 1
                  %s169 = sphi %s140, %s140
                  %s170 = sphi %s138, %s138
                $region46: #{_lambda_.21} parent=42 // loop_header_branch
                  %167 = sbr.rel (%p165) target = $region50
                $region47: #{_lambda_.21} parent=42 // loop_body
                  %v171 = vld [vmem:[%s169] sm:$0xff]
                  %172 = vst [vmem:[%s170] sm:$0xff] %v171
                  %v173 = vld [vmem:[%s169 + $0x10] sm:$0xff]
                  %174 = vst [vmem:[%s170 + $0x8] sm:$0xff] %v173
                $region48: #{_lambda_.21} parent=42 // loop_footer
                  %s168 = sadd.s32 1, %s164
                $region49: #{_lambda_.21} parent=42 // loop_footer_branch
                  %163 = sbr.rel target = $region45
                $region50: #{_lambda_.21} parent=42 // loop_exit
                  _
              $region43: #{_lambda_.21} parent=27 // pred_fallthru
                _
              // Predicated region
              $region51: #{_lambda_.21} parent=27 // pred_check
                _
              $region52: #{_lambda_.21} parent=27 // pred_check_branch
                %176 = sbr.rel target = $region54
              $region53: #{_lambda_.21} parent=27 // pred_region
                _
              $region54: #{_lambda_.21} parent=27 // pred_fallthru
                _
            $region28: #{_lambda_.21} parent=23 // pred_fallthru
              _
            // Predicated region
            $region29: #{_lambda_.21} parent=23 // pred_check
              _
            $region30: #{_lambda_.21} parent=23 // pred_check_branch
              %146 = sbr.rel target = $region32
            $region31: #{_lambda_.21} parent=23 // pred_region
              %s148 = ssub.s32 256, 1
              loop: start=0, step=1, limit=1
              $region33: #{_lambda_.21} parent=31 // loop_pre_header
                _
              $region34: #{_lambda_.21} parent=31 // loop_header
                %s150 = sphi 0, %s154
                %p151 = scmp.ge.s32.totalorder %s150, 1
                %s155 = sphi %s140, %s140
                %s156 = sphi %s138, %s138
              $region35: #{_lambda_.21} parent=31 // loop_header_branch
                %153 = sbr.rel (%p151) target = $region39
              $region36: #{_lambda_.21} parent=31 // loop_body
                %v157 = vld [vmem:[%s155] sm:%s148]
                %158 = vst [vmem:[%s156] sm:%s148] %v157
                %v159 = vld [vmem:[%s155 + $0x10] sm:%s148]
                %160 = vst [vmem:[%s156 + $0x8] sm:%s148] %v159
              $region37: #{_lambda_.21} parent=31 // loop_footer
                %s154 = sadd.s32 1, %s150
              $region38: #{_lambda_.21} parent=31 // loop_footer_branch
                %149 = sbr.rel target = $region34
              $region39: #{_lambda_.21} parent=31 // loop_exit
                _
            $region32: #{_lambda_.21} parent=23 // pred_fallthru
              _
          $region24: #{_lambda_.21} parent=19 // pred_fallthru
            _
          %177 = vnop
        $region20: #{_lambda_.21} parent=15 // pred_fallthru
          _
        // Predicated region
        $region55: #{_lambda_.21} parent=15 // pred_check
          %p178 = pneg %p55
        $region56: #{_lambda_.21} parent=15 // pred_check_branch
          %180 = sbr.rel (%p178) target = $region58
        $region57: #{_lambda_.21} parent=15 // pred_region
          %s181 = sand.u32 %s45, 1
          %s182 = sand.u32 %s45, 1
          %s183 = smul.addr %s182, 16
          %s184 = scalar_lea.vmem [#allocation3], %s183
          %s185 = smul.addr %s9, 8
          %s186 = scalar_lea.vmem %s1, %s185
          // Predicated region
          $region59: #{_lambda_.21} parent=57 // pred_check
            _
          $region60: #{_lambda_.21} parent=57 // pred_check_branch
            %188 = sbr.rel (0) target = $region62
          $region61: #{_lambda_.21} parent=57 // pred_region
            // Predicated region
            $region63: #{_lambda_.21} parent=61 // pred_check
              _
            $region64: #{_lambda_.21} parent=61 // pred_check_branch
              %190 = sbr.rel (0) target = $region66
            $region65: #{_lambda_.21} parent=61 // pred_region
              // Predicated region
              $region78: #{_lambda_.21} parent=65 // pred_check
                _
              $region79: #{_lambda_.21} parent=65 // pred_check_branch
                %208 = sbr.rel (0) target = $region81
              $region80: #{_lambda_.21} parent=65 // pred_region
                loop: start=0, step=1, limit=1
                $region82: #{_lambda_.21} parent=80 // loop_pre_header
                  _
                $region83: #{_lambda_.21} parent=80 // loop_header
                  %s210 = sphi 0, %s214
                  %p211 = scmp.ge.s32.totalorder %s210, 1
                  %s215 = sphi %s186, %s186
                  %s216 = sphi %s184, %s184
                $region84: #{_lambda_.21} parent=80 // loop_header_branch
                  %213 = sbr.rel (%p211) target = $region88
                $region85: #{_lambda_.21} parent=80 // loop_body
                  %v217 = vld [vmem:[%s215] sm:$0xff]
                  %218 = vst [vmem:[%s216] sm:$0xff] %v217
                  %v219 = vld [vmem:[%s215 + $0x10] sm:$0xff]
                  %220 = vst [vmem:[%s216 + $0x8] sm:$0xff] %v219
                $region86: #{_lambda_.21} parent=80 // loop_footer
                  %s214 = sadd.s32 1, %s210
                $region87: #{_lambda_.21} parent=80 // loop_footer_branch
                  %209 = sbr.rel target = $region83
                $region88: #{_lambda_.21} parent=80 // loop_exit
                  _
              $region81: #{_lambda_.21} parent=65 // pred_fallthru
                _
              // Predicated region
              $region89: #{_lambda_.21} parent=65 // pred_check
                _
              $region90: #{_lambda_.21} parent=65 // pred_check_branch
                %222 = sbr.rel target = $region92
              $region91: #{_lambda_.21} parent=65 // pred_region
                _
              $region92: #{_lambda_.21} parent=65 // pred_fallthru
                _
            $region66: #{_lambda_.21} parent=61 // pred_fallthru
              _
            // Predicated region
            $region67: #{_lambda_.21} parent=61 // pred_check
              _
            $region68: #{_lambda_.21} parent=61 // pred_check_branch
              %192 = sbr.rel target = $region70
            $region69: #{_lambda_.21} parent=61 // pred_region
              %s194 = ssub.s32 256, 1
              loop: start=0, step=1, limit=1
              $region71: #{_lambda_.21} parent=69 // loop_pre_header
                _
              $region72: #{_lambda_.21} parent=69 // loop_header
                %s196 = sphi 0, %s200
                %p197 = scmp.ge.s32.totalorder %s196, 1
                %s201 = sphi %s186, %s186
                %s202 = sphi %s184, %s184
              $region73: #{_lambda_.21} parent=69 // loop_header_branch
                %199 = sbr.rel (%p197) target = $region77
              $region74: #{_lambda_.21} parent=69 // loop_body
                %v203 = vld [vmem:[%s201] sm:%s194]
                %204 = vst [vmem:[%s202] sm:%s194] %v203
                %v205 = vld [vmem:[%s201 + $0x10] sm:%s194]
                %206 = vst [vmem:[%s202 + $0x8] sm:%s194] %v205
              $region75: #{_lambda_.21} parent=69 // loop_footer
                %s200 = sadd.s32 1, %s196
              $region76: #{_lambda_.21} parent=69 // loop_footer_branch
                %195 = sbr.rel target = $region72
              $region77: #{_lambda_.21} parent=69 // loop_exit
                _
            $region70: #{_lambda_.21} parent=61 // pred_fallthru
              _
          $region62: #{_lambda_.21} parent=57 // pred_fallthru
            _
          %223 = vnop
        $region58: #{_lambda_.21} parent=15 // pred_fallthru
          _
        // Predicated region
        $region93: #{_lambda_.21} parent=15 // pred_check
          %p224 = pneg %p81
        $region94: #{_lambda_.21} parent=15 // pred_check_branch
          %226 = sbr.rel (%p224) target = $region96
        $region95: #{_lambda_.21} parent=15 // pred_region
          %s227 = sand.u32 %s71, 1
          %s228 = sand.u32 %s71, 1
          %s229 = smul.addr %s228, 16
          %s230 = scalar_lea.vmem [#allocation4], %s229
          %s231 = smul.addr %s9, 8
          %s232 = scalar_lea.vmem %s2, %s231
          // Predicated region
          $region97: #{_lambda_.21} parent=95 // pred_check
            _
          $region98: #{_lambda_.21} parent=95 // pred_check_branch
            %234 = sbr.rel (0) target = $region100
          $region99: #{_lambda_.21} parent=95 // pred_region
            // Predicated region
            $region101: #{_lambda_.21} parent=99 // pred_check
              _
            $region102: #{_lambda_.21} parent=99 // pred_check_branch
              %236 = sbr.rel (0) target = $region104
            $region103: #{_lambda_.21} parent=99 // pred_region
              // Predicated region
              $region116: #{_lambda_.21} parent=103 // pred_check
                _
              $region117: #{_lambda_.21} parent=103 // pred_check_branch
                %254 = sbr.rel (0) target = $region119
              $region118: #{_lambda_.21} parent=103 // pred_region
                loop: start=0, step=1, limit=1
                $region120: #{_lambda_.21} parent=118 // loop_pre_header
                  _
                $region121: #{_lambda_.21} parent=118 // loop_header
                  %s256 = sphi 0, %s260
                  %p257 = scmp.ge.s32.totalorder %s256, 1
                  %s261 = sphi %s232, %s232
                  %s262 = sphi %s230, %s230
                $region122: #{_lambda_.21} parent=118 // loop_header_branch
                  %259 = sbr.rel (%p257) target = $region126
                $region123: #{_lambda_.21} parent=118 // loop_body
                  %v263 = vld [vmem:[%s261] sm:$0xff]
                  %264 = vst [vmem:[%s262] sm:$0xff] %v263
                  %v265 = vld [vmem:[%s261 + $0x10] sm:$0xff]
                  %266 = vst [vmem:[%s262 + $0x8] sm:$0xff] %v265
                $region124: #{_lambda_.21} parent=118 // loop_footer
                  %s260 = sadd.s32 1, %s256
                $region125: #{_lambda_.21} parent=118 // loop_footer_branch
                  %255 = sbr.rel target = $region121
                $region126: #{_lambda_.21} parent=118 // loop_exit
                  _
              $region119: #{_lambda_.21} parent=103 // pred_fallthru
                _
              // Predicated region
              $region127: #{_lambda_.21} parent=103 // pred_check
                _
              $region128: #{_lambda_.21} parent=103 // pred_check_branch
                %268 = sbr.rel target = $region130
              $region129: #{_lambda_.21} parent=103 // pred_region
                _
              $region130: #{_lambda_.21} parent=103 // pred_fallthru
                _
            $region104: #{_lambda_.21} parent=99 // pred_fallthru
              _
            // Predicated region
            $region105: #{_lambda_.21} parent=99 // pred_check
              _
            $region106: #{_lambda_.21} parent=99 // pred_check_branch
              %238 = sbr.rel target = $region108
            $region107: #{_lambda_.21} parent=99 // pred_region
              %s240 = ssub.s32 256, 1
              loop: start=0, step=1, limit=1
              $region109: #{_lambda_.21} parent=107 // loop_pre_header
                _
              $region110: #{_lambda_.21} parent=107 // loop_header
                %s242 = sphi 0, %s246
                %p243 = scmp.ge.s32.totalorder %s242, 1
                %s247 = sphi %s232, %s232
                %s248 = sphi %s230, %s230
              $region111: #{_lambda_.21} parent=107 // loop_header_branch
                %245 = sbr.rel (%p243) target = $region115
              $region112: #{_lambda_.21} parent=107 // loop_body
                %v249 = vld [vmem:[%s247] sm:%s240]
                %250 = vst [vmem:[%s248] sm:%s240] %v249
                %v251 = vld [vmem:[%s247 + $0x10] sm:%s240]
                %252 = vst [vmem:[%s248 + $0x8] sm:%s240] %v251
              $region113: #{_lambda_.21} parent=107 // loop_footer
                %s246 = sadd.s32 1, %s242
              $region114: #{_lambda_.21} parent=107 // loop_footer_branch
                %241 = sbr.rel target = $region110
              $region115: #{_lambda_.21} parent=107 // loop_exit
                _
            $region108: #{_lambda_.21} parent=99 // pred_fallthru
              _
          $region100: #{_lambda_.21} parent=95 // pred_fallthru
            _
          %269 = vnop
        $region96: #{_lambda_.21} parent=15 // pred_fallthru
          _
      $region16: #{_lambda_.21} parent=5 // pred_fallthru
        _
      %p270 = scmp.le.s32.totalorder 1, %s9
      %p271 = scmp.lt.s32.totalorder %s9, 3
      %p272 = pnand %p270, %p271
      %p273 = pneg %p272
      // Predicated region
      $region131: #{_lambda_.21} parent=5 // pred_check
        _
      $region132: #{_lambda_.21} parent=5 // pred_check_branch
        %275 = sbr.rel (%p272) target = $region134
      $region133: #{_lambda_.21} parent=5 // pred_region
        %s276 = ssub.s32 %s9, 1
        %s277 = sand.u32 %s22, 1
        %s278 = sand.u32 %s22, 1
        %s279 = smul.addr %s278, 16
        %s280 = scalar_lea.vmem [#allocation2], %s279
        // Predicated region
        $region135: #{_lambda_.21} parent=133 // pred_check
          %p281 = pneg %p35
        $region136: #{_lambda_.21} parent=133 // pred_check_branch
          %283 = sbr.rel (%p281) target = $region138
        $region137: #{_lambda_.21} parent=133 // pred_region
          _
        $region138: #{_lambda_.21} parent=133 // pred_fallthru
          _
        %s284 = sand.u32 %s48, 1
        %s285 = sand.u32 %s48, 1
        %s286 = smul.addr %s285, 16
        %s287 = scalar_lea.vmem [#allocation3], %s286
        // Predicated region
        $region139: #{_lambda_.21} parent=133 // pred_check
          %p288 = pneg %p61
        $region140: #{_lambda_.21} parent=133 // pred_check_branch
          %290 = sbr.rel (%p288) target = $region142
        $region141: #{_lambda_.21} parent=133 // pred_region
          _
        $region142: #{_lambda_.21} parent=133 // pred_fallthru
          _
        %s291 = sand.u32 %s74, 1
        %s292 = sand.u32 %s74, 1
        %s293 = smul.addr %s292, 16
        %s294 = scalar_lea.vmem [#allocation4], %s293
        // Predicated region
        $region143: #{_lambda_.21} parent=133 // pred_check
          %p295 = pneg %p87
        $region144: #{_lambda_.21} parent=133 // pred_check_branch
          %297 = sbr.rel (%p295) target = $region146
        $region145: #{_lambda_.21} parent=133 // pred_region
          _
        $region146: #{_lambda_.21} parent=133 // pred_fallthru
          _
        %s298 = sand.u32 %s22, 1
        %s299 = sand.u32 %s22, 1
        %s300 = smul.addr %s299, 16
        %s301 = scalar_lea.vmem [#allocation2], %s300
        %p302 = pneg %p35
        %p303 = pneg %p32
        %s304 = sand.u32 %s48, 1
        %s305 = sand.u32 %s48, 1
        %s306 = smul.addr %s305, 16
        %s307 = scalar_lea.vmem [#allocation3], %s306
        %p308 = pneg %p61
        %p309 = pneg %p58
        %s310 = sand.u32 %s74, 1
        %s311 = sand.u32 %s74, 1
        %s312 = smul.addr %s311, 16
        %s313 = scalar_lea.vmem [#allocation4], %s312
        %p314 = pneg %p87
        %p315 = pneg %p84
        %p316 = pneg %p113
        %p317 = pneg %p110
        %s318 = sand.u32 %s100, 1
        %s319 = sand.u32 %s100, 1
        %s320 = smul.addr %s319, 16
        %s321 = scalar_lea.vmem [#allocation5], %s320
        %v322 = vld [vmem:[%s280] sm:$0xff]
        %v323 = vld [vmem:[%s280 + $0x8] sm:$0xff]
        %v324 = vld [vmem:[%s287] sm:$0xff]
        %v325 = vld [vmem:[%s287 + $0x8] sm:$0xff]
        %v326 = vld [vmem:[%s294] sm:$0xff]
        %v327 = vld [vmem:[%s294 + $0x8] sm:$0xff]
        %v328 = vmul.f32 %v322, %v324
        %v329 = vrot.slane %v328, 4
        %v330 = vadd.f32 %v328, %v329
        %v331 = vrot.slane %v330, 2
        %v332 = vadd.f32 %v330, %v331
        %v333 = vrot.slane %v332, 1
        %v334 = vadd.f32 %v332, %v333
        %v335 = vmul.f32 %v334, 0.35355338
        %v336 = vmul.f32 %v322, %v325
        %v337 = vrot.slane %v336, 4
        %v338 = vadd.f32 %v336, %v337
        %v339 = vrot.slane %v338, 2
        %v340 = vadd.f32 %v338, %v339
        %v341 = vrot.slane %v340, 1
        %v342 = vadd.f32 %v340, %v341
        %v343 = vmul.f32 %v342, 0.35355338
        %v344 = vmul.f32 %v323, %v324
        %v345 = vrot.slane %v344, 4
        %v346 = vadd.f32 %v344, %v345
        %v347 = vrot.slane %v346, 2
        %v348 = vadd.f32 %v346, %v347
        %v349 = vrot.slane %v348, 1
        %v350 = vadd.f32 %v348, %v349
        %v351 = vmul.f32 %v350, 0.35355338
        %v352 = vmul.f32 %v323, %v325
        %v353 = vrot.slane %v352, 4
        %v354 = vadd.f32 %v352, %v353
        %v355 = vrot.slane %v354, 2
        %v356 = vadd.f32 %v354, %v355
        %v357 = vrot.slane %v356, 1
        %v358 = vadd.f32 %v356, %v357
        %v359 = vmul.f32 %v358, 0.35355338
        %v360 = vmax.f32 %v335, %v343
        %v361 = vsub.f32 %v335, %v360
        %v362 = vmul.f32 %v361, 1.442695
        %v363 = vpow.pop %v362
        %v364 = vsub.f32 %v343, %v360
        %v365 = vmul.f32 %v364, 1.442695
        %v366 = vpow.pop %v365
        %v367 = vadd.f32 %v363, %v366
        %v368 = vrcp.pop %v367
        %v369 = vmul.f32 %v363, %v368
        %v370 = vmul.f32 %v369, %v326
        %v371 = vmul.f32 %v366, %v368
        %v372 = vmul.f32 %v371, %v327
        %v373 = vadd.f32 %v370, %v372
        %374 = vst [vmem:[%s321] sm:$0xff] %v373
        %v375 = vmax.f32 %v351, %v359
        %v376 = vsub.f32 %v351, %v375
        %v377 = vmul.f32 %v376, 1.442695
        %v378 = vpow.pop %v377
        %v379 = vsub.f32 %v359, %v375
        %v380 = vmul.f32 %v379, 1.442695
        %v381 = vpow.pop %v380
        %v382 = vadd.f32 %v378, %v381
        %v383 = vrcp.pop %v382
        %v384 = vmul.f32 %v378, %v383
        %v385 = vmul.f32 %v384, %v326
        %v386 = vmul.f32 %v381, %v383
        %v387 = vmul.f32 %v386, %v327
        %v388 = vadd.f32 %v385, %v387
        %s389 = scalar_lea.vmem %s321, 8 [#allocation5]
        %390 = vst [vmem:[%s389] sm:$0xff] %v388
        %s391 = sand.u32 %s100, 1
        %s392 = sand.u32 %s100, 1
        %s393 = smul.addr %s392, 16
        %s394 = scalar_lea.vmem [#allocation5], %s393
        // Predicated region
        $region147: #{_lambda_.21} parent=133 // pred_check
          %p395 = pneg %p110
        $region148: #{_lambda_.21} parent=133 // pred_check_branch
          %397 = sbr.rel (%p395) target = $region150
        $region149: #{_lambda_.21} parent=133 // pred_region
          %s398 = smul.addr %s14, 8
          %s399 = scalar_lea.vmem %s3, %s398
          // Predicated region
          $region151: #{_lambda_.21} parent=149 // pred_check
            _
          $region152: #{_lambda_.21} parent=149 // pred_check_branch
            %401 = sbr.rel (0) target = $region154
          $region153: #{_lambda_.21} parent=149 // pred_region
            // Predicated region
            $region155: #{_lambda_.21} parent=153 // pred_check
              _
            $region156: #{_lambda_.21} parent=153 // pred_check_branch
              %403 = sbr.rel (0) target = $region158
            $region157: #{_lambda_.21} parent=153 // pred_region
              // Predicated region
              $region170: #{_lambda_.21} parent=157 // pred_check
                _
              $region171: #{_lambda_.21} parent=157 // pred_check_branch
                %421 = sbr.rel (0) target = $region173
              $region172: #{_lambda_.21} parent=157 // pred_region
                loop: start=0, step=1, limit=1
                $region174: #{_lambda_.21} parent=172 // loop_pre_header
                  _
                $region175: #{_lambda_.21} parent=172 // loop_header
                  %s423 = sphi 0, %s427
                  %p424 = scmp.ge.s32.totalorder %s423, 1
                  %s428 = sphi %s394, %s394
                  %s429 = sphi %s399, %s399
                $region176: #{_lambda_.21} parent=172 // loop_header_branch
                  %426 = sbr.rel (%p424) target = $region180
                $region177: #{_lambda_.21} parent=172 // loop_body
                  %v430 = vld [vmem:[%s428] sm:$0xff]
                  %431 = vst [vmem:[%s429] sm:$0xff] %v430
                  %v432 = vld [vmem:[%s428 + $0x8] sm:$0xff]
                  %433 = vst [vmem:[%s429 + $0x10] sm:$0xff] %v432
                $region178: #{_lambda_.21} parent=172 // loop_footer
                  %s427 = sadd.s32 1, %s423
                $region179: #{_lambda_.21} parent=172 // loop_footer_branch
                  %422 = sbr.rel target = $region175
                $region180: #{_lambda_.21} parent=172 // loop_exit
                  _
              $region173: #{_lambda_.21} parent=157 // pred_fallthru
                _
              // Predicated region
              $region181: #{_lambda_.21} parent=157 // pred_check
                _
              $region182: #{_lambda_.21} parent=157 // pred_check_branch
                %435 = sbr.rel target = $region184
              $region183: #{_lambda_.21} parent=157 // pred_region
                _
              $region184: #{_lambda_.21} parent=157 // pred_fallthru
                _
            $region158: #{_lambda_.21} parent=153 // pred_fallthru
              _
            // Predicated region
            $region159: #{_lambda_.21} parent=153 // pred_check
              _
            $region160: #{_lambda_.21} parent=153 // pred_check_branch
              %405 = sbr.rel target = $region162
            $region161: #{_lambda_.21} parent=153 // pred_region
              %s407 = ssub.s32 256, 1
              loop: start=0, step=1, limit=1
              $region163: #{_lambda_.21} parent=161 // loop_pre_header
                _
              $region164: #{_lambda_.21} parent=161 // loop_header
                %s409 = sphi 0, %s413
                %p410 = scmp.ge.s32.totalorder %s409, 1
                %s414 = sphi %s394, %s394
                %s415 = sphi %s399, %s399
              $region165: #{_lambda_.21} parent=161 // loop_header_branch
                %412 = sbr.rel (%p410) target = $region169
              $region166: #{_lambda_.21} parent=161 // loop_body
                %v416 = vld [vmem:[%s414] sm:%s407]
                %417 = vst [vmem:[%s415] sm:%s407] %v416
                %v418 = vld [vmem:[%s414 + $0x8] sm:%s407]
                %419 = vst [vmem:[%s415 + $0x10] sm:%s407] %v418
              $region167: #{_lambda_.21} parent=161 // loop_footer
                %s413 = sadd.s32 1, %s409
              $region168: #{_lambda_.21} parent=161 // loop_footer_branch
                %408 = sbr.rel target = $region164
              $region169: #{_lambda_.21} parent=161 // loop_exit
                _
            $region162: #{_lambda_.21} parent=153 // pred_fallthru
              _
          $region154: #{_lambda_.21} parent=149 // pred_fallthru
            _
          %436 = vnop
        $region150: #{_lambda_.21} parent=133 // pred_fallthru
          _
      $region134: #{_lambda_.21} parent=5 // pred_fallthru
        _
      %p437 = scmp.le.s32.totalorder 2, %s9
      // Predicated region
      $region185: #{_lambda_.21} parent=5 // pred_check
        %p438 = pneg %p437
      $region186: #{_lambda_.21} parent=5 // pred_check_branch
        %440 = sbr.rel (%p438) target = $region188
      $region187: #{_lambda_.21} parent=5 // pred_region
        %s441 = ssub.s32 %s9, 2
        // Predicated region
        $region189: #{_lambda_.21} parent=187 // pred_check
          %p442 = pneg %p116
        $region190: #{_lambda_.21} parent=187 // pred_check_branch
          %444 = sbr.rel (%p442) target = $region192
        $region191: #{_lambda_.21} parent=187 // pred_region
          %s445 = sand.u32 %s101, 1
          %s446 = sand.u32 %s101, 1
          %s447 = smul.addr %s446, 16
          %s448 = scalar_lea.vmem [#allocation5], %s447
        $region192: #{_lambda_.21} parent=187 // pred_fallthru
          _
      $region188: #{_lambda_.21} parent=5 // pred_fallthru
        _
    $region6: #{_lambda_.21} parent=1 // loop_footer
      %s13 = sadd.s32 1, %s9
    $region7: #{_lambda_.21} parent=1 // loop_footer_branch
      %8 = sbr.rel target = $region3
    $region8: #{_lambda_.21} parent=1 // loop_exit
      _

// kernel: _lambda_.22
$region0: #{_lambda_.22}
  #allocation0 [shape = 'u32[]', space=smem, size = 0x4, offset = 0x4, fixed_abs, tag = 'smem constant byte address 0x4 - core index']
  #allocation1 [shape = 'u32[72,128]{1,0:T(1,128)}', space=vmem, size = 0x9000, scoped, tag = 'internal scratch']
  #allocation2 [shape = 'f32[64,128]{1,0:T(8,128)}', space=vmem, size = 0x8000, scoped, tag = 'scratch operand']
  %s0 = inlined_call_operand.vmem [shape: bf16[128,128], index: 0, kind: input, shape index: {}]
  %s1 = inlined_call_operand.vmem [shape: bf16[128,128], index: 1, kind: input, shape index: {}]
  %s2 = inlined_call_operand.vmem [shape: f32[1,128], index: 2, kind: input, shape index: {}]
  %s3 = inlined_call_operand.vmem [shape: f32[128,128], index: 3, kind: input, shape index: {}]
  %s4 = inlined_call_operand.vmem [shape: f32[128,128], index: 4, kind: output, shape index: {}]
  %s5 = sld [smem:[#allocation0]]
  $region57: #{_lambda_.22} parent=0
    _
  %s7 = ssub.s32 1, %s5
  %s8 = scalar_select 0, %s7, %s5
  loop: start=0, step=1, limit=4
  $region2: #{_lambda_.22} parent=0 // loop_pre_header
    _
  $region3: #{_lambda_.22} parent=0 // loop_header
    %s10 = sphi 0, %s14
    %p11 = scmp.ge.s32.totalorder %s10, 4
    %s17 = sphi 0, %s36
    %s18 = sphi 0, %s32
    %s19 = sphi 0, %s28
    %s20 = sphi 0, %s17
    %s21 = sphi 0, %s18
    %s22 = sphi 0, %s19
    %s23 = sphi 0, %s20
    %s24 = sphi 0, %s21
    %s25 = sphi 0, %s22
    %s41 = sphi 0, %s43
    %s44 = sphi 0, %s41
    %s45 = sphi 0, %s44
    %s61 = sphi 0, %s45
    %s69 = sphi 0, %s71
    %s72 = sphi 0, %s69
    %s73 = sphi 0, %s72
    %s89 = sphi 0, %s73
    %s95 = sphi 0, %s97
    %s98 = sphi 0, %s95
    %s99 = sphi 0, %s98
    %s115 = sphi 0, %s99
    %s123 = sphi 0, %s125
    %s126 = sphi 0, %s123
    %s127 = sphi 0, %s126
    %s143 = sphi 0, %s127
    %s151 = sphi 0, %s153
    %s154 = sphi 0, %s151
    %s155 = sphi 0, %s154
    %s171 = sphi 0, %s155
  $region4: #{_lambda_.22} parent=0 // loop_header_branch
    %13 = sbr.rel (%p11) target = $region8
  $region5: #{_lambda_.22} parent=0 // loop_body
    %s15 = ssub.s32 %s10, 1
    %s16 = ssub.s32 %s10, 2
    %s26 = sadd.s32 1, %s19
    %p27 = scmp.ge.s32.totalorder %s26, 1
    %s28 = scalar_select %p27, 0, %s26
    %s29 = sadd.s32 1, %s18
    %s30 = scalar_select %p27, %s29, %s18
    %p31 = scmp.ge.s32.totalorder %s30, 1
    %s32 = scalar_select %p31, 0, %s30
    %s33 = sadd.s32 1, %s17
    %s34 = scalar_select %p31, %s33, %s17
    %p35 = scmp.ge.s32.totalorder %s34, 2
    %s36 = scalar_select %p35, 0, %s34
    %s37 = ssub.s32 %s17, %s36
    %s38 = ssub.s32 %s19, %s28
    %s39 = sor.u32 %s37, %s38
    %p40 = scmp.eq.s32.totalorder %s39, 0
    %s42 = sadd.s32 %s41, 1
    %s43 = scalar_select %p40, %s41, %s42
    %p46 = pneg %p40
    %p47 = scmp.eq.s32.totalorder %s10, 1
    %p48 = por %p46, %p47
    %p49 = scmp.ne.s32.totalorder %s41, %s44
    %p50 = scmp.eq.s32.totalorder %s10, 0
    %p51 = por %p49, %p50
    %p52 = scmp.ne.s32.totalorder %s41, %s44
    %p53 = scmp.eq.s32.totalorder %s15, 1
    %p54 = por %p52, %p53
    %p55 = scmp.ne.s32.totalorder %s44, %s45
    %p56 = scmp.eq.s32.totalorder %s15, 0
    %p57 = por %p55, %p56
    %p58 = scmp.ne.s32.totalorder %s44, %s45
    %p59 = scmp.eq.s32.totalorder %s16, 1
    %p60 = por %p58, %p59
    %p62 = scmp.ne.s32.totalorder %s45, %s61
    %p63 = scmp.eq.s32.totalorder %s16, 0
    %p64 = por %p62, %p63
    %s65 = ssub.s32 %s19, %s28
    %s66 = ssub.s32 %s18, %s32
    %s67 = sor.u32 %s65, %s66
    %p68 = scmp.eq.s32.totalorder %s67, 0
    %s70 = sadd.s32 %s69, 1
    %s71 = scalar_select %p68, %s69, %s70
    %p74 = pneg %p68
    %p75 = scmp.eq.s32.totalorder %s10, 1
    %p76 = por %p74, %p75
    %p77 = scmp.ne.s32.totalorder %s69, %s72
    %p78 = scmp.eq.s32.totalorder %s10, 0
    %p79 = por %p77, %p78
    %p80 = scmp.ne.s32.totalorder %s69, %s72
    %p81 = scmp.eq.s32.totalorder %s15, 1
    %p82 = por %p80, %p81
    %p83 = scmp.ne.s32.totalorder %s72, %s73
    %p84 = scmp.eq.s32.totalorder %s15, 0
    %p85 = por %p83, %p84
    %p86 = scmp.ne.s32.totalorder %s72, %s73
    %p87 = scmp.eq.s32.totalorder %s16, 1
    %p88 = por %p86, %p87
    %p90 = scmp.ne.s32.totalorder %s73, %s89
    %p91 = scmp.eq.s32.totalorder %s16, 0
    %p92 = por %p90, %p91
    %s93 = ssub.s32 %s18, %s32
    %p94 = scmp.eq.s32.totalorder %s93, 0
    %s96 = sadd.s32 %s95, 1
    %s97 = scalar_select %p94, %s95, %s96
    %p100 = pneg %p94
    %p101 = scmp.eq.s32.totalorder %s10, 1
    %p102 = por %p100, %p101
    %p103 = scmp.ne.s32.totalorder %s95, %s98
    %p104 = scmp.eq.s32.totalorder %s10, 0
    %p105 = por %p103, %p104
    %p106 = scmp.ne.s32.totalorder %s95, %s98
    %p107 = scmp.eq.s32.totalorder %s15, 1
    %p108 = por %p106, %p107
    %p109 = scmp.ne.s32.totalorder %s98, %s99
    %p110 = scmp.eq.s32.totalorder %s15, 0
    %p111 = por %p109, %p110
    %p112 = scmp.ne.s32.totalorder %s98, %s99
    %p113 = scmp.eq.s32.totalorder %s16, 1
    %p114 = por %p112, %p113
    %p116 = scmp.ne.s32.totalorder %s99, %s115
    %p117 = scmp.eq.s32.totalorder %s16, 0
    %p118 = por %p116, %p117
    %s119 = ssub.s32 %s17, %s36
    %s120 = ssub.s32 %s18, %s32
    %s121 = sor.u32 %s119, %s120
    %p122 = scmp.eq.s32.totalorder %s121, 0
    %s124 = sadd.s32 %s123, 1
    %s125 = scalar_select %p122, %s123, %s124
    %p128 = pneg %p122
    %p129 = scmp.eq.s32.totalorder %s10, 1
    %p130 = por %p128, %p129
    %p131 = scmp.ne.s32.totalorder %s123, %s126
    %p132 = scmp.eq.s32.totalorder %s10, 0
    %p133 = por %p131, %p132
    %p134 = scmp.ne.s32.totalorder %s123, %s126
    %p135 = scmp.eq.s32.totalorder %s15, 1
    %p136 = por %p134, %p135
    %p137 = scmp.ne.s32.totalorder %s126, %s127
    %p138 = scmp.eq.s32.totalorder %s15, 0
    %p139 = por %p137, %p138
    %p140 = scmp.ne.s32.totalorder %s126, %s127
    %p141 = scmp.eq.s32.totalorder %s16, 1
    %p142 = por %p140, %p141
    %p144 = scmp.ne.s32.totalorder %s127, %s143
    %p145 = scmp.eq.s32.totalorder %s16, 0
    %p146 = por %p144, %p145
    %s147 = ssub.s32 %s17, %s36
    %s148 = ssub.s32 %s18, %s32
    %s149 = sor.u32 %s147, %s148
    %p150 = scmp.eq.s32.totalorder %s149, 0
    %s152 = sadd.s32 %s151, 1
    %s153 = scalar_select %p150, %s151, %s152
    %p156 = pneg %p150
    %p157 = scmp.eq.s32.totalorder %s10, 1
    %p158 = por %p156, %p157
    %p159 = scmp.ne.s32.totalorder %s151, %s154
    %p160 = scmp.eq.s32.totalorder %s10, 0
    %p161 = por %p159, %p160
    %p162 = scmp.ne.s32.totalorder %s151, %s154
    %p163 = scmp.eq.s32.totalorder %s15, 1
    %p164 = por %p162, %p163
    %p165 = scmp.ne.s32.totalorder %s154, %s155
    %p166 = scmp.eq.s32.totalorder %s15, 0
    %p167 = por %p165, %p166
    %p168 = scmp.ne.s32.totalorder %s154, %s155
    %p169 = scmp.eq.s32.totalorder %s16, 1
    %p170 = por %p168, %p169
    %p172 = scmp.ne.s32.totalorder %s155, %s171
    %p173 = scmp.eq.s32.totalorder %s16, 0
    %p174 = por %p172, %p173
    %p175 = scmp.le.s32.totalorder 1, %s10
    %p176 = scmp.lt.s32.totalorder %s10, 3
    %p177 = pnand %p175, %p176
    %p178 = pneg %p177
    // Predicated region
    $region9: #{_lambda_.22} parent=5 // pred_check
      _
    $region10: #{_lambda_.22} parent=5 // pred_check_branch
      %180 = sbr.rel (%p177) target = $region12
    $region11: #{_lambda_.22} parent=5 // pred_region
      %s181 = ssub.s32 %s10, 1
      // Predicated region
      $region13: #{_lambda_.22} parent=11 // pred_check
        %p182 = pneg %p85
      $region14: #{_lambda_.22} parent=11 // pred_check_branch
        %184 = sbr.rel (%p182) target = $region16
      $region15: #{_lambda_.22} parent=11 // pred_region
        %s185 = smul.u32 16, %s22
        %p186 = scmp.lt.s32.totalorder %s185, 15
        %s187 = scalar_select %p186, %s185, 15
        %p188 = scmp.lt.s32.totalorder %s21, 0
        %s189 = scalar_select %p188, %s21, 0
        %s190 = sadd.s32 %s189, %s187
        %s191 = smul.addr %s190, 4
        %s192 = scalar_lea.vmem %s1, %s191
        %s193 = smul.u32 16, %s22
      $region16: #{_lambda_.22} parent=11 // pred_fallthru
        _
      // Predicated region
      $region17: #{_lambda_.22} parent=11 // pred_check
        %p194 = pneg %p111
      $region18: #{_lambda_.22} parent=11 // pred_check_branch
        %196 = sbr.rel (%p194) target = $region20
      $region19: #{_lambda_.22} parent=11 // pred_region
        %p197 = scmp.lt.s32.totalorder %s21, 0
        %s198 = scalar_select %p197, %s21, 0
        %s199 = scalar_lea.vmem %s2, %s198
      $region20: #{_lambda_.22} parent=11 // pred_fallthru
        _
    $region12: #{_lambda_.22} parent=5 // pred_fallthru
      _
    %p200 = scmp.lt.s32.totalorder %s10, 2
    // Predicated region
    $region21: #{_lambda_.22} parent=5 // pred_check
      %p201 = pneg %p200
    $region22: #{_lambda_.22} parent=5 // pred_check_branch
      %203 = sbr.rel (%p201) target = $region24
    $region23: #{_lambda_.22} parent=5 // pred_region
      // Predicated region
      $region25: #{_lambda_.22} parent=23 // pred_check
        %p204 = pneg %p51
      $region26: #{_lambda_.22} parent=23 // pred_check_branch
        %206 = sbr.rel (%p204) target = $region28
      $region27: #{_lambda_.22} parent=23 // pred_region
        %s207 = smul.u32 8, %s17
        %p208 = scmp.lt.s32.totalorder %s207, 15
        %s209 = scalar_select %p208, %s207, 15
        %p210 = scmp.lt.s32.totalorder %s19, 0
        %s211 = scalar_select %p210, %s19, 0
        %s212 = sadd.s32 %s211, %s209
        %s213 = smul.addr %s212, 4
        %s214 = scalar_lea.vmem %s0, %s213
        %s215 = smul.u32 8, %s17
      $region28: #{_lambda_.22} parent=23 // pred_fallthru
        _
      // Predicated region
      $region29: #{_lambda_.22} parent=23 // pred_check
        %p216 = pneg %p133
      $region30: #{_lambda_.22} parent=23 // pred_check_branch
        %218 = sbr.rel (%p216) target = $region32
      $region31: #{_lambda_.22} parent=23 // pred_region
        %s219 = smul.u32 8, %s17
        %p220 = scmp.lt.s32.totalorder %s219, 15
        %s221 = scalar_select %p220, %s219, 15
        %p222 = scmp.lt.s32.totalorder %s18, 0
        %s223 = scalar_select %p222, %s18, 0
        %s224 = sadd.s32 %s223, %s221
        %s225 = smul.addr %s224, 8
        %s226 = scalar_lea.vmem %s3, %s225
        %s227 = smul.u32 8, %s17
      $region32: #{_lambda_.22} parent=23 // pred_fallthru
        _
    $region24: #{_lambda_.22} parent=5 // pred_fallthru
      _
    %p228 = scmp.le.s32.totalorder 1, %s10
    %p229 = scmp.lt.s32.totalorder %s10, 3
    %p230 = pnand %p228, %p229
    %p231 = pneg %p230
    // Predicated region
    $region33: #{_lambda_.22} parent=5 // pred_check
      _
    $region34: #{_lambda_.22} parent=5 // pred_check_branch
      %233 = sbr.rel (%p230) target = $region36
    $region35: #{_lambda_.22} parent=5 // pred_region
      %s234 = ssub.s32 %s10, 1
      %s235 = smul.u32 8, %s20
      %p236 = scmp.lt.s32.totalorder %s235, 15
      %s237 = scalar_select %p236, %s235, 15
      %p238 = scmp.lt.s32.totalorder %s22, 0
      %s239 = scalar_select %p238, %s22, 0
      %s240 = sadd.s32 %s239, %s237
      %s241 = smul.addr %s240, 4
      %s242 = scalar_lea.vmem %s0, %s241
      %p243 = pneg %p57
      %p244 = pneg %p54
      %s245 = smul.u32 16, %s22
      %p246 = scmp.lt.s32.totalorder %s245, 15
      %s247 = scalar_select %p246, %s245, 15
      %p248 = scmp.lt.s32.totalorder %s21, 0
      %s249 = scalar_select %p248, %s21, 0
      %s250 = sadd.s32 %s249, %s247
      %s251 = smul.addr %s250, 4
      %s252 = scalar_lea.vmem %s1, %s251
      %p253 = pneg %p85
      %p254 = pneg %p82
      %p255 = scmp.lt.s32.totalorder %s21, 0
      %s256 = scalar_select %p255, %s21, 0
      %s257 = scalar_lea.vmem %s2, %s256
      %p258 = pneg %p111
      %p259 = pneg %p108
      %s260 = smul.u32 8, %s20
      %p261 = scmp.lt.s32.totalorder %s260, 15
      %s262 = scalar_select %p261, %s260, 15
      %p263 = scmp.lt.s32.totalorder %s21, 0
      %s264 = scalar_select %p263, %s21, 0
      %s265 = sadd.s32 %s264, %s262
      %s266 = smul.addr %s265, 8
      %s267 = scalar_lea.vmem %s3, %s266
      %p268 = pneg %p139
      %p269 = pneg %p136
      %p270 = pneg %p167
      %p271 = pneg %p164
      %s272 = smul.u32 8, %s20
      %p273 = scmp.lt.s32.totalorder %s272, 15
      %s274 = scalar_select %p273, %s272, 15
      %p275 = scmp.lt.s32.totalorder %s21, 0
      %s276 = scalar_select %p275, %s21, 0
      %s277 = sadd.s32 %s276, %s274
      %s278 = smul.addr %s277, 8
      %s279 = scalar_lea.vmem %s4, %s278
      %s280 = smul.u32 8, %s20
      %p281 = scmp.lt.s32.totalorder %s280, 15
      %s282 = scalar_select %p281, %s280, 15
      %p283 = scmp.lt.s32.totalorder %s22, 0
      %s284 = scalar_select %p283, %s22, 0
      %s285 = sadd.s32 %s284, %s282
      %s286 = smul.addr %s285, 4
      %s287 = scalar_lea.vmem %s0, %s286
      %s288 = smul.u32 8, %s20
      %s289 = smul.u32 16, %s22
      %p290 = scmp.lt.s32.totalorder %s289, 15
      %s291 = scalar_select %p290, %s289, 15
      %p292 = scmp.lt.s32.totalorder %s21, 0
      %s293 = scalar_select %p292, %s21, 0
      %s294 = sadd.s32 %s293, %s291
      %s295 = smul.addr %s294, 4
      %s296 = scalar_lea.vmem %s1, %s295
      %s297 = smul.u32 16, %s22
      %p298 = scmp.lt.s32.totalorder %s21, 0
      %s299 = scalar_select %p298, %s21, 0
      %s300 = scalar_lea.vmem %s2, %s299
      %s301 = smul.u32 8, %s20
      %p302 = scmp.lt.s32.totalorder %s301, 15
      %s303 = scalar_select %p302, %s301, 15
      %p304 = scmp.lt.s32.totalorder %s21, 0
      %s305 = scalar_select %p304, %s21, 0
      %s306 = sadd.s32 %s305, %s303
      %s307 = smul.addr %s306, 8
      %s308 = scalar_lea.vmem %s3, %s307
      %s309 = smul.u32 8, %s20
      %s310 = smul.u32 8, %s20
      %p311 = scmp.lt.s32.totalorder %s310, 15
      %s312 = scalar_select %p311, %s310, 15
      %p313 = scmp.lt.s32.totalorder %s21, 0
      %s314 = scalar_select %p313, %s21, 0
      %s315 = sadd.s32 %s314, %s312
      %s316 = smul.addr %s315, 8
      %s317 = scalar_lea.vmem %s4, %s316
      %s318 = smul.u32 8, %s20
      %p319 = scmp.eq.s32.totalorder %s22, 0
      // Predicated region
      $region37: #{_lambda_.22} parent=35 // pred_check
        %p320 = pneg %p319
      $region38: #{_lambda_.22} parent=35 // pred_check_branch
        %322 = sbr.rel (%p320) target = $region40
      $region39: #{_lambda_.22} parent=35 // pred_region
        %323 = vst [vmem:[#allocation2] sm:$0xff] 0.0
        %324 = vst [vmem:[#allocation2 + $0x8] sm:$0xff] 0.0
        %325 = vst [vmem:[#allocation2 + $0x10] sm:$0xff] 0.0
        %326 = vst [vmem:[#allocation2 + $0x18] sm:$0xff] 0.0
        %327 = vst [vmem:[#allocation2 + $0x20] sm:$0xff] 0.0
        %328 = vst [vmem:[#allocation2 + $0x28] sm:$0xff] 0.0
        %329 = vst [vmem:[#allocation2 + $0x30] sm:$0xff] 0.0
        %330 = vst [vmem:[#allocation2 + $0x38] sm:$0xff] 0.0
      $region40: #{_lambda_.22} parent=35 // pred_fallthru
        _
      %v331 = vld [vmem:[%s287] sm:$0xf]
      %v332 = vld [vmem:[%s287 + $0x4] sm:$0xf]
      %v333 = vld [vmem:[%s287 + $0x8] sm:$0xf]
      %v334 = vld [vmem:[%s287 + $0xc] sm:$0xf]
      %v335 = vld [vmem:[%s287 + $0x10] sm:$0xf]
      %v336 = vld [vmem:[%s287 + $0x14] sm:$0xf]
      %v337 = vld [vmem:[%s287 + $0x18] sm:$0xf]
      %v338 = vld [vmem:[%s287 + $0x1c] sm:$0xf]
      %v339 = vld [vmem:[#allocation2] sm:$0xff]
      %v340 = vld [vmem:[#allocation2 + $0x8] sm:$0xff]
      %v341 = vld [vmem:[#allocation2 + $0x10] sm:$0xff]
      %v342 = vld [vmem:[#allocation2 + $0x18] sm:$0xff]
      %v343 = vld [vmem:[#allocation2 + $0x20] sm:$0xff]
      %v344 = vld [vmem:[#allocation2 + $0x28] sm:$0xff]
      %v345 = vld [vmem:[#allocation2 + $0x30] sm:$0xff]
      %v346 = vld [vmem:[#allocation2 + $0x38] sm:$0xff]
      %v347 = vld [vmem:[%s296] sm:$0xf]
      %v348 = vld [vmem:[%s296 + $0x4] sm:$0xf]
      %v349 = vld [vmem:[%s296 + $0x8] sm:$0xf]
      %v350 = vld [vmem:[%s296 + $0xc] sm:$0xf]
      %v351 = vld [vmem:[%s296 + $0x10] sm:$0xf]
      %v352 = vld [vmem:[%s296 + $0x14] sm:$0xf]
      %v353 = vld [vmem:[%s296 + $0x18] sm:$0xf]
      %v354 = vld [vmem:[%s296 + $0x1c] sm:$0xf]
      %v355 = vld [vmem:[%s296 + $0x20] sm:$0xf]
      %v356 = vld [vmem:[%s296 + $0x24] sm:$0xf]
      %v357 = vld [vmem:[%s296 + $0x28] sm:$0xf]
      %v358 = vld [vmem:[%s296 + $0x2c] sm:$0xf]
      %v359 = vld [vmem:[%s296 + $0x30] sm:$0xf]
      %v360 = vld [vmem:[%s296 + $0x34] sm:$0xf]
      %v361 = vld [vmem:[%s296 + $0x38] sm:$0xf]
      %v362 = vld [vmem:[%s296 + $0x3c] sm:$0xf]
      %v371 = vunpack.c.l.b16 %v331
      %v372 = vunpack.c.l.b16 %v332
      %v373 = vunpack.c.l.b16 %v333
      %v374 = vunpack.c.l.b16 %v334
      %v375 = vunpack.c.l.b16 %v335
      %v376 = vunpack.c.l.b16 %v336
      %v377 = vunpack.c.l.b16 %v337
      %v378 = vunpack.c.l.b16 %v338
      %v379 = vpack.c.b16 %v372, %v371
      %v380 = vpack.c.b16 %v374, %v373
      %v381 = vpack.c.b16 %v376, %v375
      %v382 = vpack.c.b16 %v378, %v377
      %v403 = vunpack.c.l.b16 %v347
      %v404 = vunpack.c.l.b16 %v348
      %v405 = vunpack.c.l.b16 %v349
      %v406 = vunpack.c.l.b16 %v350
      %v407 = vunpack.c.l.b16 %v351
      %v408 = vunpack.c.l.b16 %v352
      %v409 = vunpack.c.l.b16 %v353
      %v410 = vunpack.c.l.b16 %v354
      %v411 = vunpack.c.l.b16 %v355
      %v412 = vunpack.c.l.b16 %v356
      %v413 = vunpack.c.l.b16 %v357
      %v414 = vunpack.c.l.b16 %v358
      %v415 = vunpack.c.l.b16 %v359
      %v416 = vunpack.c.l.b16 %v360
      %v417 = vunpack.c.l.b16 %v361
      %v418 = vunpack.c.l.b16 %v362
      %v419 = vpack.c.b16 %v404, %v403
      %v420 = vpack.c.b16 %v406, %v405
      %v421 = vpack.c.b16 %v408, %v407
      %v422 = vpack.c.b16 %v410, %v409
      %v423 = vpack.c.b16 %v412, %v411
      %v424 = vpack.c.b16 %v414, %v413
      %v425 = vpack.c.b16 %v416, %v415
      %v426 = vpack.c.b16 %v418, %v417
      %435 = vmatpush.bf16.msra.mxu0 %v426
      %436 = vmatpush.bf16.msra.mxu0 %v425
      %437 = vmatpush.bf16.msra.mxu0 %v424
      %438 = vmatpush.bf16.msra.mxu0 %v423
      %439 = vmatpush.bf16.msra.mxu0 %v422
      %440 = vmatpush.bf16.msra.mxu0 %v421
      %441 = vmatpush.bf16.msra.mxu0 %v420
      %442 = vmatpush.bf16.msra.mxu0 %v419
      %443 = vmatmul.bf16.gmra.mxu0 %v379
      %v444 = vpop.f32.mrf.mxu0
      %v445 = vadd.f32 0.0, %v444
      %v446 = vpop.f32.mrf.mxu0
      %v447 = vadd.f32 0.0, %v446
      %448 = vmatmul.bf16.gmra.mxu0 %v380
      %v449 = vpop.f32.mrf.mxu0
      %v450 = vadd.f32 0.0, %v449
      %v451 = vpop.f32.mrf.mxu0
      %v452 = vadd.f32 0.0, %v451
      %453 = vmatmul.bf16.gmra.mxu0 %v381
      %v454 = vpop.f32.mrf.mxu0
      %v455 = vadd.f32 0.0, %v454
      %v456 = vpop.f32.mrf.mxu0
      %v457 = vadd.f32 0.0, %v456
      %458 = vmatmul.bf16.gmra.mxu0 %v382
      %v459 = vpop.f32.mrf.mxu0
      %v460 = vadd.f32 0.0, %v459
      %v461 = vpop.f32.mrf.mxu0
      %v462 = vadd.f32 0.0, %v461
      %463 = vdwg.mxu0
      %v464 = vadd.f32 %v339, %v445
      %v465 = vadd.f32 %v340, %v447
      %v466 = vadd.f32 %v341, %v450
      %v467 = vadd.f32 %v342, %v452
      %v468 = vadd.f32 %v343, %v455
      %v469 = vadd.f32 %v344, %v457
      %v470 = vadd.f32 %v345, %v460
      %v471 = vadd.f32 %v346, %v462
      %472 = vst [vmem:[#allocation2] sm:$0xff] %v464
      %473 = vst [vmem:[#allocation2 + $0x8] sm:$0xff] %v465
      %474 = vst [vmem:[#allocation2 + $0x10] sm:$0xff] %v466
      %475 = vst [vmem:[#allocation2 + $0x18] sm:$0xff] %v467
      %476 = vst [vmem:[#allocation2 + $0x20] sm:$0xff] %v468
      %477 = vst [vmem:[#allocation2 + $0x28] sm:$0xff] %v469
      %478 = vst [vmem:[#allocation2 + $0x30] sm:$0xff] %v470
      %479 = vst [vmem:[#allocation2 + $0x38] sm:$0xff] %v471
      // Predicated region
      $region41: #{_lambda_.22} parent=35 // pred_check
        %p480 = pneg %p319
      $region42: #{_lambda_.22} parent=35 // pred_check_branch
        %482 = sbr.rel (%p480) target = $region44
      $region43: #{_lambda_.22} parent=35 // pred_region
        %v483 = vld [vmem:[#allocation2] sm:$0xff]
        %v484 = vld [vmem:[#allocation2 + $0x8] sm:$0xff]
        %v485 = vld [vmem:[#allocation2 + $0x10] sm:$0xff]
        %v486 = vld [vmem:[#allocation2 + $0x18] sm:$0xff]
        %v487 = vld [vmem:[#allocation2 + $0x20] sm:$0xff]
        %v488 = vld [vmem:[#allocation2 + $0x28] sm:$0xff]
        %v489 = vld [vmem:[#allocation2 + $0x30] sm:$0xff]
        %v490 = vld [vmem:[#allocation2 + $0x38] sm:$0xff]
        %v491 = vld [vmem:[%s300] sm:$0x1]
        %v493 = vperm.slane %v491, 0
        %v495 = vadd.f32 %v483, %v493
        %v496 = vadd.f32 %v484, %v493
        %v497 = vadd.f32 %v485, %v493
        %v498 = vadd.f32 %v486, %v493
        %v499 = vadd.f32 %v487, %v493
        %v500 = vadd.f32 %v488, %v493
        %v501 = vadd.f32 %v489, %v493
        %v502 = vadd.f32 %v490, %v493
        %v503 = vld [vmem:[%s308] sm:$0xff]
        %v504 = vld [vmem:[%s308 + $0x8] sm:$0xff]
        %v505 = vld [vmem:[%s308 + $0x10] sm:$0xff]
        %v506 = vld [vmem:[%s308 + $0x18] sm:$0xff]
        %v507 = vld [vmem:[%s308 + $0x20] sm:$0xff]
        %v508 = vld [vmem:[%s308 + $0x28] sm:$0xff]
        %v509 = vld [vmem:[%s308 + $0x30] sm:$0xff]
        %v510 = vld [vmem:[%s308 + $0x38] sm:$0xff]
        %v511 = vadd.f32 %v495, %v503
        %v512 = vadd.f32 %v496, %v504
        %v513 = vadd.f32 %v497, %v505
        %v514 = vadd.f32 %v498, %v506
        %v515 = vadd.f32 %v499, %v507
        %v516 = vadd.f32 %v500, %v508
        %v517 = vadd.f32 %v501, %v509
        %v518 = vadd.f32 %v502, %v510
        %519 = vst [vmem:[%s317] sm:$0xff] %v511
        %520 = vst [vmem:[%s317 + $0x8] sm:$0xff] %v512
        %521 = vst [vmem:[%s317 + $0x10] sm:$0xff] %v513
        %522 = vst [vmem:[%s317 + $0x18] sm:$0xff] %v514
        %523 = vst [vmem:[%s317 + $0x20] sm:$0xff] %v515
        %524 = vst [vmem:[%s317 + $0x28] sm:$0xff] %v516
        %525 = vst [vmem:[%s317 + $0x30] sm:$0xff] %v517
        %526 = vst [vmem:[%s317 + $0x38] sm:$0xff] %v518
      $region44: #{_lambda_.22} parent=35 // pred_fallthru
        _
      %s527 = smul.u32 8, %s20
      %p528 = scmp.lt.s32.totalorder %s527, 15
      %s529 = scalar_select %p528, %s527, 15
      %p530 = scmp.lt.s32.totalorder %s21, 0
      %s531 = scalar_select %p530, %s21, 0
      %s532 = sadd.s32 %s531, %s529
      %s533 = smul.addr %s532, 8
      %s534 = scalar_lea.vmem %s4, %s533
      // Predicated region
      $region45: #{_lambda_.22} parent=35 // pred_check
        %p535 = pneg %p164
      $region46: #{_lambda_.22} parent=35 // pred_check_branch
        %537 = sbr.rel (%p535) target = $region48
      $region47: #{_lambda_.22} parent=35 // pred_region
        %s538 = smul.u32 8, %s20
      $region48: #{_lambda_.22} parent=35 // pred_fallthru
        _
    $region36: #{_lambda_.22} parent=5 // pred_fallthru
      _
    %p539 = scmp.le.s32.totalorder 2, %s10
    // Predicated region
    $region49: #{_lambda_.22} parent=5 // pred_check
      %p540 = pneg %p539
    $region50: #{_lambda_.22} parent=5 // pred_check_branch
      %542 = sbr.rel (%p540) target = $region52
    $region51: #{_lambda_.22} parent=5 // pred_region
      %s543 = ssub.s32 %s10, 2
      // Predicated region
      $region53: #{_lambda_.22} parent=51 // pred_check
        %p544 = pneg %p170
      $region54: #{_lambda_.22} parent=51 // pred_check_branch
        %546 = sbr.rel (%p544) target = $region56
      $region55: #{_lambda_.22} parent=51 // pred_region
        %s547 = smul.u32 8, %s23
        %p548 = scmp.lt.s32.totalorder %s547, 15
        %s549 = scalar_select %p548, %s547, 15
        %p550 = scmp.lt.s32.totalorder %s24, 0
        %s551 = scalar_select %p550, %s24, 0
        %s552 = sadd.s32 %s551, %s549
        %s553 = smul.addr %s552, 8
        %s554 = scalar_lea.vmem %s4, %s553
      $region56: #{_lambda_.22} parent=51 // pred_fallthru
        _
    $region52: #{_lambda_.22} parent=5 // pred_fallthru
      _
  $region6: #{_lambda_.22} parent=0 // loop_footer
    %s14 = sadd.s32 1, %s10
  $region7: #{_lambda_.22} parent=0 // loop_footer_branch
    %9 = sbr.rel target = $region3
  $region8: #{_lambda_.22} parent=0 // loop_exit
    _

// kernel: _lambda_.23
$region0: #{_lambda_.23}
  #allocation0 [shape = 'u32[]', space=smem, size = 0x4, offset = 0x4, fixed_abs, tag = 'smem constant byte address 0x4 - core index']
  #allocation1 [shape = 'u32[72,128]{1,0:T(1,128)}', space=vmem, size = 0x9000, scoped, tag = 'internal scratch']
  #allocation2 [shape = 'f32[64,128]{1,0:T(8,128)}', space=vmem, size = 0x8000, scoped, tag = 'scratch operand']
  %s0 = inlined_call_operand.vmem [shape: f32[128,128], index: 0, kind: input, shape index: {}]
  %s1 = inlined_call_operand.vmem [shape: bf16[128,128], index: 1, kind: input, shape index: {}]
  %s2 = inlined_call_operand.vmem [shape: f32[1,128], index: 2, kind: input, shape index: {}]
  %s3 = inlined_call_operand.vmem [shape: f32[1,128], index: 3, kind: input, shape index: {}]
  %s4 = inlined_call_operand.vmem [shape: f32[1,128], index: 4, kind: input, shape index: {}]
  %s5 = inlined_call_operand.vmem [shape: f32[128,128], index: 5, kind: output, shape index: {}]
  %s6 = sld [smem:[#allocation0]]
  $region61: #{_lambda_.23} parent=0
    _
  %s8 = ssub.s32 1, %s6
  %s9 = scalar_select 0, %s8, %s6
  loop: start=0, step=1, limit=4
  $region2: #{_lambda_.23} parent=0 // loop_pre_header
    _
  $region3: #{_lambda_.23} parent=0 // loop_header
    %s11 = sphi 0, %s15
    %p12 = scmp.ge.s32.totalorder %s11, 4
    %s18 = sphi 0, %s37
    %s19 = sphi 0, %s33
    %s20 = sphi 0, %s29
    %s21 = sphi 0, %s18
    %s22 = sphi 0, %s19
    %s23 = sphi 0, %s20
    %s24 = sphi 0, %s21
    %s25 = sphi 0, %s22
    %s26 = sphi 0, %s23
    %s42 = sphi 0, %s44
    %s45 = sphi 0, %s42
    %s46 = sphi 0, %s45
    %s62 = sphi 0, %s46
    %s70 = sphi 0, %s72
    %s73 = sphi 0, %s70
    %s74 = sphi 0, %s73
    %s90 = sphi 0, %s74
    %s96 = sphi 0, %s98
    %s99 = sphi 0, %s96
    %s100 = sphi 0, %s99
    %s116 = sphi 0, %s100
    %s122 = sphi 0, %s124
    %s125 = sphi 0, %s122
    %s126 = sphi 0, %s125
    %s142 = sphi 0, %s126
    %s148 = sphi 0, %s150
    %s151 = sphi 0, %s148
    %s152 = sphi 0, %s151
    %s168 = sphi 0, %s152
    %s176 = sphi 0, %s178
    %s179 = sphi 0, %s176
    %s180 = sphi 0, %s179
    %s196 = sphi 0, %s180
  $region4: #{_lambda_.23} parent=0 // loop_header_branch
    %14 = sbr.rel (%p12) target = $region8
  $region5: #{_lambda_.23} parent=0 // loop_body
    %s16 = ssub.s32 %s11, 1
    %s17 = ssub.s32 %s11, 2
    %s27 = sadd.s32 1, %s20
    %p28 = scmp.ge.s32.totalorder %s27, 1
    %s29 = scalar_select %p28, 0, %s27
    %s30 = sadd.s32 1, %s19
    %s31 = scalar_select %p28, %s30, %s19
    %p32 = scmp.ge.s32.totalorder %s31, 1
    %s33 = scalar_select %p32, 0, %s31
    %s34 = sadd.s32 1, %s18
    %s35 = scalar_select %p32, %s34, %s18
    %p36 = scmp.ge.s32.totalorder %s35, 2
    %s37 = scalar_select %p36, 0, %s35
    %s38 = ssub.s32 %s18, %s37
    %s39 = ssub.s32 %s20, %s29
    %s40 = sor.u32 %s38, %s39
    %p41 = scmp.eq.s32.totalorder %s40, 0
    %s43 = sadd.s32 %s42, 1
    %s44 = scalar_select %p41, %s42, %s43
    %p47 = pneg %p41
    %p48 = scmp.eq.s32.totalorder %s11, 1
    %p49 = por %p47, %p48
    %p50 = scmp.ne.s32.totalorder %s42, %s45
    %p51 = scmp.eq.s32.totalorder %s11, 0
    %p52 = por %p50, %p51
    %p53 = scmp.ne.s32.totalorder %s42, %s45
    %p54 = scmp.eq.s32.totalorder %s16, 1
    %p55 = por %p53, %p54
    %p56 = scmp.ne.s32.totalorder %s45, %s46
    %p57 = scmp.eq.s32.totalorder %s16, 0
    %p58 = por %p56, %p57
    %p59 = scmp.ne.s32.totalorder %s45, %s46
    %p60 = scmp.eq.s32.totalorder %s17, 1
    %p61 = por %p59, %p60
    %p63 = scmp.ne.s32.totalorder %s46, %s62
    %p64 = scmp.eq.s32.totalorder %s17, 0
    %p65 = por %p63, %p64
    %s66 = ssub.s32 %s20, %s29
    %s67 = ssub.s32 %s19, %s33
    %s68 = sor.u32 %s66, %s67
    %p69 = scmp.eq.s32.totalorder %s68, 0
    %s71 = sadd.s32 %s70, 1
    %s72 = scalar_select %p69, %s70, %s71
    %p75 = pneg %p69
    %p76 = scmp.eq.s32.totalorder %s11, 1
    %p77 = por %p75, %p76
    %p78 = scmp.ne.s32.totalorder %s70, %s73
    %p79 = scmp.eq.s32.totalorder %s11, 0
    %p80 = por %p78, %p79
    %p81 = scmp.ne.s32.totalorder %s70, %s73
    %p82 = scmp.eq.s32.totalorder %s16, 1
    %p83 = por %p81, %p82
    %p84 = scmp.ne.s32.totalorder %s73, %s74
    %p85 = scmp.eq.s32.totalorder %s16, 0
    %p86 = por %p84, %p85
    %p87 = scmp.ne.s32.totalorder %s73, %s74
    %p88 = scmp.eq.s32.totalorder %s17, 1
    %p89 = por %p87, %p88
    %p91 = scmp.ne.s32.totalorder %s74, %s90
    %p92 = scmp.eq.s32.totalorder %s17, 0
    %p93 = por %p91, %p92
    %s94 = ssub.s32 %s19, %s33
    %p95 = scmp.eq.s32.totalorder %s94, 0
    %s97 = sadd.s32 %s96, 1
    %s98 = scalar_select %p95, %s96, %s97
    %p101 = pneg %p95
    %p102 = scmp.eq.s32.totalorder %s11, 1
    %p103 = por %p101, %p102
    %p104 = scmp.ne.s32.totalorder %s96, %s99
    %p105 = scmp.eq.s32.totalorder %s11, 0
    %p106 = por %p104, %p105
    %p107 = scmp.ne.s32.totalorder %s96, %s99
    %p108 = scmp.eq.s32.totalorder %s16, 1
    %p109 = por %p107, %p108
    %p110 = scmp.ne.s32.totalorder %s99, %s100
    %p111 = scmp.eq.s32.totalorder %s16, 0
    %p112 = por %p110, %p111
    %p113 = scmp.ne.s32.totalorder %s99, %s100
    %p114 = scmp.eq.s32.totalorder %s17, 1
    %p115 = por %p113, %p114
    %p117 = scmp.ne.s32.totalorder %s100, %s116
    %p118 = scmp.eq.s32.totalorder %s17, 0
    %p119 = por %p117, %p118
    %s120 = ssub.s32 %s20, %s29
    %p121 = scmp.eq.s32.totalorder %s120, 0
    %s123 = sadd.s32 %s122, 1
    %s124 = scalar_select %p121, %s122, %s123
    %p127 = pneg %p121
    %p128 = scmp.eq.s32.totalorder %s11, 1
    %p129 = por %p127, %p128
    %p130 = scmp.ne.s32.totalorder %s122, %s125
    %p131 = scmp.eq.s32.totalorder %s11, 0
    %p132 = por %p130, %p131
    %p133 = scmp.ne.s32.totalorder %s122, %s125
    %p134 = scmp.eq.s32.totalorder %s16, 1
    %p135 = por %p133, %p134
    %p136 = scmp.ne.s32.totalorder %s125, %s126
    %p137 = scmp.eq.s32.totalorder %s16, 0
    %p138 = por %p136, %p137
    %p139 = scmp.ne.s32.totalorder %s125, %s126
    %p140 = scmp.eq.s32.totalorder %s17, 1
    %p141 = por %p139, %p140
    %p143 = scmp.ne.s32.totalorder %s126, %s142
    %p144 = scmp.eq.s32.totalorder %s17, 0
    %p145 = por %p143, %p144
    %s146 = ssub.s32 %s20, %s29
    %p147 = scmp.eq.s32.totalorder %s146, 0
    %s149 = sadd.s32 %s148, 1
    %s150 = scalar_select %p147, %s148, %s149
    %p153 = pneg %p147
    %p154 = scmp.eq.s32.totalorder %s11, 1
    %p155 = por %p153, %p154
    %p156 = scmp.ne.s32.totalorder %s148, %s151
    %p157 = scmp.eq.s32.totalorder %s11, 0
    %p158 = por %p156, %p157
    %p159 = scmp.ne.s32.totalorder %s148, %s151
    %p160 = scmp.eq.s32.totalorder %s16, 1
    %p161 = por %p159, %p160
    %p162 = scmp.ne.s32.totalorder %s151, %s152
    %p163 = scmp.eq.s32.totalorder %s16, 0
    %p164 = por %p162, %p163
    %p165 = scmp.ne.s32.totalorder %s151, %s152
    %p166 = scmp.eq.s32.totalorder %s17, 1
    %p167 = por %p165, %p166
    %p169 = scmp.ne.s32.totalorder %s152, %s168
    %p170 = scmp.eq.s32.totalorder %s17, 0
    %p171 = por %p169, %p170
    %s172 = ssub.s32 %s18, %s37
    %s173 = ssub.s32 %s19, %s33
    %s174 = sor.u32 %s172, %s173
    %p175 = scmp.eq.s32.totalorder %s174, 0
    %s177 = sadd.s32 %s176, 1
    %s178 = scalar_select %p175, %s176, %s177
    %p181 = pneg %p175
    %p182 = scmp.eq.s32.totalorder %s11, 1
    %p183 = por %p181, %p182
    %p184 = scmp.ne.s32.totalorder %s176, %s179
    %p185 = scmp.eq.s32.totalorder %s11, 0
    %p186 = por %p184, %p185
    %p187 = scmp.ne.s32.totalorder %s176, %s179
    %p188 = scmp.eq.s32.totalorder %s16, 1
    %p189 = por %p187, %p188
    %p190 = scmp.ne.s32.totalorder %s179, %s180
    %p191 = scmp.eq.s32.totalorder %s16, 0
    %p192 = por %p190, %p191
    %p193 = scmp.ne.s32.totalorder %s179, %s180
    %p194 = scmp.eq.s32.totalorder %s17, 1
    %p195 = por %p193, %p194
    %p197 = scmp.ne.s32.totalorder %s180, %s196
    %p198 = scmp.eq.s32.totalorder %s17, 0
    %p199 = por %p197, %p198
    %p200 = scmp.le.s32.totalorder 1, %s11
    %p201 = scmp.lt.s32.totalorder %s11, 3
    %p202 = pnand %p200, %p201
    %p203 = pneg %p202
    // Predicated region
    $region9: #{_lambda_.23} parent=5 // pred_check
      _
    $region10: #{_lambda_.23} parent=5 // pred_check_branch
      %205 = sbr.rel (%p202) target = $region12
    $region11: #{_lambda_.23} parent=5 // pred_region
      %s206 = ssub.s32 %s11, 1
      // Predicated region
      $region13: #{_lambda_.23} parent=11 // pred_check
        %p207 = pneg %p86
      $region14: #{_lambda_.23} parent=11 // pred_check_branch
        %209 = sbr.rel (%p207) target = $region16
      $region15: #{_lambda_.23} parent=11 // pred_region
        %s210 = smul.u32 16, %s23
        %p211 = scmp.lt.s32.totalorder %s210, 15
        %s212 = scalar_select %p211, %s210, 15
        %p213 = scmp.lt.s32.totalorder %s22, 0
        %s214 = scalar_select %p213, %s22, 0
        %s215 = sadd.s32 %s214, %s212
        %s216 = smul.addr %s215, 4
        %s217 = scalar_lea.vmem %s1, %s216
        %s218 = smul.u32 16, %s23
      $region16: #{_lambda_.23} parent=11 // pred_fallthru
        _
      // Predicated region
      $region17: #{_lambda_.23} parent=11 // pred_check
        %p219 = pneg %p112
      $region18: #{_lambda_.23} parent=11 // pred_check_branch
        %221 = sbr.rel (%p219) target = $region20
      $region19: #{_lambda_.23} parent=11 // pred_region
        %p222 = scmp.lt.s32.totalorder %s22, 0
        %s223 = scalar_select %p222, %s22, 0
        %s224 = scalar_lea.vmem %s2, %s223
      $region20: #{_lambda_.23} parent=11 // pred_fallthru
        _
      // Predicated region
      $region21: #{_lambda_.23} parent=11 // pred_check
        %p225 = pneg %p138
      $region22: #{_lambda_.23} parent=11 // pred_check_branch
        %227 = sbr.rel (%p225) target = $region24
      $region23: #{_lambda_.23} parent=11 // pred_region
        %p228 = scmp.lt.s32.totalorder %s23, 0
        %s229 = scalar_select %p228, %s23, 0
        %s230 = scalar_lea.vmem %s3, %s229
      $region24: #{_lambda_.23} parent=11 // pred_fallthru
        _
      // Predicated region
      $region25: #{_lambda_.23} parent=11 // pred_check
        %p231 = pneg %p164
      $region26: #{_lambda_.23} parent=11 // pred_check_branch
        %233 = sbr.rel (%p231) target = $region28
      $region27: #{_lambda_.23} parent=11 // pred_region
        %p234 = scmp.lt.s32.totalorder %s23, 0
        %s235 = scalar_select %p234, %s23, 0
        %s236 = scalar_lea.vmem %s4, %s235
      $region28: #{_lambda_.23} parent=11 // pred_fallthru
        _
    $region12: #{_lambda_.23} parent=5 // pred_fallthru
      _
    %p237 = scmp.lt.s32.totalorder %s11, 2
    // Predicated region
    $region29: #{_lambda_.23} parent=5 // pred_check
      %p238 = pneg %p237
    $region30: #{_lambda_.23} parent=5 // pred_check_branch
      %240 = sbr.rel (%p238) target = $region32
    $region31: #{_lambda_.23} parent=5 // pred_region
      // Predicated region
      $region33: #{_lambda_.23} parent=31 // pred_check
        %p241 = pneg %p52
      $region34: #{_lambda_.23} parent=31 // pred_check_branch
        %243 = sbr.rel (%p241) target = $region36
      $region35: #{_lambda_.23} parent=31 // pred_region
        %s244 = smul.u32 8, %s18
        %p245 = scmp.lt.s32.totalorder %s244, 15
        %s246 = scalar_select %p245, %s244, 15
        %p247 = scmp.lt.s32.totalorder %s20, 0
        %s248 = scalar_select %p247, %s20, 0
        %s249 = sadd.s32 %s248, %s246
        %s250 = smul.addr %s249, 8
        %s251 = scalar_lea.vmem %s0, %s250
        %s252 = smul.u32 8, %s18
      $region36: #{_lambda_.23} parent=31 // pred_fallthru
        _
    $region32: #{_lambda_.23} parent=5 // pred_fallthru
      _
    %p253 = scmp.le.s32.totalorder 1, %s11
    %p254 = scmp.lt.s32.totalorder %s11, 3
    %p255 = pnand %p253, %p254
    %p256 = pneg %p255
    // Predicated region
    $region37: #{_lambda_.23} parent=5 // pred_check
      _
    $region38: #{_lambda_.23} parent=5 // pred_check_branch
      %258 = sbr.rel (%p255) target = $region40
    $region39: #{_lambda_.23} parent=5 // pred_region
      %s259 = ssub.s32 %s11, 1
      %s260 = smul.u32 8, %s21
      %p261 = scmp.lt.s32.totalorder %s260, 15
      %s262 = scalar_select %p261, %s260, 15
      %p263 = scmp.lt.s32.totalorder %s23, 0
      %s264 = scalar_select %p263, %s23, 0
      %s265 = sadd.s32 %s264, %s262
      %s266 = smul.addr %s265, 8
      %s267 = scalar_lea.vmem %s0, %s266
      %p268 = pneg %p58
      %p269 = pneg %p55
      %s270 = smul.u32 16, %s23
      %p271 = scmp.lt.s32.totalorder %s270, 15
      %s272 = scalar_select %p271, %s270, 15
      %p273 = scmp.lt.s32.totalorder %s22, 0
      %s274 = scalar_select %p273, %s22, 0
      %s275 = sadd.s32 %s274, %s272
      %s276 = smul.addr %s275, 4
      %s277 = scalar_lea.vmem %s1, %s276
      %p278 = pneg %p86
      %p279 = pneg %p83
      %p280 = scmp.lt.s32.totalorder %s22, 0
      %s281 = scalar_select %p280, %s22, 0
      %s282 = scalar_lea.vmem %s2, %s281
      %p283 = pneg %p112
      %p284 = pneg %p109
      %p285 = scmp.lt.s32.totalorder %s23, 0
      %s286 = scalar_select %p285, %s23, 0
      %s287 = scalar_lea.vmem %s3, %s286
      %p288 = pneg %p138
      %p289 = pneg %p135
      %p290 = scmp.lt.s32.totalorder %s23, 0
      %s291 = scalar_select %p290, %s23, 0
      %s292 = scalar_lea.vmem %s4, %s291
      %p293 = pneg %p164
      %p294 = pneg %p161
      %p295 = pneg %p192
      %p296 = pneg %p189
      %s297 = smul.u32 8, %s21
      %p298 = scmp.lt.s32.totalorder %s297, 15
      %s299 = scalar_select %p298, %s297, 15
      %p300 = scmp.lt.s32.totalorder %s22, 0
      %s301 = scalar_select %p300, %s22, 0
      %s302 = sadd.s32 %s301, %s299
      %s303 = smul.addr %s302, 8
      %s304 = scalar_lea.vmem %s5, %s303
      %s305 = smul.u32 8, %s21
      %p306 = scmp.lt.s32.totalorder %s305, 15
      %s307 = scalar_select %p306, %s305, 15
      %p308 = scmp.lt.s32.totalorder %s23, 0
      %s309 = scalar_select %p308, %s23, 0
      %s310 = sadd.s32 %s309, %s307
      %s311 = smul.addr %s310, 8
      %s312 = scalar_lea.vmem %s0, %s311
      %s313 = smul.u32 8, %s21
      %s314 = smul.u32 16, %s23
      %p315 = scmp.lt.s32.totalorder %s314, 15
      %s316 = scalar_select %p315, %s314, 15
      %p317 = scmp.lt.s32.totalorder %s22, 0
      %s318 = scalar_select %p317, %s22, 0
      %s319 = sadd.s32 %s318, %s316
      %s320 = smul.addr %s319, 4
      %s321 = scalar_lea.vmem %s1, %s320
      %s322 = smul.u32 16, %s23
      %p323 = scmp.lt.s32.totalorder %s22, 0
      %s324 = scalar_select %p323, %s22, 0
      %s325 = scalar_lea.vmem %s2, %s324
      %p326 = scmp.lt.s32.totalorder %s23, 0
      %s327 = scalar_select %p326, %s23, 0
      %s328 = scalar_lea.vmem %s3, %s327
      %p329 = scmp.lt.s32.totalorder %s23, 0
      %s330 = scalar_select %p329, %s23, 0
      %s331 = scalar_lea.vmem %s4, %s330
      %s332 = smul.u32 8, %s21
      %p333 = scmp.lt.s32.totalorder %s332, 15
      %s334 = scalar_select %p333, %s332, 15
      %p335 = scmp.lt.s32.totalorder %s22, 0
      %s336 = scalar_select %p335, %s22, 0
      %s337 = sadd.s32 %s336, %s334
      %s338 = smul.addr %s337, 8
      %s339 = scalar_lea.vmem %s5, %s338
      %s340 = smul.u32 8, %s21
      %p341 = scmp.eq.s32.totalorder %s23, 0
      // Predicated region
      $region41: #{_lambda_.23} parent=39 // pred_check
        %p342 = pneg %p341
      $region42: #{_lambda_.23} parent=39 // pred_check_branch
        %344 = sbr.rel (%p342) target = $region44
      $region43: #{_lambda_.23} parent=39 // pred_region
        %345 = vst [vmem:[#allocation2] sm:$0xff] 0.0
        %346 = vst [vmem:[#allocation2 + $0x8] sm:$0xff] 0.0
        %347 = vst [vmem:[#allocation2 + $0x10] sm:$0xff] 0.0
        %348 = vst [vmem:[#allocation2 + $0x18] sm:$0xff] 0.0
        %349 = vst [vmem:[#allocation2 + $0x20] sm:$0xff] 0.0
        %350 = vst [vmem:[#allocation2 + $0x28] sm:$0xff] 0.0
        %351 = vst [vmem:[#allocation2 + $0x30] sm:$0xff] 0.0
        %352 = vst [vmem:[#allocation2 + $0x38] sm:$0xff] 0.0
      $region44: #{_lambda_.23} parent=39 // pred_fallthru
        _
      %v353 = vld [vmem:[%s312] sm:$0xff]
      %v354 = vld [vmem:[%s312 + $0x8] sm:$0xff]
      %v355 = vld [vmem:[%s312 + $0x10] sm:$0xff]
      %v356 = vld [vmem:[%s312 + $0x18] sm:$0xff]
      %v357 = vld [vmem:[%s312 + $0x20] sm:$0xff]
      %v358 = vld [vmem:[%s312 + $0x28] sm:$0xff]
      %v359 = vld [vmem:[%s312 + $0x30] sm:$0xff]
      %v360 = vld [vmem:[%s312 + $0x38] sm:$0xff]
      %v361 = vlaneseq
      %v362 = vand.u32 %v361, 127
      %vm363 = vcmp.lt.s32.totalorder %v362, 32
      %v364 = vsel %vm363, 1, 0
      %v365 = vcvt.s32.f32 %v364
      %366 = vadd.xlane.f32.xlu0 %v353
      %v367 = vpop.xlane.xlu0 %366
      %368 = vadd.xlane.f32.xlu0 %v354
      %v369 = vpop.xlane.xlu0 %368
      %370 = vadd.xlane.f32.xlu0 %v355
      %v371 = vpop.xlane.xlu0 %370
      %372 = vadd.xlane.f32.xlu0 %v356
      %v373 = vpop.xlane.xlu0 %372
      %374 = vadd.xlane.f32.xlu0 %v357
      %v375 = vpop.xlane.xlu0 %374
      %376 = vadd.xlane.f32.xlu0 %v358
      %v377 = vpop.xlane.xlu0 %376
      %378 = vadd.xlane.f32.xlu0 %v359
      %v379 = vpop.xlane.xlu0 %378
      %380 = vadd.xlane.f32.xlu0 %v360
      %v381 = vpop.xlane.xlu0 %380
      %v382 = vmul.f32 %v367, 0.03125
      %v383 = vmul.f32 %v369, 0.03125
      %v384 = vmul.f32 %v371, 0.03125
      %v385 = vmul.f32 %v373, 0.03125
      %v386 = vmul.f32 %v375, 0.03125
      %v387 = vmul.f32 %v377, 0.03125
      %v388 = vmul.f32 %v379, 0.03125
      %v389 = vmul.f32 %v381, 0.03125
      %v390 = vsub.f32 %v353, %v382
      %v391 = vsub.f32 %v354, %v383
      %v392 = vsub.f32 %v355, %v384
      %v393 = vsub.f32 %v356, %v385
      %v394 = vsub.f32 %v357, %v386
      %v395 = vsub.f32 %v358, %v387
      %v396 = vsub.f32 %v359, %v388
      %v397 = vsub.f32 %v360, %v389
      %v398 = vmul.f32 %v390, %v365
      %v399 = vmul.f32 %v391, %v365
      %v400 = vmul.f32 %v392, %v365
      %v401 = vmul.f32 %v393, %v365
      %v402 = vmul.f32 %v394, %v365
      %v403 = vmul.f32 %v395, %v365
      %v404 = vmul.f32 %v396, %v365
      %v405 = vmul.f32 %v397, %v365
      %v406 = vmul.f32 %v398, %v398
      %v407 = vmul.f32 %v399, %v399
      %v408 = vmul.f32 %v400, %v400
      %v409 = vmul.f32 %v401, %v401
      %v410 = vmul.f32 %v402, %v402
      %v411 = vmul.f32 %v403, %v403
      %v412 = vmul.f32 %v404, %v404
      %v413 = vmul.f32 %v405, %v405
      %414 = vadd.xlane.f32.xlu0 %v406
      %v415 = vpop.xlane.xlu0 %414
      %416 = vadd.xlane.f32.xlu0 %v407
      %v417 = vpop.xlane.xlu0 %416
      %418 = vadd.xlane.f32.xlu0 %v408
      %v419 = vpop.xlane.xlu0 %418
      %420 = vadd.xlane.f32.xlu0 %v409
      %v421 = vpop.xlane.xlu0 %420
      %422 = vadd.xlane.f32.xlu0 %v410
      %v423 = vpop.xlane.xlu0 %422
      %424 = vadd.xlane.f32.xlu0 %v411
      %v425 = vpop.xlane.xlu0 %424
      %426 = vadd.xlane.f32.xlu0 %v412
      %v427 = vpop.xlane.xlu0 %426
      %428 = vadd.xlane.f32.xlu0 %v413
      %v429 = vpop.xlane.xlu0 %428
      %v430 = vmul.f32 %v415, 0.03125
      %v431 = vmul.f32 %v417, 0.03125
      %v432 = vmul.f32 %v419, 0.03125
      %v433 = vmul.f32 %v421, 0.03125
      %v434 = vmul.f32 %v423, 0.03125
      %v435 = vmul.f32 %v425, 0.03125
      %v436 = vmul.f32 %v427, 0.03125
      %v437 = vmul.f32 %v429, 0.03125
      %v438 = vadd.f32 %v430, 1e-05
      %v439 = vadd.f32 %v431, 1e-05
      %v440 = vadd.f32 %v432, 1e-05
      %v441 = vadd.f32 %v433, 1e-05
      %v442 = vadd.f32 %v434, 1e-05
      %v443 = vadd.f32 %v435, 1e-05
      %v444 = vadd.f32 %v436, 1e-05
      %v445 = vadd.f32 %v437, 1e-05
      %v446 = vrsqrt.pop %v438
      %v447 = vmul.f32 %v446, %v438
      %v448 = vmul.f32 %v447, %v446
      %v449 = vmul.f32 0.5, %v448
      %v450 = vsub.f32 1.5, %v449
      %v451 = vmul.f32 %v446, %v450
      %vm452 = vweird.f32 %v438
      %vm453 = vweird.f32 %v446
      %vm454 = vmor %vm452, %vm453
      %v455 = vsel %vm454, %v446, %v451
      %v456 = vrsqrt.pop %v439
      %v457 = vmul.f32 %v456, %v439
      %v458 = vmul.f32 %v457, %v456
      %v459 = vmul.f32 0.5, %v458
      %v460 = vsub.f32 1.5, %v459
      %v461 = vmul.f32 %v456, %v460
      %vm462 = vweird.f32 %v439
      %vm463 = vweird.f32 %v456
      %vm464 = vmor %vm462, %vm463
      %v465 = vsel %vm464, %v456, %v461
      %v466 = vrsqrt.pop %v440
      %v467 = vmul.f32 %v466, %v440
      %v468 = vmul.f32 %v467, %v466
      %v469 = vmul.f32 0.5, %v468
      %v470 = vsub.f32 1.5, %v469
      %v471 = vmul.f32 %v466, %v470
      %vm472 = vweird.f32 %v440
      %vm473 = vweird.f32 %v466
      %vm474 = vmor %vm472, %vm473
      %v475 = vsel %vm474, %v466, %v471
      %v476 = vrsqrt.pop %v441
      %v477 = vmul.f32 %v476, %v441
      %v478 = vmul.f32 %v477, %v476
      %v479 = vmul.f32 0.5, %v478
      %v480 = vsub.f32 1.5, %v479
      %v481 = vmul.f32 %v476, %v480
      %vm482 = vweird.f32 %v441
      %vm483 = vweird.f32 %v476
      %vm484 = vmor %vm482, %vm483
      %v485 = vsel %vm484, %v476, %v481
      %v486 = vrsqrt.pop %v442
      %v487 = vmul.f32 %v486, %v442
      %v488 = vmul.f32 %v487, %v486
      %v489 = vmul.f32 0.5, %v488
      %v490 = vsub.f32 1.5, %v489
      %v491 = vmul.f32 %v486, %v490
      %vm492 = vweird.f32 %v442
      %vm493 = vweird.f32 %v486
      %vm494 = vmor %vm492, %vm493
      %v495 = vsel %vm494, %v486, %v491
      %v496 = vrsqrt.pop %v443
      %v497 = vmul.f32 %v496, %v443
      %v498 = vmul.f32 %v497, %v496
      %v499 = vmul.f32 0.5, %v498
      %v500 = vsub.f32 1.5, %v499
      %v501 = vmul.f32 %v496, %v500
      %vm502 = vweird.f32 %v443
      %vm503 = vweird.f32 %v496
      %vm504 = vmor %vm502, %vm503
      %v505 = vsel %vm504, %v496, %v501
      %v506 = vrsqrt.pop %v444
      %v507 = vmul.f32 %v506, %v444
      %v508 = vmul.f32 %v507, %v506
      %v509 = vmul.f32 0.5, %v508
      %v510 = vsub.f32 1.5, %v509
      %v511 = vmul.f32 %v506, %v510
      %vm512 = vweird.f32 %v444
      %vm513 = vweird.f32 %v506
      %vm514 = vmor %vm512, %vm513
      %v515 = vsel %vm514, %v506, %v511
      %v516 = vrsqrt.pop %v445
      %v517 = vmul.f32 %v516, %v445
      %v518 = vmul.f32 %v517, %v516
      %v519 = vmul.f32 0.5, %v518
      %v520 = vsub.f32 1.5, %v519
      %v521 = vmul.f32 %v516, %v520
      %vm522 = vweird.f32 %v445
      %vm523 = vweird.f32 %v516
      %vm524 = vmor %vm522, %vm523
      %v525 = vsel %vm524, %v516, %v521
      %v526 = vmul.f32 %v398, %v455
      %v527 = vmul.f32 %v399, %v465
      %v528 = vmul.f32 %v400, %v475
      %v529 = vmul.f32 %v401, %v485
      %v530 = vmul.f32 %v402, %v495
      %v531 = vmul.f32 %v403, %v505
      %v532 = vmul.f32 %v404, %v515
      %v533 = vmul.f32 %v405, %v525
      %v534 = vld [vmem:[%s328] sm:$0x1]
      %v536 = vperm.slane %v534, 0
      %v538 = vmul.f32 %v526, %v536
      %v539 = vmul.f32 %v527, %v536
      %v540 = vmul.f32 %v528, %v536
      %v541 = vmul.f32 %v529, %v536
      %v542 = vmul.f32 %v530, %v536
      %v543 = vmul.f32 %v531, %v536
      %v544 = vmul.f32 %v532, %v536
      %v545 = vmul.f32 %v533, %v536
      %v546 = vld [vmem:[%s331] sm:$0x1]
      %v548 = vperm.slane %v546, 0
      %v550 = vadd.f32 %v538, %v548
      %v551 = vadd.f32 %v539, %v548
      %v552 = vadd.f32 %v540, %v548
      %v553 = vadd.f32 %v541, %v548
      %v554 = vadd.f32 %v542, %v548
      %v555 = vadd.f32 %v543, %v548
      %v556 = vadd.f32 %v544, %v548
      %v557 = vadd.f32 %v545, %v548
      %v558 = vld [vmem:[#allocation2] sm:$0xff]
      %v559 = vld [vmem:[#allocation2 + $0x8] sm:$0xff]
      %v560 = vld [vmem:[#allocation2 + $0x10] sm:$0xff]
      %v561 = vld [vmem:[#allocation2 + $0x18] sm:$0xff]
      %v562 = vld [vmem:[#allocation2 + $0x20] sm:$0xff]
      %v563 = vld [vmem:[#allocation2 + $0x28] sm:$0xff]
      %v564 = vld [vmem:[#allocation2 + $0x30] sm:$0xff]
      %v565 = vld [vmem:[#allocation2 + $0x38] sm:$0xff]
      %v566 = vpack.c.bf16 %v551, %v550
      %v567 = vpack.c.bf16 %v553, %v552
      %v568 = vpack.c.bf16 %v555, %v554
      %v569 = vpack.c.bf16 %v557, %v556
      %v570 = vld [vmem:[%s321] sm:$0xf]
      %v571 = vld [vmem:[%s321 + $0x4] sm:$0xf]
      %v572 = vld [vmem:[%s321 + $0x8] sm:$0xf]
      %v573 = vld [vmem:[%s321 + $0xc] sm:$0xf]
      %v574 = vld [vmem:[%s321 + $0x10] sm:$0xf]
      %v575 = vld [vmem:[%s321 + $0x14] sm:$0xf]
      %v576 = vld [vmem:[%s321 + $0x18] sm:$0xf]
      %v577 = vld [vmem:[%s321 + $0x1c] sm:$0xf]
      %v578 = vld [vmem:[%s321 + $0x20] sm:$0xf]
      %v579 = vld [vmem:[%s321 + $0x24] sm:$0xf]
      %v580 = vld [vmem:[%s321 + $0x28] sm:$0xf]
      %v581 = vld [vmem:[%s321 + $0x2c] sm:$0xf]
      %v582 = vld [vmem:[%s321 + $0x30] sm:$0xf]
      %v583 = vld [vmem:[%s321 + $0x34] sm:$0xf]
      %v584 = vld [vmem:[%s321 + $0x38] sm:$0xf]
      %v585 = vld [vmem:[%s321 + $0x3c] sm:$0xf]
      %v602 = vunpack.c.l.b16 %v570
      %v603 = vunpack.c.l.b16 %v571
      %v604 = vunpack.c.l.b16 %v572
      %v605 = vunpack.c.l.b16 %v573
      %v606 = vunpack.c.l.b16 %v574
      %v607 = vunpack.c.l.b16 %v575
      %v608 = vunpack.c.l.b16 %v576
      %v609 = vunpack.c.l.b16 %v577
      %v610 = vunpack.c.l.b16 %v578
      %v611 = vunpack.c.l.b16 %v579
      %v612 = vunpack.c.l.b16 %v580
      %v613 = vunpack.c.l.b16 %v581
      %v614 = vunpack.c.l.b16 %v582
      %v615 = vunpack.c.l.b16 %v583
      %v616 = vunpack.c.l.b16 %v584
      %v617 = vunpack.c.l.b16 %v585
      %v618 = vpack.c.b16 %v603, %v602
      %v619 = vpack.c.b16 %v605, %v604
      %v620 = vpack.c.b16 %v607, %v606
      %v621 = vpack.c.b16 %v609, %v608
      %v622 = vpack.c.b16 %v611, %v610
      %v623 = vpack.c.b16 %v613, %v612
      %v624 = vpack.c.b16 %v615, %v614
      %v625 = vpack.c.b16 %v617, %v616
      %634 = vmatpush.bf16.msra.mxu0 %v625
      %635 = vmatpush.bf16.msra.mxu0 %v624
      %636 = vmatpush.bf16.msra.mxu0 %v623
      %637 = vmatpush.bf16.msra.mxu0 %v622
      %638 = vmatpush.bf16.msra.mxu0 %v621
      %639 = vmatpush.bf16.msra.mxu0 %v620
      %640 = vmatpush.bf16.msra.mxu0 %v619
      %641 = vmatpush.bf16.msra.mxu0 %v618
      %642 = vmatmul.bf16.gmra.mxu0 %v566
      %v643 = vpop.f32.mrf.mxu0
      %v644 = vadd.f32 0.0, %v643
      %v645 = vpop.f32.mrf.mxu0
      %v646 = vadd.f32 0.0, %v645
      %647 = vmatmul.bf16.gmra.mxu0 %v567
      %v648 = vpop.f32.mrf.mxu0
      %v649 = vadd.f32 0.0, %v648
      %v650 = vpop.f32.mrf.mxu0
      %v651 = vadd.f32 0.0, %v650
      %652 = vmatmul.bf16.gmra.mxu0 %v568
      %v653 = vpop.f32.mrf.mxu0
      %v654 = vadd.f32 0.0, %v653
      %v655 = vpop.f32.mrf.mxu0
      %v656 = vadd.f32 0.0, %v655
      %657 = vmatmul.bf16.gmra.mxu0 %v569
      %v658 = vpop.f32.mrf.mxu0
      %v659 = vadd.f32 0.0, %v658
      %v660 = vpop.f32.mrf.mxu0
      %v661 = vadd.f32 0.0, %v660
      %662 = vdwg.mxu0
      %v663 = vadd.f32 %v558, %v644
      %v664 = vadd.f32 %v559, %v646
      %v665 = vadd.f32 %v560, %v649
      %v666 = vadd.f32 %v561, %v651
      %v667 = vadd.f32 %v562, %v654
      %v668 = vadd.f32 %v563, %v656
      %v669 = vadd.f32 %v564, %v659
      %v670 = vadd.f32 %v565, %v661
      %671 = vst [vmem:[#allocation2] sm:$0xff] %v663
      %672 = vst [vmem:[#allocation2 + $0x8] sm:$0xff] %v664
      %673 = vst [vmem:[#allocation2 + $0x10] sm:$0xff] %v665
      %674 = vst [vmem:[#allocation2 + $0x18] sm:$0xff] %v666
      %675 = vst [vmem:[#allocation2 + $0x20] sm:$0xff] %v667
      %676 = vst [vmem:[#allocation2 + $0x28] sm:$0xff] %v668
      %677 = vst [vmem:[#allocation2 + $0x30] sm:$0xff] %v669
      %678 = vst [vmem:[#allocation2 + $0x38] sm:$0xff] %v670
      // Predicated region
      $region45: #{_lambda_.23} parent=39 // pred_check
        %p679 = pneg %p341
      $region46: #{_lambda_.23} parent=39 // pred_check_branch
        %681 = sbr.rel (%p679) target = $region48
      $region47: #{_lambda_.23} parent=39 // pred_region
        %v682 = vld [vmem:[#allocation2] sm:$0xff]
        %v683 = vld [vmem:[#allocation2 + $0x8] sm:$0xff]
        %v684 = vld [vmem:[#allocation2 + $0x10] sm:$0xff]
        %v685 = vld [vmem:[#allocation2 + $0x18] sm:$0xff]
        %v686 = vld [vmem:[#allocation2 + $0x20] sm:$0xff]
        %v687 = vld [vmem:[#allocation2 + $0x28] sm:$0xff]
        %v688 = vld [vmem:[#allocation2 + $0x30] sm:$0xff]
        %v689 = vld [vmem:[#allocation2 + $0x38] sm:$0xff]
        %v690 = vld [vmem:[%s325] sm:$0x1]
        %v692 = vperm.slane %v690, 0
        %v694 = vadd.f32 %v682, %v692
        %v695 = vadd.f32 %v683, %v692
        %v696 = vadd.f32 %v684, %v692
        %v697 = vadd.f32 %v685, %v692
        %v698 = vadd.f32 %v686, %v692
        %v699 = vadd.f32 %v687, %v692
        %v700 = vadd.f32 %v688, %v692
        %v701 = vadd.f32 %v689, %v692
        %v702 = vmul.f32 %v694, 0.5
        %v703 = vmul.f32 %v695, 0.5
        %v704 = vmul.f32 %v696, 0.5
        %v705 = vmul.f32 %v697, 0.5
        %v706 = vmul.f32 %v698, 0.5
        %v707 = vmul.f32 %v699, 0.5
        %v708 = vmul.f32 %v700, 0.5
        %v709 = vmul.f32 %v701, 0.5
        %v710 = vmul.f32 %v694, 0.70710677
        %v711 = vmul.f32 %v695, 0.70710677
        %v712 = vmul.f32 %v696, 0.70710677
        %v713 = vmul.f32 %v697, 0.70710677
        %v714 = vmul.f32 %v698, 0.70710677
        %v715 = vmul.f32 %v699, 0.70710677
        %v716 = vmul.f32 %v700, 0.70710677
        %v717 = vmul.f32 %v701, 0.70710677
        %v718 = vand.u32 2147483647, %v710
        %v719 = vand.u32 2147483647, %v711
        %v720 = vand.u32 2147483647, %v712
        %v721 = vand.u32 2147483647, %v713
        %v722 = vand.u32 2147483647, %v714
        %v723 = vand.u32 2147483647, %v715
        %v724 = vand.u32 2147483647, %v716
        %v725 = vand.u32 2147483647, %v717
        %v726 = vmul.f32 %v718, 0.3275911
        %v727 = vmul.f32 %v719, 0.3275911
        %v728 = vmul.f32 %v720, 0.3275911
        %v729 = vmul.f32 %v721, 0.3275911
        %v730 = vmul.f32 %v722, 0.3275911
        %v731 = vmul.f32 %v723, 0.3275911
        %v732 = vmul.f32 %v724, 0.3275911
        %v733 = vmul.f32 %v725, 0.3275911
        %v734 = vadd.f32 %v726, 1.0
        %v735 = vadd.f32 %v727, 1.0
        %v736 = vadd.f32 %v728, 1.0
        %v737 = vadd.f32 %v729, 1.0
        %v738 = vadd.f32 %v730, 1.0
        %v739 = vadd.f32 %v731, 1.0
        %v740 = vadd.f32 %v732, 1.0
        %v741 = vadd.f32 %v733, 1.0
        %v742 = vrcp.pop %v734
        %v743 = vmul.f32 %v734, %v742
        %v744 = vsub.f32 1.0, %v743
        %v745 = vmul.f32 %v742, %v744
        %v746 = vadd.f32 %v742, %v745
        %vm747 = vweird.f32 %v734
        %vm748 = vweird.f32 %v742
        %vm749 = vmor %vm747, %vm748
        %v750 = vsel %vm749, %v742, %v746
        %v751 = vand.u32 2147483647, %v734
        %vm752 = vcmp.eq.f32.partialorder %v751, 8.507059e+37
        %v753 = vand.u32 %v734, 2147483648
        %v754 = vor.u32 1.1754944e-38, %v753
        %v755 = vsel %vm752, %v754, %v750
        %v756 = vmul.f32 1.0, %v755
        %v757 = vrcp.pop %v735
        %v758 = vmul.f32 %v735, %v757
        %v759 = vsub.f32 1.0, %v758
        %v760 = vmul.f32 %v757, %v759
        %v761 = vadd.f32 %v757, %v760
        %vm762 = vweird.f32 %v735
        %vm763 = vweird.f32 %v757
        %vm764 = vmor %vm762, %vm763
        %v765 = vsel %vm764, %v757, %v761
        %v766 = vand.u32 2147483647, %v735
        %vm767 = vcmp.eq.f32.partialorder %v766, 8.507059e+37
        %v768 = vand.u32 %v735, 2147483648
        %v769 = vor.u32 1.1754944e-38, %v768
        %v770 = vsel %vm767, %v769, %v765
        %v771 = vmul.f32 1.0, %v770
        %v772 = vrcp.pop %v736
        %v773 = vmul.f32 %v736, %v772
        %v774 = vsub.f32 1.0, %v773
        %v775 = vmul.f32 %v772, %v774
        %v776 = vadd.f32 %v772, %v775
        %vm777 = vweird.f32 %v736
        %vm778 = vweird.f32 %v772
        %vm779 = vmor %vm777, %vm778
        %v780 = vsel %vm779, %v772, %v776
        %v781 = vand.u32 2147483647, %v736
        %vm782 = vcmp.eq.f32.partialorder %v781, 8.507059e+37
        %v783 = vand.u32 %v736, 2147483648
        %v784 = vor.u32 1.1754944e-38, %v783
        %v785 = vsel %vm782, %v784, %v780
        %v786 = vmul.f32 1.0, %v785
        %v787 = vrcp.pop %v737
        %v788 = vmul.f32 %v737, %v787
        %v789 = vsub.f32 1.0, %v788
        %v790 = vmul.f32 %v787, %v789
        %v791 = vadd.f32 %v787, %v790
        %vm792 = vweird.f32 %v737
        %vm793 = vweird.f32 %v787
        %vm794 = vmor %vm792, %vm793
        %v795 = vsel %vm794, %v787, %v791
        %v796 = vand.u32 2147483647, %v737
        %vm797 = vcmp.eq.f32.partialorder %v796, 8.507059e+37
        %v798 = vand.u32 %v737, 2147483648
        %v799 = vor.u32 1.1754944e-38, %v798
        %v800 = vsel %vm797, %v799, %v795
        %v801 = vmul.f32 1.0, %v800
        %v802 = vrcp.pop %v738
        %v803 = vmul.f32 %v738, %v802
        %v804 = vsub.f32 1.0, %v803
        %v805 = vmul.f32 %v802, %v804
        %v806 = vadd.f32 %v802, %v805
        %vm807 = vweird.f32 %v738
        %vm808 = vweird.f32 %v802
        %vm809 = vmor %vm807, %vm808
        %v810 = vsel %vm809, %v802, %v806
        %v811 = vand.u32 2147483647, %v738
        %vm812 = vcmp.eq.f32.partialorder %v811, 8.507059e+37
        %v813 = vand.u32 %v738, 2147483648
        %v814 = vor.u32 1.1754944e-38, %v813
        %v815 = vsel %vm812, %v814, %v810
        %v816 = vmul.f32 1.0, %v815
        %v817 = vrcp.pop %v739
        %v818 = vmul.f32 %v739, %v817
        %v819 = vsub.f32 1.0, %v818
        %v820 = vmul.f32 %v817, %v819
        %v821 = vadd.f32 %v817, %v820
        %vm822 = vweird.f32 %v739
        %vm823 = vweird.f32 %v817
        %vm824 = vmor %vm822, %vm823
        %v825 = vsel %vm824, %v817, %v821
        %v826 = vand.u32 2147483647, %v739
        %vm827 = vcmp.eq.f32.partialorder %v826, 8.507059e+37
        %v828 = vand.u32 %v739, 2147483648
        %v829 = vor.u32 1.1754944e-38, %v828
        %v830 = vsel %vm827, %v829, %v825
        %v831 = vmul.f32 1.0, %v830
        %v832 = vrcp.pop %v740
        %v833 = vmul.f32 %v740, %v832
        %v834 = vsub.f32 1.0, %v833
        %v835 = vmul.f32 %v832, %v834
        %v836 = vadd.f32 %v832, %v835
        %vm837 = vweird.f32 %v740
        %vm838 = vweird.f32 %v832
        %vm839 = vmor %vm837, %vm838
        %v840 = vsel %vm839, %v832, %v836
        %v841 = vand.u32 2147483647, %v740
        %vm842 = vcmp.eq.f32.partialorder %v841, 8.507059e+37
        %v843 = vand.u32 %v740, 2147483648
        %v844 = vor.u32 1.1754944e-38, %v843
        %v845 = vsel %vm842, %v844, %v840
        %v846 = vmul.f32 1.0, %v845
        %v847 = vrcp.pop %v741
        %v848 = vmul.f32 %v741, %v847
        %v849 = vsub.f32 1.0, %v848
        %v850 = vmul.f32 %v847, %v849
        %v851 = vadd.f32 %v847, %v850
        %vm852 = vweird.f32 %v741
        %vm853 = vweird.f32 %v847
        %vm854 = vmor %vm852, %vm853
        %v855 = vsel %vm854, %v847, %v851
        %v856 = vand.u32 2147483647, %v741
        %vm857 = vcmp.eq.f32.partialorder %v856, 8.507059e+37
        %v858 = vand.u32 %v741, 2147483648
        %v859 = vor.u32 1.1754944e-38, %v858
        %v860 = vsel %vm857, %v859, %v855
        %v861 = vmul.f32 1.0, %v860
        %v862 = vmul.f32 %v756, 1.0614054
        %v863 = vmul.f32 %v771, 1.0614054
        %v864 = vmul.f32 %v786, 1.0614054
        %v865 = vmul.f32 %v801, 1.0614054
        %v866 = vmul.f32 %v816, 1.0614054
        %v867 = vmul.f32 %v831, 1.0614054
        %v868 = vmul.f32 %v846, 1.0614054
        %v869 = vmul.f32 %v861, 1.0614054
        %v870 = vadd.f32 %v862, -1.4531521
        %v871 = vadd.f32 %v863, -1.4531521
        %v872 = vadd.f32 %v864, -1.4531521
        %v873 = vadd.f32 %v865, -1.4531521
        %v874 = vadd.f32 %v866, -1.4531521
        %v875 = vadd.f32 %v867, -1.4531521
        %v876 = vadd.f32 %v868, -1.4531521
        %v877 = vadd.f32 %v869, -1.4531521
        %v878 = vmul.f32 %v870, %v756
        %v879 = vmul.f32 %v871, %v771
        %v880 = vmul.f32 %v872, %v786
        %v881 = vmul.f32 %v873, %v801
        %v882 = vmul.f32 %v874, %v816
        %v883 = vmul.f32 %v875, %v831
        %v884 = vmul.f32 %v876, %v846
        %v885 = vmul.f32 %v877, %v861
        %v886 = vadd.f32 %v878, 1.4214138
        %v887 = vadd.f32 %v879, 1.4214138
        %v888 = vadd.f32 %v880, 1.4214138
        %v889 = vadd.f32 %v881, 1.4214138
        %v890 = vadd.f32 %v882, 1.4214138
        %v891 = vadd.f32 %v883, 1.4214138
        %v892 = vadd.f32 %v884, 1.4214138
        %v893 = vadd.f32 %v885, 1.4214138
        %v894 = vmul.f32 %v886, %v756
        %v895 = vmul.f32 %v887, %v771
        %v896 = vmul.f32 %v888, %v786
        %v897 = vmul.f32 %v889, %v801
        %v898 = vmul.f32 %v890, %v816
        %v899 = vmul.f32 %v891, %v831
        %v900 = vmul.f32 %v892, %v846
        %v901 = vmul.f32 %v893, %v861
        %v902 = vadd.f32 %v894, -0.28449672
        %v903 = vadd.f32 %v895, -0.28449672
        %v904 = vadd.f32 %v896, -0.28449672
        %v905 = vadd.f32 %v897, -0.28449672
        %v906 = vadd.f32 %v898, -0.28449672
        %v907 = vadd.f32 %v899, -0.28449672
        %v908 = vadd.f32 %v900, -0.28449672
        %v909 = vadd.f32 %v901, -0.28449672
        %v910 = vmul.f32 %v902, %v756
        %v911 = vmul.f32 %v903, %v771
        %v912 = vmul.f32 %v904, %v786
        %v913 = vmul.f32 %v905, %v801
        %v914 = vmul.f32 %v906, %v816
        %v915 = vmul.f32 %v907, %v831
        %v916 = vmul.f32 %v908, %v846
        %v917 = vmul.f32 %v909, %v861
        %v918 = vadd.f32 %v910, 0.2548296
        %v919 = vadd.f32 %v911, 0.2548296
        %v920 = vadd.f32 %v912, 0.2548296
        %v921 = vadd.f32 %v913, 0.2548296
        %v922 = vadd.f32 %v914, 0.2548296
        %v923 = vadd.f32 %v915, 0.2548296
        %v924 = vadd.f32 %v916, 0.2548296
        %v925 = vadd.f32 %v917, 0.2548296
        %v926 = vmul.f32 %v918, %v756
        %v927 = vmul.f32 %v919, %v771
        %v928 = vmul.f32 %v920, %v786
        %v929 = vmul.f32 %v921, %v801
        %v930 = vmul.f32 %v922, %v816
        %v931 = vmul.f32 %v923, %v831
        %v932 = vmul.f32 %v924, %v846
        %v933 = vmul.f32 %v925, %v861
        %v934 = vsub.f32 0.0, %v718
        %v935 = vsub.f32 0.0, %v719
        %v936 = vsub.f32 0.0, %v720
        %v937 = vsub.f32 0.0, %v721
        %v938 = vsub.f32 0.0, %v722
        %v939 = vsub.f32 0.0, %v723
        %v940 = vsub.f32 0.0, %v724
        %v941 = vsub.f32 0.0, %v725
        %v942 = vmul.f32 %v934, %v718
        %v943 = vmul.f32 %v935, %v719
        %v944 = vmul.f32 %v936, %v720
        %v945 = vmul.f32 %v937, %v721
        %v946 = vmul.f32 %v938, %v722
        %v947 = vmul.f32 %v939, %v723
        %v948 = vmul.f32 %v940, %v724
        %v949 = vmul.f32 %v941, %v725
        %v950 = vmul.f32 %v942, 1.442695
        %v951 = vpow.pop %v950
        %v952 = vmul.f32 %v943, 1.442695
        %v953 = vpow.pop %v952
        %v954 = vmul.f32 %v944, 1.442695
        %v955 = vpow.pop %v954
        %v956 = vmul.f32 %v945, 1.442695
        %v957 = vpow.pop %v956
        %v958 = vmul.f32 %v946, 1.442695
        %v959 = vpow.pop %v958
        %v960 = vmul.f32 %v947, 1.442695
        %v961 = vpow.pop %v960
        %v962 = vmul.f32 %v948, 1.442695
        %v963 = vpow.pop %v962
        %v964 = vmul.f32 %v949, 1.442695
        %v965 = vpow.pop %v964
        %v966 = vmul.f32 %v926, %v951
        %v967 = vmul.f32 %v927, %v953
        %v968 = vmul.f32 %v928, %v955
        %v969 = vmul.f32 %v929, %v957
        %v970 = vmul.f32 %v930, %v959
        %v971 = vmul.f32 %v931, %v961
        %v972 = vmul.f32 %v932, %v963
        %v973 = vmul.f32 %v933, %v965
        %v974 = vsub.f32 1.0, %v966
        %v975 = vsub.f32 1.0, %v967
        %v976 = vsub.f32 1.0, %v968
        %v977 = vsub.f32 1.0, %v969
        %v978 = vsub.f32 1.0, %v970
        %v979 = vsub.f32 1.0, %v971
        %v980 = vsub.f32 1.0, %v972
        %v981 = vsub.f32 1.0, %v973
        %vm982 = vcmp.ge.f32.partialorder %v710, 0.0
        %vm983 = vcmp.ge.f32.partialorder %v711, 0.0
        %vm984 = vcmp.ge.f32.partialorder %v712, 0.0
        %vm985 = vcmp.ge.f32.partialorder %v713, 0.0
        %vm986 = vcmp.ge.f32.partialorder %v714, 0.0
        %vm987 = vcmp.ge.f32.partialorder %v715, 0.0
        %vm988 = vcmp.ge.f32.partialorder %v716, 0.0
        %vm989 = vcmp.ge.f32.partialorder %v717, 0.0
        %v990 = vsub.f32 0.0, %v974
        %v991 = vsub.f32 0.0, %v975
        %v992 = vsub.f32 0.0, %v976
        %v993 = vsub.f32 0.0, %v977
        %v994 = vsub.f32 0.0, %v978
        %v995 = vsub.f32 0.0, %v979
        %v996 = vsub.f32 0.0, %v980
        %v997 = vsub.f32 0.0, %v981
        %v998 = vsel %vm982, %v974, %v990
        %v999 = vsel %vm983, %v975, %v991
        %v1000 = vsel %vm984, %v976, %v992
        %v1001 = vsel %vm985, %v977, %v993
        %v1002 = vsel %vm986, %v978, %v994
        %v1003 = vsel %vm987, %v979, %v995
        %v1004 = vsel %vm988, %v980, %v996
        %v1005 = vsel %vm989, %v981, %v997
        %v1006 = vadd.f32 %v998, 1.0
        %v1007 = vadd.f32 %v999, 1.0
        %v1008 = vadd.f32 %v1000, 1.0
        %v1009 = vadd.f32 %v1001, 1.0
        %v1010 = vadd.f32 %v1002, 1.0
        %v1011 = vadd.f32 %v1003, 1.0
        %v1012 = vadd.f32 %v1004, 1.0
        %v1013 = vadd.f32 %v1005, 1.0
        %v1014 = vmul.f32 %v702, %v1006
        %v1015 = vmul.f32 %v703, %v1007
        %v1016 = vmul.f32 %v704, %v1008
        %v1017 = vmul.f32 %v705, %v1009
        %v1018 = vmul.f32 %v706, %v1010
        %v1019 = vmul.f32 %v707, %v1011
        %v1020 = vmul.f32 %v708, %v1012
        %v1021 = vmul.f32 %v709, %v1013
        %1022 = vst [vmem:[%s339] sm:$0xff] %v1014
        %1023 = vst [vmem:[%s339 + $0x8] sm:$0xff] %v1015
        %1024 = vst [vmem:[%s339 + $0x10] sm:$0xff] %v1016
        %1025 = vst [vmem:[%s339 + $0x18] sm:$0xff] %v1017
        %1026 = vst [vmem:[%s339 + $0x20] sm:$0xff] %v1018
        %1027 = vst [vmem:[%s339 + $0x28] sm:$0xff] %v1019
        %1028 = vst [vmem:[%s339 + $0x30] sm:$0xff] %v1020
        %1029 = vst [vmem:[%s339 + $0x38] sm:$0xff] %v1021
      $region48: #{_lambda_.23} parent=39 // pred_fallthru
        _
      %s1030 = smul.u32 8, %s21
      %p1031 = scmp.lt.s32.totalorder %s1030, 15
      %s1032 = scalar_select %p1031, %s1030, 15
      %p1033 = scmp.lt.s32.totalorder %s22, 0
      %s1034 = scalar_select %p1033, %s22, 0
      %s1035 = sadd.s32 %s1034, %s1032
      %s1036 = smul.addr %s1035, 8
      %s1037 = scalar_lea.vmem %s5, %s1036
      // Predicated region
      $region49: #{_lambda_.23} parent=39 // pred_check
        %p1038 = pneg %p189
      $region50: #{_lambda_.23} parent=39 // pred_check_branch
        %1040 = sbr.rel (%p1038) target = $region52
      $region51: #{_lambda_.23} parent=39 // pred_region
        %s1041 = smul.u32 8, %s21
      $region52: #{_lambda_.23} parent=39 // pred_fallthru
        _
    $region40: #{_lambda_.23} parent=5 // pred_fallthru
      _
    %p1042 = scmp.le.s32.totalorder 2, %s11
    // Predicated region
    $region53: #{_lambda_.23} parent=5 // pred_check
      %p1043 = pneg %p1042
    $region54: #{_lambda_.23} parent=5 // pred_check_branch
      %1045 = sbr.rel (%p1043) target = $region56
    $region55: #{_lambda_.23} parent=5 // pred_region
      %s1046 = ssub.s32 %s11, 2
      // Predicated region
      $region57: #{_lambda_.23} parent=55 // pred_check
        %p1047 = pneg %p195
      $region58: #{_lambda_.23} parent=55 // pred_check_branch
        %1049 = sbr.rel (%p1047) target = $region60
      $region59: #{_lambda_.23} parent=55 // pred_region
        %s1050 = smul.u32 8, %s24
        %p1051 = scmp.lt.s32.totalorder %s1050, 15
        %s1052 = scalar_select %p1051, %s1050, 15
        %p1053 = scmp.lt.s32.totalorder %s25, 0
        %s1054 = scalar_select %p1053, %s25, 0
        %s1055 = sadd.s32 %s1054, %s1052
        %s1056 = smul.addr %s1055, 8
        %s1057 = scalar_lea.vmem %s5, %s1056
      $region60: #{_lambda_.23} parent=55 // pred_fallthru
        _
    $region56: #{_lambda_.23} parent=5 // pred_fallthru
      _
  $region6: #{_lambda_.23} parent=0 // loop_footer
    %s15 = sadd.s32 1, %s11
  $region7: #{_lambda_.23} parent=0 // loop_footer_branch
    %10 = sbr.rel target = $region3
  $region8: #{_lambda_.23} parent=0 // loop_exit
    _

// kernel: _lambda_.30
$region0: #{_lambda_.30}
  #allocation0 [shape = 'u32[]', space=smem, size = 0x4, offset = 0x4, fixed_abs, tag = 'smem constant byte address 0x4 - core index']
  #allocation1 [shape = 'u32[72,128]{1,0:T(1,128)}', space=vmem, size = 0x9000, scoped, tag = 'internal scratch']
  #allocation2 [shape = 'f32[64,128]{1,0:T(8,128)}', space=vmem, size = 0x8000, scoped, tag = 'scratch operand']
  %s0 = inlined_call_operand.vmem [shape: bf16[128,384], index: 0, kind: input, shape index: {}]
  %s1 = inlined_call_operand.vmem [shape: bf16[384,128], index: 1, kind: input, shape index: {}]
  %s2 = inlined_call_operand.vmem [shape: f32[1,128], index: 2, kind: input, shape index: {}]
  %s3 = inlined_call_operand.vmem [shape: f32[128,128], index: 3, kind: output, shape index: {}]
  %s4 = sld [smem:[#allocation0]]
  $region53: #{_lambda_.30} parent=0
    _
  %s6 = ssub.s32 1, %s4
  %s7 = scalar_select 0, %s6, %s4
  loop: start=0, step=1, limit=4
  $region2: #{_lambda_.30} parent=0 // loop_pre_header
    _
  $region3: #{_lambda_.30} parent=0 // loop_header
    %s9 = sphi 0, %s13
    %p10 = scmp.ge.s32.totalorder %s9, 4
    %s16 = sphi 0, %s35
    %s17 = sphi 0, %s31
    %s18 = sphi 0, %s27
    %s19 = sphi 0, %s16
    %s20 = sphi 0, %s17
    %s21 = sphi 0, %s18
    %s22 = sphi 0, %s19
    %s23 = sphi 0, %s20
    %s24 = sphi 0, %s21
    %s40 = sphi 0, %s42
    %s43 = sphi 0, %s40
    %s44 = sphi 0, %s43
    %s60 = sphi 0, %s44
    %s68 = sphi 0, %s70
    %s71 = sphi 0, %s68
    %s72 = sphi 0, %s71
    %s88 = sphi 0, %s72
    %s94 = sphi 0, %s96
    %s97 = sphi 0, %s94
    %s98 = sphi 0, %s97
    %s114 = sphi 0, %s98
    %s122 = sphi 0, %s124
    %s125 = sphi 0, %s122
    %s126 = sphi 0, %s125
    %s142 = sphi 0, %s126
  $region4: #{_lambda_.30} parent=0 // loop_header_branch
    %12 = sbr.rel (%p10) target = $region8
  $region5: #{_lambda_.30} parent=0 // loop_body
    %s14 = ssub.s32 %s9, 1
    %s15 = ssub.s32 %s9, 2
    %s25 = sadd.s32 1, %s18
    %p26 = scmp.ge.s32.totalorder %s25, 1
    %s27 = scalar_select %p26, 0, %s25
    %s28 = sadd.s32 1, %s17
    %s29 = scalar_select %p26, %s28, %s17
    %p30 = scmp.ge.s32.totalorder %s29, 1
    %s31 = scalar_select %p30, 0, %s29
    %s32 = sadd.s32 1, %s16
    %s33 = scalar_select %p30, %s32, %s16
    %p34 = scmp.ge.s32.totalorder %s33, 2
    %s35 = scalar_select %p34, 0, %s33
    %s36 = ssub.s32 %s16, %s35
    %s37 = ssub.s32 %s18, %s27
    %s38 = sor.u32 %s36, %s37
    %p39 = scmp.eq.s32.totalorder %s38, 0
    %s41 = sadd.s32 %s40, 1
    %s42 = scalar_select %p39, %s40, %s41
    %p45 = pneg %p39
    %p46 = scmp.eq.s32.totalorder %s9, 1
    %p47 = por %p45, %p46
    %p48 = scmp.ne.s32.totalorder %s40, %s43
    %p49 = scmp.eq.s32.totalorder %s9, 0
    %p50 = por %p48, %p49
    %p51 = scmp.ne.s32.totalorder %s40, %s43
    %p52 = scmp.eq.s32.totalorder %s14, 1
    %p53 = por %p51, %p52
    %p54 = scmp.ne.s32.totalorder %s43, %s44
    %p55 = scmp.eq.s32.totalorder %s14, 0
    %p56 = por %p54, %p55
    %p57 = scmp.ne.s32.totalorder %s43, %s44
    %p58 = scmp.eq.s32.totalorder %s15, 1
    %p59 = por %p57, %p58
    %p61 = scmp.ne.s32.totalorder %s44, %s60
    %p62 = scmp.eq.s32.totalorder %s15, 0
    %p63 = por %p61, %p62
    %s64 = ssub.s32 %s18, %s27
    %s65 = ssub.s32 %s17, %s31
    %s66 = sor.u32 %s64, %s65
    %p67 = scmp.eq.s32.totalorder %s66, 0
    %s69 = sadd.s32 %s68, 1
    %s70 = scalar_select %p67, %s68, %s69
    %p73 = pneg %p67
    %p74 = scmp.eq.s32.totalorder %s9, 1
    %p75 = por %p73, %p74
    %p76 = scmp.ne.s32.totalorder %s68, %s71
    %p77 = scmp.eq.s32.totalorder %s9, 0
    %p78 = por %p76, %p77
    %p79 = scmp.ne.s32.totalorder %s68, %s71
    %p80 = scmp.eq.s32.totalorder %s14, 1
    %p81 = por %p79, %p80
    %p82 = scmp.ne.s32.totalorder %s71, %s72
    %p83 = scmp.eq.s32.totalorder %s14, 0
    %p84 = por %p82, %p83
    %p85 = scmp.ne.s32.totalorder %s71, %s72
    %p86 = scmp.eq.s32.totalorder %s15, 1
    %p87 = por %p85, %p86
    %p89 = scmp.ne.s32.totalorder %s72, %s88
    %p90 = scmp.eq.s32.totalorder %s15, 0
    %p91 = por %p89, %p90
    %s92 = ssub.s32 %s17, %s31
    %p93 = scmp.eq.s32.totalorder %s92, 0
    %s95 = sadd.s32 %s94, 1
    %s96 = scalar_select %p93, %s94, %s95
    %p99 = pneg %p93
    %p100 = scmp.eq.s32.totalorder %s9, 1
    %p101 = por %p99, %p100
    %p102 = scmp.ne.s32.totalorder %s94, %s97
    %p103 = scmp.eq.s32.totalorder %s9, 0
    %p104 = por %p102, %p103
    %p105 = scmp.ne.s32.totalorder %s94, %s97
    %p106 = scmp.eq.s32.totalorder %s14, 1
    %p107 = por %p105, %p106
    %p108 = scmp.ne.s32.totalorder %s97, %s98
    %p109 = scmp.eq.s32.totalorder %s14, 0
    %p110 = por %p108, %p109
    %p111 = scmp.ne.s32.totalorder %s97, %s98
    %p112 = scmp.eq.s32.totalorder %s15, 1
    %p113 = por %p111, %p112
    %p115 = scmp.ne.s32.totalorder %s98, %s114
    %p116 = scmp.eq.s32.totalorder %s15, 0
    %p117 = por %p115, %p116
    %s118 = ssub.s32 %s16, %s35
    %s119 = ssub.s32 %s17, %s31
    %s120 = sor.u32 %s118, %s119
    %p121 = scmp.eq.s32.totalorder %s120, 0
    %s123 = sadd.s32 %s122, 1
    %s124 = scalar_select %p121, %s122, %s123
    %p127 = pneg %p121
    %p128 = scmp.eq.s32.totalorder %s9, 1
    %p129 = por %p127, %p128
    %p130 = scmp.ne.s32.totalorder %s122, %s125
    %p131 = scmp.eq.s32.totalorder %s9, 0
    %p132 = por %p130, %p131
    %p133 = scmp.ne.s32.totalorder %s122, %s125
    %p134 = scmp.eq.s32.totalorder %s14, 1
    %p135 = por %p133, %p134
    %p136 = scmp.ne.s32.totalorder %s125, %s126
    %p137 = scmp.eq.s32.totalorder %s14, 0
    %p138 = por %p136, %p137
    %p139 = scmp.ne.s32.totalorder %s125, %s126
    %p140 = scmp.eq.s32.totalorder %s15, 1
    %p141 = por %p139, %p140
    %p143 = scmp.ne.s32.totalorder %s126, %s142
    %p144 = scmp.eq.s32.totalorder %s15, 0
    %p145 = por %p143, %p144
    %p146 = scmp.le.s32.totalorder 1, %s9
    %p147 = scmp.lt.s32.totalorder %s9, 3
    %p148 = pnand %p146, %p147
    %p149 = pneg %p148
    // Predicated region
    $region9: #{_lambda_.30} parent=5 // pred_check
      _
    $region10: #{_lambda_.30} parent=5 // pred_check_branch
      %151 = sbr.rel (%p148) target = $region12
    $region11: #{_lambda_.30} parent=5 // pred_region
      %s152 = ssub.s32 %s9, 1
      // Predicated region
      $region13: #{_lambda_.30} parent=11 // pred_check
        %p153 = pneg %p84
      $region14: #{_lambda_.30} parent=11 // pred_check_branch
        %155 = sbr.rel (%p153) target = $region16
      $region15: #{_lambda_.30} parent=11 // pred_region
        %s156 = smul.u32 48, %s21
        %p157 = scmp.lt.s32.totalorder %s156, 47
        %s158 = scalar_select %p157, %s156, 47
        %p159 = scmp.lt.s32.totalorder %s20, 0
        %s160 = scalar_select %p159, %s20, 0
        %s161 = sadd.s32 %s160, %s158
        %s162 = smul.addr %s161, 4
        %s163 = scalar_lea.vmem %s1, %s162
        %s164 = smul.u32 48, %s21
      $region16: #{_lambda_.30} parent=11 // pred_fallthru
        _
      // Predicated region
      $region17: #{_lambda_.30} parent=11 // pred_check
        %p165 = pneg %p110
      $region18: #{_lambda_.30} parent=11 // pred_check_branch
        %167 = sbr.rel (%p165) target = $region20
      $region19: #{_lambda_.30} parent=11 // pred_region
        %p168 = scmp.lt.s32.totalorder %s20, 0
        %s169 = scalar_select %p168, %s20, 0
        %s170 = scalar_lea.vmem %s2, %s169
      $region20: #{_lambda_.30} parent=11 // pred_fallthru
        _
    $region12: #{_lambda_.30} parent=5 // pred_fallthru
      _
    %p171 = scmp.lt.s32.totalorder %s9, 2
    // Predicated region
    $region21: #{_lambda_.30} parent=5 // pred_check
      %p172 = pneg %p171
    $region22: #{_lambda_.30} parent=5 // pred_check_branch
      %174 = sbr.rel (%p172) target = $region24
    $region23: #{_lambda_.30} parent=5 // pred_region
      // Predicated region
      $region25: #{_lambda_.30} parent=23 // pred_check
        %p175 = pneg %p50
      $region26: #{_lambda_.30} parent=23 // pred_check_branch
        %177 = sbr.rel (%p175) target = $region28
      $region27: #{_lambda_.30} parent=23 // pred_region
        %s178 = smul.u32 8, %s16
        %s179 = smul.u32 3, %s18
        %p180 = scmp.lt.s32.totalorder %s178, 15
        %s181 = scalar_select %p180, %s178, 15
        %p182 = scmp.lt.s32.totalorder %s179, 2
        %s183 = scalar_select %p182, %s179, 2
        %s184 = smul.addr %s181, 3
        %s185 = sadd.s32 %s183, %s184
        %s186 = smul.addr %s185, 4
        %s187 = scalar_lea.vmem %s0, %s186
        %s188 = smul.u32 8, %s16
        %s189 = smul.u32 3, %s18
      $region28: #{_lambda_.30} parent=23 // pred_fallthru
        _
    $region24: #{_lambda_.30} parent=5 // pred_fallthru
      _
    %p190 = scmp.le.s32.totalorder 1, %s9
    %p191 = scmp.lt.s32.totalorder %s9, 3
    %p192 = pnand %p190, %p191
    %p193 = pneg %p192
    // Predicated region
    $region29: #{_lambda_.30} parent=5 // pred_check
      _
    $region30: #{_lambda_.30} parent=5 // pred_check_branch
      %195 = sbr.rel (%p192) target = $region32
    $region31: #{_lambda_.30} parent=5 // pred_region
      %s196 = ssub.s32 %s9, 1
      %s197 = smul.u32 8, %s19
      %s198 = smul.u32 3, %s21
      %p199 = scmp.lt.s32.totalorder %s197, 15
      %s200 = scalar_select %p199, %s197, 15
      %p201 = scmp.lt.s32.totalorder %s198, 2
      %s202 = scalar_select %p201, %s198, 2
      %s203 = smul.addr %s200, 3
      %s204 = sadd.s32 %s202, %s203
      %s205 = smul.addr %s204, 4
      %s206 = scalar_lea.vmem %s0, %s205
      %p207 = pneg %p56
      %p208 = pneg %p53
      %s209 = smul.u32 48, %s21
      %p210 = scmp.lt.s32.totalorder %s209, 47
      %s211 = scalar_select %p210, %s209, 47
      %p212 = scmp.lt.s32.totalorder %s20, 0
      %s213 = scalar_select %p212, %s20, 0
      %s214 = sadd.s32 %s213, %s211
      %s215 = smul.addr %s214, 4
      %s216 = scalar_lea.vmem %s1, %s215
      %p217 = pneg %p84
      %p218 = pneg %p81
      %p219 = scmp.lt.s32.totalorder %s20, 0
      %s220 = scalar_select %p219, %s20, 0
      %s221 = scalar_lea.vmem %s2, %s220
      %p222 = pneg %p110
      %p223 = pneg %p107
      %p224 = pneg %p138
      %p225 = pneg %p135
      %s226 = smul.u32 8, %s19
      %p227 = scmp.lt.s32.totalorder %s226, 15
      %s228 = scalar_select %p227, %s226, 15
      %p229 = scmp.lt.s32.totalorder %s20, 0
      %s230 = scalar_select %p229, %s20, 0
      %s231 = sadd.s32 %s230, %s228
      %s232 = smul.addr %s231, 8
      %s233 = scalar_lea.vmem %s3, %s232
      %s234 = smul.u32 8, %s19
      %s235 = smul.u32 3, %s21
      %p236 = scmp.lt.s32.totalorder %s234, 15
      %s237 = scalar_select %p236, %s234, 15
      %p238 = scmp.lt.s32.totalorder %s235, 2
      %s239 = scalar_select %p238, %s235, 2
      %s240 = smul.addr %s237, 3
      %s241 = sadd.s32 %s239, %s240
      %s242 = smul.addr %s241, 4
      %s243 = scalar_lea.vmem %s0, %s242
      %s244 = smul.u32 8, %s19
      %s245 = smul.u32 3, %s21
      %s246 = smul.u32 48, %s21
      %p247 = scmp.lt.s32.totalorder %s246, 47
      %s248 = scalar_select %p247, %s246, 47
      %p249 = scmp.lt.s32.totalorder %s20, 0
      %s250 = scalar_select %p249, %s20, 0
      %s251 = sadd.s32 %s250, %s248
      %s252 = smul.addr %s251, 4
      %s253 = scalar_lea.vmem %s1, %s252
      %s254 = smul.u32 48, %s21
      %p255 = scmp.lt.s32.totalorder %s20, 0
      %s256 = scalar_select %p255, %s20, 0
      %s257 = scalar_lea.vmem %s2, %s256
      %s258 = smul.u32 8, %s19
      %p259 = scmp.lt.s32.totalorder %s258, 15
      %s260 = scalar_select %p259, %s258, 15
      %p261 = scmp.lt.s32.totalorder %s20, 0
      %s262 = scalar_select %p261, %s20, 0
      %s263 = sadd.s32 %s262, %s260
      %s264 = smul.addr %s263, 8
      %s265 = scalar_lea.vmem %s3, %s264
      %s266 = smul.u32 8, %s19
      %p267 = scmp.eq.s32.totalorder %s21, 0
      // Predicated region
      $region33: #{_lambda_.30} parent=31 // pred_check
        %p268 = pneg %p267
      $region34: #{_lambda_.30} parent=31 // pred_check_branch
        %270 = sbr.rel (%p268) target = $region36
      $region35: #{_lambda_.30} parent=31 // pred_region
        %271 = vst [vmem:[#allocation2] sm:$0xff] 0.0
        %272 = vst [vmem:[#allocation2 + $0x8] sm:$0xff] 0.0
        %273 = vst [vmem:[#allocation2 + $0x10] sm:$0xff] 0.0
        %274 = vst [vmem:[#allocation2 + $0x18] sm:$0xff] 0.0
        %275 = vst [vmem:[#allocation2 + $0x20] sm:$0xff] 0.0
        %276 = vst [vmem:[#allocation2 + $0x28] sm:$0xff] 0.0
        %277 = vst [vmem:[#allocation2 + $0x30] sm:$0xff] 0.0
        %278 = vst [vmem:[#allocation2 + $0x38] sm:$0xff] 0.0
      $region36: #{_lambda_.30} parent=31 // pred_fallthru
        _
      %v279 = vld [vmem:[%s243] sm:$0xff]
      %v280 = vld [vmem:[%s243 + $0x8] sm:$0xf]
      %v281 = vld [vmem:[%s243 + $0xc] sm:$0xff]
      %v282 = vld [vmem:[%s243 + $0x14] sm:$0xf]
      %v283 = vld [vmem:[%s243 + $0x18] sm:$0xff]
      %v284 = vld [vmem:[%s243 + $0x20] sm:$0xf]
      %v285 = vld [vmem:[%s243 + $0x24] sm:$0xff]
      %v286 = vld [vmem:[%s243 + $0x2c] sm:$0xf]
      %v287 = vld [vmem:[%s243 + $0x30] sm:$0xff]
      %v288 = vld [vmem:[%s243 + $0x38] sm:$0xf]
      %v289 = vld [vmem:[%s243 + $0x3c] sm:$0xff]
      %v290 = vld [vmem:[%s243 + $0x44] sm:$0xf]
      %v291 = vld [vmem:[%s243 + $0x48] sm:$0xff]
      %v292 = vld [vmem:[%s243 + $0x50] sm:$0xf]
      %v293 = vld [vmem:[%s243 + $0x54] sm:$0xff]
      %v294 = vld [vmem:[%s243 + $0x5c] sm:$0xf]
      %v295 = vld [vmem:[#allocation2] sm:$0xff]
      %v296 = vld [vmem:[#allocation2 + $0x8] sm:$0xff]
      %v297 = vld [vmem:[#allocation2 + $0x10] sm:$0xff]
      %v298 = vld [vmem:[#allocation2 + $0x18] sm:$0xff]
      %v299 = vld [vmem:[#allocation2 + $0x20] sm:$0xff]
      %v300 = vld [vmem:[#allocation2 + $0x28] sm:$0xff]
      %v301 = vld [vmem:[#allocation2 + $0x30] sm:$0xff]
      %v302 = vld [vmem:[#allocation2 + $0x38] sm:$0xff]
      %v303 = vld [vmem:[%s253] sm:$0xf]
      %v304 = vld [vmem:[%s253 + $0x4] sm:$0xf]
      %v305 = vld [vmem:[%s253 + $0x8] sm:$0xf]
      %v306 = vld [vmem:[%s253 + $0xc] sm:$0xf]
      %v307 = vld [vmem:[%s253 + $0x10] sm:$0xf]
      %v308 = vld [vmem:[%s253 + $0x14] sm:$0xf]
      %v309 = vld [vmem:[%s253 + $0x18] sm:$0xf]
      %v310 = vld [vmem:[%s253 + $0x1c] sm:$0xf]
      %v311 = vld [vmem:[%s253 + $0x20] sm:$0xf]
      %v312 = vld [vmem:[%s253 + $0x24] sm:$0xf]
      %v313 = vld [vmem:[%s253 + $0x28] sm:$0xf]
      %v314 = vld [vmem:[%s253 + $0x2c] sm:$0xf]
      %v315 = vld [vmem:[%s253 + $0x30] sm:$0xf]
      %v316 = vld [vmem:[%s253 + $0x34] sm:$0xf]
      %v317 = vld [vmem:[%s253 + $0x38] sm:$0xf]
      %v318 = vld [vmem:[%s253 + $0x3c] sm:$0xf]
      %v319 = vld [vmem:[%s253 + $0x40] sm:$0xf]
      %v320 = vld [vmem:[%s253 + $0x44] sm:$0xf]
      %v321 = vld [vmem:[%s253 + $0x48] sm:$0xf]
      %v322 = vld [vmem:[%s253 + $0x4c] sm:$0xf]
      %v323 = vld [vmem:[%s253 + $0x50] sm:$0xf]
      %v324 = vld [vmem:[%s253 + $0x54] sm:$0xf]
      %v325 = vld [vmem:[%s253 + $0x58] sm:$0xf]
      %v326 = vld [vmem:[%s253 + $0x5c] sm:$0xf]
      %v327 = vld [vmem:[%s253 + $0x60] sm:$0xf]
      %v328 = vld [vmem:[%s253 + $0x64] sm:$0xf]
      %v329 = vld [vmem:[%s253 + $0x68] sm:$0xf]
      %v330 = vld [vmem:[%s253 + $0x6c] sm:$0xf]
      %v331 = vld [vmem:[%s253 + $0x70] sm:$0xf]
      %v332 = vld [vmem:[%s253 + $0x74] sm:$0xf]
      %v333 = vld [vmem:[%s253 + $0x78] sm:$0xf]
      %v334 = vld [vmem:[%s253 + $0x7c] sm:$0xf]
      %v335 = vld [vmem:[%s253 + $0x80] sm:$0xf]
      %v336 = vld [vmem:[%s253 + $0x84] sm:$0xf]
      %v337 = vld [vmem:[%s253 + $0x88] sm:$0xf]
      %v338 = vld [vmem:[%s253 + $0x8c] sm:$0xf]
      %v339 = vld [vmem:[%s253 + $0x90] sm:$0xf]
      %v340 = vld [vmem:[%s253 + $0x94] sm:$0xf]
      %v341 = vld [vmem:[%s253 + $0x98] sm:$0xf]
      %v342 = vld [vmem:[%s253 + $0x9c] sm:$0xf]
      %v343 = vld [vmem:[%s253 + $0xa0] sm:$0xf]
      %v344 = vld [vmem:[%s253 + $0xa4] sm:$0xf]
      %v345 = vld [vmem:[%s253 + $0xa8] sm:$0xf]
      %v346 = vld [vmem:[%s253 + $0xac] sm:$0xf]
      %v347 = vld [vmem:[%s253 + $0xb0] sm:$0xf]
      %v348 = vld [vmem:[%s253 + $0xb4] sm:$0xf]
      %v349 = vld [vmem:[%s253 + $0xb8] sm:$0xf]
      %v350 = vld [vmem:[%s253 + $0xbc] sm:$0xf]
      %v367 = vunpack.c.l.b16 %v279
      %v368 = vunpack.c.h.b16 %v279
      %v369 = vunpack.c.l.b16 %v280
      %v370 = vunpack.c.l.b16 %v281
      %v371 = vunpack.c.h.b16 %v281
      %v372 = vunpack.c.l.b16 %v282
      %v373 = vunpack.c.l.b16 %v283
      %v374 = vunpack.c.h.b16 %v283
      %v375 = vunpack.c.l.b16 %v284
      %v376 = vunpack.c.l.b16 %v285
      %v377 = vunpack.c.h.b16 %v285
      %v378 = vunpack.c.l.b16 %v286
      %v379 = vunpack.c.l.b16 %v287
      %v380 = vunpack.c.h.b16 %v287
      %v381 = vunpack.c.l.b16 %v288
      %v382 = vunpack.c.l.b16 %v289
      %v383 = vunpack.c.h.b16 %v289
      %v384 = vunpack.c.l.b16 %v290
      %v385 = vunpack.c.l.b16 %v291
      %v386 = vunpack.c.h.b16 %v291
      %v387 = vunpack.c.l.b16 %v292
      %v388 = vunpack.c.l.b16 %v293
      %v389 = vunpack.c.h.b16 %v293
      %v390 = vunpack.c.l.b16 %v294
      %v391 = vpack.c.b16 %v370, %v367
      %v392 = vpack.c.b16 %v371, %v368
      %v393 = vpack.c.b16 %v372, %v369
      %v394 = vpack.c.b16 %v376, %v373
      %v395 = vpack.c.b16 %v377, %v374
      %v396 = vpack.c.b16 %v378, %v375
      %v397 = vpack.c.b16 %v382, %v379
      %v398 = vpack.c.b16 %v383, %v380
      %v399 = vpack.c.b16 %v384, %v381
      %v400 = vpack.c.b16 %v388, %v385
      %v401 = vpack.c.b16 %v389, %v386
      %v402 = vpack.c.b16 %v390, %v387
      %v463 = vunpack.c.l.b16 %v303
      %v464 = vunpack.c.l.b16 %v304
      %v465 = vunpack.c.l.b16 %v305
      %v466 = vunpack.c.l.b16 %v306
      %v467 = vunpack.c.l.b16 %v307
      %v468 = vunpack.c.l.b16 %v308
      %v469 = vunpack.c.l.b16 %v309
      %v470 = vunpack.c.l.b16 %v310
      %v471 = vunpack.c.l.b16 %v311
      %v472 = vunpack.c.l.b16 %v312
      %v473 = vunpack.c.l.b16 %v313
      %v474 = vunpack.c.l.b16 %v314
      %v475 = vunpack.c.l.b16 %v315
      %v476 = vunpack.c.l.b16 %v316
      %v477 = vunpack.c.l.b16 %v317
      %v478 = vunpack.c.l.b16 %v318
      %v479 = vunpack.c.l.b16 %v319
      %v480 = vunpack.c.l.b16 %v320
      %v481 = vunpack.c.l.b16 %v321
      %v482 = vunpack.c.l.b16 %v322
      %v483 = vunpack.c.l.b16 %v323
      %v484 = vunpack.c.l.b16 %v324
      %v485 = vunpack.c.l.b16 %v325
      %v486 = vunpack.c.l.b16 %v326
      %v487 = vunpack.c.l.b16 %v327
      %v488 = vunpack.c.l.b16 %v328
      %v489 = vunpack.c.l.b16 %v329
      %v490 = vunpack.c.l.b16 %v330
      %v491 = vunpack.c.l.b16 %v331
      %v492 = vunpack.c.l.b16 %v332
      %v493 = vunpack.c.l.b16 %v333
      %v494 = vunpack.c.l.b16 %v334
      %v495 = vunpack.c.l.b16 %v335
      %v496 = vunpack.c.l.b16 %v336
      %v497 = vunpack.c.l.b16 %v337
      %v498 = vunpack.c.l.b16 %v338
      %v499 = vunpack.c.l.b16 %v339
      %v500 = vunpack.c.l.b16 %v340
      %v501 = vunpack.c.l.b16 %v341
      %v502 = vunpack.c.l.b16 %v342
      %v503 = vunpack.c.l.b16 %v343
      %v504 = vunpack.c.l.b16 %v344
      %v505 = vunpack.c.l.b16 %v345
      %v506 = vunpack.c.l.b16 %v346
      %v507 = vunpack.c.l.b16 %v347
      %v508 = vunpack.c.l.b16 %v348
      %v509 = vunpack.c.l.b16 %v349
      %v510 = vunpack.c.l.b16 %v350
      %v511 = vpack.c.b16 %v464, %v463
      %v512 = vpack.c.b16 %v466, %v465
      %v513 = vpack.c.b16 %v468, %v467
      %v514 = vpack.c.b16 %v470, %v469
      %v515 = vpack.c.b16 %v472, %v471
      %v516 = vpack.c.b16 %v474, %v473
      %v517 = vpack.c.b16 %v476, %v475
      %v518 = vpack.c.b16 %v478, %v477
      %v519 = vpack.c.b16 %v480, %v479
      %v520 = vpack.c.b16 %v482, %v481
      %v521 = vpack.c.b16 %v484, %v483
      %v522 = vpack.c.b16 %v486, %v485
      %v523 = vpack.c.b16 %v488, %v487
      %v524 = vpack.c.b16 %v490, %v489
      %v525 = vpack.c.b16 %v492, %v491
      %v526 = vpack.c.b16 %v494, %v493
      %v527 = vpack.c.b16 %v496, %v495
      %v528 = vpack.c.b16 %v498, %v497
      %v529 = vpack.c.b16 %v500, %v499
      %v530 = vpack.c.b16 %v502, %v501
      %v531 = vpack.c.b16 %v504, %v503
      %v532 = vpack.c.b16 %v506, %v505
      %v533 = vpack.c.b16 %v508, %v507
      %v534 = vpack.c.b16 %v510, %v509
      %559 = vmatpush.bf16.msra.mxu0 %v518
      %560 = vmatpush.bf16.msra.mxu0 %v517
      %561 = vmatpush.bf16.msra.mxu0 %v516
      %562 = vmatpush.bf16.msra.mxu0 %v515
      %563 = vmatpush.bf16.msra.mxu0 %v514
      %564 = vmatpush.bf16.msra.mxu0 %v513
      %565 = vmatpush.bf16.msra.mxu0 %v512
      %566 = vmatpush.bf16.msra.mxu0 %v511
      %567 = vmatmul.bf16.gmra.mxu0 %v391
      %v568 = vpop.f32.mrf.mxu0
      %v569 = vadd.f32 0.0, %v568
      %v570 = vpop.f32.mrf.mxu0
      %v571 = vadd.f32 0.0, %v570
      %572 = vmatmul.bf16.gmra.mxu0 %v394
      %v573 = vpop.f32.mrf.mxu0
      %v574 = vadd.f32 0.0, %v573
      %v575 = vpop.f32.mrf.mxu0
      %v576 = vadd.f32 0.0, %v575
      %577 = vmatmul.bf16.gmra.mxu0 %v397
      %v578 = vpop.f32.mrf.mxu0
      %v579 = vadd.f32 0.0, %v578
      %v580 = vpop.f32.mrf.mxu0
      %v581 = vadd.f32 0.0, %v580
      %582 = vmatmul.bf16.gmra.mxu0 %v400
      %v583 = vpop.f32.mrf.mxu0
      %v584 = vadd.f32 0.0, %v583
      %v585 = vpop.f32.mrf.mxu0
      %v586 = vadd.f32 0.0, %v585
      %587 = vdwg.mxu0
      %588 = vmatpush.bf16.msra.mxu0 %v526
      %589 = vmatpush.bf16.msra.mxu0 %v525
      %590 = vmatpush.bf16.msra.mxu0 %v524
      %591 = vmatpush.bf16.msra.mxu0 %v523
      %592 = vmatpush.bf16.msra.mxu0 %v522
      %593 = vmatpush.bf16.msra.mxu0 %v521
      %594 = vmatpush.bf16.msra.mxu0 %v520
      %595 = vmatpush.bf16.msra.mxu0 %v519
      %596 = vmatmul.bf16.gmra.mxu0 %v392
      %v597 = vpop.f32.mrf.mxu0
      %v598 = vadd.f32 %v569, %v597
      %v599 = vpop.f32.mrf.mxu0
      %v600 = vadd.f32 %v571, %v599
      %601 = vmatmul.bf16.gmra.mxu0 %v395
      %v602 = vpop.f32.mrf.mxu0
      %v603 = vadd.f32 %v574, %v602
      %v604 = vpop.f32.mrf.mxu0
      %v605 = vadd.f32 %v576, %v604
      %606 = vmatmul.bf16.gmra.mxu0 %v398
      %v607 = vpop.f32.mrf.mxu0
      %v608 = vadd.f32 %v579, %v607
      %v609 = vpop.f32.mrf.mxu0
      %v610 = vadd.f32 %v581, %v609
      %611 = vmatmul.bf16.gmra.mxu0 %v401
      %v612 = vpop.f32.mrf.mxu0
      %v613 = vadd.f32 %v584, %v612
      %v614 = vpop.f32.mrf.mxu0
      %v615 = vadd.f32 %v586, %v614
      %616 = vdwg.mxu0
      %617 = vmatpush.bf16.msra.mxu0 %v534
      %618 = vmatpush.bf16.msra.mxu0 %v533
      %619 = vmatpush.bf16.msra.mxu0 %v532
      %620 = vmatpush.bf16.msra.mxu0 %v531
      %621 = vmatpush.bf16.msra.mxu0 %v530
      %622 = vmatpush.bf16.msra.mxu0 %v529
      %623 = vmatpush.bf16.msra.mxu0 %v528
      %624 = vmatpush.bf16.msra.mxu0 %v527
      %625 = vmatmul.bf16.gmra.mxu0 %v393
      %v626 = vpop.f32.mrf.mxu0
      %v627 = vadd.f32 %v598, %v626
      %v628 = vpop.f32.mrf.mxu0
      %v629 = vadd.f32 %v600, %v628
      %630 = vmatmul.bf16.gmra.mxu0 %v396
      %v631 = vpop.f32.mrf.mxu0
      %v632 = vadd.f32 %v603, %v631
      %v633 = vpop.f32.mrf.mxu0
      %v634 = vadd.f32 %v605, %v633
      %635 = vmatmul.bf16.gmra.mxu0 %v399
      %v636 = vpop.f32.mrf.mxu0
      %v637 = vadd.f32 %v608, %v636
      %v638 = vpop.f32.mrf.mxu0
      %v639 = vadd.f32 %v610, %v638
      %640 = vmatmul.bf16.gmra.mxu0 %v402
      %v641 = vpop.f32.mrf.mxu0
      %v642 = vadd.f32 %v613, %v641
      %v643 = vpop.f32.mrf.mxu0
      %v644 = vadd.f32 %v615, %v643
      %645 = vdwg.mxu0
      %v646 = vadd.f32 %v295, %v627
      %v647 = vadd.f32 %v296, %v629
      %v648 = vadd.f32 %v297, %v632
      %v649 = vadd.f32 %v298, %v634
      %v650 = vadd.f32 %v299, %v637
      %v651 = vadd.f32 %v300, %v639
      %v652 = vadd.f32 %v301, %v642
      %v653 = vadd.f32 %v302, %v644
      %654 = vst [vmem:[#allocation2] sm:$0xff] %v646
      %655 = vst [vmem:[#allocation2 + $0x8] sm:$0xff] %v647
      %656 = vst [vmem:[#allocation2 + $0x10] sm:$0xff] %v648
      %657 = vst [vmem:[#allocation2 + $0x18] sm:$0xff] %v649
      %658 = vst [vmem:[#allocation2 + $0x20] sm:$0xff] %v650
      %659 = vst [vmem:[#allocation2 + $0x28] sm:$0xff] %v651
      %660 = vst [vmem:[#allocation2 + $0x30] sm:$0xff] %v652
      %661 = vst [vmem:[#allocation2 + $0x38] sm:$0xff] %v653
      // Predicated region
      $region37: #{_lambda_.30} parent=31 // pred_check
        %p662 = pneg %p267
      $region38: #{_lambda_.30} parent=31 // pred_check_branch
        %664 = sbr.rel (%p662) target = $region40
      $region39: #{_lambda_.30} parent=31 // pred_region
        %v665 = vld [vmem:[#allocation2] sm:$0xff]
        %v666 = vld [vmem:[#allocation2 + $0x8] sm:$0xff]
        %v667 = vld [vmem:[#allocation2 + $0x10] sm:$0xff]
        %v668 = vld [vmem:[#allocation2 + $0x18] sm:$0xff]
        %v669 = vld [vmem:[#allocation2 + $0x20] sm:$0xff]
        %v670 = vld [vmem:[#allocation2 + $0x28] sm:$0xff]
        %v671 = vld [vmem:[#allocation2 + $0x30] sm:$0xff]
        %v672 = vld [vmem:[#allocation2 + $0x38] sm:$0xff]
        %v673 = vld [vmem:[%s257] sm:$0x1]
        %v675 = vperm.slane %v673, 0
        %v677 = vadd.f32 %v665, %v675
        %v678 = vadd.f32 %v666, %v675
        %v679 = vadd.f32 %v667, %v675
        %v680 = vadd.f32 %v668, %v675
        %v681 = vadd.f32 %v669, %v675
        %v682 = vadd.f32 %v670, %v675
        %v683 = vadd.f32 %v671, %v675
        %v684 = vadd.f32 %v672, %v675
        %685 = vst [vmem:[%s265] sm:$0xff] %v677
        %686 = vst [vmem:[%s265 + $0x8] sm:$0xff] %v678
        %687 = vst [vmem:[%s265 + $0x10] sm:$0xff] %v679
        %688 = vst [vmem:[%s265 + $0x18] sm:$0xff] %v680
        %689 = vst [vmem:[%s265 + $0x20] sm:$0xff] %v681
        %690 = vst [vmem:[%s265 + $0x28] sm:$0xff] %v682
        %691 = vst [vmem:[%s265 + $0x30] sm:$0xff] %v683
        %692 = vst [vmem:[%s265 + $0x38] sm:$0xff] %v684
      $region40: #{_lambda_.30} parent=31 // pred_fallthru
        _
      %s693 = smul.u32 8, %s19
      %p694 = scmp.lt.s32.totalorder %s693, 15
      %s695 = scalar_select %p694, %s693, 15
      %p696 = scmp.lt.s32.totalorder %s20, 0
      %s697 = scalar_select %p696, %s20, 0
      %s698 = sadd.s32 %s697, %s695
      %s699 = smul.addr %s698, 8
      %s700 = scalar_lea.vmem %s3, %s699
      // Predicated region
      $region41: #{_lambda_.30} parent=31 // pred_check
        %p701 = pneg %p135
      $region42: #{_lambda_.30} parent=31 // pred_check_branch
        %703 = sbr.rel (%p701) target = $region44
      $region43: #{_lambda_.30} parent=31 // pred_region
        %s704 = smul.u32 8, %s19
      $region44: #{_lambda_.30} parent=31 // pred_fallthru
        _
    $region32: #{_lambda_.30} parent=5 // pred_fallthru
      _
    %p705 = scmp.le.s32.totalorder 2, %s9
    // Predicated region
    $region45: #{_lambda_.30} parent=5 // pred_check
      %p706 = pneg %p705
    $region46: #{_lambda_.30} parent=5 // pred_check_branch
      %708 = sbr.rel (%p706) target = $region48
    $region47: #{_lambda_.30} parent=5 // pred_region
      %s709 = ssub.s32 %s9, 2
      // Predicated region
      $region49: #{_lambda_.30} parent=47 // pred_check
        %p710 = pneg %p141
      $region50: #{_lambda_.30} parent=47 // pred_check_branch
        %712 = sbr.rel (%p710) target = $region52
      $region51: #{_lambda_.30} parent=47 // pred_region
        %s713 = smul.u32 8, %s22
        %p714 = scmp.lt.s32.totalorder %s713, 15
        %s715 = scalar_select %p714, %s713, 15
        %p716 = scmp.lt.s32.totalorder %s23, 0
        %s717 = scalar_select %p716, %s23, 0
        %s718 = sadd.s32 %s717, %s715
        %s719 = smul.addr %s718, 8
        %s720 = scalar_lea.vmem %s3, %s719
      $region52: #{_lambda_.30} parent=47 // pred_fallthru
        _
    $region48: #{_lambda_.30} parent=5 // pred_fallthru
      _
  $region6: #{_lambda_.30} parent=0 // loop_footer
    %s13 = sadd.s32 1, %s9
  $region7: #{_lambda_.30} parent=0 // loop_footer_branch
    %8 = sbr.rel target = $region3
  $region8: #{_lambda_.30} parent=0 // loop_exit
    _

// kernel: _lambda_.32
$region0: #{_lambda_.32}
  #allocation0 [shape = 'u32[]', space=smem, size = 0x4, offset = 0x4, fixed_abs, tag = 'smem constant byte address 0x4 - core index']
  #allocation1 [shape = 'u32[72,128]{1,0:T(1,128)}', space=vmem, size = 0x9000, scoped, tag = 'internal scratch']
  #allocation2 [shape = 'f32[256,128]{1,0:T(8,128)}', space=vmem, size = 0x20000, scoped, tag = 'scratch operand']
  %s0 = inlined_call_operand.vmem [shape: bf16[512,128], index: 0, kind: input, shape index: {}]
  %s1 = inlined_call_operand.vmem [shape: bf16[128,128], index: 1, kind: input, shape index: {}]
  %s2 = inlined_call_operand.vmem [shape: f32[1,128], index: 2, kind: input, shape index: {}]
  %s3 = inlined_call_operand.vmem [shape: f32[512,128], index: 3, kind: output, shape index: {}]
  %s4 = sld [smem:[#allocation0]]
  $region53: #{_lambda_.32} parent=0
    _
  %s6 = ssub.s32 1, %s4
  %s7 = scalar_select 0, %s6, %s4
  loop: start=0, step=1, limit=4
  $region2: #{_lambda_.32} parent=0 // loop_pre_header
    _
  $region3: #{_lambda_.32} parent=0 // loop_header
    %s9 = sphi 0, %s13
    %p10 = scmp.ge.s32.totalorder %s9, 4
    %s16 = sphi 0, %s35
    %s17 = sphi 0, %s31
    %s18 = sphi 0, %s27
    %s19 = sphi 0, %s16
    %s20 = sphi 0, %s17
    %s21 = sphi 0, %s18
    %s22 = sphi 0, %s19
    %s23 = sphi 0, %s20
    %s24 = sphi 0, %s21
    %s40 = sphi 0, %s42
    %s43 = sphi 0, %s40
    %s44 = sphi 0, %s43
    %s60 = sphi 0, %s44
    %s68 = sphi 0, %s70
    %s71 = sphi 0, %s68
    %s72 = sphi 0, %s71
    %s88 = sphi 0, %s72
    %s94 = sphi 0, %s96
    %s97 = sphi 0, %s94
    %s98 = sphi 0, %s97
    %s114 = sphi 0, %s98
    %s122 = sphi 0, %s124
    %s125 = sphi 0, %s122
    %s126 = sphi 0, %s125
    %s142 = sphi 0, %s126
  $region4: #{_lambda_.32} parent=0 // loop_header_branch
    %12 = sbr.rel (%p10) target = $region8
  $region5: #{_lambda_.32} parent=0 // loop_body
    %s14 = ssub.s32 %s9, 1
    %s15 = ssub.s32 %s9, 2
    %s25 = sadd.s32 1, %s18
    %p26 = scmp.ge.s32.totalorder %s25, 1
    %s27 = scalar_select %p26, 0, %s25
    %s28 = sadd.s32 1, %s17
    %s29 = scalar_select %p26, %s28, %s17
    %p30 = scmp.ge.s32.totalorder %s29, 1
    %s31 = scalar_select %p30, 0, %s29
    %s32 = sadd.s32 1, %s16
    %s33 = scalar_select %p30, %s32, %s16
    %p34 = scmp.ge.s32.totalorder %s33, 2
    %s35 = scalar_select %p34, 0, %s33
    %s36 = ssub.s32 %s16, %s35
    %s37 = ssub.s32 %s18, %s27
    %s38 = sor.u32 %s36, %s37
    %p39 = scmp.eq.s32.totalorder %s38, 0
    %s41 = sadd.s32 %s40, 1
    %s42 = scalar_select %p39, %s40, %s41
    %p45 = pneg %p39
    %p46 = scmp.eq.s32.totalorder %s9, 1
    %p47 = por %p45, %p46
    %p48 = scmp.ne.s32.totalorder %s40, %s43
    %p49 = scmp.eq.s32.totalorder %s9, 0
    %p50 = por %p48, %p49
    %p51 = scmp.ne.s32.totalorder %s40, %s43
    %p52 = scmp.eq.s32.totalorder %s14, 1
    %p53 = por %p51, %p52
    %p54 = scmp.ne.s32.totalorder %s43, %s44
    %p55 = scmp.eq.s32.totalorder %s14, 0
    %p56 = por %p54, %p55
    %p57 = scmp.ne.s32.totalorder %s43, %s44
    %p58 = scmp.eq.s32.totalorder %s15, 1
    %p59 = por %p57, %p58
    %p61 = scmp.ne.s32.totalorder %s44, %s60
    %p62 = scmp.eq.s32.totalorder %s15, 0
    %p63 = por %p61, %p62
    %s64 = ssub.s32 %s18, %s27
    %s65 = ssub.s32 %s17, %s31
    %s66 = sor.u32 %s64, %s65
    %p67 = scmp.eq.s32.totalorder %s66, 0
    %s69 = sadd.s32 %s68, 1
    %s70 = scalar_select %p67, %s68, %s69
    %p73 = pneg %p67
    %p74 = scmp.eq.s32.totalorder %s9, 1
    %p75 = por %p73, %p74
    %p76 = scmp.ne.s32.totalorder %s68, %s71
    %p77 = scmp.eq.s32.totalorder %s9, 0
    %p78 = por %p76, %p77
    %p79 = scmp.ne.s32.totalorder %s68, %s71
    %p80 = scmp.eq.s32.totalorder %s14, 1
    %p81 = por %p79, %p80
    %p82 = scmp.ne.s32.totalorder %s71, %s72
    %p83 = scmp.eq.s32.totalorder %s14, 0
    %p84 = por %p82, %p83
    %p85 = scmp.ne.s32.totalorder %s71, %s72
    %p86 = scmp.eq.s32.totalorder %s15, 1
    %p87 = por %p85, %p86
    %p89 = scmp.ne.s32.totalorder %s72, %s88
    %p90 = scmp.eq.s32.totalorder %s15, 0
    %p91 = por %p89, %p90
    %s92 = ssub.s32 %s17, %s31
    %p93 = scmp.eq.s32.totalorder %s92, 0
    %s95 = sadd.s32 %s94, 1
    %s96 = scalar_select %p93, %s94, %s95
    %p99 = pneg %p93
    %p100 = scmp.eq.s32.totalorder %s9, 1
    %p101 = por %p99, %p100
    %p102 = scmp.ne.s32.totalorder %s94, %s97
    %p103 = scmp.eq.s32.totalorder %s9, 0
    %p104 = por %p102, %p103
    %p105 = scmp.ne.s32.totalorder %s94, %s97
    %p106 = scmp.eq.s32.totalorder %s14, 1
    %p107 = por %p105, %p106
    %p108 = scmp.ne.s32.totalorder %s97, %s98
    %p109 = scmp.eq.s32.totalorder %s14, 0
    %p110 = por %p108, %p109
    %p111 = scmp.ne.s32.totalorder %s97, %s98
    %p112 = scmp.eq.s32.totalorder %s15, 1
    %p113 = por %p111, %p112
    %p115 = scmp.ne.s32.totalorder %s98, %s114
    %p116 = scmp.eq.s32.totalorder %s15, 0
    %p117 = por %p115, %p116
    %s118 = ssub.s32 %s16, %s35
    %s119 = ssub.s32 %s17, %s31
    %s120 = sor.u32 %s118, %s119
    %p121 = scmp.eq.s32.totalorder %s120, 0
    %s123 = sadd.s32 %s122, 1
    %s124 = scalar_select %p121, %s122, %s123
    %p127 = pneg %p121
    %p128 = scmp.eq.s32.totalorder %s9, 1
    %p129 = por %p127, %p128
    %p130 = scmp.ne.s32.totalorder %s122, %s125
    %p131 = scmp.eq.s32.totalorder %s9, 0
    %p132 = por %p130, %p131
    %p133 = scmp.ne.s32.totalorder %s122, %s125
    %p134 = scmp.eq.s32.totalorder %s14, 1
    %p135 = por %p133, %p134
    %p136 = scmp.ne.s32.totalorder %s125, %s126
    %p137 = scmp.eq.s32.totalorder %s14, 0
    %p138 = por %p136, %p137
    %p139 = scmp.ne.s32.totalorder %s125, %s126
    %p140 = scmp.eq.s32.totalorder %s15, 1
    %p141 = por %p139, %p140
    %p143 = scmp.ne.s32.totalorder %s126, %s142
    %p144 = scmp.eq.s32.totalorder %s15, 0
    %p145 = por %p143, %p144
    %p146 = scmp.le.s32.totalorder 1, %s9
    %p147 = scmp.lt.s32.totalorder %s9, 3
    %p148 = pnand %p146, %p147
    %p149 = pneg %p148
    // Predicated region
    $region9: #{_lambda_.32} parent=5 // pred_check
      _
    $region10: #{_lambda_.32} parent=5 // pred_check_branch
      %151 = sbr.rel (%p148) target = $region12
    $region11: #{_lambda_.32} parent=5 // pred_region
      %s152 = ssub.s32 %s9, 1
      // Predicated region
      $region13: #{_lambda_.32} parent=11 // pred_check
        %p153 = pneg %p84
      $region14: #{_lambda_.32} parent=11 // pred_check_branch
        %155 = sbr.rel (%p153) target = $region16
      $region15: #{_lambda_.32} parent=11 // pred_region
        %s156 = smul.u32 16, %s21
        %p157 = scmp.lt.s32.totalorder %s156, 15
        %s158 = scalar_select %p157, %s156, 15
        %p159 = scmp.lt.s32.totalorder %s20, 0
        %s160 = scalar_select %p159, %s20, 0
        %s161 = sadd.s32 %s160, %s158
        %s162 = smul.addr %s161, 4
        %s163 = scalar_lea.vmem %s1, %s162
        %s164 = smul.u32 16, %s21
      $region16: #{_lambda_.32} parent=11 // pred_fallthru
        _
      // Predicated region
      $region17: #{_lambda_.32} parent=11 // pred_check
        %p165 = pneg %p110
      $region18: #{_lambda_.32} parent=11 // pred_check_branch
        %167 = sbr.rel (%p165) target = $region20
      $region19: #{_lambda_.32} parent=11 // pred_region
        %p168 = scmp.lt.s32.totalorder %s20, 0
        %s169 = scalar_select %p168, %s20, 0
        %s170 = scalar_lea.vmem %s2, %s169
      $region20: #{_lambda_.32} parent=11 // pred_fallthru
        _
    $region12: #{_lambda_.32} parent=5 // pred_fallthru
      _
    %p171 = scmp.lt.s32.totalorder %s9, 2
    // Predicated region
    $region21: #{_lambda_.32} parent=5 // pred_check
      %p172 = pneg %p171
    $region22: #{_lambda_.32} parent=5 // pred_check_branch
      %174 = sbr.rel (%p172) target = $region24
    $region23: #{_lambda_.32} parent=5 // pred_region
      // Predicated region
      $region25: #{_lambda_.32} parent=23 // pred_check
        %p175 = pneg %p50
      $region26: #{_lambda_.32} parent=23 // pred_check_branch
        %177 = sbr.rel (%p175) target = $region28
      $region27: #{_lambda_.32} parent=23 // pred_region
        %s178 = smul.u32 32, %s16
        %p179 = scmp.lt.s32.totalorder %s178, 63
        %s180 = scalar_select %p179, %s178, 63
        %p181 = scmp.lt.s32.totalorder %s18, 0
        %s182 = scalar_select %p181, %s18, 0
        %s183 = sadd.s32 %s182, %s180
        %s184 = smul.addr %s183, 4
        %s185 = scalar_lea.vmem %s0, %s184
        %s186 = smul.u32 32, %s16
      $region28: #{_lambda_.32} parent=23 // pred_fallthru
        _
    $region24: #{_lambda_.32} parent=5 // pred_fallthru
      _
    %p187 = scmp.le.s32.totalorder 1, %s9
    %p188 = scmp.lt.s32.totalorder %s9, 3
    %p189 = pnand %p187, %p188
    %p190 = pneg %p189
    // Predicated region
    $region29: #{_lambda_.32} parent=5 // pred_check
      _
    $region30: #{_lambda_.32} parent=5 // pred_check_branch
      %192 = sbr.rel (%p189) target = $region32
    $region31: #{_lambda_.32} parent=5 // pred_region
      %s193 = ssub.s32 %s9, 1
      %s194 = smul.u32 32, %s19
      %p195 = scmp.lt.s32.totalorder %s194, 63
      %s196 = scalar_select %p195, %s194, 63
      %p197 = scmp.lt.s32.totalorder %s21, 0
      %s198 = scalar_select %p197, %s21, 0
      %s199 = sadd.s32 %s198, %s196
      %s200 = smul.addr %s199, 4
      %s201 = scalar_lea.vmem %s0, %s200
      %p202 = pneg %p56
      %p203 = pneg %p53
      %s204 = smul.u32 16, %s21
      %p205 = scmp.lt.s32.totalorder %s204, 15
      %s206 = scalar_select %p205, %s204, 15
      %p207 = scmp.lt.s32.totalorder %s20, 0
      %s208 = scalar_select %p207, %s20, 0
      %s209 = sadd.s32 %s208, %s206
      %s210 = smul.addr %s209, 4
      %s211 = scalar_lea.vmem %s1, %s210
      %p212 = pneg %p84
      %p213 = pneg %p81
      %p214 = scmp.lt.s32.totalorder %s20, 0
      %s215 = scalar_select %p214, %s20, 0
      %s216 = scalar_lea.vmem %s2, %s215
      %p217 = pneg %p110
      %p218 = pneg %p107
      %p219 = pneg %p138
      %p220 = pneg %p135
      %s221 = smul.u32 32, %s19
      %p222 = scmp.lt.s32.totalorder %s221, 63
      %s223 = scalar_select %p222, %s221, 63
      %p224 = scmp.lt.s32.totalorder %s20, 0
      %s225 = scalar_select %p224, %s20, 0
      %s226 = sadd.s32 %s225, %s223
      %s227 = smul.addr %s226, 8
      %s228 = scalar_lea.vmem %s3, %s227
      %s229 = smul.u32 32, %s19
      %p230 = scmp.lt.s32.totalorder %s229, 63
      %s231 = scalar_select %p230, %s229, 63
      %p232 = scmp.lt.s32.totalorder %s21, 0
      %s233 = scalar_select %p232, %s21, 0
      %s234 = sadd.s32 %s233, %s231
      %s235 = smul.addr %s234, 4
      %s236 = scalar_lea.vmem %s0, %s235
      %s237 = smul.u32 32, %s19
      %s238 = smul.u32 16, %s21
      %p239 = scmp.lt.s32.totalorder %s238, 15
      %s240 = scalar_select %p239, %s238, 15
      %p241 = scmp.lt.s32.totalorder %s20, 0
      %s242 = scalar_select %p241, %s20, 0
      %s243 = sadd.s32 %s242, %s240
      %s244 = smul.addr %s243, 4
      %s245 = scalar_lea.vmem %s1, %s244
      %s246 = smul.u32 16, %s21
      %p247 = scmp.lt.s32.totalorder %s20, 0
      %s248 = scalar_select %p247, %s20, 0
      %s249 = scalar_lea.vmem %s2, %s248
      %s250 = smul.u32 32, %s19
      %p251 = scmp.lt.s32.totalorder %s250, 63
      %s252 = scalar_select %p251, %s250, 63
      %p253 = scmp.lt.s32.totalorder %s20, 0
      %s254 = scalar_select %p253, %s20, 0
      %s255 = sadd.s32 %s254, %s252
      %s256 = smul.addr %s255, 8
      %s257 = scalar_lea.vmem %s3, %s256
      %s258 = smul.u32 32, %s19
      %p259 = scmp.eq.s32.totalorder %s21, 0
      // Predicated region
      $region33: #{_lambda_.32} parent=31 // pred_check
        %p260 = pneg %p259
      $region34: #{_lambda_.32} parent=31 // pred_check_branch
        %262 = sbr.rel (%p260) target = $region36
      $region35: #{_lambda_.32} parent=31 // pred_region
        %263 = vst [vmem:[#allocation2] sm:$0xff] 0.0
        %264 = vst [vmem:[#allocation2 + $0x8] sm:$0xff] 0.0
        %265 = vst [vmem:[#allocation2 + $0x10] sm:$0xff] 0.0
        %266 = vst [vmem:[#allocation2 + $0x18] sm:$0xff] 0.0
        %267 = vst [vmem:[#allocation2 + $0x20] sm:$0xff] 0.0
        %268 = vst [vmem:[#allocation2 + $0x28] sm:$0xff] 0.0
        %269 = vst [vmem:[#allocation2 + $0x30] sm:$0xff] 0.0
        %270 = vst [vmem:[#allocation2 + $0x38] sm:$0xff] 0.0
        %271 = vst [vmem:[#allocation2 + $0x40] sm:$0xff] 0.0
        %272 = vst [vmem:[#allocation2 + $0x48] sm:$0xff] 0.0
        %273 = vst [vmem:[#allocation2 + $0x50] sm:$0xff] 0.0
        %274 = vst [vmem:[#allocation2 + $0x58] sm:$0xff] 0.0
        %275 = vst [vmem:[#allocation2 + $0x60] sm:$0xff] 0.0
        %276 = vst [vmem:[#allocation2 + $0x68] sm:$0xff] 0.0
        %277 = vst [vmem:[#allocation2 + $0x70] sm:$0xff] 0.0
        %278 = vst [vmem:[#allocation2 + $0x78] sm:$0xff] 0.0
        %279 = vst [vmem:[#allocation2 + $0x80] sm:$0xff] 0.0
        %280 = vst [vmem:[#allocation2 + $0x88] sm:$0xff] 0.0
        %281 = vst [vmem:[#allocation2 + $0x90] sm:$0xff] 0.0
        %282 = vst [vmem:[#allocation2 + $0x98] sm:$0xff] 0.0
        %283 = vst [vmem:[#allocation2 + $0xa0] sm:$0xff] 0.0
        %284 = vst [vmem:[#allocation2 + $0xa8] sm:$0xff] 0.0
        %285 = vst [vmem:[#allocation2 + $0xb0] sm:$0xff] 0.0
        %286 = vst [vmem:[#allocation2 + $0xb8] sm:$0xff] 0.0
        %287 = vst [vmem:[#allocation2 + $0xc0] sm:$0xff] 0.0
        %288 = vst [vmem:[#allocation2 + $0xc8] sm:$0xff] 0.0
        %289 = vst [vmem:[#allocation2 + $0xd0] sm:$0xff] 0.0
        %290 = vst [vmem:[#allocation2 + $0xd8] sm:$0xff] 0.0
        %291 = vst [vmem:[#allocation2 + $0xe0] sm:$0xff] 0.0
        %292 = vst [vmem:[#allocation2 + $0xe8] sm:$0xff] 0.0
        %293 = vst [vmem:[#allocation2 + $0xf0] sm:$0xff] 0.0
        %294 = vst [vmem:[#allocation2 + $0xf8] sm:$0xff] 0.0
      $region36: #{_lambda_.32} parent=31 // pred_fallthru
        _
      %v295 = vld [vmem:[%s236] sm:$0xf]
      %v296 = vld [vmem:[%s236 + $0x4] sm:$0xf]
      %v297 = vld [vmem:[%s236 + $0x8] sm:$0xf]
      %v298 = vld [vmem:[%s236 + $0xc] sm:$0xf]
      %v299 = vld [vmem:[%s236 + $0x10] sm:$0xf]
      %v300 = vld [vmem:[%s236 + $0x14] sm:$0xf]
      %v301 = vld [vmem:[%s236 + $0x18] sm:$0xf]
      %v302 = vld [vmem:[%s236 + $0x1c] sm:$0xf]
      %v303 = vld [vmem:[%s236 + $0x20] sm:$0xf]
      %v304 = vld [vmem:[%s236 + $0x24] sm:$0xf]
      %v305 = vld [vmem:[%s236 + $0x28] sm:$0xf]
      %v306 = vld [vmem:[%s236 + $0x2c] sm:$0xf]
      %v307 = vld [vmem:[%s236 + $0x30] sm:$0xf]
      %v308 = vld [vmem:[%s236 + $0x34] sm:$0xf]
      %v309 = vld [vmem:[%s236 + $0x38] sm:$0xf]
      %v310 = vld [vmem:[%s236 + $0x3c] sm:$0xf]
      %v311 = vld [vmem:[%s236 + $0x40] sm:$0xf]
      %v312 = vld [vmem:[%s236 + $0x44] sm:$0xf]
      %v313 = vld [vmem:[%s236 + $0x48] sm:$0xf]
      %v314 = vld [vmem:[%s236 + $0x4c] sm:$0xf]
      %v315 = vld [vmem:[%s236 + $0x50] sm:$0xf]
      %v316 = vld [vmem:[%s236 + $0x54] sm:$0xf]
      %v317 = vld [vmem:[%s236 + $0x58] sm:$0xf]
      %v318 = vld [vmem:[%s236 + $0x5c] sm:$0xf]
      %v319 = vld [vmem:[%s236 + $0x60] sm:$0xf]
      %v320 = vld [vmem:[%s236 + $0x64] sm:$0xf]
      %v321 = vld [vmem:[%s236 + $0x68] sm:$0xf]
      %v322 = vld [vmem:[%s236 + $0x6c] sm:$0xf]
      %v323 = vld [vmem:[%s236 + $0x70] sm:$0xf]
      %v324 = vld [vmem:[%s236 + $0x74] sm:$0xf]
      %v325 = vld [vmem:[%s236 + $0x78] sm:$0xf]
      %v326 = vld [vmem:[%s236 + $0x7c] sm:$0xf]
      %v327 = vld [vmem:[#allocation2] sm:$0xff]
      %v328 = vld [vmem:[#allocation2 + $0x8] sm:$0xff]
      %v329 = vld [vmem:[#allocation2 + $0x10] sm:$0xff]
      %v330 = vld [vmem:[#allocation2 + $0x18] sm:$0xff]
      %v331 = vld [vmem:[#allocation2 + $0x20] sm:$0xff]
      %v332 = vld [vmem:[#allocation2 + $0x28] sm:$0xff]
      %v333 = vld [vmem:[#allocation2 + $0x30] sm:$0xff]
      %v334 = vld [vmem:[#allocation2 + $0x38] sm:$0xff]
      %v335 = vld [vmem:[#allocation2 + $0x40] sm:$0xff]
      %v336 = vld [vmem:[#allocation2 + $0x48] sm:$0xff]
      %v337 = vld [vmem:[#allocation2 + $0x50] sm:$0xff]
      %v338 = vld [vmem:[#allocation2 + $0x58] sm:$0xff]
      %v339 = vld [vmem:[#allocation2 + $0x60] sm:$0xff]
      %v340 = vld [vmem:[#allocation2 + $0x68] sm:$0xff]
      %v341 = vld [vmem:[#allocation2 + $0x70] sm:$0xff]
      %v342 = vld [vmem:[#allocation2 + $0x78] sm:$0xff]
      %v343 = vld [vmem:[#allocation2 + $0x80] sm:$0xff]
      %v344 = vld [vmem:[#allocation2 + $0x88] sm:$0xff]
      %v345 = vld [vmem:[#allocation2 + $0x90] sm:$0xff]
      %v346 = vld [vmem:[#allocation2 + $0x98] sm:$0xff]
      %v347 = vld [vmem:[#allocation2 + $0xa0] sm:$0xff]
      %v348 = vld [vmem:[#allocation2 + $0xa8] sm:$0xff]
      %v349 = vld [vmem:[#allocation2 + $0xb0] sm:$0xff]
      %v350 = vld [vmem:[#allocation2 + $0xb8] sm:$0xff]
      %v351 = vld [vmem:[#allocation2 + $0xc0] sm:$0xff]
      %v352 = vld [vmem:[#allocation2 + $0xc8] sm:$0xff]
      %v353 = vld [vmem:[#allocation2 + $0xd0] sm:$0xff]
      %v354 = vld [vmem:[#allocation2 + $0xd8] sm:$0xff]
      %v355 = vld [vmem:[#allocation2 + $0xe0] sm:$0xff]
      %v356 = vld [vmem:[#allocation2 + $0xe8] sm:$0xff]
      %v357 = vld [vmem:[#allocation2 + $0xf0] sm:$0xff]
      %v358 = vld [vmem:[#allocation2 + $0xf8] sm:$0xff]
      %v359 = vld [vmem:[%s245] sm:$0xf]
      %v360 = vld [vmem:[%s245 + $0x4] sm:$0xf]
      %v361 = vld [vmem:[%s245 + $0x8] sm:$0xf]
      %v362 = vld [vmem:[%s245 + $0xc] sm:$0xf]
      %v363 = vld [vmem:[%s245 + $0x10] sm:$0xf]
      %v364 = vld [vmem:[%s245 + $0x14] sm:$0xf]
      %v365 = vld [vmem:[%s245 + $0x18] sm:$0xf]
      %v366 = vld [vmem:[%s245 + $0x1c] sm:$0xf]
      %v367 = vld [vmem:[%s245 + $0x20] sm:$0xf]
      %v368 = vld [vmem:[%s245 + $0x24] sm:$0xf]
      %v369 = vld [vmem:[%s245 + $0x28] sm:$0xf]
      %v370 = vld [vmem:[%s245 + $0x2c] sm:$0xf]
      %v371 = vld [vmem:[%s245 + $0x30] sm:$0xf]
      %v372 = vld [vmem:[%s245 + $0x34] sm:$0xf]
      %v373 = vld [vmem:[%s245 + $0x38] sm:$0xf]
      %v374 = vld [vmem:[%s245 + $0x3c] sm:$0xf]
      %v407 = vunpack.c.l.b16 %v295
      %v408 = vunpack.c.l.b16 %v296
      %v409 = vunpack.c.l.b16 %v297
      %v410 = vunpack.c.l.b16 %v298
      %v411 = vunpack.c.l.b16 %v299
      %v412 = vunpack.c.l.b16 %v300
      %v413 = vunpack.c.l.b16 %v301
      %v414 = vunpack.c.l.b16 %v302
      %v415 = vunpack.c.l.b16 %v303
      %v416 = vunpack.c.l.b16 %v304
      %v417 = vunpack.c.l.b16 %v305
      %v418 = vunpack.c.l.b16 %v306
      %v419 = vunpack.c.l.b16 %v307
      %v420 = vunpack.c.l.b16 %v308
      %v421 = vunpack.c.l.b16 %v309
      %v422 = vunpack.c.l.b16 %v310
      %v423 = vunpack.c.l.b16 %v311
      %v424 = vunpack.c.l.b16 %v312
      %v425 = vunpack.c.l.b16 %v313
      %v426 = vunpack.c.l.b16 %v314
      %v427 = vunpack.c.l.b16 %v315
      %v428 = vunpack.c.l.b16 %v316
      %v429 = vunpack.c.l.b16 %v317
      %v430 = vunpack.c.l.b16 %v318
      %v431 = vunpack.c.l.b16 %v319
      %v432 = vunpack.c.l.b16 %v320
      %v433 = vunpack.c.l.b16 %v321
      %v434 = vunpack.c.l.b16 %v322
      %v435 = vunpack.c.l.b16 %v323
      %v436 = vunpack.c.l.b16 %v324
      %v437 = vunpack.c.l.b16 %v325
      %v438 = vunpack.c.l.b16 %v326
      %v439 = vpack.c.b16 %v408, %v407
      %v440 = vpack.c.b16 %v410, %v409
      %v441 = vpack.c.b16 %v412, %v411
      %v442 = vpack.c.b16 %v414, %v413
      %v443 = vpack.c.b16 %v416, %v415
      %v444 = vpack.c.b16 %v418, %v417
      %v445 = vpack.c.b16 %v420, %v419
      %v446 = vpack.c.b16 %v422, %v421
      %v447 = vpack.c.b16 %v424, %v423
      %v448 = vpack.c.b16 %v426, %v425
      %v449 = vpack.c.b16 %v428, %v427
      %v450 = vpack.c.b16 %v430, %v429
      %v451 = vpack.c.b16 %v432, %v431
      %v452 = vpack.c.b16 %v434, %v433
      %v453 = vpack.c.b16 %v436, %v435
      %v454 = vpack.c.b16 %v438, %v437
      %v487 = vunpack.c.l.b16 %v359
      %v488 = vunpack.c.l.b16 %v360
      %v489 = vunpack.c.l.b16 %v361
      %v490 = vunpack.c.l.b16 %v362
      %v491 = vunpack.c.l.b16 %v363
      %v492 = vunpack.c.l.b16 %v364
      %v493 = vunpack.c.l.b16 %v365
      %v494 = vunpack.c.l.b16 %v366
      %v495 = vunpack.c.l.b16 %v367
      %v496 = vunpack.c.l.b16 %v368
      %v497 = vunpack.c.l.b16 %v369
      %v498 = vunpack.c.l.b16 %v370
      %v499 = vunpack.c.l.b16 %v371
      %v500 = vunpack.c.l.b16 %v372
      %v501 = vunpack.c.l.b16 %v373
      %v502 = vunpack.c.l.b16 %v374
      %v503 = vpack.c.b16 %v488, %v487
      %v504 = vpack.c.b16 %v490, %v489
      %v505 = vpack.c.b16 %v492, %v491
      %v506 = vpack.c.b16 %v494, %v493
      %v507 = vpack.c.b16 %v496, %v495
      %v508 = vpack.c.b16 %v498, %v497
      %v509 = vpack.c.b16 %v500, %v499
      %v510 = vpack.c.b16 %v502, %v501
      %519 = vmatpush.bf16.msra.mxu0 %v510
      %520 = vmatpush.bf16.msra.mxu0 %v509
      %521 = vmatpush.bf16.msra.mxu0 %v508
      %522 = vmatpush.bf16.msra.mxu0 %v507
      %523 = vmatpush.bf16.msra.mxu0 %v506
      %524 = vmatpush.bf16.msra.mxu0 %v505
      %525 = vmatpush.bf16.msra.mxu0 %v504
      %526 = vmatpush.bf16.msra.mxu0 %v503
      %527 = vmatmul.bf16.gmra.mxu0 %v439
      %v528 = vpop.f32.mrf.mxu0
      %v529 = vadd.f32 0.0, %v528
      %v530 = vpop.f32.mrf.mxu0
      %v531 = vadd.f32 0.0, %v530
      %532 = vmatmul.bf16.gmra.mxu0 %v440
      %v533 = vpop.f32.mrf.mxu0
      %v534 = vadd.f32 0.0, %v533
      %v535 = vpop.f32.mrf.mxu0
      %v536 = vadd.f32 0.0, %v535
      %537 = vmatmul.bf16.gmra.mxu0 %v441
      %v538 = vpop.f32.mrf.mxu0
      %v539 = vadd.f32 0.0, %v538
      %v540 = vpop.f32.mrf.mxu0
      %v541 = vadd.f32 0.0, %v540
      %542 = vmatmul.bf16.gmra.mxu0 %v442
      %v543 = vpop.f32.mrf.mxu0
      %v544 = vadd.f32 0.0, %v543
      %v545 = vpop.f32.mrf.mxu0
      %v546 = vadd.f32 0.0, %v545
      %547 = vmatmul.bf16.gmra.mxu0 %v443
      %v548 = vpop.f32.mrf.mxu0
      %v549 = vadd.f32 0.0, %v548
      %v550 = vpop.f32.mrf.mxu0
      %v551 = vadd.f32 0.0, %v550
      %552 = vmatmul.bf16.gmra.mxu0 %v444
      %v553 = vpop.f32.mrf.mxu0
      %v554 = vadd.f32 0.0, %v553
      %v555 = vpop.f32.mrf.mxu0
      %v556 = vadd.f32 0.0, %v555
      %557 = vmatmul.bf16.gmra.mxu0 %v445
      %v558 = vpop.f32.mrf.mxu0
      %v559 = vadd.f32 0.0, %v558
      %v560 = vpop.f32.mrf.mxu0
      %v561 = vadd.f32 0.0, %v560
      %562 = vmatmul.bf16.gmra.mxu0 %v446
      %v563 = vpop.f32.mrf.mxu0
      %v564 = vadd.f32 0.0, %v563
      %v565 = vpop.f32.mrf.mxu0
      %v566 = vadd.f32 0.0, %v565
      %567 = vmatmul.bf16.gmra.mxu0 %v447
      %v568 = vpop.f32.mrf.mxu0
      %v569 = vadd.f32 0.0, %v568
      %v570 = vpop.f32.mrf.mxu0
      %v571 = vadd.f32 0.0, %v570
      %572 = vmatmul.bf16.gmra.mxu0 %v448
      %v573 = vpop.f32.mrf.mxu0
      %v574 = vadd.f32 0.0, %v573
      %v575 = vpop.f32.mrf.mxu0
      %v576 = vadd.f32 0.0, %v575
      %577 = vmatmul.bf16.gmra.mxu0 %v449
      %v578 = vpop.f32.mrf.mxu0
      %v579 = vadd.f32 0.0, %v578
      %v580 = vpop.f32.mrf.mxu0
      %v581 = vadd.f32 0.0, %v580
      %582 = vmatmul.bf16.gmra.mxu0 %v450
      %v583 = vpop.f32.mrf.mxu0
      %v584 = vadd.f32 0.0, %v583
      %v585 = vpop.f32.mrf.mxu0
      %v586 = vadd.f32 0.0, %v585
      %587 = vmatmul.bf16.gmra.mxu0 %v451
      %v588 = vpop.f32.mrf.mxu0
      %v589 = vadd.f32 0.0, %v588
      %v590 = vpop.f32.mrf.mxu0
      %v591 = vadd.f32 0.0, %v590
      %592 = vmatmul.bf16.gmra.mxu0 %v452
      %v593 = vpop.f32.mrf.mxu0
      %v594 = vadd.f32 0.0, %v593
      %v595 = vpop.f32.mrf.mxu0
      %v596 = vadd.f32 0.0, %v595
      %597 = vmatmul.bf16.gmra.mxu0 %v453
      %v598 = vpop.f32.mrf.mxu0
      %v599 = vadd.f32 0.0, %v598
      %v600 = vpop.f32.mrf.mxu0
      %v601 = vadd.f32 0.0, %v600
      %602 = vmatmul.bf16.gmra.mxu0 %v454
      %v603 = vpop.f32.mrf.mxu0
      %v604 = vadd.f32 0.0, %v603
      %v605 = vpop.f32.mrf.mxu0
      %v606 = vadd.f32 0.0, %v605
      %607 = vdwg.mxu0
      %v608 = vadd.f32 %v327, %v529
      %v609 = vadd.f32 %v328, %v531
      %v610 = vadd.f32 %v329, %v534
      %v611 = vadd.f32 %v330, %v536
      %v612 = vadd.f32 %v331, %v539
      %v613 = vadd.f32 %v332, %v541
      %v614 = vadd.f32 %v333, %v544
      %v615 = vadd.f32 %v334, %v546
      %v616 = vadd.f32 %v335, %v549
      %v617 = vadd.f32 %v336, %v551
      %v618 = vadd.f32 %v337, %v554
      %v619 = vadd.f32 %v338, %v556
      %v620 = vadd.f32 %v339, %v559
      %v621 = vadd.f32 %v340, %v561
      %v622 = vadd.f32 %v341, %v564
      %v623 = vadd.f32 %v342, %v566
      %v624 = vadd.f32 %v343, %v569
      %v625 = vadd.f32 %v344, %v571
      %v626 = vadd.f32 %v345, %v574
      %v627 = vadd.f32 %v346, %v576
      %v628 = vadd.f32 %v347, %v579
      %v629 = vadd.f32 %v348, %v581
      %v630 = vadd.f32 %v349, %v584
      %v631 = vadd.f32 %v350, %v586
      %v632 = vadd.f32 %v351, %v589
      %v633 = vadd.f32 %v352, %v591
      %v634 = vadd.f32 %v353, %v594
      %v635 = vadd.f32 %v354, %v596
      %v636 = vadd.f32 %v355, %v599
      %v637 = vadd.f32 %v356, %v601
      %v638 = vadd.f32 %v357, %v604
      %v639 = vadd.f32 %v358, %v606
      %640 = vst [vmem:[#allocation2] sm:$0xff] %v608
      %641 = vst [vmem:[#allocation2 + $0x8] sm:$0xff] %v609
      %642 = vst [vmem:[#allocation2 + $0x10] sm:$0xff] %v610
      %643 = vst [vmem:[#allocation2 + $0x18] sm:$0xff] %v611
      %644 = vst [vmem:[#allocation2 + $0x20] sm:$0xff] %v612
      %645 = vst [vmem:[#allocation2 + $0x28] sm:$0xff] %v613
      %646 = vst [vmem:[#allocation2 + $0x30] sm:$0xff] %v614
      %647 = vst [vmem:[#allocation2 + $0x38] sm:$0xff] %v615
      %648 = vst [vmem:[#allocation2 + $0x40] sm:$0xff] %v616
      %649 = vst [vmem:[#allocation2 + $0x48] sm:$0xff] %v617
      %650 = vst [vmem:[#allocation2 + $0x50] sm:$0xff] %v618
      %651 = vst [vmem:[#allocation2 + $0x58] sm:$0xff] %v619
      %652 = vst [vmem:[#allocation2 + $0x60] sm:$0xff] %v620
      %653 = vst [vmem:[#allocation2 + $0x68] sm:$0xff] %v621
      %654 = vst [vmem:[#allocation2 + $0x70] sm:$0xff] %v622
      %655 = vst [vmem:[#allocation2 + $0x78] sm:$0xff] %v623
      %656 = vst [vmem:[#allocation2 + $0x80] sm:$0xff] %v624
      %657 = vst [vmem:[#allocation2 + $0x88] sm:$0xff] %v625
      %658 = vst [vmem:[#allocation2 + $0x90] sm:$0xff] %v626
      %659 = vst [vmem:[#allocation2 + $0x98] sm:$0xff] %v627
      %660 = vst [vmem:[#allocation2 + $0xa0] sm:$0xff] %v628
      %661 = vst [vmem:[#allocation2 + $0xa8] sm:$0xff] %v629
      %662 = vst [vmem:[#allocation2 + $0xb0] sm:$0xff] %v630
      %663 = vst [vmem:[#allocation2 + $0xb8] sm:$0xff] %v631
      %664 = vst [vmem:[#allocation2 + $0xc0] sm:$0xff] %v632
      %665 = vst [vmem:[#allocation2 + $0xc8] sm:$0xff] %v633
      %666 = vst [vmem:[#allocation2 + $0xd0] sm:$0xff] %v634
      %667 = vst [vmem:[#allocation2 + $0xd8] sm:$0xff] %v635
      %668 = vst [vmem:[#allocation2 + $0xe0] sm:$0xff] %v636
      %669 = vst [vmem:[#allocation2 + $0xe8] sm:$0xff] %v637
      %670 = vst [vmem:[#allocation2 + $0xf0] sm:$0xff] %v638
      %671 = vst [vmem:[#allocation2 + $0xf8] sm:$0xff] %v639
      // Predicated region
      $region37: #{_lambda_.32} parent=31 // pred_check
        %p672 = pneg %p259
      $region38: #{_lambda_.32} parent=31 // pred_check_branch
        %674 = sbr.rel (%p672) target = $region40
      $region39: #{_lambda_.32} parent=31 // pred_region
        %v675 = vld [vmem:[#allocation2] sm:$0xff]
        %v676 = vld [vmem:[#allocation2 + $0x8] sm:$0xff]
        %v677 = vld [vmem:[#allocation2 + $0x10] sm:$0xff]
        %v678 = vld [vmem:[#allocation2 + $0x18] sm:$0xff]
        %v679 = vld [vmem:[#allocation2 + $0x20] sm:$0xff]
        %v680 = vld [vmem:[#allocation2 + $0x28] sm:$0xff]
        %v681 = vld [vmem:[#allocation2 + $0x30] sm:$0xff]
        %v682 = vld [vmem:[#allocation2 + $0x38] sm:$0xff]
        %v683 = vld [vmem:[#allocation2 + $0x40] sm:$0xff]
        %v684 = vld [vmem:[#allocation2 + $0x48] sm:$0xff]
        %v685 = vld [vmem:[#allocation2 + $0x50] sm:$0xff]
        %v686 = vld [vmem:[#allocation2 + $0x58] sm:$0xff]
        %v687 = vld [vmem:[#allocation2 + $0x60] sm:$0xff]
        %v688 = vld [vmem:[#allocation2 + $0x68] sm:$0xff]
        %v689 = vld [vmem:[#allocation2 + $0x70] sm:$0xff]
        %v690 = vld [vmem:[#allocation2 + $0x78] sm:$0xff]
        %v691 = vld [vmem:[#allocation2 + $0x80] sm:$0xff]
        %v692 = vld [vmem:[#allocation2 + $0x88] sm:$0xff]
        %v693 = vld [vmem:[#allocation2 + $0x90] sm:$0xff]
        %v694 = vld [vmem:[#allocation2 + $0x98] sm:$0xff]
        %v695 = vld [vmem:[#allocation2 + $0xa0] sm:$0xff]
        %v696 = vld [vmem:[#allocation2 + $0xa8] sm:$0xff]
        %v697 = vld [vmem:[#allocation2 + $0xb0] sm:$0xff]
        %v698 = vld [vmem:[#allocation2 + $0xb8] sm:$0xff]
        %v699 = vld [vmem:[#allocation2 + $0xc0] sm:$0xff]
        %v700 = vld [vmem:[#allocation2 + $0xc8] sm:$0xff]
        %v701 = vld [vmem:[#allocation2 + $0xd0] sm:$0xff]
        %v702 = vld [vmem:[#allocation2 + $0xd8] sm:$0xff]
        %v703 = vld [vmem:[#allocation2 + $0xe0] sm:$0xff]
        %v704 = vld [vmem:[#allocation2 + $0xe8] sm:$0xff]
        %v705 = vld [vmem:[#allocation2 + $0xf0] sm:$0xff]
        %v706 = vld [vmem:[#allocation2 + $0xf8] sm:$0xff]
        %v707 = vld [vmem:[%s249] sm:$0x1]
        %v709 = vperm.slane %v707, 0
        %v711 = vadd.f32 %v675, %v709
        %v712 = vadd.f32 %v676, %v709
        %v713 = vadd.f32 %v677, %v709
        %v714 = vadd.f32 %v678, %v709
        %v715 = vadd.f32 %v679, %v709
        %v716 = vadd.f32 %v680, %v709
        %v717 = vadd.f32 %v681, %v709
        %v718 = vadd.f32 %v682, %v709
        %v719 = vadd.f32 %v683, %v709
        %v720 = vadd.f32 %v684, %v709
        %v721 = vadd.f32 %v685, %v709
        %v722 = vadd.f32 %v686, %v709
        %v723 = vadd.f32 %v687, %v709
        %v724 = vadd.f32 %v688, %v709
        %v725 = vadd.f32 %v689, %v709
        %v726 = vadd.f32 %v690, %v709
        %v727 = vadd.f32 %v691, %v709
        %v728 = vadd.f32 %v692, %v709
        %v729 = vadd.f32 %v693, %v709
        %v730 = vadd.f32 %v694, %v709
        %v731 = vadd.f32 %v695, %v709
        %v732 = vadd.f32 %v696, %v709
        %v733 = vadd.f32 %v697, %v709
        %v734 = vadd.f32 %v698, %v709
        %v735 = vadd.f32 %v699, %v709
        %v736 = vadd.f32 %v700, %v709
        %v737 = vadd.f32 %v701, %v709
        %v738 = vadd.f32 %v702, %v709
        %v739 = vadd.f32 %v703, %v709
        %v740 = vadd.f32 %v704, %v709
        %v741 = vadd.f32 %v705, %v709
        %v742 = vadd.f32 %v706, %v709
        %743 = vst [vmem:[%s257] sm:$0xff] %v711
        %744 = vst [vmem:[%s257 + $0x8] sm:$0xff] %v712
        %745 = vst [vmem:[%s257 + $0x10] sm:$0xff] %v713
        %746 = vst [vmem:[%s257 + $0x18] sm:$0xff] %v714
        %747 = vst [vmem:[%s257 + $0x20] sm:$0xff] %v715
        %748 = vst [vmem:[%s257 + $0x28] sm:$0xff] %v716
        %749 = vst [vmem:[%s257 + $0x30] sm:$0xff] %v717
        %750 = vst [vmem:[%s257 + $0x38] sm:$0xff] %v718
        %751 = vst [vmem:[%s257 + $0x40] sm:$0xff] %v719
        %752 = vst [vmem:[%s257 + $0x48] sm:$0xff] %v720
        %753 = vst [vmem:[%s257 + $0x50] sm:$0xff] %v721
        %754 = vst [vmem:[%s257 + $0x58] sm:$0xff] %v722
        %755 = vst [vmem:[%s257 + $0x60] sm:$0xff] %v723
        %756 = vst [vmem:[%s257 + $0x68] sm:$0xff] %v724
        %757 = vst [vmem:[%s257 + $0x70] sm:$0xff] %v725
        %758 = vst [vmem:[%s257 + $0x78] sm:$0xff] %v726
        %759 = vst [vmem:[%s257 + $0x80] sm:$0xff] %v727
        %760 = vst [vmem:[%s257 + $0x88] sm:$0xff] %v728
        %761 = vst [vmem:[%s257 + $0x90] sm:$0xff] %v729
        %762 = vst [vmem:[%s257 + $0x98] sm:$0xff] %v730
        %763 = vst [vmem:[%s257 + $0xa0] sm:$0xff] %v731
        %764 = vst [vmem:[%s257 + $0xa8] sm:$0xff] %v732
        %765 = vst [vmem:[%s257 + $0xb0] sm:$0xff] %v733
        %766 = vst [vmem:[%s257 + $0xb8] sm:$0xff] %v734
        %767 = vst [vmem:[%s257 + $0xc0] sm:$0xff] %v735
        %768 = vst [vmem:[%s257 + $0xc8] sm:$0xff] %v736
        %769 = vst [vmem:[%s257 + $0xd0] sm:$0xff] %v737
        %770 = vst [vmem:[%s257 + $0xd8] sm:$0xff] %v738
        %771 = vst [vmem:[%s257 + $0xe0] sm:$0xff] %v739
        %772 = vst [vmem:[%s257 + $0xe8] sm:$0xff] %v740
        %773 = vst [vmem:[%s257 + $0xf0] sm:$0xff] %v741
        %774 = vst [vmem:[%s257 + $0xf8] sm:$0xff] %v742
      $region40: #{_lambda_.32} parent=31 // pred_fallthru
        _
      %s775 = smul.u32 32, %s19
      %p776 = scmp.lt.s32.totalorder %s775, 63
      %s777 = scalar_select %p776, %s775, 63
      %p778 = scmp.lt.s32.totalorder %s20, 0
      %s779 = scalar_select %p778, %s20, 0
      %s780 = sadd.s32 %s779, %s777
      %s781 = smul.addr %s780, 8
      %s782 = scalar_lea.vmem %s3, %s781
      // Predicated region
      $region41: #{_lambda_.32} parent=31 // pred_check
        %p783 = pneg %p135
      $region42: #{_lambda_.32} parent=31 // pred_check_branch
        %785 = sbr.rel (%p783) target = $region44
      $region43: #{_lambda_.32} parent=31 // pred_region
        %s786 = smul.u32 32, %s19
      $region44: #{_lambda_.32} parent=31 // pred_fallthru
        _
    $region32: #{_lambda_.32} parent=5 // pred_fallthru
      _
    %p787 = scmp.le.s32.totalorder 2, %s9
    // Predicated region
    $region45: #{_lambda_.32} parent=5 // pred_check
      %p788 = pneg %p787
    $region46: #{_lambda_.32} parent=5 // pred_check_branch
      %790 = sbr.rel (%p788) target = $region48
    $region47: #{_lambda_.32} parent=5 // pred_region
      %s791 = ssub.s32 %s9, 2
      // Predicated region
      $region49: #{_lambda_.32} parent=47 // pred_check
        %p792 = pneg %p141
      $region50: #{_lambda_.32} parent=47 // pred_check_branch
        %794 = sbr.rel (%p792) target = $region52
      $region51: #{_lambda_.32} parent=47 // pred_region
        %s795 = smul.u32 32, %s22
        %p796 = scmp.lt.s32.totalorder %s795, 63
        %s797 = scalar_select %p796, %s795, 63
        %p798 = scmp.lt.s32.totalorder %s23, 0
        %s799 = scalar_select %p798, %s23, 0
        %s800 = sadd.s32 %s799, %s797
        %s801 = smul.addr %s800, 8
        %s802 = scalar_lea.vmem %s3, %s801
      $region52: #{_lambda_.32} parent=47 // pred_fallthru
        _
    $region48: #{_lambda_.32} parent=5 // pred_fallthru
      _
  $region6: #{_lambda_.32} parent=0 // loop_footer
    %s13 = sadd.s32 1, %s9
  $region7: #{_lambda_.32} parent=0 // loop_footer_branch
    %8 = sbr.rel target = $region3
  $region8: #{_lambda_.32} parent=0 // loop_exit
    _

// kernel: _lambda_.33
$region0: #{_lambda_.33}
  #allocation0 [shape = 'u32[]', space=smem, size = 0x4, offset = 0x4, fixed_abs, tag = 'smem constant byte address 0x4 - core index']
  #allocation1 [shape = 'u32[72,128]{1,0:T(1,128)}', space=vmem, size = 0x9000, scoped, tag = 'internal scratch']
  #allocation2 [shape = 'f32[512,128]{1,0:T(8,128)}', space=vmem, size = 0x40000, scoped, tag = 'scratch operand']
  %s0 = inlined_call_operand.vmem [shape: bf16[2048,128], index: 0, kind: input, shape index: {}]
  %s1 = inlined_call_operand.vmem [shape: bf16[128,128], index: 1, kind: input, shape index: {}]
  %s2 = inlined_call_operand.vmem [shape: f32[1,128], index: 2, kind: input, shape index: {}]
  %s3 = inlined_call_operand.vmem [shape: f32[2048,128], index: 3, kind: output, shape index: {}]
  %s4 = sld [smem:[#allocation0]]
  $region53: #{_lambda_.33} parent=0
    _
  %s6 = ssub.s32 1, %s4
  %s7 = scalar_select 0, %s6, %s4
  loop: start=0, step=1, limit=6
  $region2: #{_lambda_.33} parent=0 // loop_pre_header
    _
  $region3: #{_lambda_.33} parent=0 // loop_header
    %s9 = sphi 0, %s13
    %p10 = scmp.ge.s32.totalorder %s9, 6
    %s16 = sphi 0, %s35
    %s17 = sphi 0, %s31
    %s18 = sphi 0, %s27
    %s19 = sphi 0, %s16
    %s20 = sphi 0, %s17
    %s21 = sphi 0, %s18
    %s22 = sphi 0, %s19
    %s23 = sphi 0, %s20
    %s24 = sphi 0, %s21
    %s40 = sphi 0, %s42
    %s43 = sphi 0, %s40
    %s44 = sphi 0, %s43
    %s60 = sphi 0, %s44
    %s68 = sphi 0, %s70
    %s71 = sphi 0, %s68
    %s72 = sphi 0, %s71
    %s88 = sphi 0, %s72
    %s94 = sphi 0, %s96
    %s97 = sphi 0, %s94
    %s98 = sphi 0, %s97
    %s114 = sphi 0, %s98
    %s122 = sphi 0, %s124
    %s125 = sphi 0, %s122
    %s126 = sphi 0, %s125
    %s142 = sphi 0, %s126
  $region4: #{_lambda_.33} parent=0 // loop_header_branch
    %12 = sbr.rel (%p10) target = $region8
  $region5: #{_lambda_.33} parent=0 // loop_body
    %s14 = ssub.s32 %s9, 1
    %s15 = ssub.s32 %s9, 2
    %s25 = sadd.s32 1, %s18
    %p26 = scmp.ge.s32.totalorder %s25, 1
    %s27 = scalar_select %p26, 0, %s25
    %s28 = sadd.s32 1, %s17
    %s29 = scalar_select %p26, %s28, %s17
    %p30 = scmp.ge.s32.totalorder %s29, 1
    %s31 = scalar_select %p30, 0, %s29
    %s32 = sadd.s32 1, %s16
    %s33 = scalar_select %p30, %s32, %s16
    %p34 = scmp.ge.s32.totalorder %s33, 4
    %s35 = scalar_select %p34, 0, %s33
    %s36 = ssub.s32 %s16, %s35
    %s37 = ssub.s32 %s18, %s27
    %s38 = sor.u32 %s36, %s37
    %p39 = scmp.eq.s32.totalorder %s38, 0
    %s41 = sadd.s32 %s40, 1
    %s42 = scalar_select %p39, %s40, %s41
    %p45 = pneg %p39
    %p46 = scmp.eq.s32.totalorder %s9, 3
    %p47 = por %p45, %p46
    %p48 = scmp.ne.s32.totalorder %s40, %s43
    %p49 = scmp.eq.s32.totalorder %s9, 0
    %p50 = por %p48, %p49
    %p51 = scmp.ne.s32.totalorder %s40, %s43
    %p52 = scmp.eq.s32.totalorder %s14, 3
    %p53 = por %p51, %p52
    %p54 = scmp.ne.s32.totalorder %s43, %s44
    %p55 = scmp.eq.s32.totalorder %s14, 0
    %p56 = por %p54, %p55
    %p57 = scmp.ne.s32.totalorder %s43, %s44
    %p58 = scmp.eq.s32.totalorder %s15, 3
    %p59 = por %p57, %p58
    %p61 = scmp.ne.s32.totalorder %s44, %s60
    %p62 = scmp.eq.s32.totalorder %s15, 0
    %p63 = por %p61, %p62
    %s64 = ssub.s32 %s18, %s27
    %s65 = ssub.s32 %s17, %s31
    %s66 = sor.u32 %s64, %s65
    %p67 = scmp.eq.s32.totalorder %s66, 0
    %s69 = sadd.s32 %s68, 1
    %s70 = scalar_select %p67, %s68, %s69
    %p73 = pneg %p67
    %p74 = scmp.eq.s32.totalorder %s9, 3
    %p75 = por %p73, %p74
    %p76 = scmp.ne.s32.totalorder %s68, %s71
    %p77 = scmp.eq.s32.totalorder %s9, 0
    %p78 = por %p76, %p77
    %p79 = scmp.ne.s32.totalorder %s68, %s71
    %p80 = scmp.eq.s32.totalorder %s14, 3
    %p81 = por %p79, %p80
    %p82 = scmp.ne.s32.totalorder %s71, %s72
    %p83 = scmp.eq.s32.totalorder %s14, 0
    %p84 = por %p82, %p83
    %p85 = scmp.ne.s32.totalorder %s71, %s72
    %p86 = scmp.eq.s32.totalorder %s15, 3
    %p87 = por %p85, %p86
    %p89 = scmp.ne.s32.totalorder %s72, %s88
    %p90 = scmp.eq.s32.totalorder %s15, 0
    %p91 = por %p89, %p90
    %s92 = ssub.s32 %s17, %s31
    %p93 = scmp.eq.s32.totalorder %s92, 0
    %s95 = sadd.s32 %s94, 1
    %s96 = scalar_select %p93, %s94, %s95
    %p99 = pneg %p93
    %p100 = scmp.eq.s32.totalorder %s9, 3
    %p101 = por %p99, %p100
    %p102 = scmp.ne.s32.totalorder %s94, %s97
    %p103 = scmp.eq.s32.totalorder %s9, 0
    %p104 = por %p102, %p103
    %p105 = scmp.ne.s32.totalorder %s94, %s97
    %p106 = scmp.eq.s32.totalorder %s14, 3
    %p107 = por %p105, %p106
    %p108 = scmp.ne.s32.totalorder %s97, %s98
    %p109 = scmp.eq.s32.totalorder %s14, 0
    %p110 = por %p108, %p109
    %p111 = scmp.ne.s32.totalorder %s97, %s98
    %p112 = scmp.eq.s32.totalorder %s15, 3
    %p113 = por %p111, %p112
    %p115 = scmp.ne.s32.totalorder %s98, %s114
    %p116 = scmp.eq.s32.totalorder %s15, 0
    %p117 = por %p115, %p116
    %s118 = ssub.s32 %s16, %s35
    %s119 = ssub.s32 %s17, %s31
    %s120 = sor.u32 %s118, %s119
    %p121 = scmp.eq.s32.totalorder %s120, 0
    %s123 = sadd.s32 %s122, 1
    %s124 = scalar_select %p121, %s122, %s123
    %p127 = pneg %p121
    %p128 = scmp.eq.s32.totalorder %s9, 3
    %p129 = por %p127, %p128
    %p130 = scmp.ne.s32.totalorder %s122, %s125
    %p131 = scmp.eq.s32.totalorder %s9, 0
    %p132 = por %p130, %p131
    %p133 = scmp.ne.s32.totalorder %s122, %s125
    %p134 = scmp.eq.s32.totalorder %s14, 3
    %p135 = por %p133, %p134
    %p136 = scmp.ne.s32.totalorder %s125, %s126
    %p137 = scmp.eq.s32.totalorder %s14, 0
    %p138 = por %p136, %p137
    %p139 = scmp.ne.s32.totalorder %s125, %s126
    %p140 = scmp.eq.s32.totalorder %s15, 3
    %p141 = por %p139, %p140
    %p143 = scmp.ne.s32.totalorder %s126, %s142
    %p144 = scmp.eq.s32.totalorder %s15, 0
    %p145 = por %p143, %p144
    %p146 = scmp.le.s32.totalorder 1, %s9
    %p147 = scmp.lt.s32.totalorder %s9, 5
    %p148 = pnand %p146, %p147
    %p149 = pneg %p148
    // Predicated region
    $region9: #{_lambda_.33} parent=5 // pred_check
      _
    $region10: #{_lambda_.33} parent=5 // pred_check_branch
      %151 = sbr.rel (%p148) target = $region12
    $region11: #{_lambda_.33} parent=5 // pred_region
      %s152 = ssub.s32 %s9, 1
      // Predicated region
      $region13: #{_lambda_.33} parent=11 // pred_check
        %p153 = pneg %p84
      $region14: #{_lambda_.33} parent=11 // pred_check_branch
        %155 = sbr.rel (%p153) target = $region16
      $region15: #{_lambda_.33} parent=11 // pred_region
        %s156 = smul.u32 16, %s21
        %p157 = scmp.lt.s32.totalorder %s156, 15
        %s158 = scalar_select %p157, %s156, 15
        %p159 = scmp.lt.s32.totalorder %s20, 0
        %s160 = scalar_select %p159, %s20, 0
        %s161 = sadd.s32 %s160, %s158
        %s162 = smul.addr %s161, 4
        %s163 = scalar_lea.vmem %s1, %s162
        %s164 = smul.u32 16, %s21
      $region16: #{_lambda_.33} parent=11 // pred_fallthru
        _
      // Predicated region
      $region17: #{_lambda_.33} parent=11 // pred_check
        %p165 = pneg %p110
      $region18: #{_lambda_.33} parent=11 // pred_check_branch
        %167 = sbr.rel (%p165) target = $region20
      $region19: #{_lambda_.33} parent=11 // pred_region
        %p168 = scmp.lt.s32.totalorder %s20, 0
        %s169 = scalar_select %p168, %s20, 0
        %s170 = scalar_lea.vmem %s2, %s169
      $region20: #{_lambda_.33} parent=11 // pred_fallthru
        _
    $region12: #{_lambda_.33} parent=5 // pred_fallthru
      _
    %p171 = scmp.lt.s32.totalorder %s9, 4
    // Predicated region
    $region21: #{_lambda_.33} parent=5 // pred_check
      %p172 = pneg %p171
    $region22: #{_lambda_.33} parent=5 // pred_check_branch
      %174 = sbr.rel (%p172) target = $region24
    $region23: #{_lambda_.33} parent=5 // pred_region
      // Predicated region
      $region25: #{_lambda_.33} parent=23 // pred_check
        %p175 = pneg %p50
      $region26: #{_lambda_.33} parent=23 // pred_check_branch
        %177 = sbr.rel (%p175) target = $region28
      $region27: #{_lambda_.33} parent=23 // pred_region
        %s178 = smul.u32 64, %s16
        %p179 = scmp.lt.s32.totalorder %s178, 255
        %s180 = scalar_select %p179, %s178, 255
        %p181 = scmp.lt.s32.totalorder %s18, 0
        %s182 = scalar_select %p181, %s18, 0
        %s183 = sadd.s32 %s182, %s180
        %s184 = smul.addr %s183, 4
        %s185 = scalar_lea.vmem %s0, %s184
        %s186 = smul.u32 64, %s16
      $region28: #{_lambda_.33} parent=23 // pred_fallthru
        _
    $region24: #{_lambda_.33} parent=5 // pred_fallthru
      _
    %p187 = scmp.le.s32.totalorder 1, %s9
    %p188 = scmp.lt.s32.totalorder %s9, 5
    %p189 = pnand %p187, %p188
    %p190 = pneg %p189
    // Predicated region
    $region29: #{_lambda_.33} parent=5 // pred_check
      _
    $region30: #{_lambda_.33} parent=5 // pred_check_branch
      %192 = sbr.rel (%p189) target = $region32
    $region31: #{_lambda_.33} parent=5 // pred_region
      %s193 = ssub.s32 %s9, 1
      %s194 = smul.u32 64, %s19
      %p195 = scmp.lt.s32.totalorder %s194, 255
      %s196 = scalar_select %p195, %s194, 255
      %p197 = scmp.lt.s32.totalorder %s21, 0
      %s198 = scalar_select %p197, %s21, 0
      %s199 = sadd.s32 %s198, %s196
      %s200 = smul.addr %s199, 4
      %s201 = scalar_lea.vmem %s0, %s200
      %p202 = pneg %p56
      %p203 = pneg %p53
      %s204 = smul.u32 16, %s21
      %p205 = scmp.lt.s32.totalorder %s204, 15
      %s206 = scalar_select %p205, %s204, 15
      %p207 = scmp.lt.s32.totalorder %s20, 0
      %s208 = scalar_select %p207, %s20, 0
      %s209 = sadd.s32 %s208, %s206
      %s210 = smul.addr %s209, 4
      %s211 = scalar_lea.vmem %s1, %s210
      %p212 = pneg %p84
      %p213 = pneg %p81
      %p214 = scmp.lt.s32.totalorder %s20, 0
      %s215 = scalar_select %p214, %s20, 0
      %s216 = scalar_lea.vmem %s2, %s215
      %p217 = pneg %p110
      %p218 = pneg %p107
      %p219 = pneg %p138
      %p220 = pneg %p135
      %s221 = smul.u32 64, %s19
      %p222 = scmp.lt.s32.totalorder %s221, 255
      %s223 = scalar_select %p222, %s221, 255
      %p224 = scmp.lt.s32.totalorder %s20, 0
      %s225 = scalar_select %p224, %s20, 0
      %s226 = sadd.s32 %s225, %s223
      %s227 = smul.addr %s226, 8
      %s228 = scalar_lea.vmem %s3, %s227
      %s229 = smul.u32 64, %s19
      %p230 = scmp.lt.s32.totalorder %s229, 255
      %s231 = scalar_select %p230, %s229, 255
      %p232 = scmp.lt.s32.totalorder %s21, 0
      %s233 = scalar_select %p232, %s21, 0
      %s234 = sadd.s32 %s233, %s231
      %s235 = smul.addr %s234, 4
      %s236 = scalar_lea.vmem %s0, %s235
      %s237 = smul.u32 64, %s19
      %s238 = smul.u32 16, %s21
      %p239 = scmp.lt.s32.totalorder %s238, 15
      %s240 = scalar_select %p239, %s238, 15
      %p241 = scmp.lt.s32.totalorder %s20, 0
      %s242 = scalar_select %p241, %s20, 0
      %s243 = sadd.s32 %s242, %s240
      %s244 = smul.addr %s243, 4
      %s245 = scalar_lea.vmem %s1, %s244
      %s246 = smul.u32 16, %s21
      %p247 = scmp.lt.s32.totalorder %s20, 0
      %s248 = scalar_select %p247, %s20, 0
      %s249 = scalar_lea.vmem %s2, %s248
      %s250 = smul.u32 64, %s19
      %p251 = scmp.lt.s32.totalorder %s250, 255
      %s252 = scalar_select %p251, %s250, 255
      %p253 = scmp.lt.s32.totalorder %s20, 0
      %s254 = scalar_select %p253, %s20, 0
      %s255 = sadd.s32 %s254, %s252
      %s256 = smul.addr %s255, 8
      %s257 = scalar_lea.vmem %s3, %s256
      %s258 = smul.u32 64, %s19
      %p259 = scmp.eq.s32.totalorder %s21, 0
      // Predicated region
      $region33: #{_lambda_.33} parent=31 // pred_check
        %p260 = pneg %p259
      $region34: #{_lambda_.33} parent=31 // pred_check_branch
        %262 = sbr.rel (%p260) target = $region36
      $region35: #{_lambda_.33} parent=31 // pred_region
        %263 = vst [vmem:[#allocation2] sm:$0xff] 0.0
        %264 = vst [vmem:[#allocation2 + $0x8] sm:$0xff] 0.0
        %265 = vst [vmem:[#allocation2 + $0x10] sm:$0xff] 0.0
        %266 = vst [vmem:[#allocation2 + $0x18] sm:$0xff] 0.0
        %267 = vst [vmem:[#allocation2 + $0x20] sm:$0xff] 0.0
        %268 = vst [vmem:[#allocation2 + $0x28] sm:$0xff] 0.0
        %269 = vst [vmem:[#allocation2 + $0x30] sm:$0xff] 0.0
        %270 = vst [vmem:[#allocation2 + $0x38] sm:$0xff] 0.0
        %271 = vst [vmem:[#allocation2 + $0x40] sm:$0xff] 0.0
        %272 = vst [vmem:[#allocation2 + $0x48] sm:$0xff] 0.0
        %273 = vst [vmem:[#allocation2 + $0x50] sm:$0xff] 0.0
        %274 = vst [vmem:[#allocation2 + $0x58] sm:$0xff] 0.0
        %275 = vst [vmem:[#allocation2 + $0x60] sm:$0xff] 0.0
        %276 = vst [vmem:[#allocation2 + $0x68] sm:$0xff] 0.0
        %277 = vst [vmem:[#allocation2 + $0x70] sm:$0xff] 0.0
        %278 = vst [vmem:[#allocation2 + $0x78] sm:$0xff] 0.0
        %279 = vst [vmem:[#allocation2 + $0x80] sm:$0xff] 0.0
        %280 = vst [vmem:[#allocation2 + $0x88] sm:$0xff] 0.0
        %281 = vst [vmem:[#allocation2 + $0x90] sm:$0xff] 0.0
        %282 = vst [vmem:[#allocation2 + $0x98] sm:$0xff] 0.0
        %283 = vst [vmem:[#allocation2 + $0xa0] sm:$0xff] 0.0
        %284 = vst [vmem:[#allocation2 + $0xa8] sm:$0xff] 0.0
        %285 = vst [vmem:[#allocation2 + $0xb0] sm:$0xff] 0.0
        %286 = vst [vmem:[#allocation2 + $0xb8] sm:$0xff] 0.0
        %287 = vst [vmem:[#allocation2 + $0xc0] sm:$0xff] 0.0
        %288 = vst [vmem:[#allocation2 + $0xc8] sm:$0xff] 0.0
        %289 = vst [vmem:[#allocation2 + $0xd0] sm:$0xff] 0.0
        %290 = vst [vmem:[#allocation2 + $0xd8] sm:$0xff] 0.0
        %291 = vst [vmem:[#allocation2 + $0xe0] sm:$0xff] 0.0
        %292 = vst [vmem:[#allocation2 + $0xe8] sm:$0xff] 0.0
        %293 = vst [vmem:[#allocation2 + $0xf0] sm:$0xff] 0.0
        %294 = vst [vmem:[#allocation2 + $0xf8] sm:$0xff] 0.0
        %295 = vst [vmem:[#allocation2 + $0x100] sm:$0xff] 0.0
        %296 = vst [vmem:[#allocation2 + $0x108] sm:$0xff] 0.0
        %297 = vst [vmem:[#allocation2 + $0x110] sm:$0xff] 0.0
        %298 = vst [vmem:[#allocation2 + $0x118] sm:$0xff] 0.0
        %299 = vst [vmem:[#allocation2 + $0x120] sm:$0xff] 0.0
        %300 = vst [vmem:[#allocation2 + $0x128] sm:$0xff] 0.0
        %301 = vst [vmem:[#allocation2 + $0x130] sm:$0xff] 0.0
        %302 = vst [vmem:[#allocation2 + $0x138] sm:$0xff] 0.0
        %303 = vst [vmem:[#allocation2 + $0x140] sm:$0xff] 0.0
        %304 = vst [vmem:[#allocation2 + $0x148] sm:$0xff] 0.0
        %305 = vst [vmem:[#allocation2 + $0x150] sm:$0xff] 0.0
        %306 = vst [vmem:[#allocation2 + $0x158] sm:$0xff] 0.0
        %307 = vst [vmem:[#allocation2 + $0x160] sm:$0xff] 0.0
        %308 = vst [vmem:[#allocation2 + $0x168] sm:$0xff] 0.0
        %309 = vst [vmem:[#allocation2 + $0x170] sm:$0xff] 0.0
        %310 = vst [vmem:[#allocation2 + $0x178] sm:$0xff] 0.0
        %311 = vst [vmem:[#allocation2 + $0x180] sm:$0xff] 0.0
        %312 = vst [vmem:[#allocation2 + $0x188] sm:$0xff] 0.0
        %313 = vst [vmem:[#allocation2 + $0x190] sm:$0xff] 0.0
        %314 = vst [vmem:[#allocation2 + $0x198] sm:$0xff] 0.0
        %315 = vst [vmem:[#allocation2 + $0x1a0] sm:$0xff] 0.0
        %316 = vst [vmem:[#allocation2 + $0x1a8] sm:$0xff] 0.0
        %317 = vst [vmem:[#allocation2 + $0x1b0] sm:$0xff] 0.0
        %318 = vst [vmem:[#allocation2 + $0x1b8] sm:$0xff] 0.0
        %319 = vst [vmem:[#allocation2 + $0x1c0] sm:$0xff] 0.0
        %320 = vst [vmem:[#allocation2 + $0x1c8] sm:$0xff] 0.0
        %321 = vst [vmem:[#allocation2 + $0x1d0] sm:$0xff] 0.0
        %322 = vst [vmem:[#allocation2 + $0x1d8] sm:$0xff] 0.0
        %323 = vst [vmem:[#allocation2 + $0x1e0] sm:$0xff] 0.0
        %324 = vst [vmem:[#allocation2 + $0x1e8] sm:$0xff] 0.0
        %325 = vst [vmem:[#allocation2 + $0x1f0] sm:$0xff] 0.0
        %326 = vst [vmem:[#allocation2 + $0x1f8] sm:$0xff] 0.0
      $region36: #{_lambda_.33} parent=31 // pred_fallthru
        _
      %v327 = vld [vmem:[%s236] sm:$0xf]
      %v328 = vld [vmem:[%s236 + $0x4] sm:$0xf]
      %v329 = vld [vmem:[%s236 + $0x8] sm:$0xf]
      %v330 = vld [vmem:[%s236 + $0xc] sm:$0xf]
      %v331 = vld [vmem:[%s236 + $0x10] sm:$0xf]
      %v332 = vld [vmem:[%s236 + $0x14] sm:$0xf]
      %v333 = vld [vmem:[%s236 + $0x18] sm:$0xf]
      %v334 = vld [vmem:[%s236 + $0x1c] sm:$0xf]
      %v335 = vld [vmem:[%s236 + $0x20] sm:$0xf]
      %v336 = vld [vmem:[%s236 + $0x24] sm:$0xf]
      %v337 = vld [vmem:[%s236 + $0x28] sm:$0xf]
      %v338 = vld [vmem:[%s236 + $0x2c] sm:$0xf]
      %v339 = vld [vmem:[%s236 + $0x30] sm:$0xf]
      %v340 = vld [vmem:[%s236 + $0x34] sm:$0xf]
      %v341 = vld [vmem:[%s236 + $0x38] sm:$0xf]
      %v342 = vld [vmem:[%s236 + $0x3c] sm:$0xf]
      %v343 = vld [vmem:[%s236 + $0x40] sm:$0xf]
      %v344 = vld [vmem:[%s236 + $0x44] sm:$0xf]
      %v345 = vld [vmem:[%s236 + $0x48] sm:$0xf]
      %v346 = vld [vmem:[%s236 + $0x4c] sm:$0xf]
      %v347 = vld [vmem:[%s236 + $0x50] sm:$0xf]
      %v348 = vld [vmem:[%s236 + $0x54] sm:$0xf]
      %v349 = vld [vmem:[%s236 + $0x58] sm:$0xf]
      %v350 = vld [vmem:[%s236 + $0x5c] sm:$0xf]
      %v351 = vld [vmem:[%s236 + $0x60] sm:$0xf]
      %v352 = vld [vmem:[%s236 + $0x64] sm:$0xf]
      %v353 = vld [vmem:[%s236 + $0x68] sm:$0xf]
      %v354 = vld [vmem:[%s236 + $0x6c] sm:$0xf]
      %v355 = vld [vmem:[%s236 + $0x70] sm:$0xf]
      %v356 = vld [vmem:[%s236 + $0x74] sm:$0xf]
      %v357 = vld [vmem:[%s236 + $0x78] sm:$0xf]
      %v358 = vld [vmem:[%s236 + $0x7c] sm:$0xf]
      %v359 = vld [vmem:[%s236 + $0x80] sm:$0xf]
      %v360 = vld [vmem:[%s236 + $0x84] sm:$0xf]
      %v361 = vld [vmem:[%s236 + $0x88] sm:$0xf]
      %v362 = vld [vmem:[%s236 + $0x8c] sm:$0xf]
      %v363 = vld [vmem:[%s236 + $0x90] sm:$0xf]
      %v364 = vld [vmem:[%s236 + $0x94] sm:$0xf]
      %v365 = vld [vmem:[%s236 + $0x98] sm:$0xf]
      %v366 = vld [vmem:[%s236 + $0x9c] sm:$0xf]
      %v367 = vld [vmem:[%s236 + $0xa0] sm:$0xf]
      %v368 = vld [vmem:[%s236 + $0xa4] sm:$0xf]
      %v369 = vld [vmem:[%s236 + $0xa8] sm:$0xf]
      %v370 = vld [vmem:[%s236 + $0xac] sm:$0xf]
      %v371 = vld [vmem:[%s236 + $0xb0] sm:$0xf]
      %v372 = vld [vmem:[%s236 + $0xb4] sm:$0xf]
      %v373 = vld [vmem:[%s236 + $0xb8] sm:$0xf]
      %v374 = vld [vmem:[%s236 + $0xbc] sm:$0xf]
      %v375 = vld [vmem:[%s236 + $0xc0] sm:$0xf]
      %v376 = vld [vmem:[%s236 + $0xc4] sm:$0xf]
      %v377 = vld [vmem:[%s236 + $0xc8] sm:$0xf]
      %v378 = vld [vmem:[%s236 + $0xcc] sm:$0xf]
      %v379 = vld [vmem:[%s236 + $0xd0] sm:$0xf]
      %v380 = vld [vmem:[%s236 + $0xd4] sm:$0xf]
      %v381 = vld [vmem:[%s236 + $0xd8] sm:$0xf]
      %v382 = vld [vmem:[%s236 + $0xdc] sm:$0xf]
      %v383 = vld [vmem:[%s236 + $0xe0] sm:$0xf]
      %v384 = vld [vmem:[%s236 + $0xe4] sm:$0xf]
      %v385 = vld [vmem:[%s236 + $0xe8] sm:$0xf]
      %v386 = vld [vmem:[%s236 + $0xec] sm:$0xf]
      %v387 = vld [vmem:[%s236 + $0xf0] sm:$0xf]
      %v388 = vld [vmem:[%s236 + $0xf4] sm:$0xf]
      %v389 = vld [vmem:[%s236 + $0xf8] sm:$0xf]
      %v390 = vld [vmem:[%s236 + $0xfc] sm:$0xf]
      %v391 = vld [vmem:[#allocation2] sm:$0xff]
      %v392 = vld [vmem:[#allocation2 + $0x8] sm:$0xff]
      %v393 = vld [vmem:[#allocation2 + $0x10] sm:$0xff]
      %v394 = vld [vmem:[#allocation2 + $0x18] sm:$0xff]
      %v395 = vld [vmem:[#allocation2 + $0x20] sm:$0xff]
      %v396 = vld [vmem:[#allocation2 + $0x28] sm:$0xff]
      %v397 = vld [vmem:[#allocation2 + $0x30] sm:$0xff]
      %v398 = vld [vmem:[#allocation2 + $0x38] sm:$0xff]
      %v399 = vld [vmem:[#allocation2 + $0x40] sm:$0xff]
      %v400 = vld [vmem:[#allocation2 + $0x48] sm:$0xff]
      %v401 = vld [vmem:[#allocation2 + $0x50] sm:$0xff]
      %v402 = vld [vmem:[#allocation2 + $0x58] sm:$0xff]
      %v403 = vld [vmem:[#allocation2 + $0x60] sm:$0xff]
      %v404 = vld [vmem:[#allocation2 + $0x68] sm:$0xff]
      %v405 = vld [vmem:[#allocation2 + $0x70] sm:$0xff]
      %v406 = vld [vmem:[#allocation2 + $0x78] sm:$0xff]
      %v407 = vld [vmem:[#allocation2 + $0x80] sm:$0xff]
      %v408 = vld [vmem:[#allocation2 + $0x88] sm:$0xff]
      %v409 = vld [vmem:[#allocation2 + $0x90] sm:$0xff]
      %v410 = vld [vmem:[#allocation2 + $0x98] sm:$0xff]
      %v411 = vld [vmem:[#allocation2 + $0xa0] sm:$0xff]
      %v412 = vld [vmem:[#allocation2 + $0xa8] sm:$0xff]
      %v413 = vld [vmem:[#allocation2 + $0xb0] sm:$0xff]
      %v414 = vld [vmem:[#allocation2 + $0xb8] sm:$0xff]
      %v415 = vld [vmem:[#allocation2 + $0xc0] sm:$0xff]
      %v416 = vld [vmem:[#allocation2 + $0xc8] sm:$0xff]
      %v417 = vld [vmem:[#allocation2 + $0xd0] sm:$0xff]
      %v418 = vld [vmem:[#allocation2 + $0xd8] sm:$0xff]
      %v419 = vld [vmem:[#allocation2 + $0xe0] sm:$0xff]
      %v420 = vld [vmem:[#allocation2 + $0xe8] sm:$0xff]
      %v421 = vld [vmem:[#allocation2 + $0xf0] sm:$0xff]
      %v422 = vld [vmem:[#allocation2 + $0xf8] sm:$0xff]
      %v423 = vld [vmem:[#allocation2 + $0x100] sm:$0xff]
      %v424 = vld [vmem:[#allocation2 + $0x108] sm:$0xff]
      %v425 = vld [vmem:[#allocation2 + $0x110] sm:$0xff]
      %v426 = vld [vmem:[#allocation2 + $0x118] sm:$0xff]
      %v427 = vld [vmem:[#allocation2 + $0x120] sm:$0xff]
      %v428 = vld [vmem:[#allocation2 + $0x128] sm:$0xff]
      %v429 = vld [vmem:[#allocation2 + $0x130] sm:$0xff]
      %v430 = vld [vmem:[#allocation2 + $0x138] sm:$0xff]
      %v431 = vld [vmem:[#allocation2 + $0x140] sm:$0xff]
      %v432 = vld [vmem:[#allocation2 + $0x148] sm:$0xff]
      %v433 = vld [vmem:[#allocation2 + $0x150] sm:$0xff]
      %v434 = vld [vmem:[#allocation2 + $0x158] sm:$0xff]
      %v435 = vld [vmem:[#allocation2 + $0x160] sm:$0xff]
      %v436 = vld [vmem:[#allocation2 + $0x168] sm:$0xff]
      %v437 = vld [vmem:[#allocation2 + $0x170] sm:$0xff]
      %v438 = vld [vmem:[#allocation2 + $0x178] sm:$0xff]
      %v439 = vld [vmem:[#allocation2 + $0x180] sm:$0xff]
      %v440 = vld [vmem:[#allocation2 + $0x188] sm:$0xff]
      %v441 = vld [vmem:[#allocation2 + $0x190] sm:$0xff]
      %v442 = vld [vmem:[#allocation2 + $0x198] sm:$0xff]
      %v443 = vld [vmem:[#allocation2 + $0x1a0] sm:$0xff]
      %v444 = vld [vmem:[#allocation2 + $0x1a8] sm:$0xff]
      %v445 = vld [vmem:[#allocation2 + $0x1b0] sm:$0xff]
      %v446 = vld [vmem:[#allocation2 + $0x1b8] sm:$0xff]
      %v447 = vld [vmem:[#allocation2 + $0x1c0] sm:$0xff]
      %v448 = vld [vmem:[#allocation2 + $0x1c8] sm:$0xff]
      %v449 = vld [vmem:[#allocation2 + $0x1d0] sm:$0xff]
      %v450 = vld [vmem:[#allocation2 + $0x1d8] sm:$0xff]
      %v451 = vld [vmem:[#allocation2 + $0x1e0] sm:$0xff]
      %v452 = vld [vmem:[#allocation2 + $0x1e8] sm:$0xff]
      %v453 = vld [vmem:[#allocation2 + $0x1f0] sm:$0xff]
      %v454 = vld [vmem:[#allocation2 + $0x1f8] sm:$0xff]
      %v455 = vld [vmem:[%s245] sm:$0xf]
      %v456 = vld [vmem:[%s245 + $0x4] sm:$0xf]
      %v457 = vld [vmem:[%s245 + $0x8] sm:$0xf]
      %v458 = vld [vmem:[%s245 + $0xc] sm:$0xf]
      %v459 = vld [vmem:[%s245 + $0x10] sm:$0xf]
      %v460 = vld [vmem:[%s245 + $0x14] sm:$0xf]
      %v461 = vld [vmem:[%s245 + $0x18] sm:$0xf]
      %v462 = vld [vmem:[%s245 + $0x1c] sm:$0xf]
      %v463 = vld [vmem:[%s245 + $0x20] sm:$0xf]
      %v464 = vld [vmem:[%s245 + $0x24] sm:$0xf]
      %v465 = vld [vmem:[%s245 + $0x28] sm:$0xf]
      %v466 = vld [vmem:[%s245 + $0x2c] sm:$0xf]
      %v467 = vld [vmem:[%s245 + $0x30] sm:$0xf]
      %v468 = vld [vmem:[%s245 + $0x34] sm:$0xf]
      %v469 = vld [vmem:[%s245 + $0x38] sm:$0xf]
      %v470 = vld [vmem:[%s245 + $0x3c] sm:$0xf]
      %v535 = vunpack.c.l.b16 %v327
      %v536 = vunpack.c.l.b16 %v328
      %v537 = vunpack.c.l.b16 %v329
      %v538 = vunpack.c.l.b16 %v330
      %v539 = vunpack.c.l.b16 %v331
      %v540 = vunpack.c.l.b16 %v332
      %v541 = vunpack.c.l.b16 %v333
      %v542 = vunpack.c.l.b16 %v334
      %v543 = vunpack.c.l.b16 %v335
      %v544 = vunpack.c.l.b16 %v336
      %v545 = vunpack.c.l.b16 %v337
      %v546 = vunpack.c.l.b16 %v338
      %v547 = vunpack.c.l.b16 %v339
      %v548 = vunpack.c.l.b16 %v340
      %v549 = vunpack.c.l.b16 %v341
      %v550 = vunpack.c.l.b16 %v342
      %v551 = vunpack.c.l.b16 %v343
      %v552 = vunpack.c.l.b16 %v344
      %v553 = vunpack.c.l.b16 %v345
      %v554 = vunpack.c.l.b16 %v346
      %v555 = vunpack.c.l.b16 %v347
      %v556 = vunpack.c.l.b16 %v348
      %v557 = vunpack.c.l.b16 %v349
      %v558 = vunpack.c.l.b16 %v350
      %v559 = vunpack.c.l.b16 %v351
      %v560 = vunpack.c.l.b16 %v352
      %v561 = vunpack.c.l.b16 %v353
      %v562 = vunpack.c.l.b16 %v354
      %v563 = vunpack.c.l.b16 %v355
      %v564 = vunpack.c.l.b16 %v356
      %v565 = vunpack.c.l.b16 %v357
      %v566 = vunpack.c.l.b16 %v358
      %v567 = vunpack.c.l.b16 %v359
      %v568 = vunpack.c.l.b16 %v360
      %v569 = vunpack.c.l.b16 %v361
      %v570 = vunpack.c.l.b16 %v362
      %v571 = vunpack.c.l.b16 %v363
      %v572 = vunpack.c.l.b16 %v364
      %v573 = vunpack.c.l.b16 %v365
      %v574 = vunpack.c.l.b16 %v366
      %v575 = vunpack.c.l.b16 %v367
      %v576 = vunpack.c.l.b16 %v368
      %v577 = vunpack.c.l.b16 %v369
      %v578 = vunpack.c.l.b16 %v370
      %v579 = vunpack.c.l.b16 %v371
      %v580 = vunpack.c.l.b16 %v372
      %v581 = vunpack.c.l.b16 %v373
      %v582 = vunpack.c.l.b16 %v374
      %v583 = vunpack.c.l.b16 %v375
      %v584 = vunpack.c.l.b16 %v376
      %v585 = vunpack.c.l.b16 %v377
      %v586 = vunpack.c.l.b16 %v378
      %v587 = vunpack.c.l.b16 %v379
      %v588 = vunpack.c.l.b16 %v380
      %v589 = vunpack.c.l.b16 %v381
      %v590 = vunpack.c.l.b16 %v382
      %v591 = vunpack.c.l.b16 %v383
      %v592 = vunpack.c.l.b16 %v384
      %v593 = vunpack.c.l.b16 %v385
      %v594 = vunpack.c.l.b16 %v386
      %v595 = vunpack.c.l.b16 %v387
      %v596 = vunpack.c.l.b16 %v388
      %v597 = vunpack.c.l.b16 %v389
      %v598 = vunpack.c.l.b16 %v390
      %v599 = vpack.c.b16 %v536, %v535
      %v600 = vpack.c.b16 %v538, %v537
      %v601 = vpack.c.b16 %v540, %v539
      %v602 = vpack.c.b16 %v542, %v541
      %v603 = vpack.c.b16 %v544, %v543
      %v604 = vpack.c.b16 %v546, %v545
      %v605 = vpack.c.b16 %v548, %v547
      %v606 = vpack.c.b16 %v550, %v549
      %v607 = vpack.c.b16 %v552, %v551
      %v608 = vpack.c.b16 %v554, %v553
      %v609 = vpack.c.b16 %v556, %v555
      %v610 = vpack.c.b16 %v558, %v557
      %v611 = vpack.c.b16 %v560, %v559
      %v612 = vpack.c.b16 %v562, %v561
      %v613 = vpack.c.b16 %v564, %v563
      %v614 = vpack.c.b16 %v566, %v565
      %v615 = vpack.c.b16 %v568, %v567
      %v616 = vpack.c.b16 %v570, %v569
      %v617 = vpack.c.b16 %v572, %v571
      %v618 = vpack.c.b16 %v574, %v573
      %v619 = vpack.c.b16 %v576, %v575
      %v620 = vpack.c.b16 %v578, %v577
      %v621 = vpack.c.b16 %v580, %v579
      %v622 = vpack.c.b16 %v582, %v581
      %v623 = vpack.c.b16 %v584, %v583
      %v624 = vpack.c.b16 %v586, %v585
      %v625 = vpack.c.b16 %v588, %v587
      %v626 = vpack.c.b16 %v590, %v589
      %v627 = vpack.c.b16 %v592, %v591
      %v628 = vpack.c.b16 %v594, %v593
      %v629 = vpack.c.b16 %v596, %v595
      %v630 = vpack.c.b16 %v598, %v597
      %v679 = vunpack.c.l.b16 %v455
      %v680 = vunpack.c.l.b16 %v456
      %v681 = vunpack.c.l.b16 %v457
      %v682 = vunpack.c.l.b16 %v458
      %v683 = vunpack.c.l.b16 %v459
      %v684 = vunpack.c.l.b16 %v460
      %v685 = vunpack.c.l.b16 %v461
      %v686 = vunpack.c.l.b16 %v462
      %v687 = vunpack.c.l.b16 %v463
      %v688 = vunpack.c.l.b16 %v464
      %v689 = vunpack.c.l.b16 %v465
      %v690 = vunpack.c.l.b16 %v466
      %v691 = vunpack.c.l.b16 %v467
      %v692 = vunpack.c.l.b16 %v468
      %v693 = vunpack.c.l.b16 %v469
      %v694 = vunpack.c.l.b16 %v470
      %v695 = vpack.c.b16 %v680, %v679
      %v696 = vpack.c.b16 %v682, %v681
      %v697 = vpack.c.b16 %v684, %v683
      %v698 = vpack.c.b16 %v686, %v685
      %v699 = vpack.c.b16 %v688, %v687
      %v700 = vpack.c.b16 %v690, %v689
      %v701 = vpack.c.b16 %v692, %v691
      %v702 = vpack.c.b16 %v694, %v693
      %711 = vmatpush.bf16.msra.mxu0 %v702
      %712 = vmatpush.bf16.msra.mxu0 %v701
      %713 = vmatpush.bf16.msra.mxu0 %v700
      %714 = vmatpush.bf16.msra.mxu0 %v699
      %715 = vmatpush.bf16.msra.mxu0 %v698
      %716 = vmatpush.bf16.msra.mxu0 %v697
      %717 = vmatpush.bf16.msra.mxu0 %v696
      %718 = vmatpush.bf16.msra.mxu0 %v695
      %719 = vmatmul.bf16.gmra.mxu0 %v599
      %v720 = vpop.f32.mrf.mxu0
      %v721 = vadd.f32 0.0, %v720
      %v722 = vpop.f32.mrf.mxu0
      %v723 = vadd.f32 0.0, %v722
      %724 = vmatmul.bf16.gmra.mxu0 %v600
      %v725 = vpop.f32.mrf.mxu0
      %v726 = vadd.f32 0.0, %v725
      %v727 = vpop.f32.mrf.mxu0
      %v728 = vadd.f32 0.0, %v727
      %729 = vmatmul.bf16.gmra.mxu0 %v601
      %v730 = vpop.f32.mrf.mxu0
      %v731 = vadd.f32 0.0, %v730
      %v732 = vpop.f32.mrf.mxu0
      %v733 = vadd.f32 0.0, %v732
      %734 = vmatmul.bf16.gmra.mxu0 %v602
      %v735 = vpop.f32.mrf.mxu0
      %v736 = vadd.f32 0.0, %v735
      %v737 = vpop.f32.mrf.mxu0
      %v738 = vadd.f32 0.0, %v737
      %739 = vmatmul.bf16.gmra.mxu0 %v603
      %v740 = vpop.f32.mrf.mxu0
      %v741 = vadd.f32 0.0, %v740
      %v742 = vpop.f32.mrf.mxu0
      %v743 = vadd.f32 0.0, %v742
      %744 = vmatmul.bf16.gmra.mxu0 %v604
      %v745 = vpop.f32.mrf.mxu0
      %v746 = vadd.f32 0.0, %v745
      %v747 = vpop.f32.mrf.mxu0
      %v748 = vadd.f32 0.0, %v747
      %749 = vmatmul.bf16.gmra.mxu0 %v605
      %v750 = vpop.f32.mrf.mxu0
      %v751 = vadd.f32 0.0, %v750
      %v752 = vpop.f32.mrf.mxu0
      %v753 = vadd.f32 0.0, %v752
      %754 = vmatmul.bf16.gmra.mxu0 %v606
      %v755 = vpop.f32.mrf.mxu0
      %v756 = vadd.f32 0.0, %v755
      %v757 = vpop.f32.mrf.mxu0
      %v758 = vadd.f32 0.0, %v757
      %759 = vmatmul.bf16.gmra.mxu0 %v607
      %v760 = vpop.f32.mrf.mxu0
      %v761 = vadd.f32 0.0, %v760
      %v762 = vpop.f32.mrf.mxu0
      %v763 = vadd.f32 0.0, %v762
      %764 = vmatmul.bf16.gmra.mxu0 %v608
      %v765 = vpop.f32.mrf.mxu0
      %v766 = vadd.f32 0.0, %v765
      %v767 = vpop.f32.mrf.mxu0
      %v768 = vadd.f32 0.0, %v767
      %769 = vmatmul.bf16.gmra.mxu0 %v609
      %v770 = vpop.f32.mrf.mxu0
      %v771 = vadd.f32 0.0, %v770
      %v772 = vpop.f32.mrf.mxu0
      %v773 = vadd.f32 0.0, %v772
      %774 = vmatmul.bf16.gmra.mxu0 %v610
      %v775 = vpop.f32.mrf.mxu0
      %v776 = vadd.f32 0.0, %v775
      %v777 = vpop.f32.mrf.mxu0
      %v778 = vadd.f32 0.0, %v777
      %779 = vmatmul.bf16.gmra.mxu0 %v611
      %v780 = vpop.f32.mrf.mxu0
      %v781 = vadd.f32 0.0, %v780
      %v782 = vpop.f32.mrf.mxu0
      %v783 = vadd.f32 0.0, %v782
      %784 = vmatmul.bf16.gmra.mxu0 %v612
      %v785 = vpop.f32.mrf.mxu0
      %v786 = vadd.f32 0.0, %v785
      %v787 = vpop.f32.mrf.mxu0
      %v788 = vadd.f32 0.0, %v787
      %789 = vmatmul.bf16.gmra.mxu0 %v613
      %v790 = vpop.f32.mrf.mxu0
      %v791 = vadd.f32 0.0, %v790
      %v792 = vpop.f32.mrf.mxu0
      %v793 = vadd.f32 0.0, %v792
      %794 = vmatmul.bf16.gmra.mxu0 %v614
      %v795 = vpop.f32.mrf.mxu0
      %v796 = vadd.f32 0.0, %v795
      %v797 = vpop.f32.mrf.mxu0
      %v798 = vadd.f32 0.0, %v797
      %799 = vmatmul.bf16.gmra.mxu0 %v615
      %v800 = vpop.f32.mrf.mxu0
      %v801 = vadd.f32 0.0, %v800
      %v802 = vpop.f32.mrf.mxu0
      %v803 = vadd.f32 0.0, %v802
      %804 = vmatmul.bf16.gmra.mxu0 %v616
      %v805 = vpop.f32.mrf.mxu0
      %v806 = vadd.f32 0.0, %v805
      %v807 = vpop.f32.mrf.mxu0
      %v808 = vadd.f32 0.0, %v807
      %809 = vmatmul.bf16.gmra.mxu0 %v617
      %v810 = vpop.f32.mrf.mxu0
      %v811 = vadd.f32 0.0, %v810
      %v812 = vpop.f32.mrf.mxu0
      %v813 = vadd.f32 0.0, %v812
      %814 = vmatmul.bf16.gmra.mxu0 %v618
      %v815 = vpop.f32.mrf.mxu0
      %v816 = vadd.f32 0.0, %v815
      %v817 = vpop.f32.mrf.mxu0
      %v818 = vadd.f32 0.0, %v817
      %819 = vmatmul.bf16.gmra.mxu0 %v619
      %v820 = vpop.f32.mrf.mxu0
      %v821 = vadd.f32 0.0, %v820
      %v822 = vpop.f32.mrf.mxu0
      %v823 = vadd.f32 0.0, %v822
      %824 = vmatmul.bf16.gmra.mxu0 %v620
      %v825 = vpop.f32.mrf.mxu0
      %v826 = vadd.f32 0.0, %v825
      %v827 = vpop.f32.mrf.mxu0
      %v828 = vadd.f32 0.0, %v827
      %829 = vmatmul.bf16.gmra.mxu0 %v621
      %v830 = vpop.f32.mrf.mxu0
      %v831 = vadd.f32 0.0, %v830
      %v832 = vpop.f32.mrf.mxu0
      %v833 = vadd.f32 0.0, %v832
      %834 = vmatmul.bf16.gmra.mxu0 %v622
      %v835 = vpop.f32.mrf.mxu0
      %v836 = vadd.f32 0.0, %v835
      %v837 = vpop.f32.mrf.mxu0
      %v838 = vadd.f32 0.0, %v837
      %839 = vmatmul.bf16.gmra.mxu0 %v623
      %v840 = vpop.f32.mrf.mxu0
      %v841 = vadd.f32 0.0, %v840
      %v842 = vpop.f32.mrf.mxu0
      %v843 = vadd.f32 0.0, %v842
      %844 = vmatmul.bf16.gmra.mxu0 %v624
      %v845 = vpop.f32.mrf.mxu0
      %v846 = vadd.f32 0.0, %v845
      %v847 = vpop.f32.mrf.mxu0
      %v848 = vadd.f32 0.0, %v847
      %849 = vmatmul.bf16.gmra.mxu0 %v625
      %v850 = vpop.f32.mrf.mxu0
      %v851 = vadd.f32 0.0, %v850
      %v852 = vpop.f32.mrf.mxu0
      %v853 = vadd.f32 0.0, %v852
      %854 = vmatmul.bf16.gmra.mxu0 %v626
      %v855 = vpop.f32.mrf.mxu0
      %v856 = vadd.f32 0.0, %v855
      %v857 = vpop.f32.mrf.mxu0
      %v858 = vadd.f32 0.0, %v857
      %859 = vmatmul.bf16.gmra.mxu0 %v627
      %v860 = vpop.f32.mrf.mxu0
      %v861 = vadd.f32 0.0, %v860
      %v862 = vpop.f32.mrf.mxu0
      %v863 = vadd.f32 0.0, %v862
      %864 = vmatmul.bf16.gmra.mxu0 %v628
      %v865 = vpop.f32.mrf.mxu0
      %v866 = vadd.f32 0.0, %v865
      %v867 = vpop.f32.mrf.mxu0
      %v868 = vadd.f32 0.0, %v867
      %869 = vmatmul.bf16.gmra.mxu0 %v629
      %v870 = vpop.f32.mrf.mxu0
      %v871 = vadd.f32 0.0, %v870
      %v872 = vpop.f32.mrf.mxu0
      %v873 = vadd.f32 0.0, %v872
      %874 = vmatmul.bf16.gmra.mxu0 %v630
      %v875 = vpop.f32.mrf.mxu0
      %v876 = vadd.f32 0.0, %v875
      %v877 = vpop.f32.mrf.mxu0
      %v878 = vadd.f32 0.0, %v877
      %879 = vdwg.mxu0
      %v880 = vadd.f32 %v391, %v721
      %v881 = vadd.f32 %v392, %v723
      %v882 = vadd.f32 %v393, %v726
      %v883 = vadd.f32 %v394, %v728
      %v884 = vadd.f32 %v395, %v731
      %v885 = vadd.f32 %v396, %v733
      %v886 = vadd.f32 %v397, %v736
      %v887 = vadd.f32 %v398, %v738
      %v888 = vadd.f32 %v399, %v741
      %v889 = vadd.f32 %v400, %v743
      %v890 = vadd.f32 %v401, %v746
      %v891 = vadd.f32 %v402, %v748
      %v892 = vadd.f32 %v403, %v751
      %v893 = vadd.f32 %v404, %v753
      %v894 = vadd.f32 %v405, %v756
      %v895 = vadd.f32 %v406, %v758
      %v896 = vadd.f32 %v407, %v761
      %v897 = vadd.f32 %v408, %v763
      %v898 = vadd.f32 %v409, %v766
      %v899 = vadd.f32 %v410, %v768
      %v900 = vadd.f32 %v411, %v771
      %v901 = vadd.f32 %v412, %v773
      %v902 = vadd.f32 %v413, %v776
      %v903 = vadd.f32 %v414, %v778
      %v904 = vadd.f32 %v415, %v781
      %v905 = vadd.f32 %v416, %v783
      %v906 = vadd.f32 %v417, %v786
      %v907 = vadd.f32 %v418, %v788
      %v908 = vadd.f32 %v419, %v791
      %v909 = vadd.f32 %v420, %v793
      %v910 = vadd.f32 %v421, %v796
      %v911 = vadd.f32 %v422, %v798
      %v912 = vadd.f32 %v423, %v801
      %v913 = vadd.f32 %v424, %v803
      %v914 = vadd.f32 %v425, %v806
      %v915 = vadd.f32 %v426, %v808
      %v916 = vadd.f32 %v427, %v811
      %v917 = vadd.f32 %v428, %v813
      %v918 = vadd.f32 %v429, %v816
      %v919 = vadd.f32 %v430, %v818
      %v920 = vadd.f32 %v431, %v821
      %v921 = vadd.f32 %v432, %v823
      %v922 = vadd.f32 %v433, %v826
      %v923 = vadd.f32 %v434, %v828
      %v924 = vadd.f32 %v435, %v831
      %v925 = vadd.f32 %v436, %v833
      %v926 = vadd.f32 %v437, %v836
      %v927 = vadd.f32 %v438, %v838
      %v928 = vadd.f32 %v439, %v841
      %v929 = vadd.f32 %v440, %v843
      %v930 = vadd.f32 %v441, %v846
      %v931 = vadd.f32 %v442, %v848
      %v932 = vadd.f32 %v443, %v851
      %v933 = vadd.f32 %v444, %v853
      %v934 = vadd.f32 %v445, %v856
      %v935 = vadd.f32 %v446, %v858
      %v936 = vadd.f32 %v447, %v861
      %v937 = vadd.f32 %v448, %v863
      %v938 = vadd.f32 %v449, %v866
      %v939 = vadd.f32 %v450, %v868
      %v940 = vadd.f32 %v451, %v871
      %v941 = vadd.f32 %v452, %v873
      %v942 = vadd.f32 %v453, %v876
      %v943 = vadd.f32 %v454, %v878
      %944 = vst [vmem:[#allocation2] sm:$0xff] %v880
      %945 = vst [vmem:[#allocation2 + $0x8] sm:$0xff] %v881
      %946 = vst [vmem:[#allocation2 + $0x10] sm:$0xff] %v882
      %947 = vst [vmem:[#allocation2 + $0x18] sm:$0xff] %v883
      %948 = vst [vmem:[#allocation2 + $0x20] sm:$0xff] %v884
      %949 = vst [vmem:[#allocation2 + $0x28] sm:$0xff] %v885
      %950 = vst [vmem:[#allocation2 + $0x30] sm:$0xff] %v886
      %951 = vst [vmem:[#allocation2 + $0x38] sm:$0xff] %v887
      %952 = vst [vmem:[#allocation2 + $0x40] sm:$0xff] %v888
      %953 = vst [vmem:[#allocation2 + $0x48] sm:$0xff] %v889
      %954 = vst [vmem:[#allocation2 + $0x50] sm:$0xff] %v890
      %955 = vst [vmem:[#allocation2 + $0x58] sm:$0xff] %v891
      %956 = vst [vmem:[#allocation2 + $0x60] sm:$0xff] %v892
      %957 = vst [vmem:[#allocation2 + $0x68] sm:$0xff] %v893
      %958 = vst [vmem:[#allocation2 + $0x70] sm:$0xff] %v894
      %959 = vst [vmem:[#allocation2 + $0x78] sm:$0xff] %v895
      %960 = vst [vmem:[#allocation2 + $0x80] sm:$0xff] %v896
      %961 = vst [vmem:[#allocation2 + $0x88] sm:$0xff] %v897
      %962 = vst [vmem:[#allocation2 + $0x90] sm:$0xff] %v898
      %963 = vst [vmem:[#allocation2 + $0x98] sm:$0xff] %v899
      %964 = vst [vmem:[#allocation2 + $0xa0] sm:$0xff] %v900
      %965 = vst [vmem:[#allocation2 + $0xa8] sm:$0xff] %v901
      %966 = vst [vmem:[#allocation2 + $0xb0] sm:$0xff] %v902
      %967 = vst [vmem:[#allocation2 + $0xb8] sm:$0xff] %v903
      %968 = vst [vmem:[#allocation2 + $0xc0] sm:$0xff] %v904
      %969 = vst [vmem:[#allocation2 + $0xc8] sm:$0xff] %v905
      %970 = vst [vmem:[#allocation2 + $0xd0] sm:$0xff] %v906
      %971 = vst [vmem:[#allocation2 + $0xd8] sm:$0xff] %v907
      %972 = vst [vmem:[#allocation2 + $0xe0] sm:$0xff] %v908
      %973 = vst [vmem:[#allocation2 + $0xe8] sm:$0xff] %v909
      %974 = vst [vmem:[#allocation2 + $0xf0] sm:$0xff] %v910
      %975 = vst [vmem:[#allocation2 + $0xf8] sm:$0xff] %v911
      %976 = vst [vmem:[#allocation2 + $0x100] sm:$0xff] %v912
      %977 = vst [vmem:[#allocation2 + $0x108] sm:$0xff] %v913
      %978 = vst [vmem:[#allocation2 + $0x110] sm:$0xff] %v914
      %979 = vst [vmem:[#allocation2 + $0x118] sm:$0xff] %v915
      %980 = vst [vmem:[#allocation2 + $0x120] sm:$0xff] %v916
      %981 = vst [vmem:[#allocation2 + $0x128] sm:$0xff] %v917
      %982 = vst [vmem:[#allocation2 + $0x130] sm:$0xff] %v918
      %983 = vst [vmem:[#allocation2 + $0x138] sm:$0xff] %v919
      %984 = vst [vmem:[#allocation2 + $0x140] sm:$0xff] %v920
      %985 = vst [vmem:[#allocation2 + $0x148] sm:$0xff] %v921
      %986 = vst [vmem:[#allocation2 + $0x150] sm:$0xff] %v922
      %987 = vst [vmem:[#allocation2 + $0x158] sm:$0xff] %v923
      %988 = vst [vmem:[#allocation2 + $0x160] sm:$0xff] %v924
      %989 = vst [vmem:[#allocation2 + $0x168] sm:$0xff] %v925
      %990 = vst [vmem:[#allocation2 + $0x170] sm:$0xff] %v926
      %991 = vst [vmem:[#allocation2 + $0x178] sm:$0xff] %v927
      %992 = vst [vmem:[#allocation2 + $0x180] sm:$0xff] %v928
      %993 = vst [vmem:[#allocation2 + $0x188] sm:$0xff] %v929
      %994 = vst [vmem:[#allocation2 + $0x190] sm:$0xff] %v930
      %995 = vst [vmem:[#allocation2 + $0x198] sm:$0xff] %v931
      %996 = vst [vmem:[#allocation2 + $0x1a0] sm:$0xff] %v932
      %997 = vst [vmem:[#allocation2 + $0x1a8] sm:$0xff] %v933
      %998 = vst [vmem:[#allocation2 + $0x1b0] sm:$0xff] %v934
      %999 = vst [vmem:[#allocation2 + $0x1b8] sm:$0xff] %v935
      %1000 = vst [vmem:[#allocation2 + $0x1c0] sm:$0xff] %v936
      %1001 = vst [vmem:[#allocation2 + $0x1c8] sm:$0xff] %v937
      %1002 = vst [vmem:[#allocation2 + $0x1d0] sm:$0xff] %v938
      %1003 = vst [vmem:[#allocation2 + $0x1d8] sm:$0xff] %v939
      %1004 = vst [vmem:[#allocation2 + $0x1e0] sm:$0xff] %v940
      %1005 = vst [vmem:[#allocation2 + $0x1e8] sm:$0xff] %v941
      %1006 = vst [vmem:[#allocation2 + $0x1f0] sm:$0xff] %v942
      %1007 = vst [vmem:[#allocation2 + $0x1f8] sm:$0xff] %v943
      // Predicated region
      $region37: #{_lambda_.33} parent=31 // pred_check
        %p1008 = pneg %p259
      $region38: #{_lambda_.33} parent=31 // pred_check_branch
        %1010 = sbr.rel (%p1008) target = $region40
      $region39: #{_lambda_.33} parent=31 // pred_region
        %v1011 = vld [vmem:[#allocation2] sm:$0xff]
        %v1012 = vld [vmem:[#allocation2 + $0x8] sm:$0xff]
        %v1013 = vld [vmem:[#allocation2 + $0x10] sm:$0xff]
        %v1014 = vld [vmem:[#allocation2 + $0x18] sm:$0xff]
        %v1015 = vld [vmem:[#allocation2 + $0x20] sm:$0xff]
        %v1016 = vld [vmem:[#allocation2 + $0x28] sm:$0xff]
        %v1017 = vld [vmem:[#allocation2 + $0x30] sm:$0xff]
        %v1018 = vld [vmem:[#allocation2 + $0x38] sm:$0xff]
        %v1019 = vld [vmem:[#allocation2 + $0x40] sm:$0xff]
        %v1020 = vld [vmem:[#allocation2 + $0x48] sm:$0xff]
        %v1021 = vld [vmem:[#allocation2 + $0x50] sm:$0xff]
        %v1022 = vld [vmem:[#allocation2 + $0x58] sm:$0xff]
        %v1023 = vld [vmem:[#allocation2 + $0x60] sm:$0xff]
        %v1024 = vld [vmem:[#allocation2 + $0x68] sm:$0xff]
        %v1025 = vld [vmem:[#allocation2 + $0x70] sm:$0xff]
        %v1026 = vld [vmem:[#allocation2 + $0x78] sm:$0xff]
        %v1027 = vld [vmem:[#allocation2 + $0x80] sm:$0xff]
        %v1028 = vld [vmem:[#allocation2 + $0x88] sm:$0xff]
        %v1029 = vld [vmem:[#allocation2 + $0x90] sm:$0xff]
        %v1030 = vld [vmem:[#allocation2 + $0x98] sm:$0xff]
        %v1031 = vld [vmem:[#allocation2 + $0xa0] sm:$0xff]
        %v1032 = vld [vmem:[#allocation2 + $0xa8] sm:$0xff]
        %v1033 = vld [vmem:[#allocation2 + $0xb0] sm:$0xff]
        %v1034 = vld [vmem:[#allocation2 + $0xb8] sm:$0xff]
        %v1035 = vld [vmem:[#allocation2 + $0xc0] sm:$0xff]
        %v1036 = vld [vmem:[#allocation2 + $0xc8] sm:$0xff]
        %v1037 = vld [vmem:[#allocation2 + $0xd0] sm:$0xff]
        %v1038 = vld [vmem:[#allocation2 + $0xd8] sm:$0xff]
        %v1039 = vld [vmem:[#allocation2 + $0xe0] sm:$0xff]
        %v1040 = vld [vmem:[#allocation2 + $0xe8] sm:$0xff]
        %v1041 = vld [vmem:[#allocation2 + $0xf0] sm:$0xff]
        %v1042 = vld [vmem:[#allocation2 + $0xf8] sm:$0xff]
        %v1043 = vld [vmem:[#allocation2 + $0x100] sm:$0xff]
        %v1044 = vld [vmem:[#allocation2 + $0x108] sm:$0xff]
        %v1045 = vld [vmem:[#allocation2 + $0x110] sm:$0xff]
        %v1046 = vld [vmem:[#allocation2 + $0x118] sm:$0xff]
        %v1047 = vld [vmem:[#allocation2 + $0x120] sm:$0xff]
        %v1048 = vld [vmem:[#allocation2 + $0x128] sm:$0xff]
        %v1049 = vld [vmem:[#allocation2 + $0x130] sm:$0xff]
        %v1050 = vld [vmem:[#allocation2 + $0x138] sm:$0xff]
        %v1051 = vld [vmem:[#allocation2 + $0x140] sm:$0xff]
        %v1052 = vld [vmem:[#allocation2 + $0x148] sm:$0xff]
        %v1053 = vld [vmem:[#allocation2 + $0x150] sm:$0xff]
        %v1054 = vld [vmem:[#allocation2 + $0x158] sm:$0xff]
        %v1055 = vld [vmem:[#allocation2 + $0x160] sm:$0xff]
        %v1056 = vld [vmem:[#allocation2 + $0x168] sm:$0xff]
        %v1057 = vld [vmem:[#allocation2 + $0x170] sm:$0xff]
        %v1058 = vld [vmem:[#allocation2 + $0x178] sm:$0xff]
        %v1059 = vld [vmem:[#allocation2 + $0x180] sm:$0xff]
        %v1060 = vld [vmem:[#allocation2 + $0x188] sm:$0xff]
        %v1061 = vld [vmem:[#allocation2 + $0x190] sm:$0xff]
        %v1062 = vld [vmem:[#allocation2 + $0x198] sm:$0xff]
        %v1063 = vld [vmem:[#allocation2 + $0x1a0] sm:$0xff]
        %v1064 = vld [vmem:[#allocation2 + $0x1a8] sm:$0xff]
        %v1065 = vld [vmem:[#allocation2 + $0x1b0] sm:$0xff]
        %v1066 = vld [vmem:[#allocation2 + $0x1b8] sm:$0xff]
        %v1067 = vld [vmem:[#allocation2 + $0x1c0] sm:$0xff]
        %v1068 = vld [vmem:[#allocation2 + $0x1c8] sm:$0xff]
        %v1069 = vld [vmem:[#allocation2 + $0x1d0] sm:$0xff]
        %v1070 = vld [vmem:[#allocation2 + $0x1d8] sm:$0xff]
        %v1071 = vld [vmem:[#allocation2 + $0x1e0] sm:$0xff]
        %v1072 = vld [vmem:[#allocation2 + $0x1e8] sm:$0xff]
        %v1073 = vld [vmem:[#allocation2 + $0x1f0] sm:$0xff]
        %v1074 = vld [vmem:[#allocation2 + $0x1f8] sm:$0xff]
        %v1075 = vld [vmem:[%s249] sm:$0x1]
        %v1077 = vperm.slane %v1075, 0
        %v1079 = vadd.f32 %v1011, %v1077
        %v1080 = vadd.f32 %v1012, %v1077
        %v1081 = vadd.f32 %v1013, %v1077
        %v1082 = vadd.f32 %v1014, %v1077
        %v1083 = vadd.f32 %v1015, %v1077
        %v1084 = vadd.f32 %v1016, %v1077
        %v1085 = vadd.f32 %v1017, %v1077
        %v1086 = vadd.f32 %v1018, %v1077
        %v1087 = vadd.f32 %v1019, %v1077
        %v1088 = vadd.f32 %v1020, %v1077
        %v1089 = vadd.f32 %v1021, %v1077
        %v1090 = vadd.f32 %v1022, %v1077
        %v1091 = vadd.f32 %v1023, %v1077
        %v1092 = vadd.f32 %v1024, %v1077
        %v1093 = vadd.f32 %v1025, %v1077
        %v1094 = vadd.f32 %v1026, %v1077
        %v1095 = vadd.f32 %v1027, %v1077
        %v1096 = vadd.f32 %v1028, %v1077
        %v1097 = vadd.f32 %v1029, %v1077
        %v1098 = vadd.f32 %v1030, %v1077
        %v1099 = vadd.f32 %v1031, %v1077
        %v1100 = vadd.f32 %v1032, %v1077
        %v1101 = vadd.f32 %v1033, %v1077
        %v1102 = vadd.f32 %v1034, %v1077
        %v1103 = vadd.f32 %v1035, %v1077
        %v1104 = vadd.f32 %v1036, %v1077
        %v1105 = vadd.f32 %v1037, %v1077
        %v1106 = vadd.f32 %v1038, %v1077
        %v1107 = vadd.f32 %v1039, %v1077
        %v1108 = vadd.f32 %v1040, %v1077
        %v1109 = vadd.f32 %v1041, %v1077
        %v1110 = vadd.f32 %v1042, %v1077
        %v1111 = vadd.f32 %v1043, %v1077
        %v1112 = vadd.f32 %v1044, %v1077
        %v1113 = vadd.f32 %v1045, %v1077
        %v1114 = vadd.f32 %v1046, %v1077
        %v1115 = vadd.f32 %v1047, %v1077
        %v1116 = vadd.f32 %v1048, %v1077
        %v1117 = vadd.f32 %v1049, %v1077
        %v1118 = vadd.f32 %v1050, %v1077
        %v1119 = vadd.f32 %v1051, %v1077
        %v1120 = vadd.f32 %v1052, %v1077
        %v1121 = vadd.f32 %v1053, %v1077
        %v1122 = vadd.f32 %v1054, %v1077
        %v1123 = vadd.f32 %v1055, %v1077
        %v1124 = vadd.f32 %v1056, %v1077
        %v1125 = vadd.f32 %v1057, %v1077
        %v1126 = vadd.f32 %v1058, %v1077
        %v1127 = vadd.f32 %v1059, %v1077
        %v1128 = vadd.f32 %v1060, %v1077
        %v1129 = vadd.f32 %v1061, %v1077
        %v1130 = vadd.f32 %v1062, %v1077
        %v1131 = vadd.f32 %v1063, %v1077
        %v1132 = vadd.f32 %v1064, %v1077
        %v1133 = vadd.f32 %v1065, %v1077
        %v1134 = vadd.f32 %v1066, %v1077
        %v1135 = vadd.f32 %v1067, %v1077
        %v1136 = vadd.f32 %v1068, %v1077
        %v1137 = vadd.f32 %v1069, %v1077
        %v1138 = vadd.f32 %v1070, %v1077
        %v1139 = vadd.f32 %v1071, %v1077
        %v1140 = vadd.f32 %v1072, %v1077
        %v1141 = vadd.f32 %v1073, %v1077
        %v1142 = vadd.f32 %v1074, %v1077
        %v1143 = vmax.f32 %v1079, 0.0
        %v1144 = vmax.f32 %v1080, 0.0
        %v1145 = vmax.f32 %v1081, 0.0
        %v1146 = vmax.f32 %v1082, 0.0
        %v1147 = vmax.f32 %v1083, 0.0
        %v1148 = vmax.f32 %v1084, 0.0
        %v1149 = vmax.f32 %v1085, 0.0
        %v1150 = vmax.f32 %v1086, 0.0
        %v1151 = vmax.f32 %v1087, 0.0
        %v1152 = vmax.f32 %v1088, 0.0
        %v1153 = vmax.f32 %v1089, 0.0
        %v1154 = vmax.f32 %v1090, 0.0
        %v1155 = vmax.f32 %v1091, 0.0
        %v1156 = vmax.f32 %v1092, 0.0
        %v1157 = vmax.f32 %v1093, 0.0
        %v1158 = vmax.f32 %v1094, 0.0
        %v1159 = vmax.f32 %v1095, 0.0
        %v1160 = vmax.f32 %v1096, 0.0
        %v1161 = vmax.f32 %v1097, 0.0
        %v1162 = vmax.f32 %v1098, 0.0
        %v1163 = vmax.f32 %v1099, 0.0
        %v1164 = vmax.f32 %v1100, 0.0
        %v1165 = vmax.f32 %v1101, 0.0
        %v1166 = vmax.f32 %v1102, 0.0
        %v1167 = vmax.f32 %v1103, 0.0
        %v1168 = vmax.f32 %v1104, 0.0
        %v1169 = vmax.f32 %v1105, 0.0
        %v1170 = vmax.f32 %v1106, 0.0
        %v1171 = vmax.f32 %v1107, 0.0
        %v1172 = vmax.f32 %v1108, 0.0
        %v1173 = vmax.f32 %v1109, 0.0
        %v1174 = vmax.f32 %v1110, 0.0
        %v1175 = vmax.f32 %v1111, 0.0
        %v1176 = vmax.f32 %v1112, 0.0
        %v1177 = vmax.f32 %v1113, 0.0
        %v1178 = vmax.f32 %v1114, 0.0
        %v1179 = vmax.f32 %v1115, 0.0
        %v1180 = vmax.f32 %v1116, 0.0
        %v1181 = vmax.f32 %v1117, 0.0
        %v1182 = vmax.f32 %v1118, 0.0
        %v1183 = vmax.f32 %v1119, 0.0
        %v1184 = vmax.f32 %v1120, 0.0
        %v1185 = vmax.f32 %v1121, 0.0
        %v1186 = vmax.f32 %v1122, 0.0
        %v1187 = vmax.f32 %v1123, 0.0
        %v1188 = vmax.f32 %v1124, 0.0
        %v1189 = vmax.f32 %v1125, 0.0
        %v1190 = vmax.f32 %v1126, 0.0
        %v1191 = vmax.f32 %v1127, 0.0
        %v1192 = vmax.f32 %v1128, 0.0
        %v1193 = vmax.f32 %v1129, 0.0
        %v1194 = vmax.f32 %v1130, 0.0
        %v1195 = vmax.f32 %v1131, 0.0
        %v1196 = vmax.f32 %v1132, 0.0
        %v1197 = vmax.f32 %v1133, 0.0
        %v1198 = vmax.f32 %v1134, 0.0
        %v1199 = vmax.f32 %v1135, 0.0
        %v1200 = vmax.f32 %v1136, 0.0
        %v1201 = vmax.f32 %v1137, 0.0
        %v1202 = vmax.f32 %v1138, 0.0
        %v1203 = vmax.f32 %v1139, 0.0
        %v1204 = vmax.f32 %v1140, 0.0
        %v1205 = vmax.f32 %v1141, 0.0
        %v1206 = vmax.f32 %v1142, 0.0
        %1207 = vst [vmem:[%s257] sm:$0xff] %v1143
        %1208 = vst [vmem:[%s257 + $0x8] sm:$0xff] %v1144
        %1209 = vst [vmem:[%s257 + $0x10] sm:$0xff] %v1145
        %1210 = vst [vmem:[%s257 + $0x18] sm:$0xff] %v1146
        %1211 = vst [vmem:[%s257 + $0x20] sm:$0xff] %v1147
        %1212 = vst [vmem:[%s257 + $0x28] sm:$0xff] %v1148
        %1213 = vst [vmem:[%s257 + $0x30] sm:$0xff] %v1149
        %1214 = vst [vmem:[%s257 + $0x38] sm:$0xff] %v1150
        %1215 = vst [vmem:[%s257 + $0x40] sm:$0xff] %v1151
        %1216 = vst [vmem:[%s257 + $0x48] sm:$0xff] %v1152
        %1217 = vst [vmem:[%s257 + $0x50] sm:$0xff] %v1153
        %1218 = vst [vmem:[%s257 + $0x58] sm:$0xff] %v1154
        %1219 = vst [vmem:[%s257 + $0x60] sm:$0xff] %v1155
        %1220 = vst [vmem:[%s257 + $0x68] sm:$0xff] %v1156
        %1221 = vst [vmem:[%s257 + $0x70] sm:$0xff] %v1157
        %1222 = vst [vmem:[%s257 + $0x78] sm:$0xff] %v1158
        %1223 = vst [vmem:[%s257 + $0x80] sm:$0xff] %v1159
        %1224 = vst [vmem:[%s257 + $0x88] sm:$0xff] %v1160
        %1225 = vst [vmem:[%s257 + $0x90] sm:$0xff] %v1161
        %1226 = vst [vmem:[%s257 + $0x98] sm:$0xff] %v1162
        %1227 = vst [vmem:[%s257 + $0xa0] sm:$0xff] %v1163
        %1228 = vst [vmem:[%s257 + $0xa8] sm:$0xff] %v1164
        %1229 = vst [vmem:[%s257 + $0xb0] sm:$0xff] %v1165
        %1230 = vst [vmem:[%s257 + $0xb8] sm:$0xff] %v1166
        %1231 = vst [vmem:[%s257 + $0xc0] sm:$0xff] %v1167
        %1232 = vst [vmem:[%s257 + $0xc8] sm:$0xff] %v1168
        %1233 = vst [vmem:[%s257 + $0xd0] sm:$0xff] %v1169
        %1234 = vst [vmem:[%s257 + $0xd8] sm:$0xff] %v1170
        %1235 = vst [vmem:[%s257 + $0xe0] sm:$0xff] %v1171
        %1236 = vst [vmem:[%s257 + $0xe8] sm:$0xff] %v1172
        %1237 = vst [vmem:[%s257 + $0xf0] sm:$0xff] %v1173
        %1238 = vst [vmem:[%s257 + $0xf8] sm:$0xff] %v1174
        %1239 = vst [vmem:[%s257 + $0x100] sm:$0xff] %v1175
        %1240 = vst [vmem:[%s257 + $0x108] sm:$0xff] %v1176
        %1241 = vst [vmem:[%s257 + $0x110] sm:$0xff] %v1177
        %1242 = vst [vmem:[%s257 + $0x118] sm:$0xff] %v1178
        %1243 = vst [vmem:[%s257 + $0x120] sm:$0xff] %v1179
        %1244 = vst [vmem:[%s257 + $0x128] sm:$0xff] %v1180
        %1245 = vst [vmem:[%s257 + $0x130] sm:$0xff] %v1181
        %1246 = vst [vmem:[%s257 + $0x138] sm:$0xff] %v1182
        %1247 = vst [vmem:[%s257 + $0x140] sm:$0xff] %v1183
        %1248 = vst [vmem:[%s257 + $0x148] sm:$0xff] %v1184
        %1249 = vst [vmem:[%s257 + $0x150] sm:$0xff] %v1185
        %1250 = vst [vmem:[%s257 + $0x158] sm:$0xff] %v1186
        %1251 = vst [vmem:[%s257 + $0x160] sm:$0xff] %v1187
        %1252 = vst [vmem:[%s257 + $0x168] sm:$0xff] %v1188
        %1253 = vst [vmem:[%s257 + $0x170] sm:$0xff] %v1189
        %1254 = vst [vmem:[%s257 + $0x178] sm:$0xff] %v1190
        %1255 = vst [vmem:[%s257 + $0x180] sm:$0xff] %v1191
        %1256 = vst [vmem:[%s257 + $0x188] sm:$0xff] %v1192
        %1257 = vst [vmem:[%s257 + $0x190] sm:$0xff] %v1193
        %1258 = vst [vmem:[%s257 + $0x198] sm:$0xff] %v1194
        %1259 = vst [vmem:[%s257 + $0x1a0] sm:$0xff] %v1195
        %1260 = vst [vmem:[%s257 + $0x1a8] sm:$0xff] %v1196
        %1261 = vst [vmem:[%s257 + $0x1b0] sm:$0xff] %v1197
        %1262 = vst [vmem:[%s257 + $0x1b8] sm:$0xff] %v1198
        %1263 = vst [vmem:[%s257 + $0x1c0] sm:$0xff] %v1199
        %1264 = vst [vmem:[%s257 + $0x1c8] sm:$0xff] %v1200
        %1265 = vst [vmem:[%s257 + $0x1d0] sm:$0xff] %v1201
        %1266 = vst [vmem:[%s257 + $0x1d8] sm:$0xff] %v1202
        %1267 = vst [vmem:[%s257 + $0x1e0] sm:$0xff] %v1203
        %1268 = vst [vmem:[%s257 + $0x1e8] sm:$0xff] %v1204
        %1269 = vst [vmem:[%s257 + $0x1f0] sm:$0xff] %v1205
        %1270 = vst [vmem:[%s257 + $0x1f8] sm:$0xff] %v1206
      $region40: #{_lambda_.33} parent=31 // pred_fallthru
        _
      %s1271 = smul.u32 64, %s19
      %p1272 = scmp.lt.s32.totalorder %s1271, 255
      %s1273 = scalar_select %p1272, %s1271, 255
      %p1274 = scmp.lt.s32.totalorder %s20, 0
      %s1275 = scalar_select %p1274, %s20, 0
      %s1276 = sadd.s32 %s1275, %s1273
      %s1277 = smul.addr %s1276, 8
      %s1278 = scalar_lea.vmem %s3, %s1277
      // Predicated region
      $region41: #{_lambda_.33} parent=31 // pred_check
        %p1279 = pneg %p135
      $region42: #{_lambda_.33} parent=31 // pred_check_branch
        %1281 = sbr.rel (%p1279) target = $region44
      $region43: #{_lambda_.33} parent=31 // pred_region
        %s1282 = smul.u32 64, %s19
      $region44: #{_lambda_.33} parent=31 // pred_fallthru
        _
    $region32: #{_lambda_.33} parent=5 // pred_fallthru
      _
    %p1283 = scmp.le.s32.totalorder 2, %s9
    // Predicated region
    $region45: #{_lambda_.33} parent=5 // pred_check
      %p1284 = pneg %p1283
    $region46: #{_lambda_.33} parent=5 // pred_check_branch
      %1286 = sbr.rel (%p1284) target = $region48
    $region47: #{_lambda_.33} parent=5 // pred_region
      %s1287 = ssub.s32 %s9, 2
      // Predicated region
      $region49: #{_lambda_.33} parent=47 // pred_check
        %p1288 = pneg %p141
      $region50: #{_lambda_.33} parent=47 // pred_check_branch
        %1290 = sbr.rel (%p1288) target = $region52
      $region51: #{_lambda_.33} parent=47 // pred_region
        %s1291 = smul.u32 64, %s22
        %p1292 = scmp.lt.s32.totalorder %s1291, 255
        %s1293 = scalar_select %p1292, %s1291, 255
        %p1294 = scmp.lt.s32.totalorder %s23, 0
        %s1295 = scalar_select %p1294, %s23, 0
        %s1296 = sadd.s32 %s1295, %s1293
        %s1297 = smul.addr %s1296, 8
        %s1298 = scalar_lea.vmem %s3, %s1297
      $region52: #{_lambda_.33} parent=47 // pred_fallthru
        _
    $region48: #{_lambda_.33} parent=5 // pred_fallthru
      _
  $region6: #{_lambda_.33} parent=0 // loop_footer
    %s13 = sadd.s32 1, %s9
  $region7: #{_lambda_.33} parent=0 // loop_footer_branch
    %8 = sbr.rel target = $region3
  $region8: #{_lambda_.33} parent=0 // loop_exit
    _

</llo_original>
